<compile_context>
chip_gen: v5e
topology: v5e:2x2
jax: 0.10.0
libtpu: 0.0.40
codegen_flags: <defaults>
</compile_context>

<pallas_src>
import functools
import math

import jax
import jax.numpy as jnp
from jax import lax
from jax.experimental import pallas as pl
from jax.experimental.pallas import tpu as pltpu


# ----------------------------- in-kernel helpers -----------------------------

def _entmax15_rows_exact(scores):
    """Exact 1.5-entmax along the last axis of a 2D [R, T] block (sort-free).

    O(R*T^2) compare/select work; use only for small T (the wrapper switches to
    bisection for T >= 32)."""
    r, t = scores.shape
    x = scores.astype(jnp.float32) * 0.5
    x = x - jnp.max(x, axis=-1, keepdims=True)

    # 1-based descending ranks (ties broken by index) via pairwise comparison.
    x_j = x[:, :, None]                                        # [R, T(j), 1]
    x_l = x[:, None, :]                                        # [R, 1, T(l)]
    jdx = lax.broadcasted_iota(jnp.int32, (r, t, t), 1)
    ldx = lax.broadcasted_iota(jnp.int32, (r, t, t), 2)
    gt = (x_l > x_j) | ((x_l == x_j) & (ldx < jdx))
    rank = 1 + jnp.sum(gt.astype(jnp.int32), axis=-1)          # [R, T]

    # Sorted sequence via the rank permutation mask (one masked reduce).
    rj = rank[:, None, :]                                      # [R, 1, T(j)]
    pos3 = lax.broadcasted_iota(jnp.int32, (r, t, t), 1) + 1   # sorted position rho
    m_eq = (rj == pos3).astype(jnp.float32)
    x_srt = jnp.sum(x[:, None, :] * m_eq, axis=-1)             # [R, T], descending

    # Prefix sums of [x_srt ; x_srt^2] in ONE MXU matmul against the constant
    # upper-triangular mask (cumsum-as-matmul, RHS latched once).
    tri = (lax.broadcasted_iota(jnp.int32, (t, t), 0)
           <= lax.broadcasted_iota(jnp.int32, (t, t), 1)).astype(jnp.float32)
    stacked = jnp.concatenate([x_srt, x_srt * x_srt], axis=0)  # [2R, T]
    sums = jnp.dot(stacked, tri, preferred_element_type=jnp.float32)
    s1, s2 = sums[:r], sums[r:]

    rho = (lax.broadcasted_iota(jnp.int32, (1, t), 1) + 1).astype(jnp.float32)
    inv_rho = 1.0 / rho                                        # once per call, tiny
    mean = s1 * inv_rho
    mean_sq = s2 * inv_rho
    ss = rho * (mean_sq - mean * mean)
    delta = jnp.maximum((1.0 - ss) * inv_rho, 0.0)
    tau = mean - jnp.sqrt(delta)

    support = jnp.sum((tau <= x_srt).astype(jnp.int32), axis=-1, keepdims=True)
    pos = lax.broadcasted_iota(jnp.int32, (r, t), 1) + 1
    tau_star = jnp.sum(jnp.where(pos == support, tau, 0.0), axis=-1, keepdims=True)

    p = jnp.maximum(x - tau_star, 0.0)
    return p * p


def _entmax15_rows_bisect(scores, n_iter=40):
    """1.5-entmax via bisection on tau: O(R*T*iters), no [R,T,T] intermediates."""
    x = scores.astype(jnp.float32) * 0.5
    x = x - jnp.max(x, axis=-1, keepdims=True)                 # max(x) == 0
    r = x.shape[0]
    lo = jnp.full((r, 1), -1.0, jnp.float32)                   # sum p >= 1 at tau=-1
    hi = jnp.zeros((r, 1), jnp.float32)                        # sum p == 0 at tau=0

    def body(_, carry):
        lo, hi = carry
        tau = 0.5 * (lo + hi)
        p = jnp.maximum(x - tau, 0.0)
        too_big = jnp.sum(p * p, axis=-1, keepdims=True) > 1.0
        lo = jnp.where(too_big, tau, lo)
        hi = jnp.where(too_big, hi, tau)
        return lo, hi

    lo, hi = lax.fori_loop(0, n_iter, body, (lo, hi))
    tau = 0.5 * (lo + hi)
    p = jnp.maximum(x - tau, 0.0)
    return p * p


def _entmax15_rows(scores):
    return (_entmax15_rows_exact(scores) if scores.shape[-1] < 32
            else _entmax15_rows_bisect(scores))


def _layer_norm(x, w, b, eps=1e-5):
    mu = jnp.mean(x, axis=-1, keepdims=True)
    var = jnp.mean((x - mu) * (x - mu), axis=-1, keepdims=True)
    return (x - mu) * lax.rsqrt(var + eps) * w + b


def _mish(x):
    sp = jnp.maximum(x, 0.0) + jnp.log(1.0 + jnp.exp(-jnp.abs(x)))
    return x * jnp.tanh(sp)


# --------------------------------- kernel ------------------------------------

# Packed vector slab row layout (width W = max(3*H*dhp, HFF, D), zero padded):
#   0: [bq | bk | bv] (head-padded)   1: bo   2: ln1w   3: ln1b
#   4: bup   5: bdn   6: ln2w   7: ln2b

def encoder_layer_kernel(x_ref, wqkv_ref, wo_ref, wup_ref, wdn_ref, vec_ref,
                         out_ref, *, heads, dh, dhp):
    bb, s, d = x_ref.shape
    hff = wup_ref.shape[1]
    qkv_w = 3 * heads * dhp
    scale = 1.0 / math.sqrt(dh)
    rows = bb * s

    # bf16 MXU operands only if the caller fed bf16 activations (v6e/v7x).
    mm_dt = jnp.bfloat16 if x_ref.dtype == jnp.bfloat16 else jnp.float32

    # Flatten the batch block onto sublanes (layout-preserving reshape).
    x = x_ref[...].reshape(rows, d).astype(jnp.float32)
    vec = vec_ref[...].astype(jnp.float32)

    # ---- fused, head-padded Q/K/V projection: one wide matmul + one bias add -
    qkv = (jnp.dot(x, wqkv_ref[...], preferred_element_type=jnp.float32)
           + vec[0:1, :qkv_w])                                 # (rows, 3*H*dhp)

    # ---- attention scores: H batched dots over the whole batch block ---------
    score_blocks = []
    v_heads = []
    for h in range(heads):
        qh = qkv[:, h * dhp:(h + 1) * dhp].reshape(bb, s, dhp)
        kh = qkv[:, heads * dhp + h * dhp:
                    heads * dhp + (h + 1) * dhp].reshape(bb, s, dhp)
        vh = qkv[:, 2 * heads * dhp + h * dhp:
                    2 * heads * dhp + (h + 1) * dhp].reshape(bb, s, dhp)
        v_heads.append(vh)
        sc = jnp.einsum('bqd,bkd->bqk', qh, kh,
                        preferred_element_type=jnp.float32) * scale
        score_blocks.append(sc.reshape(rows, s))
    scores = jnp.concatenate(score_blocks, axis=0)             # (H*rows, S)

    # ---- single entmax15 pass over all score rows -----------------------------
    attn = _entmax15_rows(scores)                              # (H*rows, S), f32

    # ---- attn @ V per head (batched), then ONE output-projection matmul -------
    ctx_blocks = []
    for h in range(heads):
        a_h = attn[h * rows:(h + 1) * rows].reshape(bb, s, s).astype(mm_dt)
        ctx = jnp.einsum('bqk,bkd->bqd', a_h, v_heads[h].astype(mm_dt),
                         preferred_element_type=jnp.float32)
        ctx_blocks.append(ctx.reshape(rows, dhp))
    ctx_all = jnp.concatenate(ctx_blocks, axis=-1)             # (rows, H*dhp)

    y = (jnp.dot(ctx_all, wo_ref[...], preferred_element_type=jnp.float32)
         + vec[1:2, :d])

    # ---- attention LayerNorm + residual ---------------------------------------
    y = _layer_norm(y, vec[2:3, :d], vec[3:4, :d])
    x1 = x + y

    # ---- FFN (Mish) + LayerNorm + residual ------------------------------------
    h1 = jnp.dot(x1, wup_ref[...], preferred_element_type=jnp.float32) + vec[4:5, :hff]
    h1 = _mish(h1)
    y2 = jnp.dot(h1, wdn_ref[...], preferred_element_type=jnp.float32) + vec[5:6, :d]
    y2 = _layer_norm(y2, vec[6:7, :d], vec[7:8, :d])

    out_ref[...] = (x1 + y2).astype(out_ref.dtype).reshape(bb, s, d)


# -------------------------------- wrapper ------------------------------------

def _pack_params(params, heads):
    """Pack 16 small parameter arrays into 5 DMA-friendly, head-padded slabs."""
    d = params["wq"].shape[0]
    hff = params["wup"].shape[1]
    dh = d // heads
    dhp = ((dh + 7) // 8) * 8            # 8-lane-aligned per-head width

    def pad_cols(w):                      # (D, D) -> (D, H*dhp), zero cols
        w = jnp.asarray(w, jnp.float32).reshape(d, heads, dh)
        return jnp.pad(w, ((0, 0), (0, 0), (0, dhp - dh))).reshape(d, heads * dhp)

    def pad_rows(w):                      # (D, D) -> (H*dhp, D), zero rows
        w = jnp.asarray(w, jnp.float32).reshape(heads, dh, d)
        return jnp.pad(w, ((0, 0), (0, dhp - dh), (0, 0))).reshape(heads * dhp, d)

    def pad_bias(b):                      # (1, D) -> (1, H*dhp)
        b = jnp.asarray(b, jnp.float32).reshape(1, heads, dh)
        return jnp.pad(b, ((0, 0), (0, 0), (0, dhp - dh))).reshape(1, heads * dhp)

    wqkv = jnp.concatenate([pad_cols(params["wq"]), pad_cols(params["wk"]),
                            pad_cols(params["wv"])], axis=1)
    wo = pad_rows(params["wo"])
    width = max(3 * heads * dhp, hff, d)

    def row(v):
        v = jnp.asarray(v, jnp.float32).reshape(1, -1)
        return jnp.pad(v, ((0, 0), (0, width - v.shape[1])))

    bqkv = jnp.concatenate([pad_bias(params["bq"]), pad_bias(params["bk"]),
                            pad_bias(params["bv"])], axis=1)
    vec = jnp.concatenate([row(bqkv), row(params["bo"]),
                           row(params["ln1w"]), row(params["ln1b"]),
                           row(params["bup"]), row(params["bdn"]),
                           row(params["ln2w"]), row(params["ln2b"])], axis=0)
    wup = jnp.asarray(params["wup"], jnp.float32)
    wdn = jnp.asarray(params["wdn"], jnp.float32)
    return wqkv, wo, wup, wdn, vec, dhp


def _step_vmem_bytes(block, s, d, heads, dhp, hff):
    """Rough per-grid-step VMEM footprint (f32 intermediates dominate)."""
    rows = block * s
    r = rows * heads
    act = rows * (3 * heads * dhp + 2 * d + hff) * 4           # qkv + ffn + residual
    att = 2 * r * s * 4                                        # scores + probs
    ent = 3 * r * s * s * 4 if s < 32 else 6 * r * s * 4       # exact vs bisection
    io = 4 * rows * d * 4                                      # double-buffered x/out
    return act + att + ent + io


def _pick_batch_block(b, s, d, heads, dhp, hff, budget=20 << 20):
    """Largest divisor of b fitting the VMEM budget; prefer >= 2 grid steps so the
    'parallel' axis spans both v7x TensorCores (no-op cost on single-TC chips)."""
    divisors = [k for k in range(1, b + 1) if b % k == 0]
    fitting = [k for k in divisors if _step_vmem_bytes(k, s, d, heads, dhp, hff) <= budget]
    if not fitting:
        return 1
    block = max(fitting)
    if b > 1 and block == b:
        smaller = [k for k in fitting if k < b]
        if smaller:
            block = max(smaller)
    return block


def encoder_layer(x, params, heads, *, batch_block=None):
    """EncoderLayer forward (inference) as a single Pallas TPU kernel.

    batch_block: batch elements per grid step.  Default: auto-picked so the
      per-step VMEM footprint stays under the default scoped limit on every TPU
      generation (v7x has only 64 MiB) and the grid has >= 2 steps when possible
      so the 'parallel' axis maps onto both v7x TensorCores.
    """
    b, s, d = x.shape
    dh = d // heads
    wqkv, wo, wup, wdn, vec, dhp = _pack_params(params, heads)
    hff = wup.shape[1]

    if batch_block is None:
        batch_block = _pick_batch_block(b, s, d, heads, dhp, hff)
    assert b % batch_block == 0, "batch must be divisible by batch_block"

    in_specs = [
        pl.BlockSpec((batch_block, s, d), lambda i: (i, 0, 0)),
        pl.BlockSpec(wqkv.shape, lambda i: (0, 0)),
        pl.BlockSpec(wo.shape, lambda i: (0, 0)),
        pl.BlockSpec(wup.shape, lambda i: (0, 0)),
        pl.BlockSpec(wdn.shape, lambda i: (0, 0)),
        pl.BlockSpec(vec.shape, lambda i: (0, 0)),
    ]
    out_specs = pl.BlockSpec((batch_block, s, d), lambda i: (i, 0, 0))

    itemsize = jnp.dtype(x.dtype).itemsize
    r_total = b * heads * s
    flops = int(2 * b * s * d * (3 * heads * dhp)              # fused QKV
                + 2 * r_total * s * dhp * 2                    # scores + attn@V
                + 2 * b * s * (heads * dhp) * d                # Wo
                + 2 * b * s * d * hff * 2                      # FFN up + down
                + (2 * 2 * r_total * s * s if s < 32 else 0))  # entmax prefix matmul
    transcendentals = int(b * s * (2 * hff + 4) + r_total * s)
    bytes_accessed = int(itemsize * 2 * x.size
                         + 4 * (wqkv.size + wo.size + wup.size + wdn.size + vec.size))

    return pl.pallas_call(
        functools.partial(encoder_layer_kernel, heads=heads, dh=dh, dhp=dhp),
        out_shape=jax.ShapeDtypeStruct((b, s, d), x.dtype),
        grid_spec=pltpu.PrefetchScalarGridSpec(
            num_scalar_prefetch=0,
            grid=(b // batch_block,),
            in_specs=in_specs,
            out_specs=out_specs,
        ),
        compiler_params=pltpu.CompilerParams(
            dimension_semantics=("parallel",)),
        cost_estimate=pl.CostEstimate(
            flops=flops, transcendentals=transcendentals,
            bytes_accessed=bytes_accessed),
    )(x, wqkv, wo, wup, wdn, vec)


# ------------------------ pure-JAX reference (check) --------------------------

def _entmax15_ref(scores):
    x = scores / 2.0
    x = x - jnp.max(x, axis=-1, keepdims=True)
    xsrt = -jnp.sort(-x, axis=-1)
    t = x.shape[-1]
    rho = jnp.arange(1, t + 1, dtype=x.dtype)
    mean = jnp.cumsum(xsrt, axis=-1) / rho
    mean_sq = jnp.cumsum(xsrt * xsrt, axis=-1) / rho
    ss = rho * (mean_sq - mean * mean)
    delta = jnp.maximum((1.0 - ss) / rho, 0.0)
    tau = mean - jnp.sqrt(delta)
    support = jnp.sum((tau <= xsrt).astype(jnp.int32), axis=-1, keepdims=True)
    tau_star = jnp.take_along_axis(tau, support - 1, axis=-1)
    return jnp.maximum(x - tau_star, 0.0) ** 2


def _layer_norm_ref(x, w, b, eps=1e-5):
    mu = jnp.mean(x, axis=-1, keepdims=True)
    var = jnp.mean((x - mu) ** 2, axis=-1, keepdims=True)
    return (x - mu) / jnp.sqrt(var + eps) * w + b


def encoder_layer_ref(x, p, heads):
    b, s, d = x.shape
    dh = d // heads
    lin = lambda t, w, bias: t @ w + bias
    q = lin(x, p["wq"], p["bq"]).reshape(b, s, heads, dh).transpose(0, 2, 1, 3)
    k = lin(x, p["wk"], p["bk"]).reshape(b, s, heads, dh).transpose(0, 2, 1, 3)
    v = lin(x, p["wv"], p["bv"]).reshape(b, s, heads, dh).transpose(0, 2, 1, 3)
    scores = jnp.einsum("bhqd,bhkd->bhqk", q, k) / math.sqrt(dh)
    attn = _entmax15_ref(scores)
    y = jnp.einsum("bhqk,bhkd->bhqd", attn, v).transpose(0, 2, 1, 3).reshape(b, s, d)
    y = lin(y, p["wo"], p["bo"])
    y = _layer_norm_ref(y, p["ln1w"], p["ln1b"])
    x1 = x + y
    h1 = lin(x1, p["wup"], p["bup"])
    h1 = h1 * jnp.tanh(jax.nn.softplus(h1))
    y2 = lin(h1, p["wdn"], p["bdn"])
    y2 = _layer_norm_ref(y2, p["ln2w"], p["ln2b"])
    return x1 + y2


# ---------------------------------- main --------------------------------------

if __name__ == "__main__":
    # GCN_TAT_unit ratios with out_channels = 16:
    #   feature_dims D = 3*out_ch = 48, num_heads = 8, hidden HFF = 6*out_ch = 96.
    # The TAT encoder consumes tokens of shape (B*V, T, D); small B*V and T here.
    OUT_CH = 16
    D, HEADS, HFF = 3 * OUT_CH, 8, 6 * OUT_CH
    N, T = 2, 8                     # N = B*V token rows, T = temporal length

    key = jax.random.PRNGKey(0)
    ks = jax.random.split(key, 20)

    def w(k, shape, scale=0.1):
        return scale * jax.random.normal(k, shape, jnp.float32)

    params = {
        "wq": w(ks[1], (D, D)),   "bq": w(ks[2], (1, D)),
        "wk": w(ks[3], (D, D)),   "bk": w(ks[4], (1, D)),
        "wv": w(ks[5], (D, D)),   "bv": w(ks[6], (1, D)),
        "wo": w(ks[7], (D, D)),   "bo": w(ks[8], (1, D)),
        "ln1w": 1.0 + w(ks[9], (1, D)),  "ln1b": w(ks[10], (1, D)),
        "wup": w(ks[11], (D, HFF)),  "bup": w(ks[12], (1, HFF)),
        "wdn": w(ks[13], (HFF, D)),  "bdn": w(ks[14], (1, D)),
        "ln2w": 1.0 + w(ks[15], (1, D)), "ln2b": w(ks[16], (1, D)),
    }
    x = jax.random.normal(ks[0], (N, T, D), jnp.float32)

    # TODO(synk): dropout layers (a_dropout / f_dropout) are identity (inference).
    out = encoder_layer(x, params, heads=HEADS)   # auto batch_block (grid >= 2 steps)
    out = jax.block_until_ready(out)

    ref = encoder_layer_ref(x, params, HEADS)
    err = float(jnp.max(jnp.abs(out - ref)))
    assert err < 5e-4, f"max abs error {err}"
    print("KERNEL_OK")
</pallas_src>

<mosaic_0001>
module attributes {stable_mosaic.version = 11 : i64} {
  func.func @encoder_layer_kernel(%arg0: i32, %arg1: memref<1x8x48xf32, #tpu.memory_space<vmem>>, %arg2: memref<48x192xf32, #tpu.memory_space<vmem>>, %arg3: memref<64x48xf32, #tpu.memory_space<vmem>>, %arg4: memref<48x96xf32, #tpu.memory_space<vmem>>, %arg5: memref<96x48xf32, #tpu.memory_space<vmem>>, %arg6: memref<8x192xf32, #tpu.memory_space<vmem>>, %arg7: memref<1x8x48xf32, #tpu.memory_space<vmem>>) attributes {dimension_semantics = [#tpu.dimension_semantics<parallel>], iteration_bounds = array<i64: 2>, scalar_prefetch = 0 : i64, scratch_operands = 0 : i64, tpu.core_type = #tpu.core_type<tc>, window_params = [{transform_indices = @transform_0, window_bounds = array<i64: 1, 8, 48>}, {pipeline_mode = #tpu.pipeline_mode<synchronous>, transform_indices = @transform_1, window_bounds = array<i64: 48, 192>}, {pipeline_mode = #tpu.pipeline_mode<synchronous>, transform_indices = @transform_2, window_bounds = array<i64: 64, 48>}, {pipeline_mode = #tpu.pipeline_mode<synchronous>, transform_indices = @transform_3, window_bounds = array<i64: 48, 96>}, {pipeline_mode = #tpu.pipeline_mode<synchronous>, transform_indices = @transform_4, window_bounds = array<i64: 96, 48>}, {pipeline_mode = #tpu.pipeline_mode<synchronous>, transform_indices = @transform_5, window_bounds = array<i64: 8, 192>}, {transform_indices = @transform_6, window_bounds = array<i64: 1, 8, 48>}]} {
    %c0 = arith.constant 0 : index
    %c0_0 = arith.constant 0 : index
    %c0_1 = arith.constant 0 : index
    %0 = vector.load %arg1[%c0, %c0_0, %c0_1] : memref<1x8x48xf32, #tpu.memory_space<vmem>>, vector<1x8x48xf32>
    %1 = vector.shape_cast %0 : vector<1x8x48xf32> to vector<8x48xf32>
    %c0_2 = arith.constant 0 : index
    %c0_3 = arith.constant 0 : index
    %2 = vector.load %arg6[%c0_2, %c0_3] : memref<8x192xf32, #tpu.memory_space<vmem>>, vector<8x192xf32>
    %c0_4 = arith.constant 0 : index
    %c0_5 = arith.constant 0 : index
    %3 = vector.load %arg2[%c0_4, %c0_5] : memref<48x192xf32, #tpu.memory_space<vmem>>, vector<48x192xf32>
    %cst = arith.constant dense<0.000000e+00> : vector<8x192xf32>
    %4 = tpu.matmul %1, %3, %cst {dimension_numbers = #tpu.dot_dimension_numbers<[1], [0], [0], [1], [0, 0, 1, 1], [], []>} : vector<8x48xf32>, vector<48x192xf32>, vector<8x192xf32> -> vector<8x192xf32>
    %5 = vector.extract_strided_slice %2 {offsets = [0, 0], sizes = [1, 192], strides = [1, 1]} : vector<8x192xf32> to vector<1x192xf32>
    %6 = vector.broadcast %5 : vector<1x192xf32> to vector<8x192xf32>
    %7 = arith.addf %4, %6 : vector<8x192xf32>
    %8 = vector.extract_strided_slice %7 {offsets = [0, 0], sizes = [8, 8], strides = [1, 1]} : vector<8x192xf32> to vector<8x8xf32>
    %9 = vector.shape_cast %8 : vector<8x8xf32> to vector<1x8x8xf32>
    %10 = vector.extract_strided_slice %7 {offsets = [0, 64], sizes = [8, 8], strides = [1, 1]} : vector<8x192xf32> to vector<8x8xf32>
    %11 = vector.shape_cast %10 : vector<8x8xf32> to vector<1x8x8xf32>
    %12 = vector.extract_strided_slice %7 {offsets = [0, 128], sizes = [8, 8], strides = [1, 1]} : vector<8x192xf32> to vector<8x8xf32>
    %13 = vector.shape_cast %12 : vector<8x8xf32> to vector<1x8x8xf32>
    "tpu.trace_start"() <{level = 10 : i32, message = "bqd,bkd->bqk"}> : () -> ()
    %cst_6 = arith.constant dense<0.000000e+00> : vector<1x8x8xf32>
    %14 = tpu.matmul %9, %11, %cst_6 {dimension_numbers = #tpu.dot_dimension_numbers<[2], [2], [1], [1], [0, 0, 0, 1, 1, 1], [0], [0]>} : vector<1x8x8xf32>, vector<1x8x8xf32>, vector<1x8x8xf32> -> vector<1x8x8xf32>
    "tpu.trace_stop"() : () -> ()
    %cst_7 = arith.constant 0.408248305 : f32
    %15 = vector.broadcast %cst_7 : f32 to vector<1x8x8xf32>
    %16 = arith.mulf %14, %15 : vector<1x8x8xf32>
    %17 = vector.shape_cast %16 : vector<1x8x8xf32> to vector<8x8xf32>
    %18 = vector.extract_strided_slice %7 {offsets = [0, 8], sizes = [8, 8], strides = [1, 1]} : vector<8x192xf32> to vector<8x8xf32>
    %19 = vector.shape_cast %18 : vector<8x8xf32> to vector<1x8x8xf32>
    %20 = vector.extract_strided_slice %7 {offsets = [0, 72], sizes = [8, 8], strides = [1, 1]} : vector<8x192xf32> to vector<8x8xf32>
    %21 = vector.shape_cast %20 : vector<8x8xf32> to vector<1x8x8xf32>
    %22 = vector.extract_strided_slice %7 {offsets = [0, 136], sizes = [8, 8], strides = [1, 1]} : vector<8x192xf32> to vector<8x8xf32>
    %23 = vector.shape_cast %22 : vector<8x8xf32> to vector<1x8x8xf32>
    "tpu.trace_start"() <{level = 10 : i32, message = "bqd,bkd->bqk"}> : () -> ()
    %cst_8 = arith.constant dense<0.000000e+00> : vector<1x8x8xf32>
    %24 = tpu.matmul %19, %21, %cst_8 {dimension_numbers = #tpu.dot_dimension_numbers<[2], [2], [1], [1], [0, 0, 0, 1, 1, 1], [0], [0]>} : vector<1x8x8xf32>, vector<1x8x8xf32>, vector<1x8x8xf32> -> vector<1x8x8xf32>
    "tpu.trace_stop"() : () -> ()
    %cst_9 = arith.constant 0.408248305 : f32
    %25 = vector.broadcast %cst_9 : f32 to vector<1x8x8xf32>
    %26 = arith.mulf %24, %25 : vector<1x8x8xf32>
    %27 = vector.shape_cast %26 : vector<1x8x8xf32> to vector<8x8xf32>
    %28 = vector.extract_strided_slice %7 {offsets = [0, 16], sizes = [8, 8], strides = [1, 1]} : vector<8x192xf32> to vector<8x8xf32>
    %29 = vector.shape_cast %28 : vector<8x8xf32> to vector<1x8x8xf32>
    %30 = vector.extract_strided_slice %7 {offsets = [0, 80], sizes = [8, 8], strides = [1, 1]} : vector<8x192xf32> to vector<8x8xf32>
    %31 = vector.shape_cast %30 : vector<8x8xf32> to vector<1x8x8xf32>
    %32 = vector.extract_strided_slice %7 {offsets = [0, 144], sizes = [8, 8], strides = [1, 1]} : vector<8x192xf32> to vector<8x8xf32>
    %33 = vector.shape_cast %32 : vector<8x8xf32> to vector<1x8x8xf32>
    "tpu.trace_start"() <{level = 10 : i32, message = "bqd,bkd->bqk"}> : () -> ()
    %cst_10 = arith.constant dense<0.000000e+00> : vector<1x8x8xf32>
    %34 = tpu.matmul %29, %31, %cst_10 {dimension_numbers = #tpu.dot_dimension_numbers<[2], [2], [1], [1], [0, 0, 0, 1, 1, 1], [0], [0]>} : vector<1x8x8xf32>, vector<1x8x8xf32>, vector<1x8x8xf32> -> vector<1x8x8xf32>
    "tpu.trace_stop"() : () -> ()
    %cst_11 = arith.constant 0.408248305 : f32
    %35 = vector.broadcast %cst_11 : f32 to vector<1x8x8xf32>
    %36 = arith.mulf %34, %35 : vector<1x8x8xf32>
    %37 = vector.shape_cast %36 : vector<1x8x8xf32> to vector<8x8xf32>
    %38 = vector.extract_strided_slice %7 {offsets = [0, 24], sizes = [8, 8], strides = [1, 1]} : vector<8x192xf32> to vector<8x8xf32>
    %39 = vector.shape_cast %38 : vector<8x8xf32> to vector<1x8x8xf32>
    %40 = vector.extract_strided_slice %7 {offsets = [0, 88], sizes = [8, 8], strides = [1, 1]} : vector<8x192xf32> to vector<8x8xf32>
    %41 = vector.shape_cast %40 : vector<8x8xf32> to vector<1x8x8xf32>
    %42 = vector.extract_strided_slice %7 {offsets = [0, 152], sizes = [8, 8], strides = [1, 1]} : vector<8x192xf32> to vector<8x8xf32>
    %43 = vector.shape_cast %42 : vector<8x8xf32> to vector<1x8x8xf32>
    "tpu.trace_start"() <{level = 10 : i32, message = "bqd,bkd->bqk"}> : () -> ()
    %cst_12 = arith.constant dense<0.000000e+00> : vector<1x8x8xf32>
    %44 = tpu.matmul %39, %41, %cst_12 {dimension_numbers = #tpu.dot_dimension_numbers<[2], [2], [1], [1], [0, 0, 0, 1, 1, 1], [0], [0]>} : vector<1x8x8xf32>, vector<1x8x8xf32>, vector<1x8x8xf32> -> vector<1x8x8xf32>
    "tpu.trace_stop"() : () -> ()
    %cst_13 = arith.constant 0.408248305 : f32
    %45 = vector.broadcast %cst_13 : f32 to vector<1x8x8xf32>
    %46 = arith.mulf %44, %45 : vector<1x8x8xf32>
    %47 = vector.shape_cast %46 : vector<1x8x8xf32> to vector<8x8xf32>
    %48 = vector.extract_strided_slice %7 {offsets = [0, 32], sizes = [8, 8], strides = [1, 1]} : vector<8x192xf32> to vector<8x8xf32>
    %49 = vector.shape_cast %48 : vector<8x8xf32> to vector<1x8x8xf32>
    %50 = vector.extract_strided_slice %7 {offsets = [0, 96], sizes = [8, 8], strides = [1, 1]} : vector<8x192xf32> to vector<8x8xf32>
    %51 = vector.shape_cast %50 : vector<8x8xf32> to vector<1x8x8xf32>
    %52 = vector.extract_strided_slice %7 {offsets = [0, 160], sizes = [8, 8], strides = [1, 1]} : vector<8x192xf32> to vector<8x8xf32>
    %53 = vector.shape_cast %52 : vector<8x8xf32> to vector<1x8x8xf32>
    "tpu.trace_start"() <{level = 10 : i32, message = "bqd,bkd->bqk"}> : () -> ()
    %cst_14 = arith.constant dense<0.000000e+00> : vector<1x8x8xf32>
    %54 = tpu.matmul %49, %51, %cst_14 {dimension_numbers = #tpu.dot_dimension_numbers<[2], [2], [1], [1], [0, 0, 0, 1, 1, 1], [0], [0]>} : vector<1x8x8xf32>, vector<1x8x8xf32>, vector<1x8x8xf32> -> vector<1x8x8xf32>
    "tpu.trace_stop"() : () -> ()
    %cst_15 = arith.constant 0.408248305 : f32
    %55 = vector.broadcast %cst_15 : f32 to vector<1x8x8xf32>
    %56 = arith.mulf %54, %55 : vector<1x8x8xf32>
    %57 = vector.shape_cast %56 : vector<1x8x8xf32> to vector<8x8xf32>
    %58 = vector.extract_strided_slice %7 {offsets = [0, 40], sizes = [8, 8], strides = [1, 1]} : vector<8x192xf32> to vector<8x8xf32>
    %59 = vector.shape_cast %58 : vector<8x8xf32> to vector<1x8x8xf32>
    %60 = vector.extract_strided_slice %7 {offsets = [0, 104], sizes = [8, 8], strides = [1, 1]} : vector<8x192xf32> to vector<8x8xf32>
    %61 = vector.shape_cast %60 : vector<8x8xf32> to vector<1x8x8xf32>
    %62 = vector.extract_strided_slice %7 {offsets = [0, 168], sizes = [8, 8], strides = [1, 1]} : vector<8x192xf32> to vector<8x8xf32>
    %63 = vector.shape_cast %62 : vector<8x8xf32> to vector<1x8x8xf32>
    "tpu.trace_start"() <{level = 10 : i32, message = "bqd,bkd->bqk"}> : () -> ()
    %cst_16 = arith.constant dense<0.000000e+00> : vector<1x8x8xf32>
    %64 = tpu.matmul %59, %61, %cst_16 {dimension_numbers = #tpu.dot_dimension_numbers<[2], [2], [1], [1], [0, 0, 0, 1, 1, 1], [0], [0]>} : vector<1x8x8xf32>, vector<1x8x8xf32>, vector<1x8x8xf32> -> vector<1x8x8xf32>
    "tpu.trace_stop"() : () -> ()
    %cst_17 = arith.constant 0.408248305 : f32
    %65 = vector.broadcast %cst_17 : f32 to vector<1x8x8xf32>
    %66 = arith.mulf %64, %65 : vector<1x8x8xf32>
    %67 = vector.shape_cast %66 : vector<1x8x8xf32> to vector<8x8xf32>
    %68 = vector.extract_strided_slice %7 {offsets = [0, 48], sizes = [8, 8], strides = [1, 1]} : vector<8x192xf32> to vector<8x8xf32>
    %69 = vector.shape_cast %68 : vector<8x8xf32> to vector<1x8x8xf32>
    %70 = vector.extract_strided_slice %7 {offsets = [0, 112], sizes = [8, 8], strides = [1, 1]} : vector<8x192xf32> to vector<8x8xf32>
    %71 = vector.shape_cast %70 : vector<8x8xf32> to vector<1x8x8xf32>
    %72 = vector.extract_strided_slice %7 {offsets = [0, 176], sizes = [8, 8], strides = [1, 1]} : vector<8x192xf32> to vector<8x8xf32>
    %73 = vector.shape_cast %72 : vector<8x8xf32> to vector<1x8x8xf32>
    "tpu.trace_start"() <{level = 10 : i32, message = "bqd,bkd->bqk"}> : () -> ()
    %cst_18 = arith.constant dense<0.000000e+00> : vector<1x8x8xf32>
    %74 = tpu.matmul %69, %71, %cst_18 {dimension_numbers = #tpu.dot_dimension_numbers<[2], [2], [1], [1], [0, 0, 0, 1, 1, 1], [0], [0]>} : vector<1x8x8xf32>, vector<1x8x8xf32>, vector<1x8x8xf32> -> vector<1x8x8xf32>
    "tpu.trace_stop"() : () -> ()
    %cst_19 = arith.constant 0.408248305 : f32
    %75 = vector.broadcast %cst_19 : f32 to vector<1x8x8xf32>
    %76 = arith.mulf %74, %75 : vector<1x8x8xf32>
    %77 = vector.shape_cast %76 : vector<1x8x8xf32> to vector<8x8xf32>
    %78 = vector.extract_strided_slice %7 {offsets = [0, 56], sizes = [8, 8], strides = [1, 1]} : vector<8x192xf32> to vector<8x8xf32>
    %79 = vector.shape_cast %78 : vector<8x8xf32> to vector<1x8x8xf32>
    %80 = vector.extract_strided_slice %7 {offsets = [0, 120], sizes = [8, 8], strides = [1, 1]} : vector<8x192xf32> to vector<8x8xf32>
    %81 = vector.shape_cast %80 : vector<8x8xf32> to vector<1x8x8xf32>
    %82 = vector.extract_strided_slice %7 {offsets = [0, 184], sizes = [8, 8], strides = [1, 1]} : vector<8x192xf32> to vector<8x8xf32>
    %83 = vector.shape_cast %82 : vector<8x8xf32> to vector<1x8x8xf32>
    "tpu.trace_start"() <{level = 10 : i32, message = "bqd,bkd->bqk"}> : () -> ()
    %cst_20 = arith.constant dense<0.000000e+00> : vector<1x8x8xf32>
    %84 = tpu.matmul %79, %81, %cst_20 {dimension_numbers = #tpu.dot_dimension_numbers<[2], [2], [1], [1], [0, 0, 0, 1, 1, 1], [0], [0]>} : vector<1x8x8xf32>, vector<1x8x8xf32>, vector<1x8x8xf32> -> vector<1x8x8xf32>
    "tpu.trace_stop"() : () -> ()
    %cst_21 = arith.constant 0.408248305 : f32
    %85 = vector.broadcast %cst_21 : f32 to vector<1x8x8xf32>
    %86 = arith.mulf %84, %85 : vector<1x8x8xf32>
    %87 = vector.shape_cast %86 : vector<1x8x8xf32> to vector<8x8xf32>
    %88 = tpu.concatenate %17, %27, %37, %47, %57, %67, %77, %87 in 0 : vector<8x8xf32>, vector<8x8xf32>, vector<8x8xf32>, vector<8x8xf32>, vector<8x8xf32>, vector<8x8xf32>, vector<8x8xf32>, vector<8x8xf32> -> vector<64x8xf32>
    %cst_22 = arith.constant 5.000000e-01 : f32
    %89 = vector.broadcast %cst_22 : f32 to vector<64x8xf32>
    %90 = arith.mulf %88, %89 : vector<64x8xf32>
    %cst_23 = arith.constant dense<0xFF800000> : vector<64xf32>
    %91 = vector.multi_reduction <maximumf>, %90, %cst_23 [1] : vector<64x8xf32> to vector<64xf32>
    %92 = vector.shape_cast %91 : vector<64xf32> to vector<64x1xf32>
    %93 = vector.broadcast %92 : vector<64x1xf32> to vector<64x8xf32>
    %94 = arith.subf %90, %93 : vector<64x8xf32>
    %95 = vector.shape_cast %94 : vector<64x8xf32> to vector<64x8x1xf32>
    %96 = vector.shape_cast %94 : vector<64x8xf32> to vector<64x1x8xf32>
    %97 = tpu.iota {dimensions = array<i32: 1>} : vector<64x8x8xi32>
    %98 = tpu.iota {dimensions = array<i32: 2>} : vector<64x8x8xi32>
    %99 = vector.broadcast %96 : vector<64x1x8xf32> to vector<64x8x8xf32>
    %100 = vector.broadcast %95 : vector<64x8x1xf32> to vector<64x8x8xf32>
    %101 = arith.cmpf ogt, %99, %100 : vector<64x8x8xf32>
    %102 = vector.broadcast %96 : vector<64x1x8xf32> to vector<64x8x8xf32>
    %103 = vector.broadcast %95 : vector<64x8x1xf32> to vector<64x8x8xf32>
    %104 = arith.cmpf oeq, %102, %103 : vector<64x8x8xf32>
    %105 = arith.cmpi slt, %98, %97 : vector<64x8x8xi32>
    %106 = arith.andi %104, %105 : vector<64x8x8xi1>
    %107 = arith.ori %101, %106 : vector<64x8x8xi1>
    %108 = arith.extui %107 : vector<64x8x8xi1> to vector<64x8x8xi32>
    %cst_24 = arith.constant dense<0> : vector<64x8xi32>
    %109 = vector.multi_reduction <add>, %108, %cst_24 [2] : vector<64x8x8xi32> to vector<64x8xi32>
    %c1_i32 = arith.constant 1 : i32
    %110 = vector.broadcast %c1_i32 : i32 to vector<64x8xi32>
    %111 = arith.addi %110, %109 : vector<64x8xi32>
    %112 = vector.shape_cast %111 : vector<64x8xi32> to vector<64x1x8xi32>
    %113 = tpu.iota {dimensions = array<i32: 1>} : vector<64x8x8xi32>
    %c1_i32_25 = arith.constant 1 : i32
    %114 = vector.broadcast %c1_i32_25 : i32 to vector<64x8x8xi32>
    %115 = arith.addi %113, %114 : vector<64x8x8xi32>
    %116 = vector.broadcast %112 : vector<64x1x8xi32> to vector<64x8x8xi32>
    %117 = arith.cmpi eq, %116, %115 : vector<64x8x8xi32>
    %118 = arith.extui %117 : vector<64x8x8xi1> to vector<64x8x8xi32>
    %119 = arith.sitofp %118 : vector<64x8x8xi32> to vector<64x8x8xf32>
    %120 = vector.shape_cast %94 : vector<64x8xf32> to vector<64x1x8xf32>
    %121 = vector.broadcast %120 : vector<64x1x8xf32> to vector<64x8x8xf32>
    %122 = arith.mulf %121, %119 : vector<64x8x8xf32>
    %cst_26 = arith.constant dense<0.000000e+00> : vector<64x8xf32>
    %123 = vector.multi_reduction <add>, %122, %cst_26 [2] : vector<64x8x8xf32> to vector<64x8xf32>
    %124 = tpu.iota {dimensions = array<i32: 0>} : vector<8x8xi32>
    %125 = tpu.iota {dimensions = array<i32: 1>} : vector<8x8xi32>
    %126 = arith.cmpi sle, %124, %125 : vector<8x8xi32>
    %127 = arith.extui %126 : vector<8x8xi1> to vector<8x8xi32>
    %128 = arith.sitofp %127 : vector<8x8xi32> to vector<8x8xf32>
    %129 = arith.mulf %123, %123 : vector<64x8xf32>
    %130 = tpu.concatenate %123, %129 in 0 : vector<64x8xf32>, vector<64x8xf32> -> vector<128x8xf32>
    %cst_27 = arith.constant dense<0.000000e+00> : vector<128x8xf32>
    %131 = tpu.matmul %130, %128, %cst_27 {dimension_numbers = #tpu.dot_dimension_numbers<[1], [0], [0], [1], [0, 0, 1, 1], [], []>} : vector<128x8xf32>, vector<8x8xf32>, vector<128x8xf32> -> vector<128x8xf32>
    %132 = vector.extract_strided_slice %131 {offsets = [0, 0], sizes = [64, 8], strides = [1, 1]} : vector<128x8xf32> to vector<64x8xf32>
    %133 = vector.extract_strided_slice %131 {offsets = [64, 0], sizes = [64, 8], strides = [1, 1]} : vector<128x8xf32> to vector<64x8xf32>
    %134 = tpu.iota {dimensions = array<i32: 1>} : vector<1x8xi32>
    %c1_i32_28 = arith.constant 1 : i32
    %135 = vector.broadcast %c1_i32_28 : i32 to vector<1x8xi32>
    %136 = arith.addi %134, %135 : vector<1x8xi32>
    %137 = arith.sitofp %136 : vector<1x8xi32> to vector<1x8xf32>
    %cst_29 = arith.constant 1.000000e+00 : f32
    %138 = vector.broadcast %cst_29 : f32 to vector<1x8xf32>
    %139 = arith.divf %138, %137 : vector<1x8xf32>
    %140 = vector.broadcast %139 : vector<1x8xf32> to vector<64x8xf32>
    %141 = arith.mulf %132, %140 : vector<64x8xf32>
    %142 = vector.broadcast %139 : vector<1x8xf32> to vector<64x8xf32>
    %143 = arith.mulf %133, %142 : vector<64x8xf32>
    %144 = arith.mulf %141, %141 : vector<64x8xf32>
    %145 = arith.subf %143, %144 : vector<64x8xf32>
    %146 = vector.broadcast %137 : vector<1x8xf32> to vector<64x8xf32>
    %147 = arith.mulf %146, %145 : vector<64x8xf32>
    %cst_30 = arith.constant 1.000000e+00 : f32
    %148 = vector.broadcast %cst_30 : f32 to vector<64x8xf32>
    %149 = arith.subf %148, %147 : vector<64x8xf32>
    %150 = vector.broadcast %139 : vector<1x8xf32> to vector<64x8xf32>
    %151 = arith.mulf %149, %150 : vector<64x8xf32>
    %cst_31 = arith.constant 0.000000e+00 : f32
    %152 = vector.broadcast %cst_31 : f32 to vector<64x8xf32>
    %153 = arith.maximumf %151, %152 : vector<64x8xf32>
    %154 = math.sqrt %153 : vector<64x8xf32>
    %155 = arith.subf %141, %154 : vector<64x8xf32>
    %156 = arith.cmpf ole, %155, %123 : vector<64x8xf32>
    %157 = arith.extui %156 : vector<64x8xi1> to vector<64x8xi32>
    %cst_32 = arith.constant dense<0> : vector<64xi32>
    %158 = vector.multi_reduction <add>, %157, %cst_32 [1] : vector<64x8xi32> to vector<64xi32>
    %159 = vector.shape_cast %158 : vector<64xi32> to vector<64x1xi32>
    %160 = tpu.iota {dimensions = array<i32: 1>} : vector<64x8xi32>
    %c1_i32_33 = arith.constant 1 : i32
    %161 = vector.broadcast %c1_i32_33 : i32 to vector<64x8xi32>
    %162 = arith.addi %160, %161 : vector<64x8xi32>
    %163 = vector.broadcast %159 : vector<64x1xi32> to vector<64x8xi32>
    %164 = arith.cmpi eq, %162, %163 : vector<64x8xi32>
    %cst_34 = arith.constant 0.000000e+00 : f32
    %165 = vector.broadcast %cst_34 : f32 to vector<64x8xf32>
    %166 = arith.select %164, %155, %165 : vector<64x8xi1>, vector<64x8xf32>
    %cst_35 = arith.constant dense<0.000000e+00> : vector<64xf32>
    %167 = vector.multi_reduction <add>, %166, %cst_35 [1] : vector<64x8xf32> to vector<64xf32>
    %168 = vector.shape_cast %167 : vector<64xf32> to vector<64x1xf32>
    %169 = vector.broadcast %168 : vector<64x1xf32> to vector<64x8xf32>
    %170 = arith.subf %94, %169 : vector<64x8xf32>
    %cst_36 = arith.constant 0.000000e+00 : f32
    %171 = vector.broadcast %cst_36 : f32 to vector<64x8xf32>
    %172 = arith.maximumf %170, %171 : vector<64x8xf32>
    %173 = arith.mulf %172, %172 : vector<64x8xf32>
    %174 = vector.extract_strided_slice %173 {offsets = [0, 0], sizes = [8, 8], strides = [1, 1]} : vector<64x8xf32> to vector<8x8xf32>
    %175 = vector.shape_cast %174 : vector<8x8xf32> to vector<1x8x8xf32>
    "tpu.trace_start"() <{level = 10 : i32, message = "bqk,bkd->bqd"}> : () -> ()
    %cst_37 = arith.constant dense<0.000000e+00> : vector<1x8x8xf32>
    %176 = tpu.matmul %175, %13, %cst_37 {dimension_numbers = #tpu.dot_dimension_numbers<[2], [1], [1], [2], [0, 0, 0, 1, 1, 2], [0], [0]>} : vector<1x8x8xf32>, vector<1x8x8xf32>, vector<1x8x8xf32> -> vector<1x8x8xf32>
    "tpu.trace_stop"() : () -> ()
    %177 = vector.shape_cast %176 : vector<1x8x8xf32> to vector<8x8xf32>
    %178 = vector.extract_strided_slice %173 {offsets = [8, 0], sizes = [8, 8], strides = [1, 1]} : vector<64x8xf32> to vector<8x8xf32>
    %179 = vector.shape_cast %178 : vector<8x8xf32> to vector<1x8x8xf32>
    "tpu.trace_start"() <{level = 10 : i32, message = "bqk,bkd->bqd"}> : () -> ()
    %cst_38 = arith.constant dense<0.000000e+00> : vector<1x8x8xf32>
    %180 = tpu.matmul %179, %23, %cst_38 {dimension_numbers = #tpu.dot_dimension_numbers<[2], [1], [1], [2], [0, 0, 0, 1, 1, 2], [0], [0]>} : vector<1x8x8xf32>, vector<1x8x8xf32>, vector<1x8x8xf32> -> vector<1x8x8xf32>
    "tpu.trace_stop"() : () -> ()
    %181 = vector.shape_cast %180 : vector<1x8x8xf32> to vector<8x8xf32>
    %182 = vector.extract_strided_slice %173 {offsets = [16, 0], sizes = [8, 8], strides = [1, 1]} : vector<64x8xf32> to vector<8x8xf32>
    %183 = vector.shape_cast %182 : vector<8x8xf32> to vector<1x8x8xf32>
    "tpu.trace_start"() <{level = 10 : i32, message = "bqk,bkd->bqd"}> : () -> ()
    %cst_39 = arith.constant dense<0.000000e+00> : vector<1x8x8xf32>
    %184 = tpu.matmul %183, %33, %cst_39 {dimension_numbers = #tpu.dot_dimension_numbers<[2], [1], [1], [2], [0, 0, 0, 1, 1, 2], [0], [0]>} : vector<1x8x8xf32>, vector<1x8x8xf32>, vector<1x8x8xf32> -> vector<1x8x8xf32>
    "tpu.trace_stop"() : () -> ()
    %185 = vector.shape_cast %184 : vector<1x8x8xf32> to vector<8x8xf32>
    %186 = vector.extract_strided_slice %173 {offsets = [24, 0], sizes = [8, 8], strides = [1, 1]} : vector<64x8xf32> to vector<8x8xf32>
    %187 = vector.shape_cast %186 : vector<8x8xf32> to vector<1x8x8xf32>
    "tpu.trace_start"() <{level = 10 : i32, message = "bqk,bkd->bqd"}> : () -> ()
    %cst_40 = arith.constant dense<0.000000e+00> : vector<1x8x8xf32>
    %188 = tpu.matmul %187, %43, %cst_40 {dimension_numbers = #tpu.dot_dimension_numbers<[2], [1], [1], [2], [0, 0, 0, 1, 1, 2], [0], [0]>} : vector<1x8x8xf32>, vector<1x8x8xf32>, vector<1x8x8xf32> -> vector<1x8x8xf32>
    "tpu.trace_stop"() : () -> ()
    %189 = vector.shape_cast %188 : vector<1x8x8xf32> to vector<8x8xf32>
    %190 = vector.extract_strided_slice %173 {offsets = [32, 0], sizes = [8, 8], strides = [1, 1]} : vector<64x8xf32> to vector<8x8xf32>
    %191 = vector.shape_cast %190 : vector<8x8xf32> to vector<1x8x8xf32>
    "tpu.trace_start"() <{level = 10 : i32, message = "bqk,bkd->bqd"}> : () -> ()
    %cst_41 = arith.constant dense<0.000000e+00> : vector<1x8x8xf32>
    %192 = tpu.matmul %191, %53, %cst_41 {dimension_numbers = #tpu.dot_dimension_numbers<[2], [1], [1], [2], [0, 0, 0, 1, 1, 2], [0], [0]>} : vector<1x8x8xf32>, vector<1x8x8xf32>, vector<1x8x8xf32> -> vector<1x8x8xf32>
    "tpu.trace_stop"() : () -> ()
    %193 = vector.shape_cast %192 : vector<1x8x8xf32> to vector<8x8xf32>
    %194 = vector.extract_strided_slice %173 {offsets = [40, 0], sizes = [8, 8], strides = [1, 1]} : vector<64x8xf32> to vector<8x8xf32>
    %195 = vector.shape_cast %194 : vector<8x8xf32> to vector<1x8x8xf32>
    "tpu.trace_start"() <{level = 10 : i32, message = "bqk,bkd->bqd"}> : () -> ()
    %cst_42 = arith.constant dense<0.000000e+00> : vector<1x8x8xf32>
    %196 = tpu.matmul %195, %63, %cst_42 {dimension_numbers = #tpu.dot_dimension_numbers<[2], [1], [1], [2], [0, 0, 0, 1, 1, 2], [0], [0]>} : vector<1x8x8xf32>, vector<1x8x8xf32>, vector<1x8x8xf32> -> vector<1x8x8xf32>
    "tpu.trace_stop"() : () -> ()
    %197 = vector.shape_cast %196 : vector<1x8x8xf32> to vector<8x8xf32>
    %198 = vector.extract_strided_slice %173 {offsets = [48, 0], sizes = [8, 8], strides = [1, 1]} : vector<64x8xf32> to vector<8x8xf32>
    %199 = vector.shape_cast %198 : vector<8x8xf32> to vector<1x8x8xf32>
    "tpu.trace_start"() <{level = 10 : i32, message = "bqk,bkd->bqd"}> : () -> ()
    %cst_43 = arith.constant dense<0.000000e+00> : vector<1x8x8xf32>
    %200 = tpu.matmul %199, %73, %cst_43 {dimension_numbers = #tpu.dot_dimension_numbers<[2], [1], [1], [2], [0, 0, 0, 1, 1, 2], [0], [0]>} : vector<1x8x8xf32>, vector<1x8x8xf32>, vector<1x8x8xf32> -> vector<1x8x8xf32>
    "tpu.trace_stop"() : () -> ()
    %201 = vector.shape_cast %200 : vector<1x8x8xf32> to vector<8x8xf32>
    %202 = vector.extract_strided_slice %173 {offsets = [56, 0], sizes = [8, 8], strides = [1, 1]} : vector<64x8xf32> to vector<8x8xf32>
    %203 = vector.shape_cast %202 : vector<8x8xf32> to vector<1x8x8xf32>
    "tpu.trace_start"() <{level = 10 : i32, message = "bqk,bkd->bqd"}> : () -> ()
    %cst_44 = arith.constant dense<0.000000e+00> : vector<1x8x8xf32>
    %204 = tpu.matmul %203, %83, %cst_44 {dimension_numbers = #tpu.dot_dimension_numbers<[2], [1], [1], [2], [0, 0, 0, 1, 1, 2], [0], [0]>} : vector<1x8x8xf32>, vector<1x8x8xf32>, vector<1x8x8xf32> -> vector<1x8x8xf32>
    "tpu.trace_stop"() : () -> ()
    %205 = vector.shape_cast %204 : vector<1x8x8xf32> to vector<8x8xf32>
    %206 = tpu.concatenate %177, %181, %185, %189, %193, %197, %201, %205 in 1 : vector<8x8xf32>, vector<8x8xf32>, vector<8x8xf32>, vector<8x8xf32>, vector<8x8xf32>, vector<8x8xf32>, vector<8x8xf32>, vector<8x8xf32> -> vector<8x64xf32>
    %c0_45 = arith.constant 0 : index
    %c0_46 = arith.constant 0 : index
    %207 = vector.load %arg3[%c0_45, %c0_46] : memref<64x48xf32, #tpu.memory_space<vmem>>, vector<64x48xf32>
    %cst_47 = arith.constant dense<0.000000e+00> : vector<8x48xf32>
    %208 = tpu.matmul %206, %207, %cst_47 {dimension_numbers = #tpu.dot_dimension_numbers<[1], [0], [0], [1], [0, 0, 1, 1], [], []>} : vector<8x64xf32>, vector<64x48xf32>, vector<8x48xf32> -> vector<8x48xf32>
    %209 = vector.extract_strided_slice %2 {offsets = [1, 0], sizes = [1, 48], strides = [1, 1]} : vector<8x192xf32> to vector<1x48xf32>
    %210 = vector.broadcast %209 : vector<1x48xf32> to vector<8x48xf32>
    %211 = arith.addf %208, %210 : vector<8x48xf32>
    %212 = vector.extract_strided_slice %2 {offsets = [2, 0], sizes = [1, 48], strides = [1, 1]} : vector<8x192xf32> to vector<1x48xf32>
    %213 = vector.extract_strided_slice %2 {offsets = [3, 0], sizes = [1, 48], strides = [1, 1]} : vector<8x192xf32> to vector<1x48xf32>
    %cst_48 = arith.constant dense<0.000000e+00> : vector<8xf32>
    %214 = vector.multi_reduction <add>, %211, %cst_48 [1] : vector<8x48xf32> to vector<8xf32>
    %215 = vector.shape_cast %214 : vector<8xf32> to vector<8x1xf32>
    %cst_49 = arith.constant 4.800000e+01 : f32
    %216 = vector.broadcast %cst_49 : f32 to vector<8x1xf32>
    %217 = arith.divf %215, %216 : vector<8x1xf32>
    %218 = vector.broadcast %217 : vector<8x1xf32> to vector<8x48xf32>
    %219 = arith.subf %211, %218 : vector<8x48xf32>
    %220 = vector.broadcast %217 : vector<8x1xf32> to vector<8x48xf32>
    %221 = arith.subf %211, %220 : vector<8x48xf32>
    %222 = arith.mulf %219, %221 : vector<8x48xf32>
    %cst_50 = arith.constant dense<0.000000e+00> : vector<8xf32>
    %223 = vector.multi_reduction <add>, %222, %cst_50 [1] : vector<8x48xf32> to vector<8xf32>
    %224 = vector.shape_cast %223 : vector<8xf32> to vector<8x1xf32>
    %cst_51 = arith.constant 4.800000e+01 : f32
    %225 = vector.broadcast %cst_51 : f32 to vector<8x1xf32>
    %226 = arith.divf %224, %225 : vector<8x1xf32>
    %227 = vector.broadcast %217 : vector<8x1xf32> to vector<8x48xf32>
    %228 = arith.subf %211, %227 : vector<8x48xf32>
    %cst_52 = arith.constant 9.99999974E-6 : f32
    %229 = vector.broadcast %cst_52 : f32 to vector<8x1xf32>
    %230 = arith.addf %226, %229 : vector<8x1xf32>
    %231 = math.rsqrt %230 : vector<8x1xf32>
    %232 = vector.broadcast %231 : vector<8x1xf32> to vector<8x48xf32>
    %233 = arith.mulf %228, %232 : vector<8x48xf32>
    %234 = vector.broadcast %212 : vector<1x48xf32> to vector<8x48xf32>
    %235 = arith.mulf %233, %234 : vector<8x48xf32>
    %236 = vector.broadcast %213 : vector<1x48xf32> to vector<8x48xf32>
    %237 = arith.addf %235, %236 : vector<8x48xf32>
    %238 = arith.addf %1, %237 : vector<8x48xf32>
    %c0_53 = arith.constant 0 : index
    %c0_54 = arith.constant 0 : index
    %239 = vector.load %arg4[%c0_53, %c0_54] : memref<48x96xf32, #tpu.memory_space<vmem>>, vector<48x96xf32>
    %cst_55 = arith.constant dense<0.000000e+00> : vector<8x96xf32>
    %240 = tpu.matmul %238, %239, %cst_55 {dimension_numbers = #tpu.dot_dimension_numbers<[1], [0], [0], [1], [0, 0, 1, 1], [], []>} : vector<8x48xf32>, vector<48x96xf32>, vector<8x96xf32> -> vector<8x96xf32>
    %241 = vector.extract_strided_slice %2 {offsets = [4, 0], sizes = [1, 96], strides = [1, 1]} : vector<8x192xf32> to vector<1x96xf32>
    %242 = vector.broadcast %241 : vector<1x96xf32> to vector<8x96xf32>
    %243 = arith.addf %240, %242 : vector<8x96xf32>
    %cst_56 = arith.constant 0.000000e+00 : f32
    %244 = vector.broadcast %cst_56 : f32 to vector<8x96xf32>
    %245 = arith.maximumf %243, %244 : vector<8x96xf32>
    %246 = math.absf %243 : vector<8x96xf32>
    %cst_57 = arith.constant 0.000000e+00 : f32
    %247 = vector.broadcast %cst_57 : f32 to vector<8x96xf32>
    %248 = arith.subf %247, %246 : vector<8x96xf32>
    %249 = math.exp %248 : vector<8x96xf32>
    %cst_58 = arith.constant 1.000000e+00 : f32
    %250 = vector.broadcast %cst_58 : f32 to vector<8x96xf32>
    %251 = arith.addf %250, %249 : vector<8x96xf32>
    %252 = math.log %251 : vector<8x96xf32>
    %253 = arith.addf %245, %252 : vector<8x96xf32>
    %254 = math.tanh %253 : vector<8x96xf32>
    %255 = arith.mulf %243, %254 : vector<8x96xf32>
    %c0_59 = arith.constant 0 : index
    %c0_60 = arith.constant 0 : index
    %256 = vector.load %arg5[%c0_59, %c0_60] : memref<96x48xf32, #tpu.memory_space<vmem>>, vector<96x48xf32>
    %cst_61 = arith.constant dense<0.000000e+00> : vector<8x48xf32>
    %257 = tpu.matmul %255, %256, %cst_61 {dimension_numbers = #tpu.dot_dimension_numbers<[1], [0], [0], [1], [0, 0, 1, 1], [], []>} : vector<8x96xf32>, vector<96x48xf32>, vector<8x48xf32> -> vector<8x48xf32>
    %258 = vector.extract_strided_slice %2 {offsets = [5, 0], sizes = [1, 48], strides = [1, 1]} : vector<8x192xf32> to vector<1x48xf32>
    %259 = vector.broadcast %258 : vector<1x48xf32> to vector<8x48xf32>
    %260 = arith.addf %257, %259 : vector<8x48xf32>
    %261 = vector.extract_strided_slice %2 {offsets = [6, 0], sizes = [1, 48], strides = [1, 1]} : vector<8x192xf32> to vector<1x48xf32>
    %262 = vector.extract_strided_slice %2 {offsets = [7, 0], sizes = [1, 48], strides = [1, 1]} : vector<8x192xf32> to vector<1x48xf32>
    %cst_62 = arith.constant dense<0.000000e+00> : vector<8xf32>
    %263 = vector.multi_reduction <add>, %260, %cst_62 [1] : vector<8x48xf32> to vector<8xf32>
    %264 = vector.shape_cast %263 : vector<8xf32> to vector<8x1xf32>
    %cst_63 = arith.constant 4.800000e+01 : f32
    %265 = vector.broadcast %cst_63 : f32 to vector<8x1xf32>
    %266 = arith.divf %264, %265 : vector<8x1xf32>
    %267 = vector.broadcast %266 : vector<8x1xf32> to vector<8x48xf32>
    %268 = arith.subf %260, %267 : vector<8x48xf32>
    %269 = vector.broadcast %266 : vector<8x1xf32> to vector<8x48xf32>
    %270 = arith.subf %260, %269 : vector<8x48xf32>
    %271 = arith.mulf %268, %270 : vector<8x48xf32>
    %cst_64 = arith.constant dense<0.000000e+00> : vector<8xf32>
    %272 = vector.multi_reduction <add>, %271, %cst_64 [1] : vector<8x48xf32> to vector<8xf32>
    %273 = vector.shape_cast %272 : vector<8xf32> to vector<8x1xf32>
    %cst_65 = arith.constant 4.800000e+01 : f32
    %274 = vector.broadcast %cst_65 : f32 to vector<8x1xf32>
    %275 = arith.divf %273, %274 : vector<8x1xf32>
    %276 = vector.broadcast %266 : vector<8x1xf32> to vector<8x48xf32>
    %277 = arith.subf %260, %276 : vector<8x48xf32>
    %cst_66 = arith.constant 9.99999974E-6 : f32
    %278 = vector.broadcast %cst_66 : f32 to vector<8x1xf32>
    %279 = arith.addf %275, %278 : vector<8x1xf32>
    %280 = math.rsqrt %279 : vector<8x1xf32>
    %281 = vector.broadcast %280 : vector<8x1xf32> to vector<8x48xf32>
    %282 = arith.mulf %277, %281 : vector<8x48xf32>
    %283 = vector.broadcast %261 : vector<1x48xf32> to vector<8x48xf32>
    %284 = arith.mulf %282, %283 : vector<8x48xf32>
    %285 = vector.broadcast %262 : vector<1x48xf32> to vector<8x48xf32>
    %286 = arith.addf %284, %285 : vector<8x48xf32>
    %287 = arith.addf %238, %286 : vector<8x48xf32>
    %288 = vector.shape_cast %287 : vector<8x48xf32> to vector<1x8x48xf32>
    %c0_67 = arith.constant 0 : index
    %c0_68 = arith.constant 0 : index
    %c0_69 = arith.constant 0 : index
    %289 = vector.load %arg7[%c0_67, %c0_68, %c0_69] : memref<1x8x48xf32, #tpu.memory_space<vmem>>, vector<1x8x48xf32>
    tpu.vector_store %arg7[%c0_67, %c0_68, %c0_69], %288 {strides = array<i32>} : memref<1x8x48xf32, #tpu.memory_space<vmem>>, vector<1x8x48xf32>,
    return
  }
  func.func @transform_0(%arg0: i32) -> (i32, i32, i32) {
    %c0_i32 = arith.constant 0 : i32
    %c0_i32_0 = arith.constant 0 : i32
    %c0_i32_1 = arith.constant 0 : i32
    return %arg0, %c0_i32, %c0_i32_0 : i32, i32, i32
  }
  func.func @transform_1(%arg0: i32) -> (i32, i32) {
    %c0_i32 = arith.constant 0 : i32
    %c0_i32_0 = arith.constant 0 : i32
    %c0_i32_1 = arith.constant 0 : i32
    return %c0_i32, %c0_i32_0 : i32, i32
  }
  func.func @transform_2(%arg0: i32) -> (i32, i32) {
    %c0_i32 = arith.constant 0 : i32
    %c0_i32_0 = arith.constant 0 : i32
    %c0_i32_1 = arith.constant 0 : i32
    return %c0_i32, %c0_i32_0 : i32, i32
  }
  func.func @transform_3(%arg0: i32) -> (i32, i32) {
    %c0_i32 = arith.constant 0 : i32
    %c0_i32_0 = arith.constant 0 : i32
    %c0_i32_1 = arith.constant 0 : i32
    return %c0_i32, %c0_i32_0 : i32, i32
  }
  func.func @transform_4(%arg0: i32) -> (i32, i32) {
    %c0_i32 = arith.constant 0 : i32
    %c0_i32_0 = arith.constant 0 : i32
    %c0_i32_1 = arith.constant 0 : i32
    return %c0_i32, %c0_i32_0 : i32, i32
  }
  func.func @transform_5(%arg0: i32) -> (i32, i32) {
    %c0_i32 = arith.constant 0 : i32
    %c0_i32_0 = arith.constant 0 : i32
    %c0_i32_1 = arith.constant 0 : i32
    return %c0_i32, %c0_i32_0 : i32, i32
  }
  func.func @transform_6(%arg0: i32) -> (i32, i32, i32) {
    %c0_i32 = arith.constant 0 : i32
    %c0_i32_0 = arith.constant 0 : i32
    %c0_i32_1 = arith.constant 0 : i32
    return %arg0, %c0_i32, %c0_i32_0 : i32, i32, i32
  }
}

</mosaic_0001>

<llo_original>
// kernel: tpu_custom_call.1
$region0: #{tpu_custom_call.1}
  #allocation0 [shape = 'u32[]', space=smem, size = 0x4, offset = 0x4, fixed_abs, tag = 'smem constant byte address 0x4 - core index']
  #allocation1 [shape = 'u32[72,128]{1,0:T(1,128)}', space=vmem, size = 0x9000, scoped, tag = 'internal scratch']
  %s0 = inlined_call_operand.vmem [shape: f32[2,8,48], index: 0, kind: input, shape index: {}]
  %s1 = inlined_call_operand.vmem [shape: f32[48,192], index: 1, kind: input, shape index: {}]
  %s2 = inlined_call_operand.vmem [shape: f32[64,48], index: 2, kind: input, shape index: {}]
  %s3 = inlined_call_operand.vmem [shape: f32[48,96], index: 3, kind: input, shape index: {}]
  %s4 = inlined_call_operand.vmem [shape: f32[96,48], index: 4, kind: input, shape index: {}]
  %s5 = inlined_call_operand.vmem [shape: f32[8,192], index: 5, kind: input, shape index: {}]
  %s6 = inlined_call_operand.hbm [shape: f32[2,8,48], index: 6, kind: output, shape index: {}]
  %s7 = sld [smem:[#allocation0]]
  $region57: #{tpu_custom_call.1} parent=0
    _
  %s9 = ssub.s32 1, %s7
  %s10 = scalar_select 0, %s9, %s7
  $region1: #{tpu_custom_call.1} parent=0
    #allocation2 [shape = 'u8[8192]{0}', space=vmem, size = 0x2000, scoped, tag = 'output window, operand 0']
    #allocation3 [shape = 's32[2]{0}', space=sflag, size = 0x8, scoped, tag = 'scoped memory for tpu_custom_call.1']
    %11 = vsyncpa [#allocation3], 0
    %s12 = scalar_lea.sflag [#allocation3], 1
    %13 = vsyncpa %s12, 0
    loop: start=0, step=1, limit=4
    $region2: #{tpu_custom_call.1} parent=1 // loop_pre_header
      _
    $region3: #{tpu_custom_call.1} parent=1 // loop_header
      %s15 = sphi 0, %s19
      %p16 = scmp.ge.s32.totalorder %s15, 4
      %s25 = sphi 0, %s27
      %s28 = sphi 0, %s25
      %s29 = sphi 0, %s28
      %s45 = sphi 0, %s29
      %s49 = sphi 0, %s49
      %s51 = sphi 0, %s49
      %s52 = sphi 0, %s51
      %s66 = sphi 0, %s52
      %s70 = sphi 0, %s70
      %s72 = sphi 0, %s70
      %s73 = sphi 0, %s72
      %s87 = sphi 0, %s73
      %s91 = sphi 0, %s91
      %s93 = sphi 0, %s91
      %s94 = sphi 0, %s93
      %s108 = sphi 0, %s94
      %s112 = sphi 0, %s112
      %s114 = sphi 0, %s112
      %s115 = sphi 0, %s114
      %s129 = sphi 0, %s115
      %s133 = sphi 0, %s133
      %s135 = sphi 0, %s133
      %s136 = sphi 0, %s135
      %s150 = sphi 0, %s136
      %s156 = sphi 0, %s158
      %s159 = sphi 0, %s156
      %s160 = sphi 0, %s159
      %s176 = sphi 0, %s160
    $region4: #{tpu_custom_call.1} parent=1 // loop_header_branch
      %18 = sbr.rel (%p16) target = $region8
    $region5: #{tpu_custom_call.1} parent=1 // loop_body
      %s20 = ssub.s32 %s15, 1
      %s21 = ssub.s32 %s15, 2
      %s22 = sadd.s32 %s15, 1
      %s23 = ssub.s32 %s15, %s22
      %p24 = scmp.eq.s32.totalorder %s23, 0
      %s26 = sadd.s32 %s25, 1
      %s27 = scalar_select %p24, %s25, %s26
      %p30 = pneg %p24
      %p31 = scmp.eq.s32.totalorder %s15, 1
      %p32 = por %p30, %p31
      %p33 = scmp.ne.s32.totalorder %s25, %s28
      %p34 = scmp.eq.s32.totalorder %s15, 0
      %p35 = por %p33, %p34
      %p36 = scmp.ne.s32.totalorder %s25, %s28
      %p37 = scmp.eq.s32.totalorder %s20, 1
      %p38 = por %p36, %p37
      %p39 = scmp.ne.s32.totalorder %s28, %s29
      %p40 = scmp.eq.s32.totalorder %s20, 0
      %p41 = por %p39, %p40
      %p42 = scmp.ne.s32.totalorder %s28, %s29
      %p43 = scmp.eq.s32.totalorder %s21, 1
      %p44 = por %p42, %p43
      %p46 = scmp.ne.s32.totalorder %s29, %s45
      %p47 = scmp.eq.s32.totalorder %s21, 0
      %p48 = por %p46, %p47
      %s50 = sadd.s32 %s49, 1
      %p53 = scmp.eq.s32.totalorder %s15, 1
      %p54 = scmp.ne.s32.totalorder %s49, %s51
      %p55 = scmp.eq.s32.totalorder %s15, 0
      %p56 = por %p54, %p55
      %p57 = scmp.ne.s32.totalorder %s49, %s51
      %p58 = scmp.eq.s32.totalorder %s20, 1
      %p59 = por %p57, %p58
      %p60 = scmp.ne.s32.totalorder %s51, %s52
      %p61 = scmp.eq.s32.totalorder %s20, 0
      %p62 = por %p60, %p61
      %p63 = scmp.ne.s32.totalorder %s51, %s52
      %p64 = scmp.eq.s32.totalorder %s21, 1
      %p65 = por %p63, %p64
      %p67 = scmp.ne.s32.totalorder %s52, %s66
      %p68 = scmp.eq.s32.totalorder %s21, 0
      %p69 = por %p67, %p68
      %s71 = sadd.s32 %s70, 1
      %p74 = scmp.eq.s32.totalorder %s15, 1
      %p75 = scmp.ne.s32.totalorder %s70, %s72
      %p76 = scmp.eq.s32.totalorder %s15, 0
      %p77 = por %p75, %p76
      %p78 = scmp.ne.s32.totalorder %s70, %s72
      %p79 = scmp.eq.s32.totalorder %s20, 1
      %p80 = por %p78, %p79
      %p81 = scmp.ne.s32.totalorder %s72, %s73
      %p82 = scmp.eq.s32.totalorder %s20, 0
      %p83 = por %p81, %p82
      %p84 = scmp.ne.s32.totalorder %s72, %s73
      %p85 = scmp.eq.s32.totalorder %s21, 1
      %p86 = por %p84, %p85
      %p88 = scmp.ne.s32.totalorder %s73, %s87
      %p89 = scmp.eq.s32.totalorder %s21, 0
      %p90 = por %p88, %p89
      %s92 = sadd.s32 %s91, 1
      %p95 = scmp.eq.s32.totalorder %s15, 1
      %p96 = scmp.ne.s32.totalorder %s91, %s93
      %p97 = scmp.eq.s32.totalorder %s15, 0
      %p98 = por %p96, %p97
      %p99 = scmp.ne.s32.totalorder %s91, %s93
      %p100 = scmp.eq.s32.totalorder %s20, 1
      %p101 = por %p99, %p100
      %p102 = scmp.ne.s32.totalorder %s93, %s94
      %p103 = scmp.eq.s32.totalorder %s20, 0
      %p104 = por %p102, %p103
      %p105 = scmp.ne.s32.totalorder %s93, %s94
      %p106 = scmp.eq.s32.totalorder %s21, 1
      %p107 = por %p105, %p106
      %p109 = scmp.ne.s32.totalorder %s94, %s108
      %p110 = scmp.eq.s32.totalorder %s21, 0
      %p111 = por %p109, %p110
      %s113 = sadd.s32 %s112, 1
      %p116 = scmp.eq.s32.totalorder %s15, 1
      %p117 = scmp.ne.s32.totalorder %s112, %s114
      %p118 = scmp.eq.s32.totalorder %s15, 0
      %p119 = por %p117, %p118
      %p120 = scmp.ne.s32.totalorder %s112, %s114
      %p121 = scmp.eq.s32.totalorder %s20, 1
      %p122 = por %p120, %p121
      %p123 = scmp.ne.s32.totalorder %s114, %s115
      %p124 = scmp.eq.s32.totalorder %s20, 0
      %p125 = por %p123, %p124
      %p126 = scmp.ne.s32.totalorder %s114, %s115
      %p127 = scmp.eq.s32.totalorder %s21, 1
      %p128 = por %p126, %p127
      %p130 = scmp.ne.s32.totalorder %s115, %s129
      %p131 = scmp.eq.s32.totalorder %s21, 0
      %p132 = por %p130, %p131
      %s134 = sadd.s32 %s133, 1
      %p137 = scmp.eq.s32.totalorder %s15, 1
      %p138 = scmp.ne.s32.totalorder %s133, %s135
      %p139 = scmp.eq.s32.totalorder %s15, 0
      %p140 = por %p138, %p139
      %p141 = scmp.ne.s32.totalorder %s133, %s135
      %p142 = scmp.eq.s32.totalorder %s20, 1
      %p143 = por %p141, %p142
      %p144 = scmp.ne.s32.totalorder %s135, %s136
      %p145 = scmp.eq.s32.totalorder %s20, 0
      %p146 = por %p144, %p145
      %p147 = scmp.ne.s32.totalorder %s135, %s136
      %p148 = scmp.eq.s32.totalorder %s21, 1
      %p149 = por %p147, %p148
      %p151 = scmp.ne.s32.totalorder %s136, %s150
      %p152 = scmp.eq.s32.totalorder %s21, 0
      %p153 = por %p151, %p152
      %s154 = ssub.s32 %s15, %s22
      %p155 = scmp.eq.s32.totalorder %s154, 0
      %s157 = sadd.s32 %s156, 1
      %s158 = scalar_select %p155, %s156, %s157
      %p161 = pneg %p155
      %p162 = scmp.eq.s32.totalorder %s15, 1
      %p163 = por %p161, %p162
      %p164 = scmp.ne.s32.totalorder %s156, %s159
      %p165 = scmp.eq.s32.totalorder %s15, 0
      %p166 = por %p164, %p165
      %p167 = scmp.ne.s32.totalorder %s156, %s159
      %p168 = scmp.eq.s32.totalorder %s20, 1
      %p169 = por %p167, %p168
      %p170 = scmp.ne.s32.totalorder %s159, %s160
      %p171 = scmp.eq.s32.totalorder %s20, 0
      %p172 = por %p170, %p171
      %p173 = scmp.ne.s32.totalorder %s159, %s160
      %p174 = scmp.eq.s32.totalorder %s21, 1
      %p175 = por %p173, %p174
      %p177 = scmp.ne.s32.totalorder %s160, %s176
      %p178 = scmp.eq.s32.totalorder %s21, 0
      %p179 = por %p177, %p178
      %p180 = scmp.le.s32.totalorder 1, %s15
      %p181 = scmp.lt.s32.totalorder %s15, 3
      %p182 = pnand %p180, %p181
      %p183 = pneg %p182
      // Predicated region
      $region9: #{tpu_custom_call.1} parent=5 // pred_check
        _
      $region10: #{tpu_custom_call.1} parent=5 // pred_check_branch
        %185 = sbr.rel (%p182) target = $region12
      $region11: #{tpu_custom_call.1} parent=5 // pred_region
        %s186 = ssub.s32 %s15, 1
        // Predicated region
        $region13: #{tpu_custom_call.1} parent=11 // pred_check
          %p187 = pneg %p62
        $region14: #{tpu_custom_call.1} parent=11 // pred_check_branch
          %189 = sbr.rel (%p187) target = $region16
        $region15: #{tpu_custom_call.1} parent=11 // pred_region
          _
        $region16: #{tpu_custom_call.1} parent=11 // pred_fallthru
          _
        // Predicated region
        $region17: #{tpu_custom_call.1} parent=11 // pred_check
          %p190 = pneg %p83
        $region18: #{tpu_custom_call.1} parent=11 // pred_check_branch
          %192 = sbr.rel (%p190) target = $region20
        $region19: #{tpu_custom_call.1} parent=11 // pred_region
          _
        $region20: #{tpu_custom_call.1} parent=11 // pred_fallthru
          _
        // Predicated region
        $region21: #{tpu_custom_call.1} parent=11 // pred_check
          %p193 = pneg %p104
        $region22: #{tpu_custom_call.1} parent=11 // pred_check_branch
          %195 = sbr.rel (%p193) target = $region24
        $region23: #{tpu_custom_call.1} parent=11 // pred_region
          _
        $region24: #{tpu_custom_call.1} parent=11 // pred_fallthru
          _
        // Predicated region
        $region25: #{tpu_custom_call.1} parent=11 // pred_check
          %p196 = pneg %p125
        $region26: #{tpu_custom_call.1} parent=11 // pred_check_branch
          %198 = sbr.rel (%p196) target = $region28
        $region27: #{tpu_custom_call.1} parent=11 // pred_region
          _
        $region28: #{tpu_custom_call.1} parent=11 // pred_fallthru
          _
        // Predicated region
        $region29: #{tpu_custom_call.1} parent=11 // pred_check
          %p199 = pneg %p146
        $region30: #{tpu_custom_call.1} parent=11 // pred_check_branch
          %201 = sbr.rel (%p199) target = $region32
        $region31: #{tpu_custom_call.1} parent=11 // pred_region
          _
        $region32: #{tpu_custom_call.1} parent=11 // pred_fallthru
          _
      $region12: #{tpu_custom_call.1} parent=5 // pred_fallthru
        _
      %p202 = scmp.lt.s32.totalorder %s15, 2
      // Predicated region
      $region33: #{tpu_custom_call.1} parent=5 // pred_check
        %p203 = pneg %p202
      $region34: #{tpu_custom_call.1} parent=5 // pred_check_branch
        %205 = sbr.rel (%p203) target = $region36
      $region35: #{tpu_custom_call.1} parent=5 // pred_region
        // Predicated region
        $region37: #{tpu_custom_call.1} parent=35 // pred_check
          %p206 = pneg %p35
        $region38: #{tpu_custom_call.1} parent=35 // pred_check_branch
          %208 = sbr.rel (%p206) target = $region40
        $region39: #{tpu_custom_call.1} parent=35 // pred_region
          %p209 = scmp.lt.s32.totalorder %s15, 1
          %s210 = scalar_select %p209, %s15, 1
          %s211 = smul.addr %s210, 8
          %s212 = scalar_lea.vmem %s0, %s211
        $region40: #{tpu_custom_call.1} parent=35 // pred_fallthru
          _
      $region36: #{tpu_custom_call.1} parent=5 // pred_fallthru
        _
      %p213 = scmp.le.s32.totalorder 1, %s15
      %p214 = scmp.lt.s32.totalorder %s15, 3
      %p215 = pnand %p213, %p214
      %p216 = pneg %p215
      // Predicated region
      $region41: #{tpu_custom_call.1} parent=5 // pred_check
        _
      $region42: #{tpu_custom_call.1} parent=5 // pred_check_branch
        %218 = sbr.rel (%p215) target = $region44
      $region43: #{tpu_custom_call.1} parent=5 // pred_region
        %s219 = ssub.s32 %s15, 1
        %p220 = scmp.lt.s32.totalorder %s20, 1
        %s221 = scalar_select %p220, %s20, 1
        %s222 = smul.addr %s221, 8
        %s223 = scalar_lea.vmem %s0, %s222
        %p224 = pneg %p41
        %p225 = pneg %p38
        %p226 = pneg %p62
        %p227 = pneg %p59
        %p228 = pneg %p83
        %p229 = pneg %p80
        %p230 = pneg %p104
        %p231 = pneg %p101
        %p232 = pneg %p125
        %p233 = pneg %p122
        %p234 = pneg %p146
        %p235 = pneg %p143
        %p236 = pneg %p172
        %p237 = pneg %p169
        %s238 = sand.u32 %s159, 1
        %s239 = scalar_lea.sflag [#allocation3], %s238
        %s240 = sand.u32 %s159, 1
        %s241 = smul.addr %s240, 8
        %s242 = scalar_lea.vmem [#allocation2], %s241
        %p243 = scmp.lt.s32.totalorder %s20, 1
        %s244 = scalar_select %p243, %s20, 1
        %s245 = smul.addr %s244, 8
        %s246 = scalar_lea.vmem %s0, %s245
        %v247 = vld [vmem:[%s246] sm:$0xff]
        %v248 = vld [vmem:[%s5] sm:$0xff]
        %v249 = vld [vmem:[%s5 + $0x8] sm:$0xff]
        %v250 = vld [vmem:[%s1] sm:$0xff]
        %v251 = vld [vmem:[%s1 + $0x8] sm:$0xff]
        %v252 = vld [vmem:[%s1 + $0x10] sm:$0xff]
        %v253 = vld [vmem:[%s1 + $0x18] sm:$0xff]
        %v254 = vld [vmem:[%s1 + $0x20] sm:$0xff]
        %v255 = vld [vmem:[%s1 + $0x28] sm:$0xff]
        %v256 = vld [vmem:[%s1 + $0x30] sm:$0xff]
        %v257 = vld [vmem:[%s1 + $0x38] sm:$0xff]
        %v258 = vld [vmem:[%s1 + $0x40] sm:$0xff]
        %v259 = vld [vmem:[%s1 + $0x48] sm:$0xff]
        %v260 = vld [vmem:[%s1 + $0x50] sm:$0xff]
        %v261 = vld [vmem:[%s1 + $0x58] sm:$0xff]
        %v262 = vperm.slane %v248, 0
        %v263 = vperm.slane %v249, 0
        %vm264 = vcmask 392192
        %v266 = vsel %vm264, %v247, 0
        %268 = vmatpush.msra.mxu0 0.0
        %269 = vmatpush.msra.mxu0 0.0
        %270 = vmatpush.msra.mxu0 0.0
        %271 = vmatpush.msra.mxu0 0.0
        %272 = vmatpush.msra.mxu0 0.0
        %273 = vmatpush.msra.mxu0 0.0
        %274 = vmatpush.msra.mxu0 0.0
        %275 = vmatpush.msra.mxu0 0.0
        %276 = vmatpush.msra.mxu0 0.0
        %277 = vmatpush.msra.mxu0 0.0
        %278 = vmatpush.msra.mxu0 %v260
        %279 = vmatpush.msra.mxu0 %v258
        %280 = vmatpush.msra.mxu0 %v256
        %281 = vmatpush.msra.mxu0 %v254
        %282 = vmatpush.msra.mxu0 %v252
        %283 = vmatpush.msra.mxu0 %v250
        %284 = vmatmul.f32.gmra.mxu0 %v266
        %v285 = vpop.f32.mrf.mxu0
        %v286 = vadd.f32 %v262, %v285
        %287 = vdwg.mxu0
        %288 = vmatpush.msra.mxu0 0.0
        %289 = vmatpush.msra.mxu0 0.0
        %290 = vmatpush.msra.mxu0 0.0
        %291 = vmatpush.msra.mxu0 0.0
        %292 = vmatpush.msra.mxu0 0.0
        %293 = vmatpush.msra.mxu0 0.0
        %294 = vmatpush.msra.mxu0 0.0
        %295 = vmatpush.msra.mxu0 0.0
        %296 = vmatpush.msra.mxu0 0.0
        %297 = vmatpush.msra.mxu0 0.0
        %298 = vmatpush.msra.mxu0 %v261
        %299 = vmatpush.msra.mxu0 %v259
        %300 = vmatpush.msra.mxu0 %v257
        %301 = vmatpush.msra.mxu0 %v255
        %302 = vmatpush.msra.mxu0 %v253
        %303 = vmatpush.msra.mxu0 %v251
        %304 = vmatmul.f32.gmra.mxu0 %v266
        %v305 = vpop.f32.mrf.mxu0
        %v306 = vadd.f32 %v263, %v305
        %307 = vdwg.mxu0
        %309 = vrot.lane.b32.xlu0 %v286, 64
        %v310 = vpop.permute.xlu0 %309
        %vm311 = vcmask 64512
        %v312 = vsel %vm311, %v286, 0
        %v314 = vsel %vm311, %v310, 0
        %316 = vmatpush.xpose.msra.mxu0 0.0
        %317 = vmatpush.xpose.msra.mxu0 0.0
        %318 = vmatpush.xpose.msra.mxu0 0.0
        %319 = vmatpush.xpose.msra.mxu0 0.0
        %320 = vmatpush.xpose.msra.mxu0 0.0
        %321 = vmatpush.xpose.msra.mxu0 0.0
        %322 = vmatpush.xpose.msra.mxu0 0.0
        %323 = vmatpush.xpose.msra.mxu0 0.0
        %324 = vmatpush.xpose.msra.mxu0 0.0
        %325 = vmatpush.xpose.msra.mxu0 0.0
        %326 = vmatpush.xpose.msra.mxu0 0.0
        %327 = vmatpush.xpose.msra.mxu0 0.0
        %328 = vmatpush.xpose.msra.mxu0 0.0
        %329 = vmatpush.xpose.msra.mxu0 0.0
        %330 = vmatpush.xpose.msra.mxu0 0.0
        %331 = vmatpush.xpose.msra.mxu0 %v314
        %332 = vmatmul.f32.gmra.mxu0 %v312
        %v333 = vpop.f32.mrf.mxu0
        %v334 = vadd.f32 0.0, %v333
        %335 = vdwg.mxu0
        %v336 = vmul.f32 %v334, 0.4082483
        %337 = vrot.lane.b32.xlu0 %v286, 120
        %v338 = vpop.permute.xlu0 %337
        %339 = vrot.lane.b32.xlu0 %v286, 56
        %v340 = vpop.permute.xlu0 %339
        %v341 = vsel %vm311, %v338, 0
        %v343 = vsel %vm311, %v340, 0
        %345 = vmatpush.xpose.msra.mxu0 0.0
        %346 = vmatpush.xpose.msra.mxu0 0.0
        %347 = vmatpush.xpose.msra.mxu0 0.0
        %348 = vmatpush.xpose.msra.mxu0 0.0
        %349 = vmatpush.xpose.msra.mxu0 0.0
        %350 = vmatpush.xpose.msra.mxu0 0.0
        %351 = vmatpush.xpose.msra.mxu0 0.0
        %352 = vmatpush.xpose.msra.mxu0 0.0
        %353 = vmatpush.xpose.msra.mxu0 0.0
        %354 = vmatpush.xpose.msra.mxu0 0.0
        %355 = vmatpush.xpose.msra.mxu0 0.0
        %356 = vmatpush.xpose.msra.mxu0 0.0
        %357 = vmatpush.xpose.msra.mxu0 0.0
        %358 = vmatpush.xpose.msra.mxu0 0.0
        %359 = vmatpush.xpose.msra.mxu0 0.0
        %360 = vmatpush.xpose.msra.mxu0 %v343
        %361 = vmatmul.f32.gmra.mxu0 %v341
        %v362 = vpop.f32.mrf.mxu0
        %v363 = vadd.f32 0.0, %v362
        %364 = vdwg.mxu0
        %v365 = vmul.f32 %v363, 0.4082483
        %366 = vrot.lane.b32.xlu0 %v286, 112
        %v367 = vpop.permute.xlu0 %366
        %368 = vrot.lane.b32.xlu0 %v286, 48
        %v369 = vpop.permute.xlu0 %368
        %v370 = vsel %vm311, %v367, 0
        %v372 = vsel %vm311, %v369, 0
        %374 = vmatpush.xpose.msra.mxu0 0.0
        %375 = vmatpush.xpose.msra.mxu0 0.0
        %376 = vmatpush.xpose.msra.mxu0 0.0
        %377 = vmatpush.xpose.msra.mxu0 0.0
        %378 = vmatpush.xpose.msra.mxu0 0.0
        %379 = vmatpush.xpose.msra.mxu0 0.0
        %380 = vmatpush.xpose.msra.mxu0 0.0
        %381 = vmatpush.xpose.msra.mxu0 0.0
        %382 = vmatpush.xpose.msra.mxu0 0.0
        %383 = vmatpush.xpose.msra.mxu0 0.0
        %384 = vmatpush.xpose.msra.mxu0 0.0
        %385 = vmatpush.xpose.msra.mxu0 0.0
        %386 = vmatpush.xpose.msra.mxu0 0.0
        %387 = vmatpush.xpose.msra.mxu0 0.0
        %388 = vmatpush.xpose.msra.mxu0 0.0
        %389 = vmatpush.xpose.msra.mxu0 %v372
        %390 = vmatmul.f32.gmra.mxu0 %v370
        %v391 = vpop.f32.mrf.mxu0
        %v392 = vadd.f32 0.0, %v391
        %393 = vdwg.mxu0
        %v394 = vmul.f32 %v392, 0.4082483
        %395 = vrot.lane.b32.xlu0 %v286, 104
        %v396 = vpop.permute.xlu0 %395
        %397 = vrot.lane.b32.xlu0 %v286, 40
        %v398 = vpop.permute.xlu0 %397
        %v399 = vsel %vm311, %v396, 0
        %v401 = vsel %vm311, %v398, 0
        %403 = vmatpush.xpose.msra.mxu0 0.0
        %404 = vmatpush.xpose.msra.mxu0 0.0
        %405 = vmatpush.xpose.msra.mxu0 0.0
        %406 = vmatpush.xpose.msra.mxu0 0.0
        %407 = vmatpush.xpose.msra.mxu0 0.0
        %408 = vmatpush.xpose.msra.mxu0 0.0
        %409 = vmatpush.xpose.msra.mxu0 0.0
        %410 = vmatpush.xpose.msra.mxu0 0.0
        %411 = vmatpush.xpose.msra.mxu0 0.0
        %412 = vmatpush.xpose.msra.mxu0 0.0
        %413 = vmatpush.xpose.msra.mxu0 0.0
        %414 = vmatpush.xpose.msra.mxu0 0.0
        %415 = vmatpush.xpose.msra.mxu0 0.0
        %416 = vmatpush.xpose.msra.mxu0 0.0
        %417 = vmatpush.xpose.msra.mxu0 0.0
        %418 = vmatpush.xpose.msra.mxu0 %v401
        %419 = vmatmul.f32.gmra.mxu0 %v399
        %v420 = vpop.f32.mrf.mxu0
        %v421 = vadd.f32 0.0, %v420
        %422 = vdwg.mxu0
        %v423 = vmul.f32 %v421, 0.4082483
        %424 = vrot.lane.b32.xlu0 %v286, 96
        %v425 = vpop.permute.xlu0 %424
        %426 = vrot.lane.b32.xlu0 %v286, 32
        %v427 = vpop.permute.xlu0 %426
        %v428 = vsel %vm311, %v425, 0
        %v430 = vsel %vm311, %v427, 0
        %432 = vmatpush.xpose.msra.mxu0 0.0
        %433 = vmatpush.xpose.msra.mxu0 0.0
        %434 = vmatpush.xpose.msra.mxu0 0.0
        %435 = vmatpush.xpose.msra.mxu0 0.0
        %436 = vmatpush.xpose.msra.mxu0 0.0
        %437 = vmatpush.xpose.msra.mxu0 0.0
        %438 = vmatpush.xpose.msra.mxu0 0.0
        %439 = vmatpush.xpose.msra.mxu0 0.0
        %440 = vmatpush.xpose.msra.mxu0 0.0
        %441 = vmatpush.xpose.msra.mxu0 0.0
        %442 = vmatpush.xpose.msra.mxu0 0.0
        %443 = vmatpush.xpose.msra.mxu0 0.0
        %444 = vmatpush.xpose.msra.mxu0 0.0
        %445 = vmatpush.xpose.msra.mxu0 0.0
        %446 = vmatpush.xpose.msra.mxu0 0.0
        %447 = vmatpush.xpose.msra.mxu0 %v430
        %448 = vmatmul.f32.gmra.mxu0 %v428
        %v449 = vpop.f32.mrf.mxu0
        %v450 = vadd.f32 0.0, %v449
        %451 = vdwg.mxu0
        %v452 = vmul.f32 %v450, 0.4082483
        %453 = vrot.lane.b32.xlu0 %v286, 88
        %v454 = vpop.permute.xlu0 %453
        %455 = vrot.lane.b32.xlu0 %v286, 24
        %v456 = vpop.permute.xlu0 %455
        %v457 = vsel %vm311, %v454, 0
        %v459 = vsel %vm311, %v456, 0
        %461 = vmatpush.xpose.msra.mxu0 0.0
        %462 = vmatpush.xpose.msra.mxu0 0.0
        %463 = vmatpush.xpose.msra.mxu0 0.0
        %464 = vmatpush.xpose.msra.mxu0 0.0
        %465 = vmatpush.xpose.msra.mxu0 0.0
        %466 = vmatpush.xpose.msra.mxu0 0.0
        %467 = vmatpush.xpose.msra.mxu0 0.0
        %468 = vmatpush.xpose.msra.mxu0 0.0
        %469 = vmatpush.xpose.msra.mxu0 0.0
        %470 = vmatpush.xpose.msra.mxu0 0.0
        %471 = vmatpush.xpose.msra.mxu0 0.0
        %472 = vmatpush.xpose.msra.mxu0 0.0
        %473 = vmatpush.xpose.msra.mxu0 0.0
        %474 = vmatpush.xpose.msra.mxu0 0.0
        %475 = vmatpush.xpose.msra.mxu0 0.0
        %476 = vmatpush.xpose.msra.mxu0 %v459
        %477 = vmatmul.f32.gmra.mxu0 %v457
        %v478 = vpop.f32.mrf.mxu0
        %v479 = vadd.f32 0.0, %v478
        %480 = vdwg.mxu0
        %v481 = vmul.f32 %v479, 0.4082483
        %482 = vrot.lane.b32.xlu0 %v286, 80
        %v483 = vpop.permute.xlu0 %482
        %484 = vrot.lane.b32.xlu0 %v286, 16
        %v485 = vpop.permute.xlu0 %484
        %v486 = vsel %vm311, %v483, 0
        %v488 = vsel %vm311, %v485, 0
        %490 = vmatpush.xpose.msra.mxu0 0.0
        %491 = vmatpush.xpose.msra.mxu0 0.0
        %492 = vmatpush.xpose.msra.mxu0 0.0
        %493 = vmatpush.xpose.msra.mxu0 0.0
        %494 = vmatpush.xpose.msra.mxu0 0.0
        %495 = vmatpush.xpose.msra.mxu0 0.0
        %496 = vmatpush.xpose.msra.mxu0 0.0
        %497 = vmatpush.xpose.msra.mxu0 0.0
        %498 = vmatpush.xpose.msra.mxu0 0.0
        %499 = vmatpush.xpose.msra.mxu0 0.0
        %500 = vmatpush.xpose.msra.mxu0 0.0
        %501 = vmatpush.xpose.msra.mxu0 0.0
        %502 = vmatpush.xpose.msra.mxu0 0.0
        %503 = vmatpush.xpose.msra.mxu0 0.0
        %504 = vmatpush.xpose.msra.mxu0 0.0
        %505 = vmatpush.xpose.msra.mxu0 %v488
        %506 = vmatmul.f32.gmra.mxu0 %v486
        %v507 = vpop.f32.mrf.mxu0
        %v508 = vadd.f32 0.0, %v507
        %509 = vdwg.mxu0
        %v510 = vmul.f32 %v508, 0.4082483
        %511 = vrot.lane.b32.xlu0 %v286, 72
        %v512 = vpop.permute.xlu0 %511
        %513 = vrot.lane.b32.xlu0 %v286, 8
        %v514 = vpop.permute.xlu0 %513
        %v515 = vsel %vm311, %v512, 0
        %v517 = vsel %vm311, %v514, 0
        %519 = vmatpush.xpose.msra.mxu0 0.0
        %520 = vmatpush.xpose.msra.mxu0 0.0
        %521 = vmatpush.xpose.msra.mxu0 0.0
        %522 = vmatpush.xpose.msra.mxu0 0.0
        %523 = vmatpush.xpose.msra.mxu0 0.0
        %524 = vmatpush.xpose.msra.mxu0 0.0
        %525 = vmatpush.xpose.msra.mxu0 0.0
        %526 = vmatpush.xpose.msra.mxu0 0.0
        %527 = vmatpush.xpose.msra.mxu0 0.0
        %528 = vmatpush.xpose.msra.mxu0 0.0
        %529 = vmatpush.xpose.msra.mxu0 0.0
        %530 = vmatpush.xpose.msra.mxu0 0.0
        %531 = vmatpush.xpose.msra.mxu0 0.0
        %532 = vmatpush.xpose.msra.mxu0 0.0
        %533 = vmatpush.xpose.msra.mxu0 0.0
        %534 = vmatpush.xpose.msra.mxu0 %v517
        %535 = vmatmul.f32.gmra.mxu0 %v515
        %v536 = vpop.f32.mrf.mxu0
        %v537 = vadd.f32 0.0, %v536
        %538 = vdwg.mxu0
        %v539 = vmul.f32 %v537, 0.4082483
        %v540 = vmul.f32 %v336, 0.5
        %v541 = vmul.f32 %v365, 0.5
        %v542 = vmul.f32 %v394, 0.5
        %v543 = vmul.f32 %v423, 0.5
        %v544 = vmul.f32 %v452, 0.5
        %v545 = vmul.f32 %v481, 0.5
        %v546 = vmul.f32 %v510, 0.5
        %v547 = vmul.f32 %v539, 0.5
        %v548 = vsel %vm311, %v540, -inf
        %549 = vmax.xlane.f32.xlu0 %v548
        %v550 = vpop.xlane.xlu0 %549
        %v551 = vsel %vm311, %v541, -inf
        %552 = vmax.xlane.f32.xlu0 %v551
        %v553 = vpop.xlane.xlu0 %552
        %v554 = vsel %vm311, %v542, -inf
        %555 = vmax.xlane.f32.xlu0 %v554
        %v556 = vpop.xlane.xlu0 %555
        %v557 = vsel %vm311, %v543, -inf
        %558 = vmax.xlane.f32.xlu0 %v557
        %v559 = vpop.xlane.xlu0 %558
        %v560 = vsel %vm311, %v544, -inf
        %561 = vmax.xlane.f32.xlu0 %v560
        %v562 = vpop.xlane.xlu0 %561
        %v563 = vsel %vm311, %v545, -inf
        %564 = vmax.xlane.f32.xlu0 %v563
        %v565 = vpop.xlane.xlu0 %564
        %v566 = vsel %vm311, %v546, -inf
        %567 = vmax.xlane.f32.xlu0 %v566
        %v568 = vpop.xlane.xlu0 %567
        %v569 = vsel %vm311, %v547, -inf
        %570 = vmax.xlane.f32.xlu0 %v569
        %v571 = vpop.xlane.xlu0 %570
        %v572 = vsub.f32 %v540, %v550
        %v573 = vsub.f32 %v541, %v553
        %v574 = vsub.f32 %v542, %v556
        %v575 = vsub.f32 %v543, %v559
        %v576 = vsub.f32 %v544, %v562
        %v577 = vsub.f32 %v545, %v565
        %v578 = vsub.f32 %v546, %v568
        %v579 = vsub.f32 %v547, %v571
        %v580 = vperm.slane %v572, 0
        %v581 = vlaneseq
        %v582 = vshrl.u32 %v581, 7
        %584 = vset.pattern.permute.xlu0 %v582
        %585 = vperm.xlu0 %584, %v580
        %v586 = vpop.permute.xlu0 %585
        %v587 = vperm.slane %v572, 1
        %v588 = vlaneseq
        %v589 = vshrl.u32 %v588, 7
        %591 = vset.pattern.permute.xlu0 %v589
        %592 = vperm.xlu0 %591, %v587
        %v593 = vpop.permute.xlu0 %592
        %v594 = vperm.slane %v572, 2
        %v595 = vlaneseq
        %v596 = vshrl.u32 %v595, 7
        %598 = vset.pattern.permute.xlu0 %v596
        %599 = vperm.xlu0 %598, %v594
        %v600 = vpop.permute.xlu0 %599
        %v601 = vperm.slane %v572, 3
        %v602 = vlaneseq
        %v603 = vshrl.u32 %v602, 7
        %605 = vset.pattern.permute.xlu0 %v603
        %606 = vperm.xlu0 %605, %v601
        %v607 = vpop.permute.xlu0 %606
        %v608 = vperm.slane %v572, 4
        %v609 = vlaneseq
        %v610 = vshrl.u32 %v609, 7
        %612 = vset.pattern.permute.xlu0 %v610
        %613 = vperm.xlu0 %612, %v608
        %v614 = vpop.permute.xlu0 %613
        %v615 = vperm.slane %v572, 5
        %v616 = vlaneseq
        %v617 = vshrl.u32 %v616, 7
        %619 = vset.pattern.permute.xlu0 %v617
        %620 = vperm.xlu0 %619, %v615
        %v621 = vpop.permute.xlu0 %620
        %v622 = vperm.slane %v572, 6
        %v623 = vlaneseq
        %v624 = vshrl.u32 %v623, 7
        %626 = vset.pattern.permute.xlu0 %v624
        %627 = vperm.xlu0 %626, %v622
        %v628 = vpop.permute.xlu0 %627
        %v629 = vperm.slane %v572, 7
        %v630 = vlaneseq
        %v631 = vshrl.u32 %v630, 7
        %633 = vset.pattern.permute.xlu0 %v631
        %634 = vperm.xlu0 %633, %v629
        %v635 = vpop.permute.xlu0 %634
        %v636 = vperm.slane %v573, 0
        %v637 = vlaneseq
        %v638 = vshrl.u32 %v637, 7
        %640 = vset.pattern.permute.xlu0 %v638
        %641 = vperm.xlu0 %640, %v636
        %v642 = vpop.permute.xlu0 %641
        %v643 = vperm.slane %v573, 1
        %v644 = vlaneseq
        %v645 = vshrl.u32 %v644, 7
        %647 = vset.pattern.permute.xlu0 %v645
        %648 = vperm.xlu0 %647, %v643
        %v649 = vpop.permute.xlu0 %648
        %v650 = vperm.slane %v573, 2
        %v651 = vlaneseq
        %v652 = vshrl.u32 %v651, 7
        %654 = vset.pattern.permute.xlu0 %v652
        %655 = vperm.xlu0 %654, %v650
        %v656 = vpop.permute.xlu0 %655
        %v657 = vperm.slane %v573, 3
        %v658 = vlaneseq
        %v659 = vshrl.u32 %v658, 7
        %661 = vset.pattern.permute.xlu0 %v659
        %662 = vperm.xlu0 %661, %v657
        %v663 = vpop.permute.xlu0 %662
        %v664 = vperm.slane %v573, 4
        %v665 = vlaneseq
        %v666 = vshrl.u32 %v665, 7
        %668 = vset.pattern.permute.xlu0 %v666
        %669 = vperm.xlu0 %668, %v664
        %v670 = vpop.permute.xlu0 %669
        %v671 = vperm.slane %v573, 5
        %v672 = vlaneseq
        %v673 = vshrl.u32 %v672, 7
        %675 = vset.pattern.permute.xlu0 %v673
        %676 = vperm.xlu0 %675, %v671
        %v677 = vpop.permute.xlu0 %676
        %v678 = vperm.slane %v573, 6
        %v679 = vlaneseq
        %v680 = vshrl.u32 %v679, 7
        %682 = vset.pattern.permute.xlu0 %v680
        %683 = vperm.xlu0 %682, %v678
        %v684 = vpop.permute.xlu0 %683
        %v685 = vperm.slane %v573, 7
        %v686 = vlaneseq
        %v687 = vshrl.u32 %v686, 7
        %689 = vset.pattern.permute.xlu0 %v687
        %690 = vperm.xlu0 %689, %v685
        %v691 = vpop.permute.xlu0 %690
        %v692 = vperm.slane %v574, 0
        %v693 = vlaneseq
        %v694 = vshrl.u32 %v693, 7
        %696 = vset.pattern.permute.xlu0 %v694
        %697 = vperm.xlu0 %696, %v692
        %v698 = vpop.permute.xlu0 %697
        %v699 = vperm.slane %v574, 1
        %v700 = vlaneseq
        %v701 = vshrl.u32 %v700, 7
        %703 = vset.pattern.permute.xlu0 %v701
        %704 = vperm.xlu0 %703, %v699
        %v705 = vpop.permute.xlu0 %704
        %v706 = vperm.slane %v574, 2
        %v707 = vlaneseq
        %v708 = vshrl.u32 %v707, 7
        %710 = vset.pattern.permute.xlu0 %v708
        %711 = vperm.xlu0 %710, %v706
        %v712 = vpop.permute.xlu0 %711
        %v713 = vperm.slane %v574, 3
        %v714 = vlaneseq
        %v715 = vshrl.u32 %v714, 7
        %717 = vset.pattern.permute.xlu0 %v715
        %718 = vperm.xlu0 %717, %v713
        %v719 = vpop.permute.xlu0 %718
        %v720 = vperm.slane %v574, 4
        %v721 = vlaneseq
        %v722 = vshrl.u32 %v721, 7
        %724 = vset.pattern.permute.xlu0 %v722
        %725 = vperm.xlu0 %724, %v720
        %v726 = vpop.permute.xlu0 %725
        %v727 = vperm.slane %v574, 5
        %v728 = vlaneseq
        %v729 = vshrl.u32 %v728, 7
        %731 = vset.pattern.permute.xlu0 %v729
        %732 = vperm.xlu0 %731, %v727
        %v733 = vpop.permute.xlu0 %732
        %v734 = vperm.slane %v574, 6
        %v735 = vlaneseq
        %v736 = vshrl.u32 %v735, 7
        %738 = vset.pattern.permute.xlu0 %v736
        %739 = vperm.xlu0 %738, %v734
        %v740 = vpop.permute.xlu0 %739
        %v741 = vperm.slane %v574, 7
        %v742 = vlaneseq
        %v743 = vshrl.u32 %v742, 7
        %745 = vset.pattern.permute.xlu0 %v743
        %746 = vperm.xlu0 %745, %v741
        %v747 = vpop.permute.xlu0 %746
        %v748 = vperm.slane %v575, 0
        %v749 = vlaneseq
        %v750 = vshrl.u32 %v749, 7
        %752 = vset.pattern.permute.xlu0 %v750
        %753 = vperm.xlu0 %752, %v748
        %v754 = vpop.permute.xlu0 %753
        %v755 = vperm.slane %v575, 1
        %v756 = vlaneseq
        %v757 = vshrl.u32 %v756, 7
        %759 = vset.pattern.permute.xlu0 %v757
        %760 = vperm.xlu0 %759, %v755
        %v761 = vpop.permute.xlu0 %760
        %v762 = vperm.slane %v575, 2
        %v763 = vlaneseq
        %v764 = vshrl.u32 %v763, 7
        %766 = vset.pattern.permute.xlu0 %v764
        %767 = vperm.xlu0 %766, %v762
        %v768 = vpop.permute.xlu0 %767
        %v769 = vperm.slane %v575, 3
        %v770 = vlaneseq
        %v771 = vshrl.u32 %v770, 7
        %773 = vset.pattern.permute.xlu0 %v771
        %774 = vperm.xlu0 %773, %v769
        %v775 = vpop.permute.xlu0 %774
        %v776 = vperm.slane %v575, 4
        %v777 = vlaneseq
        %v778 = vshrl.u32 %v777, 7
        %780 = vset.pattern.permute.xlu0 %v778
        %781 = vperm.xlu0 %780, %v776
        %v782 = vpop.permute.xlu0 %781
        %v783 = vperm.slane %v575, 5
        %v784 = vlaneseq
        %v785 = vshrl.u32 %v784, 7
        %787 = vset.pattern.permute.xlu0 %v785
        %788 = vperm.xlu0 %787, %v783
        %v789 = vpop.permute.xlu0 %788
        %v790 = vperm.slane %v575, 6
        %v791 = vlaneseq
        %v792 = vshrl.u32 %v791, 7
        %794 = vset.pattern.permute.xlu0 %v792
        %795 = vperm.xlu0 %794, %v790
        %v796 = vpop.permute.xlu0 %795
        %v797 = vperm.slane %v575, 7
        %v798 = vlaneseq
        %v799 = vshrl.u32 %v798, 7
        %801 = vset.pattern.permute.xlu0 %v799
        %802 = vperm.xlu0 %801, %v797
        %v803 = vpop.permute.xlu0 %802
        %v804 = vperm.slane %v576, 0
        %v805 = vlaneseq
        %v806 = vshrl.u32 %v805, 7
        %808 = vset.pattern.permute.xlu0 %v806
        %809 = vperm.xlu0 %808, %v804
        %v810 = vpop.permute.xlu0 %809
        %v811 = vperm.slane %v576, 1
        %v812 = vlaneseq
        %v813 = vshrl.u32 %v812, 7
        %815 = vset.pattern.permute.xlu0 %v813
        %816 = vperm.xlu0 %815, %v811
        %v817 = vpop.permute.xlu0 %816
        %v818 = vperm.slane %v576, 2
        %v819 = vlaneseq
        %v820 = vshrl.u32 %v819, 7
        %822 = vset.pattern.permute.xlu0 %v820
        %823 = vperm.xlu0 %822, %v818
        %v824 = vpop.permute.xlu0 %823
        %v825 = vperm.slane %v576, 3
        %v826 = vlaneseq
        %v827 = vshrl.u32 %v826, 7
        %829 = vset.pattern.permute.xlu0 %v827
        %830 = vperm.xlu0 %829, %v825
        %v831 = vpop.permute.xlu0 %830
        %v832 = vperm.slane %v576, 4
        %v833 = vlaneseq
        %v834 = vshrl.u32 %v833, 7
        %836 = vset.pattern.permute.xlu0 %v834
        %837 = vperm.xlu0 %836, %v832
        %v838 = vpop.permute.xlu0 %837
        %v839 = vperm.slane %v576, 5
        %v840 = vlaneseq
        %v841 = vshrl.u32 %v840, 7
        %843 = vset.pattern.permute.xlu0 %v841
        %844 = vperm.xlu0 %843, %v839
        %v845 = vpop.permute.xlu0 %844
        %v846 = vperm.slane %v576, 6
        %v847 = vlaneseq
        %v848 = vshrl.u32 %v847, 7
        %850 = vset.pattern.permute.xlu0 %v848
        %851 = vperm.xlu0 %850, %v846
        %v852 = vpop.permute.xlu0 %851
        %v853 = vperm.slane %v576, 7
        %v854 = vlaneseq
        %v855 = vshrl.u32 %v854, 7
        %857 = vset.pattern.permute.xlu0 %v855
        %858 = vperm.xlu0 %857, %v853
        %v859 = vpop.permute.xlu0 %858
        %v860 = vperm.slane %v577, 0
        %v861 = vlaneseq
        %v862 = vshrl.u32 %v861, 7
        %864 = vset.pattern.permute.xlu0 %v862
        %865 = vperm.xlu0 %864, %v860
        %v866 = vpop.permute.xlu0 %865
        %v867 = vperm.slane %v577, 1
        %v868 = vlaneseq
        %v869 = vshrl.u32 %v868, 7
        %871 = vset.pattern.permute.xlu0 %v869
        %872 = vperm.xlu0 %871, %v867
        %v873 = vpop.permute.xlu0 %872
        %v874 = vperm.slane %v577, 2
        %v875 = vlaneseq
        %v876 = vshrl.u32 %v875, 7
        %878 = vset.pattern.permute.xlu0 %v876
        %879 = vperm.xlu0 %878, %v874
        %v880 = vpop.permute.xlu0 %879
        %v881 = vperm.slane %v577, 3
        %v882 = vlaneseq
        %v883 = vshrl.u32 %v882, 7
        %885 = vset.pattern.permute.xlu0 %v883
        %886 = vperm.xlu0 %885, %v881
        %v887 = vpop.permute.xlu0 %886
        %v888 = vperm.slane %v577, 4
        %v889 = vlaneseq
        %v890 = vshrl.u32 %v889, 7
        %892 = vset.pattern.permute.xlu0 %v890
        %893 = vperm.xlu0 %892, %v888
        %v894 = vpop.permute.xlu0 %893
        %v895 = vperm.slane %v577, 5
        %v896 = vlaneseq
        %v897 = vshrl.u32 %v896, 7
        %899 = vset.pattern.permute.xlu0 %v897
        %900 = vperm.xlu0 %899, %v895
        %v901 = vpop.permute.xlu0 %900
        %v902 = vperm.slane %v577, 6
        %v903 = vlaneseq
        %v904 = vshrl.u32 %v903, 7
        %906 = vset.pattern.permute.xlu0 %v904
        %907 = vperm.xlu0 %906, %v902
        %v908 = vpop.permute.xlu0 %907
        %v909 = vperm.slane %v577, 7
        %v910 = vlaneseq
        %v911 = vshrl.u32 %v910, 7
        %913 = vset.pattern.permute.xlu0 %v911
        %914 = vperm.xlu0 %913, %v909
        %v915 = vpop.permute.xlu0 %914
        %v916 = vperm.slane %v578, 0
        %v917 = vlaneseq
        %v918 = vshrl.u32 %v917, 7
        %920 = vset.pattern.permute.xlu0 %v918
        %921 = vperm.xlu0 %920, %v916
        %v922 = vpop.permute.xlu0 %921
        %v923 = vperm.slane %v578, 1
        %v924 = vlaneseq
        %v925 = vshrl.u32 %v924, 7
        %927 = vset.pattern.permute.xlu0 %v925
        %928 = vperm.xlu0 %927, %v923
        %v929 = vpop.permute.xlu0 %928
        %v930 = vperm.slane %v578, 2
        %v931 = vlaneseq
        %v932 = vshrl.u32 %v931, 7
        %934 = vset.pattern.permute.xlu0 %v932
        %935 = vperm.xlu0 %934, %v930
        %v936 = vpop.permute.xlu0 %935
        %v937 = vperm.slane %v578, 3
        %v938 = vlaneseq
        %v939 = vshrl.u32 %v938, 7
        %941 = vset.pattern.permute.xlu0 %v939
        %942 = vperm.xlu0 %941, %v937
        %v943 = vpop.permute.xlu0 %942
        %v944 = vperm.slane %v578, 4
        %v945 = vlaneseq
        %v946 = vshrl.u32 %v945, 7
        %948 = vset.pattern.permute.xlu0 %v946
        %949 = vperm.xlu0 %948, %v944
        %v950 = vpop.permute.xlu0 %949
        %v951 = vperm.slane %v578, 5
        %v952 = vlaneseq
        %v953 = vshrl.u32 %v952, 7
        %955 = vset.pattern.permute.xlu0 %v953
        %956 = vperm.xlu0 %955, %v951
        %v957 = vpop.permute.xlu0 %956
        %v958 = vperm.slane %v578, 6
        %v959 = vlaneseq
        %v960 = vshrl.u32 %v959, 7
        %962 = vset.pattern.permute.xlu0 %v960
        %963 = vperm.xlu0 %962, %v958
        %v964 = vpop.permute.xlu0 %963
        %v965 = vperm.slane %v578, 7
        %v966 = vlaneseq
        %v967 = vshrl.u32 %v966, 7
        %969 = vset.pattern.permute.xlu0 %v967
        %970 = vperm.xlu0 %969, %v965
        %v971 = vpop.permute.xlu0 %970
        %v972 = vperm.slane %v579, 0
        %v973 = vlaneseq
        %v974 = vshrl.u32 %v973, 7
        %976 = vset.pattern.permute.xlu0 %v974
        %977 = vperm.xlu0 %976, %v972
        %v978 = vpop.permute.xlu0 %977
        %v979 = vperm.slane %v579, 1
        %v980 = vlaneseq
        %v981 = vshrl.u32 %v980, 7
        %983 = vset.pattern.permute.xlu0 %v981
        %984 = vperm.xlu0 %983, %v979
        %v985 = vpop.permute.xlu0 %984
        %v986 = vperm.slane %v579, 2
        %v987 = vlaneseq
        %v988 = vshrl.u32 %v987, 7
        %990 = vset.pattern.permute.xlu0 %v988
        %991 = vperm.xlu0 %990, %v986
        %v992 = vpop.permute.xlu0 %991
        %v993 = vperm.slane %v579, 3
        %v994 = vlaneseq
        %v995 = vshrl.u32 %v994, 7
        %997 = vset.pattern.permute.xlu0 %v995
        %998 = vperm.xlu0 %997, %v993
        %v999 = vpop.permute.xlu0 %998
        %v1000 = vperm.slane %v579, 4
        %v1001 = vlaneseq
        %v1002 = vshrl.u32 %v1001, 7
        %1004 = vset.pattern.permute.xlu0 %v1002
        %1005 = vperm.xlu0 %1004, %v1000
        %v1006 = vpop.permute.xlu0 %1005
        %v1007 = vperm.slane %v579, 5
        %v1008 = vlaneseq
        %v1009 = vshrl.u32 %v1008, 7
        %1011 = vset.pattern.permute.xlu0 %v1009
        %1012 = vperm.xlu0 %1011, %v1007
        %v1013 = vpop.permute.xlu0 %1012
        %v1014 = vperm.slane %v579, 6
        %v1015 = vlaneseq
        %v1016 = vshrl.u32 %v1015, 7
        %1018 = vset.pattern.permute.xlu0 %v1016
        %1019 = vperm.xlu0 %1018, %v1014
        %v1020 = vpop.permute.xlu0 %1019
        %v1021 = vperm.slane %v579, 7
        %v1022 = vlaneseq
        %v1023 = vshrl.u32 %v1022, 7
        %1025 = vset.pattern.permute.xlu0 %v1023
        %1026 = vperm.xlu0 %1025, %v1021
        %v1027 = vpop.permute.xlu0 %1026
        %v1036 = vrot.slane %v572, 1
        %v1037 = vrot.slane %v572, 2
        %v1038 = vrot.slane %v572, 3
        %v1039 = vrot.slane %v572, 4
        %v1040 = vrot.slane %v572, 5
        %v1041 = vrot.slane %v572, 6
        %v1042 = vrot.slane %v572, 7
        %v1043 = vrot.slane %v573, 1
        %v1044 = vrot.slane %v573, 2
        %v1045 = vrot.slane %v573, 3
        %v1046 = vrot.slane %v573, 4
        %v1047 = vrot.slane %v573, 5
        %v1048 = vrot.slane %v573, 6
        %v1049 = vrot.slane %v573, 7
        %v1050 = vrot.slane %v574, 1
        %v1051 = vrot.slane %v574, 2
        %v1052 = vrot.slane %v574, 3
        %v1053 = vrot.slane %v574, 4
        %v1054 = vrot.slane %v574, 5
        %v1055 = vrot.slane %v574, 6
        %v1056 = vrot.slane %v574, 7
        %v1057 = vrot.slane %v575, 1
        %v1058 = vrot.slane %v575, 2
        %v1059 = vrot.slane %v575, 3
        %v1060 = vrot.slane %v575, 4
        %v1061 = vrot.slane %v575, 5
        %v1062 = vrot.slane %v575, 6
        %v1063 = vrot.slane %v575, 7
        %v1064 = vrot.slane %v576, 1
        %v1065 = vrot.slane %v576, 2
        %v1066 = vrot.slane %v576, 3
        %v1067 = vrot.slane %v576, 4
        %v1068 = vrot.slane %v576, 5
        %v1069 = vrot.slane %v576, 6
        %v1070 = vrot.slane %v576, 7
        %v1071 = vrot.slane %v577, 1
        %v1072 = vrot.slane %v577, 2
        %v1073 = vrot.slane %v577, 3
        %v1074 = vrot.slane %v577, 4
        %v1075 = vrot.slane %v577, 5
        %v1076 = vrot.slane %v577, 6
        %v1077 = vrot.slane %v577, 7
        %v1078 = vrot.slane %v578, 1
        %v1079 = vrot.slane %v578, 2
        %v1080 = vrot.slane %v578, 3
        %v1081 = vrot.slane %v578, 4
        %v1082 = vrot.slane %v578, 5
        %v1083 = vrot.slane %v578, 6
        %v1084 = vrot.slane %v578, 7
        %v1085 = vrot.slane %v579, 1
        %v1086 = vrot.slane %v579, 2
        %v1087 = vrot.slane %v579, 3
        %v1088 = vrot.slane %v579, 4
        %v1089 = vrot.slane %v579, 5
        %v1090 = vrot.slane %v579, 6
        %v1091 = vrot.slane %v579, 7
        %v1092 = vlaneseq
        %v1093 = vshrl.u32 %v1092, 7
        %v1094 = vlaneseq
        %v1095 = vand.u32 %v1094, 127
        %v1096 = vperm.slane %v572, 0
        %v1097 = vperm.slane %v1036, 0
        %v1098 = vperm.slane %v1037, 0
        %v1099 = vperm.slane %v1038, 0
        %v1100 = vperm.slane %v1039, 0
        %v1101 = vperm.slane %v1040, 0
        %v1102 = vperm.slane %v1041, 0
        %v1103 = vperm.slane %v1042, 0
        %v1104 = vperm.slane %v573, 0
        %v1105 = vperm.slane %v1043, 0
        %v1106 = vperm.slane %v1044, 0
        %v1107 = vperm.slane %v1045, 0
        %v1108 = vperm.slane %v1046, 0
        %v1109 = vperm.slane %v1047, 0
        %v1110 = vperm.slane %v1048, 0
        %v1111 = vperm.slane %v1049, 0
        %v1112 = vperm.slane %v574, 0
        %v1113 = vperm.slane %v1050, 0
        %v1114 = vperm.slane %v1051, 0
        %v1115 = vperm.slane %v1052, 0
        %v1116 = vperm.slane %v1053, 0
        %v1117 = vperm.slane %v1054, 0
        %v1118 = vperm.slane %v1055, 0
        %v1119 = vperm.slane %v1056, 0
        %v1120 = vperm.slane %v575, 0
        %v1121 = vperm.slane %v1057, 0
        %v1122 = vperm.slane %v1058, 0
        %v1123 = vperm.slane %v1059, 0
        %v1124 = vperm.slane %v1060, 0
        %v1125 = vperm.slane %v1061, 0
        %v1126 = vperm.slane %v1062, 0
        %v1127 = vperm.slane %v1063, 0
        %v1128 = vperm.slane %v576, 0
        %v1129 = vperm.slane %v1064, 0
        %v1130 = vperm.slane %v1065, 0
        %v1131 = vperm.slane %v1066, 0
        %v1132 = vperm.slane %v1067, 0
        %v1133 = vperm.slane %v1068, 0
        %v1134 = vperm.slane %v1069, 0
        %v1135 = vperm.slane %v1070, 0
        %v1136 = vperm.slane %v577, 0
        %v1137 = vperm.slane %v1071, 0
        %v1138 = vperm.slane %v1072, 0
        %v1139 = vperm.slane %v1073, 0
        %v1140 = vperm.slane %v1074, 0
        %v1141 = vperm.slane %v1075, 0
        %v1142 = vperm.slane %v1076, 0
        %v1143 = vperm.slane %v1077, 0
        %v1144 = vperm.slane %v578, 0
        %v1145 = vperm.slane %v1078, 0
        %v1146 = vperm.slane %v1079, 0
        %v1147 = vperm.slane %v1080, 0
        %v1148 = vperm.slane %v1081, 0
        %v1149 = vperm.slane %v1082, 0
        %v1150 = vperm.slane %v1083, 0
        %v1151 = vperm.slane %v1084, 0
        %v1152 = vperm.slane %v579, 0
        %v1153 = vperm.slane %v1085, 0
        %v1154 = vperm.slane %v1086, 0
        %v1155 = vperm.slane %v1087, 0
        %v1156 = vperm.slane %v1088, 0
        %v1157 = vperm.slane %v1089, 0
        %v1158 = vperm.slane %v1090, 0
        %v1159 = vperm.slane %v1091, 0
        %vm1224 = vcmp.gt.f32.partialorder %v1096, %v586
        %vm1225 = vcmp.gt.f32.partialorder %v1097, %v593
        %vm1226 = vcmp.gt.f32.partialorder %v1098, %v600
        %vm1227 = vcmp.gt.f32.partialorder %v1099, %v607
        %vm1228 = vcmp.gt.f32.partialorder %v1100, %v614
        %vm1229 = vcmp.gt.f32.partialorder %v1101, %v621
        %vm1230 = vcmp.gt.f32.partialorder %v1102, %v628
        %vm1231 = vcmp.gt.f32.partialorder %v1103, %v635
        %vm1232 = vcmp.gt.f32.partialorder %v1104, %v642
        %vm1233 = vcmp.gt.f32.partialorder %v1105, %v649
        %vm1234 = vcmp.gt.f32.partialorder %v1106, %v656
        %vm1235 = vcmp.gt.f32.partialorder %v1107, %v663
        %vm1236 = vcmp.gt.f32.partialorder %v1108, %v670
        %vm1237 = vcmp.gt.f32.partialorder %v1109, %v677
        %vm1238 = vcmp.gt.f32.partialorder %v1110, %v684
        %vm1239 = vcmp.gt.f32.partialorder %v1111, %v691
        %vm1240 = vcmp.gt.f32.partialorder %v1112, %v698
        %vm1241 = vcmp.gt.f32.partialorder %v1113, %v705
        %vm1242 = vcmp.gt.f32.partialorder %v1114, %v712
        %vm1243 = vcmp.gt.f32.partialorder %v1115, %v719
        %vm1244 = vcmp.gt.f32.partialorder %v1116, %v726
        %vm1245 = vcmp.gt.f32.partialorder %v1117, %v733
        %vm1246 = vcmp.gt.f32.partialorder %v1118, %v740
        %vm1247 = vcmp.gt.f32.partialorder %v1119, %v747
        %vm1248 = vcmp.gt.f32.partialorder %v1120, %v754
        %vm1249 = vcmp.gt.f32.partialorder %v1121, %v761
        %vm1250 = vcmp.gt.f32.partialorder %v1122, %v768
        %vm1251 = vcmp.gt.f32.partialorder %v1123, %v775
        %vm1252 = vcmp.gt.f32.partialorder %v1124, %v782
        %vm1253 = vcmp.gt.f32.partialorder %v1125, %v789
        %vm1254 = vcmp.gt.f32.partialorder %v1126, %v796
        %vm1255 = vcmp.gt.f32.partialorder %v1127, %v803
        %vm1256 = vcmp.gt.f32.partialorder %v1128, %v810
        %vm1257 = vcmp.gt.f32.partialorder %v1129, %v817
        %vm1258 = vcmp.gt.f32.partialorder %v1130, %v824
        %vm1259 = vcmp.gt.f32.partialorder %v1131, %v831
        %vm1260 = vcmp.gt.f32.partialorder %v1132, %v838
        %vm1261 = vcmp.gt.f32.partialorder %v1133, %v845
        %vm1262 = vcmp.gt.f32.partialorder %v1134, %v852
        %vm1263 = vcmp.gt.f32.partialorder %v1135, %v859
        %vm1264 = vcmp.gt.f32.partialorder %v1136, %v866
        %vm1265 = vcmp.gt.f32.partialorder %v1137, %v873
        %vm1266 = vcmp.gt.f32.partialorder %v1138, %v880
        %vm1267 = vcmp.gt.f32.partialorder %v1139, %v887
        %vm1268 = vcmp.gt.f32.partialorder %v1140, %v894
        %vm1269 = vcmp.gt.f32.partialorder %v1141, %v901
        %vm1270 = vcmp.gt.f32.partialorder %v1142, %v908
        %vm1271 = vcmp.gt.f32.partialorder %v1143, %v915
        %vm1272 = vcmp.gt.f32.partialorder %v1144, %v922
        %vm1273 = vcmp.gt.f32.partialorder %v1145, %v929
        %vm1274 = vcmp.gt.f32.partialorder %v1146, %v936
        %vm1275 = vcmp.gt.f32.partialorder %v1147, %v943
        %vm1276 = vcmp.gt.f32.partialorder %v1148, %v950
        %vm1277 = vcmp.gt.f32.partialorder %v1149, %v957
        %vm1278 = vcmp.gt.f32.partialorder %v1150, %v964
        %vm1279 = vcmp.gt.f32.partialorder %v1151, %v971
        %vm1280 = vcmp.gt.f32.partialorder %v1152, %v978
        %vm1281 = vcmp.gt.f32.partialorder %v1153, %v985
        %vm1282 = vcmp.gt.f32.partialorder %v1154, %v992
        %vm1283 = vcmp.gt.f32.partialorder %v1155, %v999
        %vm1284 = vcmp.gt.f32.partialorder %v1156, %v1006
        %vm1285 = vcmp.gt.f32.partialorder %v1157, %v1013
        %vm1286 = vcmp.gt.f32.partialorder %v1158, %v1020
        %vm1287 = vcmp.gt.f32.partialorder %v1159, %v1027
        %vm1288 = vcmp.eq.f32.partialorder %v1096, %v586
        %vm1289 = vcmp.eq.f32.partialorder %v1097, %v593
        %vm1290 = vcmp.eq.f32.partialorder %v1098, %v600
        %vm1291 = vcmp.eq.f32.partialorder %v1099, %v607
        %vm1292 = vcmp.eq.f32.partialorder %v1100, %v614
        %vm1293 = vcmp.eq.f32.partialorder %v1101, %v621
        %vm1294 = vcmp.eq.f32.partialorder %v1102, %v628
        %vm1295 = vcmp.eq.f32.partialorder %v1103, %v635
        %vm1296 = vcmp.eq.f32.partialorder %v1104, %v642
        %vm1297 = vcmp.eq.f32.partialorder %v1105, %v649
        %vm1298 = vcmp.eq.f32.partialorder %v1106, %v656
        %vm1299 = vcmp.eq.f32.partialorder %v1107, %v663
        %vm1300 = vcmp.eq.f32.partialorder %v1108, %v670
        %vm1301 = vcmp.eq.f32.partialorder %v1109, %v677
        %vm1302 = vcmp.eq.f32.partialorder %v1110, %v684
        %vm1303 = vcmp.eq.f32.partialorder %v1111, %v691
        %vm1304 = vcmp.eq.f32.partialorder %v1112, %v698
        %vm1305 = vcmp.eq.f32.partialorder %v1113, %v705
        %vm1306 = vcmp.eq.f32.partialorder %v1114, %v712
        %vm1307 = vcmp.eq.f32.partialorder %v1115, %v719
        %vm1308 = vcmp.eq.f32.partialorder %v1116, %v726
        %vm1309 = vcmp.eq.f32.partialorder %v1117, %v733
        %vm1310 = vcmp.eq.f32.partialorder %v1118, %v740
        %vm1311 = vcmp.eq.f32.partialorder %v1119, %v747
        %vm1312 = vcmp.eq.f32.partialorder %v1120, %v754
        %vm1313 = vcmp.eq.f32.partialorder %v1121, %v761
        %vm1314 = vcmp.eq.f32.partialorder %v1122, %v768
        %vm1315 = vcmp.eq.f32.partialorder %v1123, %v775
        %vm1316 = vcmp.eq.f32.partialorder %v1124, %v782
        %vm1317 = vcmp.eq.f32.partialorder %v1125, %v789
        %vm1318 = vcmp.eq.f32.partialorder %v1126, %v796
        %vm1319 = vcmp.eq.f32.partialorder %v1127, %v803
        %vm1320 = vcmp.eq.f32.partialorder %v1128, %v810
        %vm1321 = vcmp.eq.f32.partialorder %v1129, %v817
        %vm1322 = vcmp.eq.f32.partialorder %v1130, %v824
        %vm1323 = vcmp.eq.f32.partialorder %v1131, %v831
        %vm1324 = vcmp.eq.f32.partialorder %v1132, %v838
        %vm1325 = vcmp.eq.f32.partialorder %v1133, %v845
        %vm1326 = vcmp.eq.f32.partialorder %v1134, %v852
        %vm1327 = vcmp.eq.f32.partialorder %v1135, %v859
        %vm1328 = vcmp.eq.f32.partialorder %v1136, %v866
        %vm1329 = vcmp.eq.f32.partialorder %v1137, %v873
        %vm1330 = vcmp.eq.f32.partialorder %v1138, %v880
        %vm1331 = vcmp.eq.f32.partialorder %v1139, %v887
        %vm1332 = vcmp.eq.f32.partialorder %v1140, %v894
        %vm1333 = vcmp.eq.f32.partialorder %v1141, %v901
        %vm1334 = vcmp.eq.f32.partialorder %v1142, %v908
        %vm1335 = vcmp.eq.f32.partialorder %v1143, %v915
        %vm1336 = vcmp.eq.f32.partialorder %v1144, %v922
        %vm1337 = vcmp.eq.f32.partialorder %v1145, %v929
        %vm1338 = vcmp.eq.f32.partialorder %v1146, %v936
        %vm1339 = vcmp.eq.f32.partialorder %v1147, %v943
        %vm1340 = vcmp.eq.f32.partialorder %v1148, %v950
        %vm1341 = vcmp.eq.f32.partialorder %v1149, %v957
        %vm1342 = vcmp.eq.f32.partialorder %v1150, %v964
        %vm1343 = vcmp.eq.f32.partialorder %v1151, %v971
        %vm1344 = vcmp.eq.f32.partialorder %v1152, %v978
        %vm1345 = vcmp.eq.f32.partialorder %v1153, %v985
        %vm1346 = vcmp.eq.f32.partialorder %v1154, %v992
        %vm1347 = vcmp.eq.f32.partialorder %v1155, %v999
        %vm1348 = vcmp.eq.f32.partialorder %v1156, %v1006
        %vm1349 = vcmp.eq.f32.partialorder %v1157, %v1013
        %vm1350 = vcmp.eq.f32.partialorder %v1158, %v1020
        %vm1351 = vcmp.eq.f32.partialorder %v1159, %v1027
        %vm1352 = vcmp.lt.s32.totalorder %v1095, %v1093
        %vm1353 = vmand %vm1288, %vm1352
        %vm1354 = vmand %vm1289, %vm1352
        %vm1355 = vmand %vm1290, %vm1352
        %vm1356 = vmand %vm1291, %vm1352
        %vm1357 = vmand %vm1292, %vm1352
        %vm1358 = vmand %vm1293, %vm1352
        %vm1359 = vmand %vm1294, %vm1352
        %vm1360 = vmand %vm1295, %vm1352
        %vm1361 = vmand %vm1296, %vm1352
        %vm1362 = vmand %vm1297, %vm1352
        %vm1363 = vmand %vm1298, %vm1352
        %vm1364 = vmand %vm1299, %vm1352
        %vm1365 = vmand %vm1300, %vm1352
        %vm1366 = vmand %vm1301, %vm1352
        %vm1367 = vmand %vm1302, %vm1352
        %vm1368 = vmand %vm1303, %vm1352
        %vm1369 = vmand %vm1304, %vm1352
        %vm1370 = vmand %vm1305, %vm1352
        %vm1371 = vmand %vm1306, %vm1352
        %vm1372 = vmand %vm1307, %vm1352
        %vm1373 = vmand %vm1308, %vm1352
        %vm1374 = vmand %vm1309, %vm1352
        %vm1375 = vmand %vm1310, %vm1352
        %vm1376 = vmand %vm1311, %vm1352
        %vm1377 = vmand %vm1312, %vm1352
        %vm1378 = vmand %vm1313, %vm1352
        %vm1379 = vmand %vm1314, %vm1352
        %vm1380 = vmand %vm1315, %vm1352
        %vm1381 = vmand %vm1316, %vm1352
        %vm1382 = vmand %vm1317, %vm1352
        %vm1383 = vmand %vm1318, %vm1352
        %vm1384 = vmand %vm1319, %vm1352
        %vm1385 = vmand %vm1320, %vm1352
        %vm1386 = vmand %vm1321, %vm1352
        %vm1387 = vmand %vm1322, %vm1352
        %vm1388 = vmand %vm1323, %vm1352
        %vm1389 = vmand %vm1324, %vm1352
        %vm1390 = vmand %vm1325, %vm1352
        %vm1391 = vmand %vm1326, %vm1352
        %vm1392 = vmand %vm1327, %vm1352
        %vm1393 = vmand %vm1328, %vm1352
        %vm1394 = vmand %vm1329, %vm1352
        %vm1395 = vmand %vm1330, %vm1352
        %vm1396 = vmand %vm1331, %vm1352
        %vm1397 = vmand %vm1332, %vm1352
        %vm1398 = vmand %vm1333, %vm1352
        %vm1399 = vmand %vm1334, %vm1352
        %vm1400 = vmand %vm1335, %vm1352
        %vm1401 = vmand %vm1336, %vm1352
        %vm1402 = vmand %vm1337, %vm1352
        %vm1403 = vmand %vm1338, %vm1352
        %vm1404 = vmand %vm1339, %vm1352
        %vm1405 = vmand %vm1340, %vm1352
        %vm1406 = vmand %vm1341, %vm1352
        %vm1407 = vmand %vm1342, %vm1352
        %vm1408 = vmand %vm1343, %vm1352
        %vm1409 = vmand %vm1344, %vm1352
        %vm1410 = vmand %vm1345, %vm1352
        %vm1411 = vmand %vm1346, %vm1352
        %vm1412 = vmand %vm1347, %vm1352
        %vm1413 = vmand %vm1348, %vm1352
        %vm1414 = vmand %vm1349, %vm1352
        %vm1415 = vmand %vm1350, %vm1352
        %vm1416 = vmand %vm1351, %vm1352
        %vm1417 = vmor %vm1224, %vm1353
        %vm1418 = vmor %vm1225, %vm1354
        %vm1419 = vmor %vm1226, %vm1355
        %vm1420 = vmor %vm1227, %vm1356
        %vm1421 = vmor %vm1228, %vm1357
        %vm1422 = vmor %vm1229, %vm1358
        %vm1423 = vmor %vm1230, %vm1359
        %vm1424 = vmor %vm1231, %vm1360
        %vm1425 = vmor %vm1232, %vm1361
        %vm1426 = vmor %vm1233, %vm1362
        %vm1427 = vmor %vm1234, %vm1363
        %vm1428 = vmor %vm1235, %vm1364
        %vm1429 = vmor %vm1236, %vm1365
        %vm1430 = vmor %vm1237, %vm1366
        %vm1431 = vmor %vm1238, %vm1367
        %vm1432 = vmor %vm1239, %vm1368
        %vm1433 = vmor %vm1240, %vm1369
        %vm1434 = vmor %vm1241, %vm1370
        %vm1435 = vmor %vm1242, %vm1371
        %vm1436 = vmor %vm1243, %vm1372
        %vm1437 = vmor %vm1244, %vm1373
        %vm1438 = vmor %vm1245, %vm1374
        %vm1439 = vmor %vm1246, %vm1375
        %vm1440 = vmor %vm1247, %vm1376
        %vm1441 = vmor %vm1248, %vm1377
        %vm1442 = vmor %vm1249, %vm1378
        %vm1443 = vmor %vm1250, %vm1379
        %vm1444 = vmor %vm1251, %vm1380
        %vm1445 = vmor %vm1252, %vm1381
        %vm1446 = vmor %vm1253, %vm1382
        %vm1447 = vmor %vm1254, %vm1383
        %vm1448 = vmor %vm1255, %vm1384
        %vm1449 = vmor %vm1256, %vm1385
        %vm1450 = vmor %vm1257, %vm1386
        %vm1451 = vmor %vm1258, %vm1387
        %vm1452 = vmor %vm1259, %vm1388
        %vm1453 = vmor %vm1260, %vm1389
        %vm1454 = vmor %vm1261, %vm1390
        %vm1455 = vmor %vm1262, %vm1391
        %vm1456 = vmor %vm1263, %vm1392
        %vm1457 = vmor %vm1264, %vm1393
        %vm1458 = vmor %vm1265, %vm1394
        %vm1459 = vmor %vm1266, %vm1395
        %vm1460 = vmor %vm1267, %vm1396
        %vm1461 = vmor %vm1268, %vm1397
        %vm1462 = vmor %vm1269, %vm1398
        %vm1463 = vmor %vm1270, %vm1399
        %vm1464 = vmor %vm1271, %vm1400
        %vm1465 = vmor %vm1272, %vm1401
        %vm1466 = vmor %vm1273, %vm1402
        %vm1467 = vmor %vm1274, %vm1403
        %vm1468 = vmor %vm1275, %vm1404
        %vm1469 = vmor %vm1276, %vm1405
        %vm1470 = vmor %vm1277, %vm1406
        %vm1471 = vmor %vm1278, %vm1407
        %vm1472 = vmor %vm1279, %vm1408
        %vm1473 = vmor %vm1280, %vm1409
        %vm1474 = vmor %vm1281, %vm1410
        %vm1475 = vmor %vm1282, %vm1411
        %vm1476 = vmor %vm1283, %vm1412
        %vm1477 = vmor %vm1284, %vm1413
        %vm1478 = vmor %vm1285, %vm1414
        %vm1479 = vmor %vm1286, %vm1415
        %vm1480 = vmor %vm1287, %vm1416
        %v1481 = vsel %vm1417, 1, 0
        %v1482 = vsel %vm1418, 1, 0
        %v1483 = vsel %vm1419, 1, 0
        %v1484 = vsel %vm1420, 1, 0
        %v1485 = vsel %vm1421, 1, 0
        %v1486 = vsel %vm1422, 1, 0
        %v1487 = vsel %vm1423, 1, 0
        %v1488 = vsel %vm1424, 1, 0
        %v1489 = vsel %vm1425, 1, 0
        %v1490 = vsel %vm1426, 1, 0
        %v1491 = vsel %vm1427, 1, 0
        %v1492 = vsel %vm1428, 1, 0
        %v1493 = vsel %vm1429, 1, 0
        %v1494 = vsel %vm1430, 1, 0
        %v1495 = vsel %vm1431, 1, 0
        %v1496 = vsel %vm1432, 1, 0
        %v1497 = vsel %vm1433, 1, 0
        %v1498 = vsel %vm1434, 1, 0
        %v1499 = vsel %vm1435, 1, 0
        %v1500 = vsel %vm1436, 1, 0
        %v1501 = vsel %vm1437, 1, 0
        %v1502 = vsel %vm1438, 1, 0
        %v1503 = vsel %vm1439, 1, 0
        %v1504 = vsel %vm1440, 1, 0
        %v1505 = vsel %vm1441, 1, 0
        %v1506 = vsel %vm1442, 1, 0
        %v1507 = vsel %vm1443, 1, 0
        %v1508 = vsel %vm1444, 1, 0
        %v1509 = vsel %vm1445, 1, 0
        %v1510 = vsel %vm1446, 1, 0
        %v1511 = vsel %vm1447, 1, 0
        %v1512 = vsel %vm1448, 1, 0
        %v1513 = vsel %vm1449, 1, 0
        %v1514 = vsel %vm1450, 1, 0
        %v1515 = vsel %vm1451, 1, 0
        %v1516 = vsel %vm1452, 1, 0
        %v1517 = vsel %vm1453, 1, 0
        %v1518 = vsel %vm1454, 1, 0
        %v1519 = vsel %vm1455, 1, 0
        %v1520 = vsel %vm1456, 1, 0
        %v1521 = vsel %vm1457, 1, 0
        %v1522 = vsel %vm1458, 1, 0
        %v1523 = vsel %vm1459, 1, 0
        %v1524 = vsel %vm1460, 1, 0
        %v1525 = vsel %vm1461, 1, 0
        %v1526 = vsel %vm1462, 1, 0
        %v1527 = vsel %vm1463, 1, 0
        %v1528 = vsel %vm1464, 1, 0
        %v1529 = vsel %vm1465, 1, 0
        %v1530 = vsel %vm1466, 1, 0
        %v1531 = vsel %vm1467, 1, 0
        %v1532 = vsel %vm1468, 1, 0
        %v1533 = vsel %vm1469, 1, 0
        %v1534 = vsel %vm1470, 1, 0
        %v1535 = vsel %vm1471, 1, 0
        %v1536 = vsel %vm1472, 1, 0
        %v1537 = vsel %vm1473, 1, 0
        %v1538 = vsel %vm1474, 1, 0
        %v1539 = vsel %vm1475, 1, 0
        %v1540 = vsel %vm1476, 1, 0
        %v1541 = vsel %vm1477, 1, 0
        %v1542 = vsel %vm1478, 1, 0
        %v1543 = vsel %vm1479, 1, 0
        %v1544 = vsel %vm1480, 1, 0
        %v1545 = vsel %vm311, %v1481, 0
        %v1546 = vand.u32 %v1545, 65535
        %v1547 = vshrl.u32 %v1545, 16
        %v1548 = vcvt.s32.f32 %v1546
        %v1549 = vcvt.s32.f32 %v1547
        %1550 = vadd.xlane.f32.xlu0 %v1548
        %v1551 = vpop.xlane.xlu0 %1550
        %1552 = vadd.xlane.f32.xlu0 %v1549
        %v1553 = vpop.xlane.xlu0 %1552
        %v1554 = vcvt.f32.s32 %v1551
        %v1555 = vcvt.f32.s32 %v1553
        %v1556 = vshll.u32 %v1555, 16
        %v1557 = vadd.s32 %v1556, %v1554
        %v1558 = vsel %vm311, %v1482, 0
        %v1559 = vand.u32 %v1558, 65535
        %v1560 = vshrl.u32 %v1558, 16
        %v1561 = vcvt.s32.f32 %v1559
        %v1562 = vcvt.s32.f32 %v1560
        %1563 = vadd.xlane.f32.xlu0 %v1561
        %v1564 = vpop.xlane.xlu0 %1563
        %1565 = vadd.xlane.f32.xlu0 %v1562
        %v1566 = vpop.xlane.xlu0 %1565
        %v1567 = vcvt.f32.s32 %v1564
        %v1568 = vcvt.f32.s32 %v1566
        %v1569 = vshll.u32 %v1568, 16
        %v1570 = vadd.s32 %v1569, %v1567
        %v1571 = vsel %vm311, %v1483, 0
        %v1572 = vand.u32 %v1571, 65535
        %v1573 = vshrl.u32 %v1571, 16
        %v1574 = vcvt.s32.f32 %v1572
        %v1575 = vcvt.s32.f32 %v1573
        %1576 = vadd.xlane.f32.xlu0 %v1574
        %v1577 = vpop.xlane.xlu0 %1576
        %1578 = vadd.xlane.f32.xlu0 %v1575
        %v1579 = vpop.xlane.xlu0 %1578
        %v1580 = vcvt.f32.s32 %v1577
        %v1581 = vcvt.f32.s32 %v1579
        %v1582 = vshll.u32 %v1581, 16
        %v1583 = vadd.s32 %v1582, %v1580
        %v1584 = vsel %vm311, %v1484, 0
        %v1585 = vand.u32 %v1584, 65535
        %v1586 = vshrl.u32 %v1584, 16
        %v1587 = vcvt.s32.f32 %v1585
        %v1588 = vcvt.s32.f32 %v1586
        %1589 = vadd.xlane.f32.xlu0 %v1587
        %v1590 = vpop.xlane.xlu0 %1589
        %1591 = vadd.xlane.f32.xlu0 %v1588
        %v1592 = vpop.xlane.xlu0 %1591
        %v1593 = vcvt.f32.s32 %v1590
        %v1594 = vcvt.f32.s32 %v1592
        %v1595 = vshll.u32 %v1594, 16
        %v1596 = vadd.s32 %v1595, %v1593
        %v1597 = vsel %vm311, %v1485, 0
        %v1598 = vand.u32 %v1597, 65535
        %v1599 = vshrl.u32 %v1597, 16
        %v1600 = vcvt.s32.f32 %v1598
        %v1601 = vcvt.s32.f32 %v1599
        %1602 = vadd.xlane.f32.xlu0 %v1600
        %v1603 = vpop.xlane.xlu0 %1602
        %1604 = vadd.xlane.f32.xlu0 %v1601
        %v1605 = vpop.xlane.xlu0 %1604
        %v1606 = vcvt.f32.s32 %v1603
        %v1607 = vcvt.f32.s32 %v1605
        %v1608 = vshll.u32 %v1607, 16
        %v1609 = vadd.s32 %v1608, %v1606
        %v1610 = vsel %vm311, %v1486, 0
        %v1611 = vand.u32 %v1610, 65535
        %v1612 = vshrl.u32 %v1610, 16
        %v1613 = vcvt.s32.f32 %v1611
        %v1614 = vcvt.s32.f32 %v1612
        %1615 = vadd.xlane.f32.xlu0 %v1613
        %v1616 = vpop.xlane.xlu0 %1615
        %1617 = vadd.xlane.f32.xlu0 %v1614
        %v1618 = vpop.xlane.xlu0 %1617
        %v1619 = vcvt.f32.s32 %v1616
        %v1620 = vcvt.f32.s32 %v1618
        %v1621 = vshll.u32 %v1620, 16
        %v1622 = vadd.s32 %v1621, %v1619
        %v1623 = vsel %vm311, %v1487, 0
        %v1624 = vand.u32 %v1623, 65535
        %v1625 = vshrl.u32 %v1623, 16
        %v1626 = vcvt.s32.f32 %v1624
        %v1627 = vcvt.s32.f32 %v1625
        %1628 = vadd.xlane.f32.xlu0 %v1626
        %v1629 = vpop.xlane.xlu0 %1628
        %1630 = vadd.xlane.f32.xlu0 %v1627
        %v1631 = vpop.xlane.xlu0 %1630
        %v1632 = vcvt.f32.s32 %v1629
        %v1633 = vcvt.f32.s32 %v1631
        %v1634 = vshll.u32 %v1633, 16
        %v1635 = vadd.s32 %v1634, %v1632
        %v1636 = vsel %vm311, %v1488, 0
        %v1637 = vand.u32 %v1636, 65535
        %v1638 = vshrl.u32 %v1636, 16
        %v1639 = vcvt.s32.f32 %v1637
        %v1640 = vcvt.s32.f32 %v1638
        %1641 = vadd.xlane.f32.xlu0 %v1639
        %v1642 = vpop.xlane.xlu0 %1641
        %1643 = vadd.xlane.f32.xlu0 %v1640
        %v1644 = vpop.xlane.xlu0 %1643
        %v1645 = vcvt.f32.s32 %v1642
        %v1646 = vcvt.f32.s32 %v1644
        %v1647 = vshll.u32 %v1646, 16
        %v1648 = vadd.s32 %v1647, %v1645
        %v1649 = vsel %vm311, %v1489, 0
        %v1650 = vand.u32 %v1649, 65535
        %v1651 = vshrl.u32 %v1649, 16
        %v1652 = vcvt.s32.f32 %v1650
        %v1653 = vcvt.s32.f32 %v1651
        %1654 = vadd.xlane.f32.xlu0 %v1652
        %v1655 = vpop.xlane.xlu0 %1654
        %1656 = vadd.xlane.f32.xlu0 %v1653
        %v1657 = vpop.xlane.xlu0 %1656
        %v1658 = vcvt.f32.s32 %v1655
        %v1659 = vcvt.f32.s32 %v1657
        %v1660 = vshll.u32 %v1659, 16
        %v1661 = vadd.s32 %v1660, %v1658
        %v1662 = vsel %vm311, %v1490, 0
        %v1663 = vand.u32 %v1662, 65535
        %v1664 = vshrl.u32 %v1662, 16
        %v1665 = vcvt.s32.f32 %v1663
        %v1666 = vcvt.s32.f32 %v1664
        %1667 = vadd.xlane.f32.xlu0 %v1665
        %v1668 = vpop.xlane.xlu0 %1667
        %1669 = vadd.xlane.f32.xlu0 %v1666
        %v1670 = vpop.xlane.xlu0 %1669
        %v1671 = vcvt.f32.s32 %v1668
        %v1672 = vcvt.f32.s32 %v1670
        %v1673 = vshll.u32 %v1672, 16
        %v1674 = vadd.s32 %v1673, %v1671
        %v1675 = vsel %vm311, %v1491, 0
        %v1676 = vand.u32 %v1675, 65535
        %v1677 = vshrl.u32 %v1675, 16
        %v1678 = vcvt.s32.f32 %v1676
        %v1679 = vcvt.s32.f32 %v1677
        %1680 = vadd.xlane.f32.xlu0 %v1678
        %v1681 = vpop.xlane.xlu0 %1680
        %1682 = vadd.xlane.f32.xlu0 %v1679
        %v1683 = vpop.xlane.xlu0 %1682
        %v1684 = vcvt.f32.s32 %v1681
        %v1685 = vcvt.f32.s32 %v1683
        %v1686 = vshll.u32 %v1685, 16
        %v1687 = vadd.s32 %v1686, %v1684
        %v1688 = vsel %vm311, %v1492, 0
        %v1689 = vand.u32 %v1688, 65535
        %v1690 = vshrl.u32 %v1688, 16
        %v1691 = vcvt.s32.f32 %v1689
        %v1692 = vcvt.s32.f32 %v1690
        %1693 = vadd.xlane.f32.xlu0 %v1691
        %v1694 = vpop.xlane.xlu0 %1693
        %1695 = vadd.xlane.f32.xlu0 %v1692
        %v1696 = vpop.xlane.xlu0 %1695
        %v1697 = vcvt.f32.s32 %v1694
        %v1698 = vcvt.f32.s32 %v1696
        %v1699 = vshll.u32 %v1698, 16
        %v1700 = vadd.s32 %v1699, %v1697
        %v1701 = vsel %vm311, %v1493, 0
        %v1702 = vand.u32 %v1701, 65535
        %v1703 = vshrl.u32 %v1701, 16
        %v1704 = vcvt.s32.f32 %v1702
        %v1705 = vcvt.s32.f32 %v1703
        %1706 = vadd.xlane.f32.xlu0 %v1704
        %v1707 = vpop.xlane.xlu0 %1706
        %1708 = vadd.xlane.f32.xlu0 %v1705
        %v1709 = vpop.xlane.xlu0 %1708
        %v1710 = vcvt.f32.s32 %v1707
        %v1711 = vcvt.f32.s32 %v1709
        %v1712 = vshll.u32 %v1711, 16
        %v1713 = vadd.s32 %v1712, %v1710
        %v1714 = vsel %vm311, %v1494, 0
        %v1715 = vand.u32 %v1714, 65535
        %v1716 = vshrl.u32 %v1714, 16
        %v1717 = vcvt.s32.f32 %v1715
        %v1718 = vcvt.s32.f32 %v1716
        %1719 = vadd.xlane.f32.xlu0 %v1717
        %v1720 = vpop.xlane.xlu0 %1719
        %1721 = vadd.xlane.f32.xlu0 %v1718
        %v1722 = vpop.xlane.xlu0 %1721
        %v1723 = vcvt.f32.s32 %v1720
        %v1724 = vcvt.f32.s32 %v1722
        %v1725 = vshll.u32 %v1724, 16
        %v1726 = vadd.s32 %v1725, %v1723
        %v1727 = vsel %vm311, %v1495, 0
        %v1728 = vand.u32 %v1727, 65535
        %v1729 = vshrl.u32 %v1727, 16
        %v1730 = vcvt.s32.f32 %v1728
        %v1731 = vcvt.s32.f32 %v1729
        %1732 = vadd.xlane.f32.xlu0 %v1730
        %v1733 = vpop.xlane.xlu0 %1732
        %1734 = vadd.xlane.f32.xlu0 %v1731
        %v1735 = vpop.xlane.xlu0 %1734
        %v1736 = vcvt.f32.s32 %v1733
        %v1737 = vcvt.f32.s32 %v1735
        %v1738 = vshll.u32 %v1737, 16
        %v1739 = vadd.s32 %v1738, %v1736
        %v1740 = vsel %vm311, %v1496, 0
        %v1741 = vand.u32 %v1740, 65535
        %v1742 = vshrl.u32 %v1740, 16
        %v1743 = vcvt.s32.f32 %v1741
        %v1744 = vcvt.s32.f32 %v1742
        %1745 = vadd.xlane.f32.xlu0 %v1743
        %v1746 = vpop.xlane.xlu0 %1745
        %1747 = vadd.xlane.f32.xlu0 %v1744
        %v1748 = vpop.xlane.xlu0 %1747
        %v1749 = vcvt.f32.s32 %v1746
        %v1750 = vcvt.f32.s32 %v1748
        %v1751 = vshll.u32 %v1750, 16
        %v1752 = vadd.s32 %v1751, %v1749
        %v1753 = vsel %vm311, %v1497, 0
        %v1754 = vand.u32 %v1753, 65535
        %v1755 = vshrl.u32 %v1753, 16
        %v1756 = vcvt.s32.f32 %v1754
        %v1757 = vcvt.s32.f32 %v1755
        %1758 = vadd.xlane.f32.xlu0 %v1756
        %v1759 = vpop.xlane.xlu0 %1758
        %1760 = vadd.xlane.f32.xlu0 %v1757
        %v1761 = vpop.xlane.xlu0 %1760
        %v1762 = vcvt.f32.s32 %v1759
        %v1763 = vcvt.f32.s32 %v1761
        %v1764 = vshll.u32 %v1763, 16
        %v1765 = vadd.s32 %v1764, %v1762
        %v1766 = vsel %vm311, %v1498, 0
        %v1767 = vand.u32 %v1766, 65535
        %v1768 = vshrl.u32 %v1766, 16
        %v1769 = vcvt.s32.f32 %v1767
        %v1770 = vcvt.s32.f32 %v1768
        %1771 = vadd.xlane.f32.xlu0 %v1769
        %v1772 = vpop.xlane.xlu0 %1771
        %1773 = vadd.xlane.f32.xlu0 %v1770
        %v1774 = vpop.xlane.xlu0 %1773
        %v1775 = vcvt.f32.s32 %v1772
        %v1776 = vcvt.f32.s32 %v1774
        %v1777 = vshll.u32 %v1776, 16
        %v1778 = vadd.s32 %v1777, %v1775
        %v1779 = vsel %vm311, %v1499, 0
        %v1780 = vand.u32 %v1779, 65535
        %v1781 = vshrl.u32 %v1779, 16
        %v1782 = vcvt.s32.f32 %v1780
        %v1783 = vcvt.s32.f32 %v1781
        %1784 = vadd.xlane.f32.xlu0 %v1782
        %v1785 = vpop.xlane.xlu0 %1784
        %1786 = vadd.xlane.f32.xlu0 %v1783
        %v1787 = vpop.xlane.xlu0 %1786
        %v1788 = vcvt.f32.s32 %v1785
        %v1789 = vcvt.f32.s32 %v1787
        %v1790 = vshll.u32 %v1789, 16
        %v1791 = vadd.s32 %v1790, %v1788
        %v1792 = vsel %vm311, %v1500, 0
        %v1793 = vand.u32 %v1792, 65535
        %v1794 = vshrl.u32 %v1792, 16
        %v1795 = vcvt.s32.f32 %v1793
        %v1796 = vcvt.s32.f32 %v1794
        %1797 = vadd.xlane.f32.xlu0 %v1795
        %v1798 = vpop.xlane.xlu0 %1797
        %1799 = vadd.xlane.f32.xlu0 %v1796
        %v1800 = vpop.xlane.xlu0 %1799
        %v1801 = vcvt.f32.s32 %v1798
        %v1802 = vcvt.f32.s32 %v1800
        %v1803 = vshll.u32 %v1802, 16
        %v1804 = vadd.s32 %v1803, %v1801
        %v1805 = vsel %vm311, %v1501, 0
        %v1806 = vand.u32 %v1805, 65535
        %v1807 = vshrl.u32 %v1805, 16
        %v1808 = vcvt.s32.f32 %v1806
        %v1809 = vcvt.s32.f32 %v1807
        %1810 = vadd.xlane.f32.xlu0 %v1808
        %v1811 = vpop.xlane.xlu0 %1810
        %1812 = vadd.xlane.f32.xlu0 %v1809
        %v1813 = vpop.xlane.xlu0 %1812
        %v1814 = vcvt.f32.s32 %v1811
        %v1815 = vcvt.f32.s32 %v1813
        %v1816 = vshll.u32 %v1815, 16
        %v1817 = vadd.s32 %v1816, %v1814
        %v1818 = vsel %vm311, %v1502, 0
        %v1819 = vand.u32 %v1818, 65535
        %v1820 = vshrl.u32 %v1818, 16
        %v1821 = vcvt.s32.f32 %v1819
        %v1822 = vcvt.s32.f32 %v1820
        %1823 = vadd.xlane.f32.xlu0 %v1821
        %v1824 = vpop.xlane.xlu0 %1823
        %1825 = vadd.xlane.f32.xlu0 %v1822
        %v1826 = vpop.xlane.xlu0 %1825
        %v1827 = vcvt.f32.s32 %v1824
        %v1828 = vcvt.f32.s32 %v1826
        %v1829 = vshll.u32 %v1828, 16
        %v1830 = vadd.s32 %v1829, %v1827
        %v1831 = vsel %vm311, %v1503, 0
        %v1832 = vand.u32 %v1831, 65535
        %v1833 = vshrl.u32 %v1831, 16
        %v1834 = vcvt.s32.f32 %v1832
        %v1835 = vcvt.s32.f32 %v1833
        %1836 = vadd.xlane.f32.xlu0 %v1834
        %v1837 = vpop.xlane.xlu0 %1836
        %1838 = vadd.xlane.f32.xlu0 %v1835
        %v1839 = vpop.xlane.xlu0 %1838
        %v1840 = vcvt.f32.s32 %v1837
        %v1841 = vcvt.f32.s32 %v1839
        %v1842 = vshll.u32 %v1841, 16
        %v1843 = vadd.s32 %v1842, %v1840
        %v1844 = vsel %vm311, %v1504, 0
        %v1845 = vand.u32 %v1844, 65535
        %v1846 = vshrl.u32 %v1844, 16
        %v1847 = vcvt.s32.f32 %v1845
        %v1848 = vcvt.s32.f32 %v1846
        %1849 = vadd.xlane.f32.xlu0 %v1847
        %v1850 = vpop.xlane.xlu0 %1849
        %1851 = vadd.xlane.f32.xlu0 %v1848
        %v1852 = vpop.xlane.xlu0 %1851
        %v1853 = vcvt.f32.s32 %v1850
        %v1854 = vcvt.f32.s32 %v1852
        %v1855 = vshll.u32 %v1854, 16
        %v1856 = vadd.s32 %v1855, %v1853
        %v1857 = vsel %vm311, %v1505, 0
        %v1858 = vand.u32 %v1857, 65535
        %v1859 = vshrl.u32 %v1857, 16
        %v1860 = vcvt.s32.f32 %v1858
        %v1861 = vcvt.s32.f32 %v1859
        %1862 = vadd.xlane.f32.xlu0 %v1860
        %v1863 = vpop.xlane.xlu0 %1862
        %1864 = vadd.xlane.f32.xlu0 %v1861
        %v1865 = vpop.xlane.xlu0 %1864
        %v1866 = vcvt.f32.s32 %v1863
        %v1867 = vcvt.f32.s32 %v1865
        %v1868 = vshll.u32 %v1867, 16
        %v1869 = vadd.s32 %v1868, %v1866
        %v1870 = vsel %vm311, %v1506, 0
        %v1871 = vand.u32 %v1870, 65535
        %v1872 = vshrl.u32 %v1870, 16
        %v1873 = vcvt.s32.f32 %v1871
        %v1874 = vcvt.s32.f32 %v1872
        %1875 = vadd.xlane.f32.xlu0 %v1873
        %v1876 = vpop.xlane.xlu0 %1875
        %1877 = vadd.xlane.f32.xlu0 %v1874
        %v1878 = vpop.xlane.xlu0 %1877
        %v1879 = vcvt.f32.s32 %v1876
        %v1880 = vcvt.f32.s32 %v1878
        %v1881 = vshll.u32 %v1880, 16
        %v1882 = vadd.s32 %v1881, %v1879
        %v1883 = vsel %vm311, %v1507, 0
        %v1884 = vand.u32 %v1883, 65535
        %v1885 = vshrl.u32 %v1883, 16
        %v1886 = vcvt.s32.f32 %v1884
        %v1887 = vcvt.s32.f32 %v1885
        %1888 = vadd.xlane.f32.xlu0 %v1886
        %v1889 = vpop.xlane.xlu0 %1888
        %1890 = vadd.xlane.f32.xlu0 %v1887
        %v1891 = vpop.xlane.xlu0 %1890
        %v1892 = vcvt.f32.s32 %v1889
        %v1893 = vcvt.f32.s32 %v1891
        %v1894 = vshll.u32 %v1893, 16
        %v1895 = vadd.s32 %v1894, %v1892
        %v1896 = vsel %vm311, %v1508, 0
        %v1897 = vand.u32 %v1896, 65535
        %v1898 = vshrl.u32 %v1896, 16
        %v1899 = vcvt.s32.f32 %v1897
        %v1900 = vcvt.s32.f32 %v1898
        %1901 = vadd.xlane.f32.xlu0 %v1899
        %v1902 = vpop.xlane.xlu0 %1901
        %1903 = vadd.xlane.f32.xlu0 %v1900
        %v1904 = vpop.xlane.xlu0 %1903
        %v1905 = vcvt.f32.s32 %v1902
        %v1906 = vcvt.f32.s32 %v1904
        %v1907 = vshll.u32 %v1906, 16
        %v1908 = vadd.s32 %v1907, %v1905
        %v1909 = vsel %vm311, %v1509, 0
        %v1910 = vand.u32 %v1909, 65535
        %v1911 = vshrl.u32 %v1909, 16
        %v1912 = vcvt.s32.f32 %v1910
        %v1913 = vcvt.s32.f32 %v1911
        %1914 = vadd.xlane.f32.xlu0 %v1912
        %v1915 = vpop.xlane.xlu0 %1914
        %1916 = vadd.xlane.f32.xlu0 %v1913
        %v1917 = vpop.xlane.xlu0 %1916
        %v1918 = vcvt.f32.s32 %v1915
        %v1919 = vcvt.f32.s32 %v1917
        %v1920 = vshll.u32 %v1919, 16
        %v1921 = vadd.s32 %v1920, %v1918
        %v1922 = vsel %vm311, %v1510, 0
        %v1923 = vand.u32 %v1922, 65535
        %v1924 = vshrl.u32 %v1922, 16
        %v1925 = vcvt.s32.f32 %v1923
        %v1926 = vcvt.s32.f32 %v1924
        %1927 = vadd.xlane.f32.xlu0 %v1925
        %v1928 = vpop.xlane.xlu0 %1927
        %1929 = vadd.xlane.f32.xlu0 %v1926
        %v1930 = vpop.xlane.xlu0 %1929
        %v1931 = vcvt.f32.s32 %v1928
        %v1932 = vcvt.f32.s32 %v1930
        %v1933 = vshll.u32 %v1932, 16
        %v1934 = vadd.s32 %v1933, %v1931
        %v1935 = vsel %vm311, %v1511, 0
        %v1936 = vand.u32 %v1935, 65535
        %v1937 = vshrl.u32 %v1935, 16
        %v1938 = vcvt.s32.f32 %v1936
        %v1939 = vcvt.s32.f32 %v1937
        %1940 = vadd.xlane.f32.xlu0 %v1938
        %v1941 = vpop.xlane.xlu0 %1940
        %1942 = vadd.xlane.f32.xlu0 %v1939
        %v1943 = vpop.xlane.xlu0 %1942
        %v1944 = vcvt.f32.s32 %v1941
        %v1945 = vcvt.f32.s32 %v1943
        %v1946 = vshll.u32 %v1945, 16
        %v1947 = vadd.s32 %v1946, %v1944
        %v1948 = vsel %vm311, %v1512, 0
        %v1949 = vand.u32 %v1948, 65535
        %v1950 = vshrl.u32 %v1948, 16
        %v1951 = vcvt.s32.f32 %v1949
        %v1952 = vcvt.s32.f32 %v1950
        %1953 = vadd.xlane.f32.xlu0 %v1951
        %v1954 = vpop.xlane.xlu0 %1953
        %1955 = vadd.xlane.f32.xlu0 %v1952
        %v1956 = vpop.xlane.xlu0 %1955
        %v1957 = vcvt.f32.s32 %v1954
        %v1958 = vcvt.f32.s32 %v1956
        %v1959 = vshll.u32 %v1958, 16
        %v1960 = vadd.s32 %v1959, %v1957
        %v1961 = vsel %vm311, %v1513, 0
        %v1962 = vand.u32 %v1961, 65535
        %v1963 = vshrl.u32 %v1961, 16
        %v1964 = vcvt.s32.f32 %v1962
        %v1965 = vcvt.s32.f32 %v1963
        %1966 = vadd.xlane.f32.xlu0 %v1964
        %v1967 = vpop.xlane.xlu0 %1966
        %1968 = vadd.xlane.f32.xlu0 %v1965
        %v1969 = vpop.xlane.xlu0 %1968
        %v1970 = vcvt.f32.s32 %v1967
        %v1971 = vcvt.f32.s32 %v1969
        %v1972 = vshll.u32 %v1971, 16
        %v1973 = vadd.s32 %v1972, %v1970
        %v1974 = vsel %vm311, %v1514, 0
        %v1975 = vand.u32 %v1974, 65535
        %v1976 = vshrl.u32 %v1974, 16
        %v1977 = vcvt.s32.f32 %v1975
        %v1978 = vcvt.s32.f32 %v1976
        %1979 = vadd.xlane.f32.xlu0 %v1977
        %v1980 = vpop.xlane.xlu0 %1979
        %1981 = vadd.xlane.f32.xlu0 %v1978
        %v1982 = vpop.xlane.xlu0 %1981
        %v1983 = vcvt.f32.s32 %v1980
        %v1984 = vcvt.f32.s32 %v1982
        %v1985 = vshll.u32 %v1984, 16
        %v1986 = vadd.s32 %v1985, %v1983
        %v1987 = vsel %vm311, %v1515, 0
        %v1988 = vand.u32 %v1987, 65535
        %v1989 = vshrl.u32 %v1987, 16
        %v1990 = vcvt.s32.f32 %v1988
        %v1991 = vcvt.s32.f32 %v1989
        %1992 = vadd.xlane.f32.xlu0 %v1990
        %v1993 = vpop.xlane.xlu0 %1992
        %1994 = vadd.xlane.f32.xlu0 %v1991
        %v1995 = vpop.xlane.xlu0 %1994
        %v1996 = vcvt.f32.s32 %v1993
        %v1997 = vcvt.f32.s32 %v1995
        %v1998 = vshll.u32 %v1997, 16
        %v1999 = vadd.s32 %v1998, %v1996
        %v2000 = vsel %vm311, %v1516, 0
        %v2001 = vand.u32 %v2000, 65535
        %v2002 = vshrl.u32 %v2000, 16
        %v2003 = vcvt.s32.f32 %v2001
        %v2004 = vcvt.s32.f32 %v2002
        %2005 = vadd.xlane.f32.xlu0 %v2003
        %v2006 = vpop.xlane.xlu0 %2005
        %2007 = vadd.xlane.f32.xlu0 %v2004
        %v2008 = vpop.xlane.xlu0 %2007
        %v2009 = vcvt.f32.s32 %v2006
        %v2010 = vcvt.f32.s32 %v2008
        %v2011 = vshll.u32 %v2010, 16
        %v2012 = vadd.s32 %v2011, %v2009
        %v2013 = vsel %vm311, %v1517, 0
        %v2014 = vand.u32 %v2013, 65535
        %v2015 = vshrl.u32 %v2013, 16
        %v2016 = vcvt.s32.f32 %v2014
        %v2017 = vcvt.s32.f32 %v2015
        %2018 = vadd.xlane.f32.xlu0 %v2016
        %v2019 = vpop.xlane.xlu0 %2018
        %2020 = vadd.xlane.f32.xlu0 %v2017
        %v2021 = vpop.xlane.xlu0 %2020
        %v2022 = vcvt.f32.s32 %v2019
        %v2023 = vcvt.f32.s32 %v2021
        %v2024 = vshll.u32 %v2023, 16
        %v2025 = vadd.s32 %v2024, %v2022
        %v2026 = vsel %vm311, %v1518, 0
        %v2027 = vand.u32 %v2026, 65535
        %v2028 = vshrl.u32 %v2026, 16
        %v2029 = vcvt.s32.f32 %v2027
        %v2030 = vcvt.s32.f32 %v2028
        %2031 = vadd.xlane.f32.xlu0 %v2029
        %v2032 = vpop.xlane.xlu0 %2031
        %2033 = vadd.xlane.f32.xlu0 %v2030
        %v2034 = vpop.xlane.xlu0 %2033
        %v2035 = vcvt.f32.s32 %v2032
        %v2036 = vcvt.f32.s32 %v2034
        %v2037 = vshll.u32 %v2036, 16
        %v2038 = vadd.s32 %v2037, %v2035
        %v2039 = vsel %vm311, %v1519, 0
        %v2040 = vand.u32 %v2039, 65535
        %v2041 = vshrl.u32 %v2039, 16
        %v2042 = vcvt.s32.f32 %v2040
        %v2043 = vcvt.s32.f32 %v2041
        %2044 = vadd.xlane.f32.xlu0 %v2042
        %v2045 = vpop.xlane.xlu0 %2044
        %2046 = vadd.xlane.f32.xlu0 %v2043
        %v2047 = vpop.xlane.xlu0 %2046
        %v2048 = vcvt.f32.s32 %v2045
        %v2049 = vcvt.f32.s32 %v2047
        %v2050 = vshll.u32 %v2049, 16
        %v2051 = vadd.s32 %v2050, %v2048
        %v2052 = vsel %vm311, %v1520, 0
        %v2053 = vand.u32 %v2052, 65535
        %v2054 = vshrl.u32 %v2052, 16
        %v2055 = vcvt.s32.f32 %v2053
        %v2056 = vcvt.s32.f32 %v2054
        %2057 = vadd.xlane.f32.xlu0 %v2055
        %v2058 = vpop.xlane.xlu0 %2057
        %2059 = vadd.xlane.f32.xlu0 %v2056
        %v2060 = vpop.xlane.xlu0 %2059
        %v2061 = vcvt.f32.s32 %v2058
        %v2062 = vcvt.f32.s32 %v2060
        %v2063 = vshll.u32 %v2062, 16
        %v2064 = vadd.s32 %v2063, %v2061
        %v2065 = vsel %vm311, %v1521, 0
        %v2066 = vand.u32 %v2065, 65535
        %v2067 = vshrl.u32 %v2065, 16
        %v2068 = vcvt.s32.f32 %v2066
        %v2069 = vcvt.s32.f32 %v2067
        %2070 = vadd.xlane.f32.xlu0 %v2068
        %v2071 = vpop.xlane.xlu0 %2070
        %2072 = vadd.xlane.f32.xlu0 %v2069
        %v2073 = vpop.xlane.xlu0 %2072
        %v2074 = vcvt.f32.s32 %v2071
        %v2075 = vcvt.f32.s32 %v2073
        %v2076 = vshll.u32 %v2075, 16
        %v2077 = vadd.s32 %v2076, %v2074
        %v2078 = vsel %vm311, %v1522, 0
        %v2079 = vand.u32 %v2078, 65535
        %v2080 = vshrl.u32 %v2078, 16
        %v2081 = vcvt.s32.f32 %v2079
        %v2082 = vcvt.s32.f32 %v2080
        %2083 = vadd.xlane.f32.xlu0 %v2081
        %v2084 = vpop.xlane.xlu0 %2083
        %2085 = vadd.xlane.f32.xlu0 %v2082
        %v2086 = vpop.xlane.xlu0 %2085
        %v2087 = vcvt.f32.s32 %v2084
        %v2088 = vcvt.f32.s32 %v2086
        %v2089 = vshll.u32 %v2088, 16
        %v2090 = vadd.s32 %v2089, %v2087
        %v2091 = vsel %vm311, %v1523, 0
        %v2092 = vand.u32 %v2091, 65535
        %v2093 = vshrl.u32 %v2091, 16
        %v2094 = vcvt.s32.f32 %v2092
        %v2095 = vcvt.s32.f32 %v2093
        %2096 = vadd.xlane.f32.xlu0 %v2094
        %v2097 = vpop.xlane.xlu0 %2096
        %2098 = vadd.xlane.f32.xlu0 %v2095
        %v2099 = vpop.xlane.xlu0 %2098
        %v2100 = vcvt.f32.s32 %v2097
        %v2101 = vcvt.f32.s32 %v2099
        %v2102 = vshll.u32 %v2101, 16
        %v2103 = vadd.s32 %v2102, %v2100
        %v2104 = vsel %vm311, %v1524, 0
        %v2105 = vand.u32 %v2104, 65535
        %v2106 = vshrl.u32 %v2104, 16
        %v2107 = vcvt.s32.f32 %v2105
        %v2108 = vcvt.s32.f32 %v2106
        %2109 = vadd.xlane.f32.xlu0 %v2107
        %v2110 = vpop.xlane.xlu0 %2109
        %2111 = vadd.xlane.f32.xlu0 %v2108
        %v2112 = vpop.xlane.xlu0 %2111
        %v2113 = vcvt.f32.s32 %v2110
        %v2114 = vcvt.f32.s32 %v2112
        %v2115 = vshll.u32 %v2114, 16
        %v2116 = vadd.s32 %v2115, %v2113
        %v2117 = vsel %vm311, %v1525, 0
        %v2118 = vand.u32 %v2117, 65535
        %v2119 = vshrl.u32 %v2117, 16
        %v2120 = vcvt.s32.f32 %v2118
        %v2121 = vcvt.s32.f32 %v2119
        %2122 = vadd.xlane.f32.xlu0 %v2120
        %v2123 = vpop.xlane.xlu0 %2122
        %2124 = vadd.xlane.f32.xlu0 %v2121
        %v2125 = vpop.xlane.xlu0 %2124
        %v2126 = vcvt.f32.s32 %v2123
        %v2127 = vcvt.f32.s32 %v2125
        %v2128 = vshll.u32 %v2127, 16
        %v2129 = vadd.s32 %v2128, %v2126
        %v2130 = vsel %vm311, %v1526, 0
        %v2131 = vand.u32 %v2130, 65535
        %v2132 = vshrl.u32 %v2130, 16
        %v2133 = vcvt.s32.f32 %v2131
        %v2134 = vcvt.s32.f32 %v2132
        %2135 = vadd.xlane.f32.xlu0 %v2133
        %v2136 = vpop.xlane.xlu0 %2135
        %2137 = vadd.xlane.f32.xlu0 %v2134
        %v2138 = vpop.xlane.xlu0 %2137
        %v2139 = vcvt.f32.s32 %v2136
        %v2140 = vcvt.f32.s32 %v2138
        %v2141 = vshll.u32 %v2140, 16
        %v2142 = vadd.s32 %v2141, %v2139
        %v2143 = vsel %vm311, %v1527, 0
        %v2144 = vand.u32 %v2143, 65535
        %v2145 = vshrl.u32 %v2143, 16
        %v2146 = vcvt.s32.f32 %v2144
        %v2147 = vcvt.s32.f32 %v2145
        %2148 = vadd.xlane.f32.xlu0 %v2146
        %v2149 = vpop.xlane.xlu0 %2148
        %2150 = vadd.xlane.f32.xlu0 %v2147
        %v2151 = vpop.xlane.xlu0 %2150
        %v2152 = vcvt.f32.s32 %v2149
        %v2153 = vcvt.f32.s32 %v2151
        %v2154 = vshll.u32 %v2153, 16
        %v2155 = vadd.s32 %v2154, %v2152
        %v2156 = vsel %vm311, %v1528, 0
        %v2157 = vand.u32 %v2156, 65535
        %v2158 = vshrl.u32 %v2156, 16
        %v2159 = vcvt.s32.f32 %v2157
        %v2160 = vcvt.s32.f32 %v2158
        %2161 = vadd.xlane.f32.xlu0 %v2159
        %v2162 = vpop.xlane.xlu0 %2161
        %2163 = vadd.xlane.f32.xlu0 %v2160
        %v2164 = vpop.xlane.xlu0 %2163
        %v2165 = vcvt.f32.s32 %v2162
        %v2166 = vcvt.f32.s32 %v2164
        %v2167 = vshll.u32 %v2166, 16
        %v2168 = vadd.s32 %v2167, %v2165
        %v2169 = vsel %vm311, %v1529, 0
        %v2170 = vand.u32 %v2169, 65535
        %v2171 = vshrl.u32 %v2169, 16
        %v2172 = vcvt.s32.f32 %v2170
        %v2173 = vcvt.s32.f32 %v2171
        %2174 = vadd.xlane.f32.xlu0 %v2172
        %v2175 = vpop.xlane.xlu0 %2174
        %2176 = vadd.xlane.f32.xlu0 %v2173
        %v2177 = vpop.xlane.xlu0 %2176
        %v2178 = vcvt.f32.s32 %v2175
        %v2179 = vcvt.f32.s32 %v2177
        %v2180 = vshll.u32 %v2179, 16
        %v2181 = vadd.s32 %v2180, %v2178
        %v2182 = vsel %vm311, %v1530, 0
        %v2183 = vand.u32 %v2182, 65535
        %v2184 = vshrl.u32 %v2182, 16
        %v2185 = vcvt.s32.f32 %v2183
        %v2186 = vcvt.s32.f32 %v2184
        %2187 = vadd.xlane.f32.xlu0 %v2185
        %v2188 = vpop.xlane.xlu0 %2187
        %2189 = vadd.xlane.f32.xlu0 %v2186
        %v2190 = vpop.xlane.xlu0 %2189
        %v2191 = vcvt.f32.s32 %v2188
        %v2192 = vcvt.f32.s32 %v2190
        %v2193 = vshll.u32 %v2192, 16
        %v2194 = vadd.s32 %v2193, %v2191
        %v2195 = vsel %vm311, %v1531, 0
        %v2196 = vand.u32 %v2195, 65535
        %v2197 = vshrl.u32 %v2195, 16
        %v2198 = vcvt.s32.f32 %v2196
        %v2199 = vcvt.s32.f32 %v2197
        %2200 = vadd.xlane.f32.xlu0 %v2198
        %v2201 = vpop.xlane.xlu0 %2200
        %2202 = vadd.xlane.f32.xlu0 %v2199
        %v2203 = vpop.xlane.xlu0 %2202
        %v2204 = vcvt.f32.s32 %v2201
        %v2205 = vcvt.f32.s32 %v2203
        %v2206 = vshll.u32 %v2205, 16
        %v2207 = vadd.s32 %v2206, %v2204
        %v2208 = vsel %vm311, %v1532, 0
        %v2209 = vand.u32 %v2208, 65535
        %v2210 = vshrl.u32 %v2208, 16
        %v2211 = vcvt.s32.f32 %v2209
        %v2212 = vcvt.s32.f32 %v2210
        %2213 = vadd.xlane.f32.xlu0 %v2211
        %v2214 = vpop.xlane.xlu0 %2213
        %2215 = vadd.xlane.f32.xlu0 %v2212
        %v2216 = vpop.xlane.xlu0 %2215
        %v2217 = vcvt.f32.s32 %v2214
        %v2218 = vcvt.f32.s32 %v2216
        %v2219 = vshll.u32 %v2218, 16
        %v2220 = vadd.s32 %v2219, %v2217
        %v2221 = vsel %vm311, %v1533, 0
        %v2222 = vand.u32 %v2221, 65535
        %v2223 = vshrl.u32 %v2221, 16
        %v2224 = vcvt.s32.f32 %v2222
        %v2225 = vcvt.s32.f32 %v2223
        %2226 = vadd.xlane.f32.xlu0 %v2224
        %v2227 = vpop.xlane.xlu0 %2226
        %2228 = vadd.xlane.f32.xlu0 %v2225
        %v2229 = vpop.xlane.xlu0 %2228
        %v2230 = vcvt.f32.s32 %v2227
        %v2231 = vcvt.f32.s32 %v2229
        %v2232 = vshll.u32 %v2231, 16
        %v2233 = vadd.s32 %v2232, %v2230
        %v2234 = vsel %vm311, %v1534, 0
        %v2235 = vand.u32 %v2234, 65535
        %v2236 = vshrl.u32 %v2234, 16
        %v2237 = vcvt.s32.f32 %v2235
        %v2238 = vcvt.s32.f32 %v2236
        %2239 = vadd.xlane.f32.xlu0 %v2237
        %v2240 = vpop.xlane.xlu0 %2239
        %2241 = vadd.xlane.f32.xlu0 %v2238
        %v2242 = vpop.xlane.xlu0 %2241
        %v2243 = vcvt.f32.s32 %v2240
        %v2244 = vcvt.f32.s32 %v2242
        %v2245 = vshll.u32 %v2244, 16
        %v2246 = vadd.s32 %v2245, %v2243
        %v2247 = vsel %vm311, %v1535, 0
        %v2248 = vand.u32 %v2247, 65535
        %v2249 = vshrl.u32 %v2247, 16
        %v2250 = vcvt.s32.f32 %v2248
        %v2251 = vcvt.s32.f32 %v2249
        %2252 = vadd.xlane.f32.xlu0 %v2250
        %v2253 = vpop.xlane.xlu0 %2252
        %2254 = vadd.xlane.f32.xlu0 %v2251
        %v2255 = vpop.xlane.xlu0 %2254
        %v2256 = vcvt.f32.s32 %v2253
        %v2257 = vcvt.f32.s32 %v2255
        %v2258 = vshll.u32 %v2257, 16
        %v2259 = vadd.s32 %v2258, %v2256
        %v2260 = vsel %vm311, %v1536, 0
        %v2261 = vand.u32 %v2260, 65535
        %v2262 = vshrl.u32 %v2260, 16
        %v2263 = vcvt.s32.f32 %v2261
        %v2264 = vcvt.s32.f32 %v2262
        %2265 = vadd.xlane.f32.xlu0 %v2263
        %v2266 = vpop.xlane.xlu0 %2265
        %2267 = vadd.xlane.f32.xlu0 %v2264
        %v2268 = vpop.xlane.xlu0 %2267
        %v2269 = vcvt.f32.s32 %v2266
        %v2270 = vcvt.f32.s32 %v2268
        %v2271 = vshll.u32 %v2270, 16
        %v2272 = vadd.s32 %v2271, %v2269
        %v2273 = vsel %vm311, %v1537, 0
        %v2274 = vand.u32 %v2273, 65535
        %v2275 = vshrl.u32 %v2273, 16
        %v2276 = vcvt.s32.f32 %v2274
        %v2277 = vcvt.s32.f32 %v2275
        %2278 = vadd.xlane.f32.xlu0 %v2276
        %v2279 = vpop.xlane.xlu0 %2278
        %2280 = vadd.xlane.f32.xlu0 %v2277
        %v2281 = vpop.xlane.xlu0 %2280
        %v2282 = vcvt.f32.s32 %v2279
        %v2283 = vcvt.f32.s32 %v2281
        %v2284 = vshll.u32 %v2283, 16
        %v2285 = vadd.s32 %v2284, %v2282
        %v2286 = vsel %vm311, %v1538, 0
        %v2287 = vand.u32 %v2286, 65535
        %v2288 = vshrl.u32 %v2286, 16
        %v2289 = vcvt.s32.f32 %v2287
        %v2290 = vcvt.s32.f32 %v2288
        %2291 = vadd.xlane.f32.xlu0 %v2289
        %v2292 = vpop.xlane.xlu0 %2291
        %2293 = vadd.xlane.f32.xlu0 %v2290
        %v2294 = vpop.xlane.xlu0 %2293
        %v2295 = vcvt.f32.s32 %v2292
        %v2296 = vcvt.f32.s32 %v2294
        %v2297 = vshll.u32 %v2296, 16
        %v2298 = vadd.s32 %v2297, %v2295
        %v2299 = vsel %vm311, %v1539, 0
        %v2300 = vand.u32 %v2299, 65535
        %v2301 = vshrl.u32 %v2299, 16
        %v2302 = vcvt.s32.f32 %v2300
        %v2303 = vcvt.s32.f32 %v2301
        %2304 = vadd.xlane.f32.xlu0 %v2302
        %v2305 = vpop.xlane.xlu0 %2304
        %2306 = vadd.xlane.f32.xlu0 %v2303
        %v2307 = vpop.xlane.xlu0 %2306
        %v2308 = vcvt.f32.s32 %v2305
        %v2309 = vcvt.f32.s32 %v2307
        %v2310 = vshll.u32 %v2309, 16
        %v2311 = vadd.s32 %v2310, %v2308
        %v2312 = vsel %vm311, %v1540, 0
        %v2313 = vand.u32 %v2312, 65535
        %v2314 = vshrl.u32 %v2312, 16
        %v2315 = vcvt.s32.f32 %v2313
        %v2316 = vcvt.s32.f32 %v2314
        %2317 = vadd.xlane.f32.xlu0 %v2315
        %v2318 = vpop.xlane.xlu0 %2317
        %2319 = vadd.xlane.f32.xlu0 %v2316
        %v2320 = vpop.xlane.xlu0 %2319
        %v2321 = vcvt.f32.s32 %v2318
        %v2322 = vcvt.f32.s32 %v2320
        %v2323 = vshll.u32 %v2322, 16
        %v2324 = vadd.s32 %v2323, %v2321
        %v2325 = vsel %vm311, %v1541, 0
        %v2326 = vand.u32 %v2325, 65535
        %v2327 = vshrl.u32 %v2325, 16
        %v2328 = vcvt.s32.f32 %v2326
        %v2329 = vcvt.s32.f32 %v2327
        %2330 = vadd.xlane.f32.xlu0 %v2328
        %v2331 = vpop.xlane.xlu0 %2330
        %2332 = vadd.xlane.f32.xlu0 %v2329
        %v2333 = vpop.xlane.xlu0 %2332
        %v2334 = vcvt.f32.s32 %v2331
        %v2335 = vcvt.f32.s32 %v2333
        %v2336 = vshll.u32 %v2335, 16
        %v2337 = vadd.s32 %v2336, %v2334
        %v2338 = vsel %vm311, %v1542, 0
        %v2339 = vand.u32 %v2338, 65535
        %v2340 = vshrl.u32 %v2338, 16
        %v2341 = vcvt.s32.f32 %v2339
        %v2342 = vcvt.s32.f32 %v2340
        %2343 = vadd.xlane.f32.xlu0 %v2341
        %v2344 = vpop.xlane.xlu0 %2343
        %2345 = vadd.xlane.f32.xlu0 %v2342
        %v2346 = vpop.xlane.xlu0 %2345
        %v2347 = vcvt.f32.s32 %v2344
        %v2348 = vcvt.f32.s32 %v2346
        %v2349 = vshll.u32 %v2348, 16
        %v2350 = vadd.s32 %v2349, %v2347
        %v2351 = vsel %vm311, %v1543, 0
        %v2352 = vand.u32 %v2351, 65535
        %v2353 = vshrl.u32 %v2351, 16
        %v2354 = vcvt.s32.f32 %v2352
        %v2355 = vcvt.s32.f32 %v2353
        %2356 = vadd.xlane.f32.xlu0 %v2354
        %v2357 = vpop.xlane.xlu0 %2356
        %2358 = vadd.xlane.f32.xlu0 %v2355
        %v2359 = vpop.xlane.xlu0 %2358
        %v2360 = vcvt.f32.s32 %v2357
        %v2361 = vcvt.f32.s32 %v2359
        %v2362 = vshll.u32 %v2361, 16
        %v2363 = vadd.s32 %v2362, %v2360
        %v2364 = vsel %vm311, %v1544, 0
        %v2365 = vand.u32 %v2364, 65535
        %v2366 = vshrl.u32 %v2364, 16
        %v2367 = vcvt.s32.f32 %v2365
        %v2368 = vcvt.s32.f32 %v2366
        %2369 = vadd.xlane.f32.xlu0 %v2367
        %v2370 = vpop.xlane.xlu0 %2369
        %2371 = vadd.xlane.f32.xlu0 %v2368
        %v2372 = vpop.xlane.xlu0 %2371
        %v2373 = vcvt.f32.s32 %v2370
        %v2374 = vcvt.f32.s32 %v2372
        %v2375 = vshll.u32 %v2374, 16
        %v2376 = vadd.s32 %v2375, %v2373
        %v2377 = vadd.s32 %v1557, 1
        %v2378 = vadd.s32 %v1570, 1
        %v2379 = vadd.s32 %v1583, 1
        %v2380 = vadd.s32 %v1596, 1
        %v2381 = vadd.s32 %v1609, 1
        %v2382 = vadd.s32 %v1622, 1
        %v2383 = vadd.s32 %v1635, 1
        %v2384 = vadd.s32 %v1648, 1
        %v2385 = vadd.s32 %v1661, 1
        %v2386 = vadd.s32 %v1674, 1
        %v2387 = vadd.s32 %v1687, 1
        %v2388 = vadd.s32 %v1700, 1
        %v2389 = vadd.s32 %v1713, 1
        %v2390 = vadd.s32 %v1726, 1
        %v2391 = vadd.s32 %v1739, 1
        %v2392 = vadd.s32 %v1752, 1
        %v2393 = vadd.s32 %v1765, 1
        %v2394 = vadd.s32 %v1778, 1
        %v2395 = vadd.s32 %v1791, 1
        %v2396 = vadd.s32 %v1804, 1
        %v2397 = vadd.s32 %v1817, 1
        %v2398 = vadd.s32 %v1830, 1
        %v2399 = vadd.s32 %v1843, 1
        %v2400 = vadd.s32 %v1856, 1
        %v2401 = vadd.s32 %v1869, 1
        %v2402 = vadd.s32 %v1882, 1
        %v2403 = vadd.s32 %v1895, 1
        %v2404 = vadd.s32 %v1908, 1
        %v2405 = vadd.s32 %v1921, 1
        %v2406 = vadd.s32 %v1934, 1
        %v2407 = vadd.s32 %v1947, 1
        %v2408 = vadd.s32 %v1960, 1
        %v2409 = vadd.s32 %v1973, 1
        %v2410 = vadd.s32 %v1986, 1
        %v2411 = vadd.s32 %v1999, 1
        %v2412 = vadd.s32 %v2012, 1
        %v2413 = vadd.s32 %v2025, 1
        %v2414 = vadd.s32 %v2038, 1
        %v2415 = vadd.s32 %v2051, 1
        %v2416 = vadd.s32 %v2064, 1
        %v2417 = vadd.s32 %v2077, 1
        %v2418 = vadd.s32 %v2090, 1
        %v2419 = vadd.s32 %v2103, 1
        %v2420 = vadd.s32 %v2116, 1
        %v2421 = vadd.s32 %v2129, 1
        %v2422 = vadd.s32 %v2142, 1
        %v2423 = vadd.s32 %v2155, 1
        %v2424 = vadd.s32 %v2168, 1
        %v2425 = vadd.s32 %v2181, 1
        %v2426 = vadd.s32 %v2194, 1
        %v2427 = vadd.s32 %v2207, 1
        %v2428 = vadd.s32 %v2220, 1
        %v2429 = vadd.s32 %v2233, 1
        %v2430 = vadd.s32 %v2246, 1
        %v2431 = vadd.s32 %v2259, 1
        %v2432 = vadd.s32 %v2272, 1
        %v2433 = vadd.s32 %v2285, 1
        %v2434 = vadd.s32 %v2298, 1
        %v2435 = vadd.s32 %v2311, 1
        %v2436 = vadd.s32 %v2324, 1
        %v2437 = vadd.s32 %v2337, 1
        %v2438 = vadd.s32 %v2350, 1
        %v2439 = vadd.s32 %v2363, 1
        %v2440 = vadd.s32 %v2376, 1
        %v2441 = vadd.s32 %v1093, 1
        %v2442 = vperm.slane %v2441, 0
        %v2443 = vperm.slane %v2441, 1
        %v2444 = vperm.slane %v2441, 2
        %v2445 = vperm.slane %v2441, 3
        %v2446 = vperm.slane %v2441, 4
        %v2447 = vperm.slane %v2441, 5
        %v2448 = vperm.slane %v2441, 6
        %v2449 = vperm.slane %v2441, 7
        %vm2450 = vcmp.eq.s32.totalorder %v2377, %v2442
        %vm2451 = vcmp.eq.s32.totalorder %v2377, %v2443
        %vm2452 = vcmp.eq.s32.totalorder %v2377, %v2444
        %vm2453 = vcmp.eq.s32.totalorder %v2377, %v2445
        %vm2454 = vcmp.eq.s32.totalorder %v2377, %v2446
        %vm2455 = vcmp.eq.s32.totalorder %v2377, %v2447
        %vm2456 = vcmp.eq.s32.totalorder %v2377, %v2448
        %vm2457 = vcmp.eq.s32.totalorder %v2377, %v2449
        %vm2458 = vcmp.eq.s32.totalorder %v2378, %v2442
        %vm2459 = vcmp.eq.s32.totalorder %v2378, %v2443
        %vm2460 = vcmp.eq.s32.totalorder %v2378, %v2444
        %vm2461 = vcmp.eq.s32.totalorder %v2378, %v2445
        %vm2462 = vcmp.eq.s32.totalorder %v2378, %v2446
        %vm2463 = vcmp.eq.s32.totalorder %v2378, %v2447
        %vm2464 = vcmp.eq.s32.totalorder %v2378, %v2448
        %vm2465 = vcmp.eq.s32.totalorder %v2378, %v2449
        %vm2466 = vcmp.eq.s32.totalorder %v2379, %v2442
        %vm2467 = vcmp.eq.s32.totalorder %v2379, %v2443
        %vm2468 = vcmp.eq.s32.totalorder %v2379, %v2444
        %vm2469 = vcmp.eq.s32.totalorder %v2379, %v2445
        %vm2470 = vcmp.eq.s32.totalorder %v2379, %v2446
        %vm2471 = vcmp.eq.s32.totalorder %v2379, %v2447
        %vm2472 = vcmp.eq.s32.totalorder %v2379, %v2448
        %vm2473 = vcmp.eq.s32.totalorder %v2379, %v2449
        %vm2474 = vcmp.eq.s32.totalorder %v2380, %v2442
        %vm2475 = vcmp.eq.s32.totalorder %v2380, %v2443
        %vm2476 = vcmp.eq.s32.totalorder %v2380, %v2444
        %vm2477 = vcmp.eq.s32.totalorder %v2380, %v2445
        %vm2478 = vcmp.eq.s32.totalorder %v2380, %v2446
        %vm2479 = vcmp.eq.s32.totalorder %v2380, %v2447
        %vm2480 = vcmp.eq.s32.totalorder %v2380, %v2448
        %vm2481 = vcmp.eq.s32.totalorder %v2380, %v2449
        %vm2482 = vcmp.eq.s32.totalorder %v2381, %v2442
        %vm2483 = vcmp.eq.s32.totalorder %v2381, %v2443
        %vm2484 = vcmp.eq.s32.totalorder %v2381, %v2444
        %vm2485 = vcmp.eq.s32.totalorder %v2381, %v2445
        %vm2486 = vcmp.eq.s32.totalorder %v2381, %v2446
        %vm2487 = vcmp.eq.s32.totalorder %v2381, %v2447
        %vm2488 = vcmp.eq.s32.totalorder %v2381, %v2448
        %vm2489 = vcmp.eq.s32.totalorder %v2381, %v2449
        %vm2490 = vcmp.eq.s32.totalorder %v2382, %v2442
        %vm2491 = vcmp.eq.s32.totalorder %v2382, %v2443
        %vm2492 = vcmp.eq.s32.totalorder %v2382, %v2444
        %vm2493 = vcmp.eq.s32.totalorder %v2382, %v2445
        %vm2494 = vcmp.eq.s32.totalorder %v2382, %v2446
        %vm2495 = vcmp.eq.s32.totalorder %v2382, %v2447
        %vm2496 = vcmp.eq.s32.totalorder %v2382, %v2448
        %vm2497 = vcmp.eq.s32.totalorder %v2382, %v2449
        %vm2498 = vcmp.eq.s32.totalorder %v2383, %v2442
        %vm2499 = vcmp.eq.s32.totalorder %v2383, %v2443
        %vm2500 = vcmp.eq.s32.totalorder %v2383, %v2444
        %vm2501 = vcmp.eq.s32.totalorder %v2383, %v2445
        %vm2502 = vcmp.eq.s32.totalorder %v2383, %v2446
        %vm2503 = vcmp.eq.s32.totalorder %v2383, %v2447
        %vm2504 = vcmp.eq.s32.totalorder %v2383, %v2448
        %vm2505 = vcmp.eq.s32.totalorder %v2383, %v2449
        %vm2506 = vcmp.eq.s32.totalorder %v2384, %v2442
        %vm2507 = vcmp.eq.s32.totalorder %v2384, %v2443
        %vm2508 = vcmp.eq.s32.totalorder %v2384, %v2444
        %vm2509 = vcmp.eq.s32.totalorder %v2384, %v2445
        %vm2510 = vcmp.eq.s32.totalorder %v2384, %v2446
        %vm2511 = vcmp.eq.s32.totalorder %v2384, %v2447
        %vm2512 = vcmp.eq.s32.totalorder %v2384, %v2448
        %vm2513 = vcmp.eq.s32.totalorder %v2384, %v2449
        %vm2514 = vcmp.eq.s32.totalorder %v2385, %v2442
        %vm2515 = vcmp.eq.s32.totalorder %v2385, %v2443
        %vm2516 = vcmp.eq.s32.totalorder %v2385, %v2444
        %vm2517 = vcmp.eq.s32.totalorder %v2385, %v2445
        %vm2518 = vcmp.eq.s32.totalorder %v2385, %v2446
        %vm2519 = vcmp.eq.s32.totalorder %v2385, %v2447
        %vm2520 = vcmp.eq.s32.totalorder %v2385, %v2448
        %vm2521 = vcmp.eq.s32.totalorder %v2385, %v2449
        %vm2522 = vcmp.eq.s32.totalorder %v2386, %v2442
        %vm2523 = vcmp.eq.s32.totalorder %v2386, %v2443
        %vm2524 = vcmp.eq.s32.totalorder %v2386, %v2444
        %vm2525 = vcmp.eq.s32.totalorder %v2386, %v2445
        %vm2526 = vcmp.eq.s32.totalorder %v2386, %v2446
        %vm2527 = vcmp.eq.s32.totalorder %v2386, %v2447
        %vm2528 = vcmp.eq.s32.totalorder %v2386, %v2448
        %vm2529 = vcmp.eq.s32.totalorder %v2386, %v2449
        %vm2530 = vcmp.eq.s32.totalorder %v2387, %v2442
        %vm2531 = vcmp.eq.s32.totalorder %v2387, %v2443
        %vm2532 = vcmp.eq.s32.totalorder %v2387, %v2444
        %vm2533 = vcmp.eq.s32.totalorder %v2387, %v2445
        %vm2534 = vcmp.eq.s32.totalorder %v2387, %v2446
        %vm2535 = vcmp.eq.s32.totalorder %v2387, %v2447
        %vm2536 = vcmp.eq.s32.totalorder %v2387, %v2448
        %vm2537 = vcmp.eq.s32.totalorder %v2387, %v2449
        %vm2538 = vcmp.eq.s32.totalorder %v2388, %v2442
        %vm2539 = vcmp.eq.s32.totalorder %v2388, %v2443
        %vm2540 = vcmp.eq.s32.totalorder %v2388, %v2444
        %vm2541 = vcmp.eq.s32.totalorder %v2388, %v2445
        %vm2542 = vcmp.eq.s32.totalorder %v2388, %v2446
        %vm2543 = vcmp.eq.s32.totalorder %v2388, %v2447
        %vm2544 = vcmp.eq.s32.totalorder %v2388, %v2448
        %vm2545 = vcmp.eq.s32.totalorder %v2388, %v2449
        %vm2546 = vcmp.eq.s32.totalorder %v2389, %v2442
        %vm2547 = vcmp.eq.s32.totalorder %v2389, %v2443
        %vm2548 = vcmp.eq.s32.totalorder %v2389, %v2444
        %vm2549 = vcmp.eq.s32.totalorder %v2389, %v2445
        %vm2550 = vcmp.eq.s32.totalorder %v2389, %v2446
        %vm2551 = vcmp.eq.s32.totalorder %v2389, %v2447
        %vm2552 = vcmp.eq.s32.totalorder %v2389, %v2448
        %vm2553 = vcmp.eq.s32.totalorder %v2389, %v2449
        %vm2554 = vcmp.eq.s32.totalorder %v2390, %v2442
        %vm2555 = vcmp.eq.s32.totalorder %v2390, %v2443
        %vm2556 = vcmp.eq.s32.totalorder %v2390, %v2444
        %vm2557 = vcmp.eq.s32.totalorder %v2390, %v2445
        %vm2558 = vcmp.eq.s32.totalorder %v2390, %v2446
        %vm2559 = vcmp.eq.s32.totalorder %v2390, %v2447
        %vm2560 = vcmp.eq.s32.totalorder %v2390, %v2448
        %vm2561 = vcmp.eq.s32.totalorder %v2390, %v2449
        %vm2562 = vcmp.eq.s32.totalorder %v2391, %v2442
        %vm2563 = vcmp.eq.s32.totalorder %v2391, %v2443
        %vm2564 = vcmp.eq.s32.totalorder %v2391, %v2444
        %vm2565 = vcmp.eq.s32.totalorder %v2391, %v2445
        %vm2566 = vcmp.eq.s32.totalorder %v2391, %v2446
        %vm2567 = vcmp.eq.s32.totalorder %v2391, %v2447
        %vm2568 = vcmp.eq.s32.totalorder %v2391, %v2448
        %vm2569 = vcmp.eq.s32.totalorder %v2391, %v2449
        %vm2570 = vcmp.eq.s32.totalorder %v2392, %v2442
        %vm2571 = vcmp.eq.s32.totalorder %v2392, %v2443
        %vm2572 = vcmp.eq.s32.totalorder %v2392, %v2444
        %vm2573 = vcmp.eq.s32.totalorder %v2392, %v2445
        %vm2574 = vcmp.eq.s32.totalorder %v2392, %v2446
        %vm2575 = vcmp.eq.s32.totalorder %v2392, %v2447
        %vm2576 = vcmp.eq.s32.totalorder %v2392, %v2448
        %vm2577 = vcmp.eq.s32.totalorder %v2392, %v2449
        %vm2578 = vcmp.eq.s32.totalorder %v2393, %v2442
        %vm2579 = vcmp.eq.s32.totalorder %v2393, %v2443
        %vm2580 = vcmp.eq.s32.totalorder %v2393, %v2444
        %vm2581 = vcmp.eq.s32.totalorder %v2393, %v2445
        %vm2582 = vcmp.eq.s32.totalorder %v2393, %v2446
        %vm2583 = vcmp.eq.s32.totalorder %v2393, %v2447
        %vm2584 = vcmp.eq.s32.totalorder %v2393, %v2448
        %vm2585 = vcmp.eq.s32.totalorder %v2393, %v2449
        %vm2586 = vcmp.eq.s32.totalorder %v2394, %v2442
        %vm2587 = vcmp.eq.s32.totalorder %v2394, %v2443
        %vm2588 = vcmp.eq.s32.totalorder %v2394, %v2444
        %vm2589 = vcmp.eq.s32.totalorder %v2394, %v2445
        %vm2590 = vcmp.eq.s32.totalorder %v2394, %v2446
        %vm2591 = vcmp.eq.s32.totalorder %v2394, %v2447
        %vm2592 = vcmp.eq.s32.totalorder %v2394, %v2448
        %vm2593 = vcmp.eq.s32.totalorder %v2394, %v2449
        %vm2594 = vcmp.eq.s32.totalorder %v2395, %v2442
        %vm2595 = vcmp.eq.s32.totalorder %v2395, %v2443
        %vm2596 = vcmp.eq.s32.totalorder %v2395, %v2444
        %vm2597 = vcmp.eq.s32.totalorder %v2395, %v2445
        %vm2598 = vcmp.eq.s32.totalorder %v2395, %v2446
        %vm2599 = vcmp.eq.s32.totalorder %v2395, %v2447
        %vm2600 = vcmp.eq.s32.totalorder %v2395, %v2448
        %vm2601 = vcmp.eq.s32.totalorder %v2395, %v2449
        %vm2602 = vcmp.eq.s32.totalorder %v2396, %v2442
        %vm2603 = vcmp.eq.s32.totalorder %v2396, %v2443
        %vm2604 = vcmp.eq.s32.totalorder %v2396, %v2444
        %vm2605 = vcmp.eq.s32.totalorder %v2396, %v2445
        %vm2606 = vcmp.eq.s32.totalorder %v2396, %v2446
        %vm2607 = vcmp.eq.s32.totalorder %v2396, %v2447
        %vm2608 = vcmp.eq.s32.totalorder %v2396, %v2448
        %vm2609 = vcmp.eq.s32.totalorder %v2396, %v2449
        %vm2610 = vcmp.eq.s32.totalorder %v2397, %v2442
        %vm2611 = vcmp.eq.s32.totalorder %v2397, %v2443
        %vm2612 = vcmp.eq.s32.totalorder %v2397, %v2444
        %vm2613 = vcmp.eq.s32.totalorder %v2397, %v2445
        %vm2614 = vcmp.eq.s32.totalorder %v2397, %v2446
        %vm2615 = vcmp.eq.s32.totalorder %v2397, %v2447
        %vm2616 = vcmp.eq.s32.totalorder %v2397, %v2448
        %vm2617 = vcmp.eq.s32.totalorder %v2397, %v2449
        %vm2618 = vcmp.eq.s32.totalorder %v2398, %v2442
        %vm2619 = vcmp.eq.s32.totalorder %v2398, %v2443
        %vm2620 = vcmp.eq.s32.totalorder %v2398, %v2444
        %vm2621 = vcmp.eq.s32.totalorder %v2398, %v2445
        %vm2622 = vcmp.eq.s32.totalorder %v2398, %v2446
        %vm2623 = vcmp.eq.s32.totalorder %v2398, %v2447
        %vm2624 = vcmp.eq.s32.totalorder %v2398, %v2448
        %vm2625 = vcmp.eq.s32.totalorder %v2398, %v2449
        %vm2626 = vcmp.eq.s32.totalorder %v2399, %v2442
        %vm2627 = vcmp.eq.s32.totalorder %v2399, %v2443
        %vm2628 = vcmp.eq.s32.totalorder %v2399, %v2444
        %vm2629 = vcmp.eq.s32.totalorder %v2399, %v2445
        %vm2630 = vcmp.eq.s32.totalorder %v2399, %v2446
        %vm2631 = vcmp.eq.s32.totalorder %v2399, %v2447
        %vm2632 = vcmp.eq.s32.totalorder %v2399, %v2448
        %vm2633 = vcmp.eq.s32.totalorder %v2399, %v2449
        %vm2634 = vcmp.eq.s32.totalorder %v2400, %v2442
        %vm2635 = vcmp.eq.s32.totalorder %v2400, %v2443
        %vm2636 = vcmp.eq.s32.totalorder %v2400, %v2444
        %vm2637 = vcmp.eq.s32.totalorder %v2400, %v2445
        %vm2638 = vcmp.eq.s32.totalorder %v2400, %v2446
        %vm2639 = vcmp.eq.s32.totalorder %v2400, %v2447
        %vm2640 = vcmp.eq.s32.totalorder %v2400, %v2448
        %vm2641 = vcmp.eq.s32.totalorder %v2400, %v2449
        %vm2642 = vcmp.eq.s32.totalorder %v2401, %v2442
        %vm2643 = vcmp.eq.s32.totalorder %v2401, %v2443
        %vm2644 = vcmp.eq.s32.totalorder %v2401, %v2444
        %vm2645 = vcmp.eq.s32.totalorder %v2401, %v2445
        %vm2646 = vcmp.eq.s32.totalorder %v2401, %v2446
        %vm2647 = vcmp.eq.s32.totalorder %v2401, %v2447
        %vm2648 = vcmp.eq.s32.totalorder %v2401, %v2448
        %vm2649 = vcmp.eq.s32.totalorder %v2401, %v2449
        %vm2650 = vcmp.eq.s32.totalorder %v2402, %v2442
        %vm2651 = vcmp.eq.s32.totalorder %v2402, %v2443
        %vm2652 = vcmp.eq.s32.totalorder %v2402, %v2444
        %vm2653 = vcmp.eq.s32.totalorder %v2402, %v2445
        %vm2654 = vcmp.eq.s32.totalorder %v2402, %v2446
        %vm2655 = vcmp.eq.s32.totalorder %v2402, %v2447
        %vm2656 = vcmp.eq.s32.totalorder %v2402, %v2448
        %vm2657 = vcmp.eq.s32.totalorder %v2402, %v2449
        %vm2658 = vcmp.eq.s32.totalorder %v2403, %v2442
        %vm2659 = vcmp.eq.s32.totalorder %v2403, %v2443
        %vm2660 = vcmp.eq.s32.totalorder %v2403, %v2444
        %vm2661 = vcmp.eq.s32.totalorder %v2403, %v2445
        %vm2662 = vcmp.eq.s32.totalorder %v2403, %v2446
        %vm2663 = vcmp.eq.s32.totalorder %v2403, %v2447
        %vm2664 = vcmp.eq.s32.totalorder %v2403, %v2448
        %vm2665 = vcmp.eq.s32.totalorder %v2403, %v2449
        %vm2666 = vcmp.eq.s32.totalorder %v2404, %v2442
        %vm2667 = vcmp.eq.s32.totalorder %v2404, %v2443
        %vm2668 = vcmp.eq.s32.totalorder %v2404, %v2444
        %vm2669 = vcmp.eq.s32.totalorder %v2404, %v2445
        %vm2670 = vcmp.eq.s32.totalorder %v2404, %v2446
        %vm2671 = vcmp.eq.s32.totalorder %v2404, %v2447
        %vm2672 = vcmp.eq.s32.totalorder %v2404, %v2448
        %vm2673 = vcmp.eq.s32.totalorder %v2404, %v2449
        %vm2674 = vcmp.eq.s32.totalorder %v2405, %v2442
        %vm2675 = vcmp.eq.s32.totalorder %v2405, %v2443
        %vm2676 = vcmp.eq.s32.totalorder %v2405, %v2444
        %vm2677 = vcmp.eq.s32.totalorder %v2405, %v2445
        %vm2678 = vcmp.eq.s32.totalorder %v2405, %v2446
        %vm2679 = vcmp.eq.s32.totalorder %v2405, %v2447
        %vm2680 = vcmp.eq.s32.totalorder %v2405, %v2448
        %vm2681 = vcmp.eq.s32.totalorder %v2405, %v2449
        %vm2682 = vcmp.eq.s32.totalorder %v2406, %v2442
        %vm2683 = vcmp.eq.s32.totalorder %v2406, %v2443
        %vm2684 = vcmp.eq.s32.totalorder %v2406, %v2444
        %vm2685 = vcmp.eq.s32.totalorder %v2406, %v2445
        %vm2686 = vcmp.eq.s32.totalorder %v2406, %v2446
        %vm2687 = vcmp.eq.s32.totalorder %v2406, %v2447
        %vm2688 = vcmp.eq.s32.totalorder %v2406, %v2448
        %vm2689 = vcmp.eq.s32.totalorder %v2406, %v2449
        %vm2690 = vcmp.eq.s32.totalorder %v2407, %v2442
        %vm2691 = vcmp.eq.s32.totalorder %v2407, %v2443
        %vm2692 = vcmp.eq.s32.totalorder %v2407, %v2444
        %vm2693 = vcmp.eq.s32.totalorder %v2407, %v2445
        %vm2694 = vcmp.eq.s32.totalorder %v2407, %v2446
        %vm2695 = vcmp.eq.s32.totalorder %v2407, %v2447
        %vm2696 = vcmp.eq.s32.totalorder %v2407, %v2448
        %vm2697 = vcmp.eq.s32.totalorder %v2407, %v2449
        %vm2698 = vcmp.eq.s32.totalorder %v2408, %v2442
        %vm2699 = vcmp.eq.s32.totalorder %v2408, %v2443
        %vm2700 = vcmp.eq.s32.totalorder %v2408, %v2444
        %vm2701 = vcmp.eq.s32.totalorder %v2408, %v2445
        %vm2702 = vcmp.eq.s32.totalorder %v2408, %v2446
        %vm2703 = vcmp.eq.s32.totalorder %v2408, %v2447
        %vm2704 = vcmp.eq.s32.totalorder %v2408, %v2448
        %vm2705 = vcmp.eq.s32.totalorder %v2408, %v2449
        %vm2706 = vcmp.eq.s32.totalorder %v2409, %v2442
        %vm2707 = vcmp.eq.s32.totalorder %v2409, %v2443
        %vm2708 = vcmp.eq.s32.totalorder %v2409, %v2444
        %vm2709 = vcmp.eq.s32.totalorder %v2409, %v2445
        %vm2710 = vcmp.eq.s32.totalorder %v2409, %v2446
        %vm2711 = vcmp.eq.s32.totalorder %v2409, %v2447
        %vm2712 = vcmp.eq.s32.totalorder %v2409, %v2448
        %vm2713 = vcmp.eq.s32.totalorder %v2409, %v2449
        %vm2714 = vcmp.eq.s32.totalorder %v2410, %v2442
        %vm2715 = vcmp.eq.s32.totalorder %v2410, %v2443
        %vm2716 = vcmp.eq.s32.totalorder %v2410, %v2444
        %vm2717 = vcmp.eq.s32.totalorder %v2410, %v2445
        %vm2718 = vcmp.eq.s32.totalorder %v2410, %v2446
        %vm2719 = vcmp.eq.s32.totalorder %v2410, %v2447
        %vm2720 = vcmp.eq.s32.totalorder %v2410, %v2448
        %vm2721 = vcmp.eq.s32.totalorder %v2410, %v2449
        %vm2722 = vcmp.eq.s32.totalorder %v2411, %v2442
        %vm2723 = vcmp.eq.s32.totalorder %v2411, %v2443
        %vm2724 = vcmp.eq.s32.totalorder %v2411, %v2444
        %vm2725 = vcmp.eq.s32.totalorder %v2411, %v2445
        %vm2726 = vcmp.eq.s32.totalorder %v2411, %v2446
        %vm2727 = vcmp.eq.s32.totalorder %v2411, %v2447
        %vm2728 = vcmp.eq.s32.totalorder %v2411, %v2448
        %vm2729 = vcmp.eq.s32.totalorder %v2411, %v2449
        %vm2730 = vcmp.eq.s32.totalorder %v2412, %v2442
        %vm2731 = vcmp.eq.s32.totalorder %v2412, %v2443
        %vm2732 = vcmp.eq.s32.totalorder %v2412, %v2444
        %vm2733 = vcmp.eq.s32.totalorder %v2412, %v2445
        %vm2734 = vcmp.eq.s32.totalorder %v2412, %v2446
        %vm2735 = vcmp.eq.s32.totalorder %v2412, %v2447
        %vm2736 = vcmp.eq.s32.totalorder %v2412, %v2448
        %vm2737 = vcmp.eq.s32.totalorder %v2412, %v2449
        %vm2738 = vcmp.eq.s32.totalorder %v2413, %v2442
        %vm2739 = vcmp.eq.s32.totalorder %v2413, %v2443
        %vm2740 = vcmp.eq.s32.totalorder %v2413, %v2444
        %vm2741 = vcmp.eq.s32.totalorder %v2413, %v2445
        %vm2742 = vcmp.eq.s32.totalorder %v2413, %v2446
        %vm2743 = vcmp.eq.s32.totalorder %v2413, %v2447
        %vm2744 = vcmp.eq.s32.totalorder %v2413, %v2448
        %vm2745 = vcmp.eq.s32.totalorder %v2413, %v2449
        %vm2746 = vcmp.eq.s32.totalorder %v2414, %v2442
        %vm2747 = vcmp.eq.s32.totalorder %v2414, %v2443
        %vm2748 = vcmp.eq.s32.totalorder %v2414, %v2444
        %vm2749 = vcmp.eq.s32.totalorder %v2414, %v2445
        %vm2750 = vcmp.eq.s32.totalorder %v2414, %v2446
        %vm2751 = vcmp.eq.s32.totalorder %v2414, %v2447
        %vm2752 = vcmp.eq.s32.totalorder %v2414, %v2448
        %vm2753 = vcmp.eq.s32.totalorder %v2414, %v2449
        %vm2754 = vcmp.eq.s32.totalorder %v2415, %v2442
        %vm2755 = vcmp.eq.s32.totalorder %v2415, %v2443
        %vm2756 = vcmp.eq.s32.totalorder %v2415, %v2444
        %vm2757 = vcmp.eq.s32.totalorder %v2415, %v2445
        %vm2758 = vcmp.eq.s32.totalorder %v2415, %v2446
        %vm2759 = vcmp.eq.s32.totalorder %v2415, %v2447
        %vm2760 = vcmp.eq.s32.totalorder %v2415, %v2448
        %vm2761 = vcmp.eq.s32.totalorder %v2415, %v2449
        %vm2762 = vcmp.eq.s32.totalorder %v2416, %v2442
        %vm2763 = vcmp.eq.s32.totalorder %v2416, %v2443
        %vm2764 = vcmp.eq.s32.totalorder %v2416, %v2444
        %vm2765 = vcmp.eq.s32.totalorder %v2416, %v2445
        %vm2766 = vcmp.eq.s32.totalorder %v2416, %v2446
        %vm2767 = vcmp.eq.s32.totalorder %v2416, %v2447
        %vm2768 = vcmp.eq.s32.totalorder %v2416, %v2448
        %vm2769 = vcmp.eq.s32.totalorder %v2416, %v2449
        %vm2770 = vcmp.eq.s32.totalorder %v2417, %v2442
        %vm2771 = vcmp.eq.s32.totalorder %v2417, %v2443
        %vm2772 = vcmp.eq.s32.totalorder %v2417, %v2444
        %vm2773 = vcmp.eq.s32.totalorder %v2417, %v2445
        %vm2774 = vcmp.eq.s32.totalorder %v2417, %v2446
        %vm2775 = vcmp.eq.s32.totalorder %v2417, %v2447
        %vm2776 = vcmp.eq.s32.totalorder %v2417, %v2448
        %vm2777 = vcmp.eq.s32.totalorder %v2417, %v2449
        %vm2778 = vcmp.eq.s32.totalorder %v2418, %v2442
        %vm2779 = vcmp.eq.s32.totalorder %v2418, %v2443
        %vm2780 = vcmp.eq.s32.totalorder %v2418, %v2444
        %vm2781 = vcmp.eq.s32.totalorder %v2418, %v2445
        %vm2782 = vcmp.eq.s32.totalorder %v2418, %v2446
        %vm2783 = vcmp.eq.s32.totalorder %v2418, %v2447
        %vm2784 = vcmp.eq.s32.totalorder %v2418, %v2448
        %vm2785 = vcmp.eq.s32.totalorder %v2418, %v2449
        %vm2786 = vcmp.eq.s32.totalorder %v2419, %v2442
        %vm2787 = vcmp.eq.s32.totalorder %v2419, %v2443
        %vm2788 = vcmp.eq.s32.totalorder %v2419, %v2444
        %vm2789 = vcmp.eq.s32.totalorder %v2419, %v2445
        %vm2790 = vcmp.eq.s32.totalorder %v2419, %v2446
        %vm2791 = vcmp.eq.s32.totalorder %v2419, %v2447
        %vm2792 = vcmp.eq.s32.totalorder %v2419, %v2448
        %vm2793 = vcmp.eq.s32.totalorder %v2419, %v2449
        %vm2794 = vcmp.eq.s32.totalorder %v2420, %v2442
        %vm2795 = vcmp.eq.s32.totalorder %v2420, %v2443
        %vm2796 = vcmp.eq.s32.totalorder %v2420, %v2444
        %vm2797 = vcmp.eq.s32.totalorder %v2420, %v2445
        %vm2798 = vcmp.eq.s32.totalorder %v2420, %v2446
        %vm2799 = vcmp.eq.s32.totalorder %v2420, %v2447
        %vm2800 = vcmp.eq.s32.totalorder %v2420, %v2448
        %vm2801 = vcmp.eq.s32.totalorder %v2420, %v2449
        %vm2802 = vcmp.eq.s32.totalorder %v2421, %v2442
        %vm2803 = vcmp.eq.s32.totalorder %v2421, %v2443
        %vm2804 = vcmp.eq.s32.totalorder %v2421, %v2444
        %vm2805 = vcmp.eq.s32.totalorder %v2421, %v2445
        %vm2806 = vcmp.eq.s32.totalorder %v2421, %v2446
        %vm2807 = vcmp.eq.s32.totalorder %v2421, %v2447
        %vm2808 = vcmp.eq.s32.totalorder %v2421, %v2448
        %vm2809 = vcmp.eq.s32.totalorder %v2421, %v2449
        %vm2810 = vcmp.eq.s32.totalorder %v2422, %v2442
        %vm2811 = vcmp.eq.s32.totalorder %v2422, %v2443
        %vm2812 = vcmp.eq.s32.totalorder %v2422, %v2444
        %vm2813 = vcmp.eq.s32.totalorder %v2422, %v2445
        %vm2814 = vcmp.eq.s32.totalorder %v2422, %v2446
        %vm2815 = vcmp.eq.s32.totalorder %v2422, %v2447
        %vm2816 = vcmp.eq.s32.totalorder %v2422, %v2448
        %vm2817 = vcmp.eq.s32.totalorder %v2422, %v2449
        %vm2818 = vcmp.eq.s32.totalorder %v2423, %v2442
        %vm2819 = vcmp.eq.s32.totalorder %v2423, %v2443
        %vm2820 = vcmp.eq.s32.totalorder %v2423, %v2444
        %vm2821 = vcmp.eq.s32.totalorder %v2423, %v2445
        %vm2822 = vcmp.eq.s32.totalorder %v2423, %v2446
        %vm2823 = vcmp.eq.s32.totalorder %v2423, %v2447
        %vm2824 = vcmp.eq.s32.totalorder %v2423, %v2448
        %vm2825 = vcmp.eq.s32.totalorder %v2423, %v2449
        %vm2826 = vcmp.eq.s32.totalorder %v2424, %v2442
        %vm2827 = vcmp.eq.s32.totalorder %v2424, %v2443
        %vm2828 = vcmp.eq.s32.totalorder %v2424, %v2444
        %vm2829 = vcmp.eq.s32.totalorder %v2424, %v2445
        %vm2830 = vcmp.eq.s32.totalorder %v2424, %v2446
        %vm2831 = vcmp.eq.s32.totalorder %v2424, %v2447
        %vm2832 = vcmp.eq.s32.totalorder %v2424, %v2448
        %vm2833 = vcmp.eq.s32.totalorder %v2424, %v2449
        %vm2834 = vcmp.eq.s32.totalorder %v2425, %v2442
        %vm2835 = vcmp.eq.s32.totalorder %v2425, %v2443
        %vm2836 = vcmp.eq.s32.totalorder %v2425, %v2444
        %vm2837 = vcmp.eq.s32.totalorder %v2425, %v2445
        %vm2838 = vcmp.eq.s32.totalorder %v2425, %v2446
        %vm2839 = vcmp.eq.s32.totalorder %v2425, %v2447
        %vm2840 = vcmp.eq.s32.totalorder %v2425, %v2448
        %vm2841 = vcmp.eq.s32.totalorder %v2425, %v2449
        %vm2842 = vcmp.eq.s32.totalorder %v2426, %v2442
        %vm2843 = vcmp.eq.s32.totalorder %v2426, %v2443
        %vm2844 = vcmp.eq.s32.totalorder %v2426, %v2444
        %vm2845 = vcmp.eq.s32.totalorder %v2426, %v2445
        %vm2846 = vcmp.eq.s32.totalorder %v2426, %v2446
        %vm2847 = vcmp.eq.s32.totalorder %v2426, %v2447
        %vm2848 = vcmp.eq.s32.totalorder %v2426, %v2448
        %vm2849 = vcmp.eq.s32.totalorder %v2426, %v2449
        %vm2850 = vcmp.eq.s32.totalorder %v2427, %v2442
        %vm2851 = vcmp.eq.s32.totalorder %v2427, %v2443
        %vm2852 = vcmp.eq.s32.totalorder %v2427, %v2444
        %vm2853 = vcmp.eq.s32.totalorder %v2427, %v2445
        %vm2854 = vcmp.eq.s32.totalorder %v2427, %v2446
        %vm2855 = vcmp.eq.s32.totalorder %v2427, %v2447
        %vm2856 = vcmp.eq.s32.totalorder %v2427, %v2448
        %vm2857 = vcmp.eq.s32.totalorder %v2427, %v2449
        %vm2858 = vcmp.eq.s32.totalorder %v2428, %v2442
        %vm2859 = vcmp.eq.s32.totalorder %v2428, %v2443
        %vm2860 = vcmp.eq.s32.totalorder %v2428, %v2444
        %vm2861 = vcmp.eq.s32.totalorder %v2428, %v2445
        %vm2862 = vcmp.eq.s32.totalorder %v2428, %v2446
        %vm2863 = vcmp.eq.s32.totalorder %v2428, %v2447
        %vm2864 = vcmp.eq.s32.totalorder %v2428, %v2448
        %vm2865 = vcmp.eq.s32.totalorder %v2428, %v2449
        %vm2866 = vcmp.eq.s32.totalorder %v2429, %v2442
        %vm2867 = vcmp.eq.s32.totalorder %v2429, %v2443
        %vm2868 = vcmp.eq.s32.totalorder %v2429, %v2444
        %vm2869 = vcmp.eq.s32.totalorder %v2429, %v2445
        %vm2870 = vcmp.eq.s32.totalorder %v2429, %v2446
        %vm2871 = vcmp.eq.s32.totalorder %v2429, %v2447
        %vm2872 = vcmp.eq.s32.totalorder %v2429, %v2448
        %vm2873 = vcmp.eq.s32.totalorder %v2429, %v2449
        %vm2874 = vcmp.eq.s32.totalorder %v2430, %v2442
        %vm2875 = vcmp.eq.s32.totalorder %v2430, %v2443
        %vm2876 = vcmp.eq.s32.totalorder %v2430, %v2444
        %vm2877 = vcmp.eq.s32.totalorder %v2430, %v2445
        %vm2878 = vcmp.eq.s32.totalorder %v2430, %v2446
        %vm2879 = vcmp.eq.s32.totalorder %v2430, %v2447
        %vm2880 = vcmp.eq.s32.totalorder %v2430, %v2448
        %vm2881 = vcmp.eq.s32.totalorder %v2430, %v2449
        %vm2882 = vcmp.eq.s32.totalorder %v2431, %v2442
        %vm2883 = vcmp.eq.s32.totalorder %v2431, %v2443
        %vm2884 = vcmp.eq.s32.totalorder %v2431, %v2444
        %vm2885 = vcmp.eq.s32.totalorder %v2431, %v2445
        %vm2886 = vcmp.eq.s32.totalorder %v2431, %v2446
        %vm2887 = vcmp.eq.s32.totalorder %v2431, %v2447
        %vm2888 = vcmp.eq.s32.totalorder %v2431, %v2448
        %vm2889 = vcmp.eq.s32.totalorder %v2431, %v2449
        %vm2890 = vcmp.eq.s32.totalorder %v2432, %v2442
        %vm2891 = vcmp.eq.s32.totalorder %v2432, %v2443
        %vm2892 = vcmp.eq.s32.totalorder %v2432, %v2444
        %vm2893 = vcmp.eq.s32.totalorder %v2432, %v2445
        %vm2894 = vcmp.eq.s32.totalorder %v2432, %v2446
        %vm2895 = vcmp.eq.s32.totalorder %v2432, %v2447
        %vm2896 = vcmp.eq.s32.totalorder %v2432, %v2448
        %vm2897 = vcmp.eq.s32.totalorder %v2432, %v2449
        %vm2898 = vcmp.eq.s32.totalorder %v2433, %v2442
        %vm2899 = vcmp.eq.s32.totalorder %v2433, %v2443
        %vm2900 = vcmp.eq.s32.totalorder %v2433, %v2444
        %vm2901 = vcmp.eq.s32.totalorder %v2433, %v2445
        %vm2902 = vcmp.eq.s32.totalorder %v2433, %v2446
        %vm2903 = vcmp.eq.s32.totalorder %v2433, %v2447
        %vm2904 = vcmp.eq.s32.totalorder %v2433, %v2448
        %vm2905 = vcmp.eq.s32.totalorder %v2433, %v2449
        %vm2906 = vcmp.eq.s32.totalorder %v2434, %v2442
        %vm2907 = vcmp.eq.s32.totalorder %v2434, %v2443
        %vm2908 = vcmp.eq.s32.totalorder %v2434, %v2444
        %vm2909 = vcmp.eq.s32.totalorder %v2434, %v2445
        %vm2910 = vcmp.eq.s32.totalorder %v2434, %v2446
        %vm2911 = vcmp.eq.s32.totalorder %v2434, %v2447
        %vm2912 = vcmp.eq.s32.totalorder %v2434, %v2448
        %vm2913 = vcmp.eq.s32.totalorder %v2434, %v2449
        %vm2914 = vcmp.eq.s32.totalorder %v2435, %v2442
        %vm2915 = vcmp.eq.s32.totalorder %v2435, %v2443
        %vm2916 = vcmp.eq.s32.totalorder %v2435, %v2444
        %vm2917 = vcmp.eq.s32.totalorder %v2435, %v2445
        %vm2918 = vcmp.eq.s32.totalorder %v2435, %v2446
        %vm2919 = vcmp.eq.s32.totalorder %v2435, %v2447
        %vm2920 = vcmp.eq.s32.totalorder %v2435, %v2448
        %vm2921 = vcmp.eq.s32.totalorder %v2435, %v2449
        %vm2922 = vcmp.eq.s32.totalorder %v2436, %v2442
        %vm2923 = vcmp.eq.s32.totalorder %v2436, %v2443
        %vm2924 = vcmp.eq.s32.totalorder %v2436, %v2444
        %vm2925 = vcmp.eq.s32.totalorder %v2436, %v2445
        %vm2926 = vcmp.eq.s32.totalorder %v2436, %v2446
        %vm2927 = vcmp.eq.s32.totalorder %v2436, %v2447
        %vm2928 = vcmp.eq.s32.totalorder %v2436, %v2448
        %vm2929 = vcmp.eq.s32.totalorder %v2436, %v2449
        %vm2930 = vcmp.eq.s32.totalorder %v2437, %v2442
        %vm2931 = vcmp.eq.s32.totalorder %v2437, %v2443
        %vm2932 = vcmp.eq.s32.totalorder %v2437, %v2444
        %vm2933 = vcmp.eq.s32.totalorder %v2437, %v2445
        %vm2934 = vcmp.eq.s32.totalorder %v2437, %v2446
        %vm2935 = vcmp.eq.s32.totalorder %v2437, %v2447
        %vm2936 = vcmp.eq.s32.totalorder %v2437, %v2448
        %vm2937 = vcmp.eq.s32.totalorder %v2437, %v2449
        %vm2938 = vcmp.eq.s32.totalorder %v2438, %v2442
        %vm2939 = vcmp.eq.s32.totalorder %v2438, %v2443
        %vm2940 = vcmp.eq.s32.totalorder %v2438, %v2444
        %vm2941 = vcmp.eq.s32.totalorder %v2438, %v2445
        %vm2942 = vcmp.eq.s32.totalorder %v2438, %v2446
        %vm2943 = vcmp.eq.s32.totalorder %v2438, %v2447
        %vm2944 = vcmp.eq.s32.totalorder %v2438, %v2448
        %vm2945 = vcmp.eq.s32.totalorder %v2438, %v2449
        %vm2946 = vcmp.eq.s32.totalorder %v2439, %v2442
        %vm2947 = vcmp.eq.s32.totalorder %v2439, %v2443
        %vm2948 = vcmp.eq.s32.totalorder %v2439, %v2444
        %vm2949 = vcmp.eq.s32.totalorder %v2439, %v2445
        %vm2950 = vcmp.eq.s32.totalorder %v2439, %v2446
        %vm2951 = vcmp.eq.s32.totalorder %v2439, %v2447
        %vm2952 = vcmp.eq.s32.totalorder %v2439, %v2448
        %vm2953 = vcmp.eq.s32.totalorder %v2439, %v2449
        %vm2954 = vcmp.eq.s32.totalorder %v2440, %v2442
        %vm2955 = vcmp.eq.s32.totalorder %v2440, %v2443
        %vm2956 = vcmp.eq.s32.totalorder %v2440, %v2444
        %vm2957 = vcmp.eq.s32.totalorder %v2440, %v2445
        %vm2958 = vcmp.eq.s32.totalorder %v2440, %v2446
        %vm2959 = vcmp.eq.s32.totalorder %v2440, %v2447
        %vm2960 = vcmp.eq.s32.totalorder %v2440, %v2448
        %vm2961 = vcmp.eq.s32.totalorder %v2440, %v2449
        %v2962 = vsel %vm2450, 1, 0
        %v2963 = vsel %vm2451, 1, 0
        %v2964 = vsel %vm2452, 1, 0
        %v2965 = vsel %vm2453, 1, 0
        %v2966 = vsel %vm2454, 1, 0
        %v2967 = vsel %vm2455, 1, 0
        %v2968 = vsel %vm2456, 1, 0
        %v2969 = vsel %vm2457, 1, 0
        %v2970 = vsel %vm2458, 1, 0
        %v2971 = vsel %vm2459, 1, 0
        %v2972 = vsel %vm2460, 1, 0
        %v2973 = vsel %vm2461, 1, 0
        %v2974 = vsel %vm2462, 1, 0
        %v2975 = vsel %vm2463, 1, 0
        %v2976 = vsel %vm2464, 1, 0
        %v2977 = vsel %vm2465, 1, 0
        %v2978 = vsel %vm2466, 1, 0
        %v2979 = vsel %vm2467, 1, 0
        %v2980 = vsel %vm2468, 1, 0
        %v2981 = vsel %vm2469, 1, 0
        %v2982 = vsel %vm2470, 1, 0
        %v2983 = vsel %vm2471, 1, 0
        %v2984 = vsel %vm2472, 1, 0
        %v2985 = vsel %vm2473, 1, 0
        %v2986 = vsel %vm2474, 1, 0
        %v2987 = vsel %vm2475, 1, 0
        %v2988 = vsel %vm2476, 1, 0
        %v2989 = vsel %vm2477, 1, 0
        %v2990 = vsel %vm2478, 1, 0
        %v2991 = vsel %vm2479, 1, 0
        %v2992 = vsel %vm2480, 1, 0
        %v2993 = vsel %vm2481, 1, 0
        %v2994 = vsel %vm2482, 1, 0
        %v2995 = vsel %vm2483, 1, 0
        %v2996 = vsel %vm2484, 1, 0
        %v2997 = vsel %vm2485, 1, 0
        %v2998 = vsel %vm2486, 1, 0
        %v2999 = vsel %vm2487, 1, 0
        %v3000 = vsel %vm2488, 1, 0
        %v3001 = vsel %vm2489, 1, 0
        %v3002 = vsel %vm2490, 1, 0
        %v3003 = vsel %vm2491, 1, 0
        %v3004 = vsel %vm2492, 1, 0
        %v3005 = vsel %vm2493, 1, 0
        %v3006 = vsel %vm2494, 1, 0
        %v3007 = vsel %vm2495, 1, 0
        %v3008 = vsel %vm2496, 1, 0
        %v3009 = vsel %vm2497, 1, 0
        %v3010 = vsel %vm2498, 1, 0
        %v3011 = vsel %vm2499, 1, 0
        %v3012 = vsel %vm2500, 1, 0
        %v3013 = vsel %vm2501, 1, 0
        %v3014 = vsel %vm2502, 1, 0
        %v3015 = vsel %vm2503, 1, 0
        %v3016 = vsel %vm2504, 1, 0
        %v3017 = vsel %vm2505, 1, 0
        %v3018 = vsel %vm2506, 1, 0
        %v3019 = vsel %vm2507, 1, 0
        %v3020 = vsel %vm2508, 1, 0
        %v3021 = vsel %vm2509, 1, 0
        %v3022 = vsel %vm2510, 1, 0
        %v3023 = vsel %vm2511, 1, 0
        %v3024 = vsel %vm2512, 1, 0
        %v3025 = vsel %vm2513, 1, 0
        %v3026 = vsel %vm2514, 1, 0
        %v3027 = vsel %vm2515, 1, 0
        %v3028 = vsel %vm2516, 1, 0
        %v3029 = vsel %vm2517, 1, 0
        %v3030 = vsel %vm2518, 1, 0
        %v3031 = vsel %vm2519, 1, 0
        %v3032 = vsel %vm2520, 1, 0
        %v3033 = vsel %vm2521, 1, 0
        %v3034 = vsel %vm2522, 1, 0
        %v3035 = vsel %vm2523, 1, 0
        %v3036 = vsel %vm2524, 1, 0
        %v3037 = vsel %vm2525, 1, 0
        %v3038 = vsel %vm2526, 1, 0
        %v3039 = vsel %vm2527, 1, 0
        %v3040 = vsel %vm2528, 1, 0
        %v3041 = vsel %vm2529, 1, 0
        %v3042 = vsel %vm2530, 1, 0
        %v3043 = vsel %vm2531, 1, 0
        %v3044 = vsel %vm2532, 1, 0
        %v3045 = vsel %vm2533, 1, 0
        %v3046 = vsel %vm2534, 1, 0
        %v3047 = vsel %vm2535, 1, 0
        %v3048 = vsel %vm2536, 1, 0
        %v3049 = vsel %vm2537, 1, 0
        %v3050 = vsel %vm2538, 1, 0
        %v3051 = vsel %vm2539, 1, 0
        %v3052 = vsel %vm2540, 1, 0
        %v3053 = vsel %vm2541, 1, 0
        %v3054 = vsel %vm2542, 1, 0
        %v3055 = vsel %vm2543, 1, 0
        %v3056 = vsel %vm2544, 1, 0
        %v3057 = vsel %vm2545, 1, 0
        %v3058 = vsel %vm2546, 1, 0
        %v3059 = vsel %vm2547, 1, 0
        %v3060 = vsel %vm2548, 1, 0
        %v3061 = vsel %vm2549, 1, 0
        %v3062 = vsel %vm2550, 1, 0
        %v3063 = vsel %vm2551, 1, 0
        %v3064 = vsel %vm2552, 1, 0
        %v3065 = vsel %vm2553, 1, 0
        %v3066 = vsel %vm2554, 1, 0
        %v3067 = vsel %vm2555, 1, 0
        %v3068 = vsel %vm2556, 1, 0
        %v3069 = vsel %vm2557, 1, 0
        %v3070 = vsel %vm2558, 1, 0
        %v3071 = vsel %vm2559, 1, 0
        %v3072 = vsel %vm2560, 1, 0
        %v3073 = vsel %vm2561, 1, 0
        %v3074 = vsel %vm2562, 1, 0
        %v3075 = vsel %vm2563, 1, 0
        %v3076 = vsel %vm2564, 1, 0
        %v3077 = vsel %vm2565, 1, 0
        %v3078 = vsel %vm2566, 1, 0
        %v3079 = vsel %vm2567, 1, 0
        %v3080 = vsel %vm2568, 1, 0
        %v3081 = vsel %vm2569, 1, 0
        %v3082 = vsel %vm2570, 1, 0
        %v3083 = vsel %vm2571, 1, 0
        %v3084 = vsel %vm2572, 1, 0
        %v3085 = vsel %vm2573, 1, 0
        %v3086 = vsel %vm2574, 1, 0
        %v3087 = vsel %vm2575, 1, 0
        %v3088 = vsel %vm2576, 1, 0
        %v3089 = vsel %vm2577, 1, 0
        %v3090 = vsel %vm2578, 1, 0
        %v3091 = vsel %vm2579, 1, 0
        %v3092 = vsel %vm2580, 1, 0
        %v3093 = vsel %vm2581, 1, 0
        %v3094 = vsel %vm2582, 1, 0
        %v3095 = vsel %vm2583, 1, 0
        %v3096 = vsel %vm2584, 1, 0
        %v3097 = vsel %vm2585, 1, 0
        %v3098 = vsel %vm2586, 1, 0
        %v3099 = vsel %vm2587, 1, 0
        %v3100 = vsel %vm2588, 1, 0
        %v3101 = vsel %vm2589, 1, 0
        %v3102 = vsel %vm2590, 1, 0
        %v3103 = vsel %vm2591, 1, 0
        %v3104 = vsel %vm2592, 1, 0
        %v3105 = vsel %vm2593, 1, 0
        %v3106 = vsel %vm2594, 1, 0
        %v3107 = vsel %vm2595, 1, 0
        %v3108 = vsel %vm2596, 1, 0
        %v3109 = vsel %vm2597, 1, 0
        %v3110 = vsel %vm2598, 1, 0
        %v3111 = vsel %vm2599, 1, 0
        %v3112 = vsel %vm2600, 1, 0
        %v3113 = vsel %vm2601, 1, 0
        %v3114 = vsel %vm2602, 1, 0
        %v3115 = vsel %vm2603, 1, 0
        %v3116 = vsel %vm2604, 1, 0
        %v3117 = vsel %vm2605, 1, 0
        %v3118 = vsel %vm2606, 1, 0
        %v3119 = vsel %vm2607, 1, 0
        %v3120 = vsel %vm2608, 1, 0
        %v3121 = vsel %vm2609, 1, 0
        %v3122 = vsel %vm2610, 1, 0
        %v3123 = vsel %vm2611, 1, 0
        %v3124 = vsel %vm2612, 1, 0
        %v3125 = vsel %vm2613, 1, 0
        %v3126 = vsel %vm2614, 1, 0
        %v3127 = vsel %vm2615, 1, 0
        %v3128 = vsel %vm2616, 1, 0
        %v3129 = vsel %vm2617, 1, 0
        %v3130 = vsel %vm2618, 1, 0
        %v3131 = vsel %vm2619, 1, 0
        %v3132 = vsel %vm2620, 1, 0
        %v3133 = vsel %vm2621, 1, 0
        %v3134 = vsel %vm2622, 1, 0
        %v3135 = vsel %vm2623, 1, 0
        %v3136 = vsel %vm2624, 1, 0
        %v3137 = vsel %vm2625, 1, 0
        %v3138 = vsel %vm2626, 1, 0
        %v3139 = vsel %vm2627, 1, 0
        %v3140 = vsel %vm2628, 1, 0
        %v3141 = vsel %vm2629, 1, 0
        %v3142 = vsel %vm2630, 1, 0
        %v3143 = vsel %vm2631, 1, 0
        %v3144 = vsel %vm2632, 1, 0
        %v3145 = vsel %vm2633, 1, 0
        %v3146 = vsel %vm2634, 1, 0
        %v3147 = vsel %vm2635, 1, 0
        %v3148 = vsel %vm2636, 1, 0
        %v3149 = vsel %vm2637, 1, 0
        %v3150 = vsel %vm2638, 1, 0
        %v3151 = vsel %vm2639, 1, 0
        %v3152 = vsel %vm2640, 1, 0
        %v3153 = vsel %vm2641, 1, 0
        %v3154 = vsel %vm2642, 1, 0
        %v3155 = vsel %vm2643, 1, 0
        %v3156 = vsel %vm2644, 1, 0
        %v3157 = vsel %vm2645, 1, 0
        %v3158 = vsel %vm2646, 1, 0
        %v3159 = vsel %vm2647, 1, 0
        %v3160 = vsel %vm2648, 1, 0
        %v3161 = vsel %vm2649, 1, 0
        %v3162 = vsel %vm2650, 1, 0
        %v3163 = vsel %vm2651, 1, 0
        %v3164 = vsel %vm2652, 1, 0
        %v3165 = vsel %vm2653, 1, 0
        %v3166 = vsel %vm2654, 1, 0
        %v3167 = vsel %vm2655, 1, 0
        %v3168 = vsel %vm2656, 1, 0
        %v3169 = vsel %vm2657, 1, 0
        %v3170 = vsel %vm2658, 1, 0
        %v3171 = vsel %vm2659, 1, 0
        %v3172 = vsel %vm2660, 1, 0
        %v3173 = vsel %vm2661, 1, 0
        %v3174 = vsel %vm2662, 1, 0
        %v3175 = vsel %vm2663, 1, 0
        %v3176 = vsel %vm2664, 1, 0
        %v3177 = vsel %vm2665, 1, 0
        %v3178 = vsel %vm2666, 1, 0
        %v3179 = vsel %vm2667, 1, 0
        %v3180 = vsel %vm2668, 1, 0
        %v3181 = vsel %vm2669, 1, 0
        %v3182 = vsel %vm2670, 1, 0
        %v3183 = vsel %vm2671, 1, 0
        %v3184 = vsel %vm2672, 1, 0
        %v3185 = vsel %vm2673, 1, 0
        %v3186 = vsel %vm2674, 1, 0
        %v3187 = vsel %vm2675, 1, 0
        %v3188 = vsel %vm2676, 1, 0
        %v3189 = vsel %vm2677, 1, 0
        %v3190 = vsel %vm2678, 1, 0
        %v3191 = vsel %vm2679, 1, 0
        %v3192 = vsel %vm2680, 1, 0
        %v3193 = vsel %vm2681, 1, 0
        %v3194 = vsel %vm2682, 1, 0
        %v3195 = vsel %vm2683, 1, 0
        %v3196 = vsel %vm2684, 1, 0
        %v3197 = vsel %vm2685, 1, 0
        %v3198 = vsel %vm2686, 1, 0
        %v3199 = vsel %vm2687, 1, 0
        %v3200 = vsel %vm2688, 1, 0
        %v3201 = vsel %vm2689, 1, 0
        %v3202 = vsel %vm2690, 1, 0
        %v3203 = vsel %vm2691, 1, 0
        %v3204 = vsel %vm2692, 1, 0
        %v3205 = vsel %vm2693, 1, 0
        %v3206 = vsel %vm2694, 1, 0
        %v3207 = vsel %vm2695, 1, 0
        %v3208 = vsel %vm2696, 1, 0
        %v3209 = vsel %vm2697, 1, 0
        %v3210 = vsel %vm2698, 1, 0
        %v3211 = vsel %vm2699, 1, 0
        %v3212 = vsel %vm2700, 1, 0
        %v3213 = vsel %vm2701, 1, 0
        %v3214 = vsel %vm2702, 1, 0
        %v3215 = vsel %vm2703, 1, 0
        %v3216 = vsel %vm2704, 1, 0
        %v3217 = vsel %vm2705, 1, 0
        %v3218 = vsel %vm2706, 1, 0
        %v3219 = vsel %vm2707, 1, 0
        %v3220 = vsel %vm2708, 1, 0
        %v3221 = vsel %vm2709, 1, 0
        %v3222 = vsel %vm2710, 1, 0
        %v3223 = vsel %vm2711, 1, 0
        %v3224 = vsel %vm2712, 1, 0
        %v3225 = vsel %vm2713, 1, 0
        %v3226 = vsel %vm2714, 1, 0
        %v3227 = vsel %vm2715, 1, 0
        %v3228 = vsel %vm2716, 1, 0
        %v3229 = vsel %vm2717, 1, 0
        %v3230 = vsel %vm2718, 1, 0
        %v3231 = vsel %vm2719, 1, 0
        %v3232 = vsel %vm2720, 1, 0
        %v3233 = vsel %vm2721, 1, 0
        %v3234 = vsel %vm2722, 1, 0
        %v3235 = vsel %vm2723, 1, 0
        %v3236 = vsel %vm2724, 1, 0
        %v3237 = vsel %vm2725, 1, 0
        %v3238 = vsel %vm2726, 1, 0
        %v3239 = vsel %vm2727, 1, 0
        %v3240 = vsel %vm2728, 1, 0
        %v3241 = vsel %vm2729, 1, 0
        %v3242 = vsel %vm2730, 1, 0
        %v3243 = vsel %vm2731, 1, 0
        %v3244 = vsel %vm2732, 1, 0
        %v3245 = vsel %vm2733, 1, 0
        %v3246 = vsel %vm2734, 1, 0
        %v3247 = vsel %vm2735, 1, 0
        %v3248 = vsel %vm2736, 1, 0
        %v3249 = vsel %vm2737, 1, 0
        %v3250 = vsel %vm2738, 1, 0
        %v3251 = vsel %vm2739, 1, 0
        %v3252 = vsel %vm2740, 1, 0
        %v3253 = vsel %vm2741, 1, 0
        %v3254 = vsel %vm2742, 1, 0
        %v3255 = vsel %vm2743, 1, 0
        %v3256 = vsel %vm2744, 1, 0
        %v3257 = vsel %vm2745, 1, 0
        %v3258 = vsel %vm2746, 1, 0
        %v3259 = vsel %vm2747, 1, 0
        %v3260 = vsel %vm2748, 1, 0
        %v3261 = vsel %vm2749, 1, 0
        %v3262 = vsel %vm2750, 1, 0
        %v3263 = vsel %vm2751, 1, 0
        %v3264 = vsel %vm2752, 1, 0
        %v3265 = vsel %vm2753, 1, 0
        %v3266 = vsel %vm2754, 1, 0
        %v3267 = vsel %vm2755, 1, 0
        %v3268 = vsel %vm2756, 1, 0
        %v3269 = vsel %vm2757, 1, 0
        %v3270 = vsel %vm2758, 1, 0
        %v3271 = vsel %vm2759, 1, 0
        %v3272 = vsel %vm2760, 1, 0
        %v3273 = vsel %vm2761, 1, 0
        %v3274 = vsel %vm2762, 1, 0
        %v3275 = vsel %vm2763, 1, 0
        %v3276 = vsel %vm2764, 1, 0
        %v3277 = vsel %vm2765, 1, 0
        %v3278 = vsel %vm2766, 1, 0
        %v3279 = vsel %vm2767, 1, 0
        %v3280 = vsel %vm2768, 1, 0
        %v3281 = vsel %vm2769, 1, 0
        %v3282 = vsel %vm2770, 1, 0
        %v3283 = vsel %vm2771, 1, 0
        %v3284 = vsel %vm2772, 1, 0
        %v3285 = vsel %vm2773, 1, 0
        %v3286 = vsel %vm2774, 1, 0
        %v3287 = vsel %vm2775, 1, 0
        %v3288 = vsel %vm2776, 1, 0
        %v3289 = vsel %vm2777, 1, 0
        %v3290 = vsel %vm2778, 1, 0
        %v3291 = vsel %vm2779, 1, 0
        %v3292 = vsel %vm2780, 1, 0
        %v3293 = vsel %vm2781, 1, 0
        %v3294 = vsel %vm2782, 1, 0
        %v3295 = vsel %vm2783, 1, 0
        %v3296 = vsel %vm2784, 1, 0
        %v3297 = vsel %vm2785, 1, 0
        %v3298 = vsel %vm2786, 1, 0
        %v3299 = vsel %vm2787, 1, 0
        %v3300 = vsel %vm2788, 1, 0
        %v3301 = vsel %vm2789, 1, 0
        %v3302 = vsel %vm2790, 1, 0
        %v3303 = vsel %vm2791, 1, 0
        %v3304 = vsel %vm2792, 1, 0
        %v3305 = vsel %vm2793, 1, 0
        %v3306 = vsel %vm2794, 1, 0
        %v3307 = vsel %vm2795, 1, 0
        %v3308 = vsel %vm2796, 1, 0
        %v3309 = vsel %vm2797, 1, 0
        %v3310 = vsel %vm2798, 1, 0
        %v3311 = vsel %vm2799, 1, 0
        %v3312 = vsel %vm2800, 1, 0
        %v3313 = vsel %vm2801, 1, 0
        %v3314 = vsel %vm2802, 1, 0
        %v3315 = vsel %vm2803, 1, 0
        %v3316 = vsel %vm2804, 1, 0
        %v3317 = vsel %vm2805, 1, 0
        %v3318 = vsel %vm2806, 1, 0
        %v3319 = vsel %vm2807, 1, 0
        %v3320 = vsel %vm2808, 1, 0
        %v3321 = vsel %vm2809, 1, 0
        %v3322 = vsel %vm2810, 1, 0
        %v3323 = vsel %vm2811, 1, 0
        %v3324 = vsel %vm2812, 1, 0
        %v3325 = vsel %vm2813, 1, 0
        %v3326 = vsel %vm2814, 1, 0
        %v3327 = vsel %vm2815, 1, 0
        %v3328 = vsel %vm2816, 1, 0
        %v3329 = vsel %vm2817, 1, 0
        %v3330 = vsel %vm2818, 1, 0
        %v3331 = vsel %vm2819, 1, 0
        %v3332 = vsel %vm2820, 1, 0
        %v3333 = vsel %vm2821, 1, 0
        %v3334 = vsel %vm2822, 1, 0
        %v3335 = vsel %vm2823, 1, 0
        %v3336 = vsel %vm2824, 1, 0
        %v3337 = vsel %vm2825, 1, 0
        %v3338 = vsel %vm2826, 1, 0
        %v3339 = vsel %vm2827, 1, 0
        %v3340 = vsel %vm2828, 1, 0
        %v3341 = vsel %vm2829, 1, 0
        %v3342 = vsel %vm2830, 1, 0
        %v3343 = vsel %vm2831, 1, 0
        %v3344 = vsel %vm2832, 1, 0
        %v3345 = vsel %vm2833, 1, 0
        %v3346 = vsel %vm2834, 1, 0
        %v3347 = vsel %vm2835, 1, 0
        %v3348 = vsel %vm2836, 1, 0
        %v3349 = vsel %vm2837, 1, 0
        %v3350 = vsel %vm2838, 1, 0
        %v3351 = vsel %vm2839, 1, 0
        %v3352 = vsel %vm2840, 1, 0
        %v3353 = vsel %vm2841, 1, 0
        %v3354 = vsel %vm2842, 1, 0
        %v3355 = vsel %vm2843, 1, 0
        %v3356 = vsel %vm2844, 1, 0
        %v3357 = vsel %vm2845, 1, 0
        %v3358 = vsel %vm2846, 1, 0
        %v3359 = vsel %vm2847, 1, 0
        %v3360 = vsel %vm2848, 1, 0
        %v3361 = vsel %vm2849, 1, 0
        %v3362 = vsel %vm2850, 1, 0
        %v3363 = vsel %vm2851, 1, 0
        %v3364 = vsel %vm2852, 1, 0
        %v3365 = vsel %vm2853, 1, 0
        %v3366 = vsel %vm2854, 1, 0
        %v3367 = vsel %vm2855, 1, 0
        %v3368 = vsel %vm2856, 1, 0
        %v3369 = vsel %vm2857, 1, 0
        %v3370 = vsel %vm2858, 1, 0
        %v3371 = vsel %vm2859, 1, 0
        %v3372 = vsel %vm2860, 1, 0
        %v3373 = vsel %vm2861, 1, 0
        %v3374 = vsel %vm2862, 1, 0
        %v3375 = vsel %vm2863, 1, 0
        %v3376 = vsel %vm2864, 1, 0
        %v3377 = vsel %vm2865, 1, 0
        %v3378 = vsel %vm2866, 1, 0
        %v3379 = vsel %vm2867, 1, 0
        %v3380 = vsel %vm2868, 1, 0
        %v3381 = vsel %vm2869, 1, 0
        %v3382 = vsel %vm2870, 1, 0
        %v3383 = vsel %vm2871, 1, 0
        %v3384 = vsel %vm2872, 1, 0
        %v3385 = vsel %vm2873, 1, 0
        %v3386 = vsel %vm2874, 1, 0
        %v3387 = vsel %vm2875, 1, 0
        %v3388 = vsel %vm2876, 1, 0
        %v3389 = vsel %vm2877, 1, 0
        %v3390 = vsel %vm2878, 1, 0
        %v3391 = vsel %vm2879, 1, 0
        %v3392 = vsel %vm2880, 1, 0
        %v3393 = vsel %vm2881, 1, 0
        %v3394 = vsel %vm2882, 1, 0
        %v3395 = vsel %vm2883, 1, 0
        %v3396 = vsel %vm2884, 1, 0
        %v3397 = vsel %vm2885, 1, 0
        %v3398 = vsel %vm2886, 1, 0
        %v3399 = vsel %vm2887, 1, 0
        %v3400 = vsel %vm2888, 1, 0
        %v3401 = vsel %vm2889, 1, 0
        %v3402 = vsel %vm2890, 1, 0
        %v3403 = vsel %vm2891, 1, 0
        %v3404 = vsel %vm2892, 1, 0
        %v3405 = vsel %vm2893, 1, 0
        %v3406 = vsel %vm2894, 1, 0
        %v3407 = vsel %vm2895, 1, 0
        %v3408 = vsel %vm2896, 1, 0
        %v3409 = vsel %vm2897, 1, 0
        %v3410 = vsel %vm2898, 1, 0
        %v3411 = vsel %vm2899, 1, 0
        %v3412 = vsel %vm2900, 1, 0
        %v3413 = vsel %vm2901, 1, 0
        %v3414 = vsel %vm2902, 1, 0
        %v3415 = vsel %vm2903, 1, 0
        %v3416 = vsel %vm2904, 1, 0
        %v3417 = vsel %vm2905, 1, 0
        %v3418 = vsel %vm2906, 1, 0
        %v3419 = vsel %vm2907, 1, 0
        %v3420 = vsel %vm2908, 1, 0
        %v3421 = vsel %vm2909, 1, 0
        %v3422 = vsel %vm2910, 1, 0
        %v3423 = vsel %vm2911, 1, 0
        %v3424 = vsel %vm2912, 1, 0
        %v3425 = vsel %vm2913, 1, 0
        %v3426 = vsel %vm2914, 1, 0
        %v3427 = vsel %vm2915, 1, 0
        %v3428 = vsel %vm2916, 1, 0
        %v3429 = vsel %vm2917, 1, 0
        %v3430 = vsel %vm2918, 1, 0
        %v3431 = vsel %vm2919, 1, 0
        %v3432 = vsel %vm2920, 1, 0
        %v3433 = vsel %vm2921, 1, 0
        %v3434 = vsel %vm2922, 1, 0
        %v3435 = vsel %vm2923, 1, 0
        %v3436 = vsel %vm2924, 1, 0
        %v3437 = vsel %vm2925, 1, 0
        %v3438 = vsel %vm2926, 1, 0
        %v3439 = vsel %vm2927, 1, 0
        %v3440 = vsel %vm2928, 1, 0
        %v3441 = vsel %vm2929, 1, 0
        %v3442 = vsel %vm2930, 1, 0
        %v3443 = vsel %vm2931, 1, 0
        %v3444 = vsel %vm2932, 1, 0
        %v3445 = vsel %vm2933, 1, 0
        %v3446 = vsel %vm2934, 1, 0
        %v3447 = vsel %vm2935, 1, 0
        %v3448 = vsel %vm2936, 1, 0
        %v3449 = vsel %vm2937, 1, 0
        %v3450 = vsel %vm2938, 1, 0
        %v3451 = vsel %vm2939, 1, 0
        %v3452 = vsel %vm2940, 1, 0
        %v3453 = vsel %vm2941, 1, 0
        %v3454 = vsel %vm2942, 1, 0
        %v3455 = vsel %vm2943, 1, 0
        %v3456 = vsel %vm2944, 1, 0
        %v3457 = vsel %vm2945, 1, 0
        %v3458 = vsel %vm2946, 1, 0
        %v3459 = vsel %vm2947, 1, 0
        %v3460 = vsel %vm2948, 1, 0
        %v3461 = vsel %vm2949, 1, 0
        %v3462 = vsel %vm2950, 1, 0
        %v3463 = vsel %vm2951, 1, 0
        %v3464 = vsel %vm2952, 1, 0
        %v3465 = vsel %vm2953, 1, 0
        %v3466 = vsel %vm2954, 1, 0
        %v3467 = vsel %vm2955, 1, 0
        %v3468 = vsel %vm2956, 1, 0
        %v3469 = vsel %vm2957, 1, 0
        %v3470 = vsel %vm2958, 1, 0
        %v3471 = vsel %vm2959, 1, 0
        %v3472 = vsel %vm2960, 1, 0
        %v3473 = vsel %vm2961, 1, 0
        %v3474 = vcvt.s32.f32 %v2962
        %v3475 = vcvt.s32.f32 %v2963
        %v3476 = vcvt.s32.f32 %v2964
        %v3477 = vcvt.s32.f32 %v2965
        %v3478 = vcvt.s32.f32 %v2966
        %v3479 = vcvt.s32.f32 %v2967
        %v3480 = vcvt.s32.f32 %v2968
        %v3481 = vcvt.s32.f32 %v2969
        %v3482 = vcvt.s32.f32 %v2970
        %v3483 = vcvt.s32.f32 %v2971
        %v3484 = vcvt.s32.f32 %v2972
        %v3485 = vcvt.s32.f32 %v2973
        %v3486 = vcvt.s32.f32 %v2974
        %v3487 = vcvt.s32.f32 %v2975
        %v3488 = vcvt.s32.f32 %v2976
        %v3489 = vcvt.s32.f32 %v2977
        %v3490 = vcvt.s32.f32 %v2978
        %v3491 = vcvt.s32.f32 %v2979
        %v3492 = vcvt.s32.f32 %v2980
        %v3493 = vcvt.s32.f32 %v2981
        %v3494 = vcvt.s32.f32 %v2982
        %v3495 = vcvt.s32.f32 %v2983
        %v3496 = vcvt.s32.f32 %v2984
        %v3497 = vcvt.s32.f32 %v2985
        %v3498 = vcvt.s32.f32 %v2986
        %v3499 = vcvt.s32.f32 %v2987
        %v3500 = vcvt.s32.f32 %v2988
        %v3501 = vcvt.s32.f32 %v2989
        %v3502 = vcvt.s32.f32 %v2990
        %v3503 = vcvt.s32.f32 %v2991
        %v3504 = vcvt.s32.f32 %v2992
        %v3505 = vcvt.s32.f32 %v2993
        %v3506 = vcvt.s32.f32 %v2994
        %v3507 = vcvt.s32.f32 %v2995
        %v3508 = vcvt.s32.f32 %v2996
        %v3509 = vcvt.s32.f32 %v2997
        %v3510 = vcvt.s32.f32 %v2998
        %v3511 = vcvt.s32.f32 %v2999
        %v3512 = vcvt.s32.f32 %v3000
        %v3513 = vcvt.s32.f32 %v3001
        %v3514 = vcvt.s32.f32 %v3002
        %v3515 = vcvt.s32.f32 %v3003
        %v3516 = vcvt.s32.f32 %v3004
        %v3517 = vcvt.s32.f32 %v3005
        %v3518 = vcvt.s32.f32 %v3006
        %v3519 = vcvt.s32.f32 %v3007
        %v3520 = vcvt.s32.f32 %v3008
        %v3521 = vcvt.s32.f32 %v3009
        %v3522 = vcvt.s32.f32 %v3010
        %v3523 = vcvt.s32.f32 %v3011
        %v3524 = vcvt.s32.f32 %v3012
        %v3525 = vcvt.s32.f32 %v3013
        %v3526 = vcvt.s32.f32 %v3014
        %v3527 = vcvt.s32.f32 %v3015
        %v3528 = vcvt.s32.f32 %v3016
        %v3529 = vcvt.s32.f32 %v3017
        %v3530 = vcvt.s32.f32 %v3018
        %v3531 = vcvt.s32.f32 %v3019
        %v3532 = vcvt.s32.f32 %v3020
        %v3533 = vcvt.s32.f32 %v3021
        %v3534 = vcvt.s32.f32 %v3022
        %v3535 = vcvt.s32.f32 %v3023
        %v3536 = vcvt.s32.f32 %v3024
        %v3537 = vcvt.s32.f32 %v3025
        %v3538 = vcvt.s32.f32 %v3026
        %v3539 = vcvt.s32.f32 %v3027
        %v3540 = vcvt.s32.f32 %v3028
        %v3541 = vcvt.s32.f32 %v3029
        %v3542 = vcvt.s32.f32 %v3030
        %v3543 = vcvt.s32.f32 %v3031
        %v3544 = vcvt.s32.f32 %v3032
        %v3545 = vcvt.s32.f32 %v3033
        %v3546 = vcvt.s32.f32 %v3034
        %v3547 = vcvt.s32.f32 %v3035
        %v3548 = vcvt.s32.f32 %v3036
        %v3549 = vcvt.s32.f32 %v3037
        %v3550 = vcvt.s32.f32 %v3038
        %v3551 = vcvt.s32.f32 %v3039
        %v3552 = vcvt.s32.f32 %v3040
        %v3553 = vcvt.s32.f32 %v3041
        %v3554 = vcvt.s32.f32 %v3042
        %v3555 = vcvt.s32.f32 %v3043
        %v3556 = vcvt.s32.f32 %v3044
        %v3557 = vcvt.s32.f32 %v3045
        %v3558 = vcvt.s32.f32 %v3046
        %v3559 = vcvt.s32.f32 %v3047
        %v3560 = vcvt.s32.f32 %v3048
        %v3561 = vcvt.s32.f32 %v3049
        %v3562 = vcvt.s32.f32 %v3050
        %v3563 = vcvt.s32.f32 %v3051
        %v3564 = vcvt.s32.f32 %v3052
        %v3565 = vcvt.s32.f32 %v3053
        %v3566 = vcvt.s32.f32 %v3054
        %v3567 = vcvt.s32.f32 %v3055
        %v3568 = vcvt.s32.f32 %v3056
        %v3569 = vcvt.s32.f32 %v3057
        %v3570 = vcvt.s32.f32 %v3058
        %v3571 = vcvt.s32.f32 %v3059
        %v3572 = vcvt.s32.f32 %v3060
        %v3573 = vcvt.s32.f32 %v3061
        %v3574 = vcvt.s32.f32 %v3062
        %v3575 = vcvt.s32.f32 %v3063
        %v3576 = vcvt.s32.f32 %v3064
        %v3577 = vcvt.s32.f32 %v3065
        %v3578 = vcvt.s32.f32 %v3066
        %v3579 = vcvt.s32.f32 %v3067
        %v3580 = vcvt.s32.f32 %v3068
        %v3581 = vcvt.s32.f32 %v3069
        %v3582 = vcvt.s32.f32 %v3070
        %v3583 = vcvt.s32.f32 %v3071
        %v3584 = vcvt.s32.f32 %v3072
        %v3585 = vcvt.s32.f32 %v3073
        %v3586 = vcvt.s32.f32 %v3074
        %v3587 = vcvt.s32.f32 %v3075
        %v3588 = vcvt.s32.f32 %v3076
        %v3589 = vcvt.s32.f32 %v3077
        %v3590 = vcvt.s32.f32 %v3078
        %v3591 = vcvt.s32.f32 %v3079
        %v3592 = vcvt.s32.f32 %v3080
        %v3593 = vcvt.s32.f32 %v3081
        %v3594 = vcvt.s32.f32 %v3082
        %v3595 = vcvt.s32.f32 %v3083
        %v3596 = vcvt.s32.f32 %v3084
        %v3597 = vcvt.s32.f32 %v3085
        %v3598 = vcvt.s32.f32 %v3086
        %v3599 = vcvt.s32.f32 %v3087
        %v3600 = vcvt.s32.f32 %v3088
        %v3601 = vcvt.s32.f32 %v3089
        %v3602 = vcvt.s32.f32 %v3090
        %v3603 = vcvt.s32.f32 %v3091
        %v3604 = vcvt.s32.f32 %v3092
        %v3605 = vcvt.s32.f32 %v3093
        %v3606 = vcvt.s32.f32 %v3094
        %v3607 = vcvt.s32.f32 %v3095
        %v3608 = vcvt.s32.f32 %v3096
        %v3609 = vcvt.s32.f32 %v3097
        %v3610 = vcvt.s32.f32 %v3098
        %v3611 = vcvt.s32.f32 %v3099
        %v3612 = vcvt.s32.f32 %v3100
        %v3613 = vcvt.s32.f32 %v3101
        %v3614 = vcvt.s32.f32 %v3102
        %v3615 = vcvt.s32.f32 %v3103
        %v3616 = vcvt.s32.f32 %v3104
        %v3617 = vcvt.s32.f32 %v3105
        %v3618 = vcvt.s32.f32 %v3106
        %v3619 = vcvt.s32.f32 %v3107
        %v3620 = vcvt.s32.f32 %v3108
        %v3621 = vcvt.s32.f32 %v3109
        %v3622 = vcvt.s32.f32 %v3110
        %v3623 = vcvt.s32.f32 %v3111
        %v3624 = vcvt.s32.f32 %v3112
        %v3625 = vcvt.s32.f32 %v3113
        %v3626 = vcvt.s32.f32 %v3114
        %v3627 = vcvt.s32.f32 %v3115
        %v3628 = vcvt.s32.f32 %v3116
        %v3629 = vcvt.s32.f32 %v3117
        %v3630 = vcvt.s32.f32 %v3118
        %v3631 = vcvt.s32.f32 %v3119
        %v3632 = vcvt.s32.f32 %v3120
        %v3633 = vcvt.s32.f32 %v3121
        %v3634 = vcvt.s32.f32 %v3122
        %v3635 = vcvt.s32.f32 %v3123
        %v3636 = vcvt.s32.f32 %v3124
        %v3637 = vcvt.s32.f32 %v3125
        %v3638 = vcvt.s32.f32 %v3126
        %v3639 = vcvt.s32.f32 %v3127
        %v3640 = vcvt.s32.f32 %v3128
        %v3641 = vcvt.s32.f32 %v3129
        %v3642 = vcvt.s32.f32 %v3130
        %v3643 = vcvt.s32.f32 %v3131
        %v3644 = vcvt.s32.f32 %v3132
        %v3645 = vcvt.s32.f32 %v3133
        %v3646 = vcvt.s32.f32 %v3134
        %v3647 = vcvt.s32.f32 %v3135
        %v3648 = vcvt.s32.f32 %v3136
        %v3649 = vcvt.s32.f32 %v3137
        %v3650 = vcvt.s32.f32 %v3138
        %v3651 = vcvt.s32.f32 %v3139
        %v3652 = vcvt.s32.f32 %v3140
        %v3653 = vcvt.s32.f32 %v3141
        %v3654 = vcvt.s32.f32 %v3142
        %v3655 = vcvt.s32.f32 %v3143
        %v3656 = vcvt.s32.f32 %v3144
        %v3657 = vcvt.s32.f32 %v3145
        %v3658 = vcvt.s32.f32 %v3146
        %v3659 = vcvt.s32.f32 %v3147
        %v3660 = vcvt.s32.f32 %v3148
        %v3661 = vcvt.s32.f32 %v3149
        %v3662 = vcvt.s32.f32 %v3150
        %v3663 = vcvt.s32.f32 %v3151
        %v3664 = vcvt.s32.f32 %v3152
        %v3665 = vcvt.s32.f32 %v3153
        %v3666 = vcvt.s32.f32 %v3154
        %v3667 = vcvt.s32.f32 %v3155
        %v3668 = vcvt.s32.f32 %v3156
        %v3669 = vcvt.s32.f32 %v3157
        %v3670 = vcvt.s32.f32 %v3158
        %v3671 = vcvt.s32.f32 %v3159
        %v3672 = vcvt.s32.f32 %v3160
        %v3673 = vcvt.s32.f32 %v3161
        %v3674 = vcvt.s32.f32 %v3162
        %v3675 = vcvt.s32.f32 %v3163
        %v3676 = vcvt.s32.f32 %v3164
        %v3677 = vcvt.s32.f32 %v3165
        %v3678 = vcvt.s32.f32 %v3166
        %v3679 = vcvt.s32.f32 %v3167
        %v3680 = vcvt.s32.f32 %v3168
        %v3681 = vcvt.s32.f32 %v3169
        %v3682 = vcvt.s32.f32 %v3170
        %v3683 = vcvt.s32.f32 %v3171
        %v3684 = vcvt.s32.f32 %v3172
        %v3685 = vcvt.s32.f32 %v3173
        %v3686 = vcvt.s32.f32 %v3174
        %v3687 = vcvt.s32.f32 %v3175
        %v3688 = vcvt.s32.f32 %v3176
        %v3689 = vcvt.s32.f32 %v3177
        %v3690 = vcvt.s32.f32 %v3178
        %v3691 = vcvt.s32.f32 %v3179
        %v3692 = vcvt.s32.f32 %v3180
        %v3693 = vcvt.s32.f32 %v3181
        %v3694 = vcvt.s32.f32 %v3182
        %v3695 = vcvt.s32.f32 %v3183
        %v3696 = vcvt.s32.f32 %v3184
        %v3697 = vcvt.s32.f32 %v3185
        %v3698 = vcvt.s32.f32 %v3186
        %v3699 = vcvt.s32.f32 %v3187
        %v3700 = vcvt.s32.f32 %v3188
        %v3701 = vcvt.s32.f32 %v3189
        %v3702 = vcvt.s32.f32 %v3190
        %v3703 = vcvt.s32.f32 %v3191
        %v3704 = vcvt.s32.f32 %v3192
        %v3705 = vcvt.s32.f32 %v3193
        %v3706 = vcvt.s32.f32 %v3194
        %v3707 = vcvt.s32.f32 %v3195
        %v3708 = vcvt.s32.f32 %v3196
        %v3709 = vcvt.s32.f32 %v3197
        %v3710 = vcvt.s32.f32 %v3198
        %v3711 = vcvt.s32.f32 %v3199
        %v3712 = vcvt.s32.f32 %v3200
        %v3713 = vcvt.s32.f32 %v3201
        %v3714 = vcvt.s32.f32 %v3202
        %v3715 = vcvt.s32.f32 %v3203
        %v3716 = vcvt.s32.f32 %v3204
        %v3717 = vcvt.s32.f32 %v3205
        %v3718 = vcvt.s32.f32 %v3206
        %v3719 = vcvt.s32.f32 %v3207
        %v3720 = vcvt.s32.f32 %v3208
        %v3721 = vcvt.s32.f32 %v3209
        %v3722 = vcvt.s32.f32 %v3210
        %v3723 = vcvt.s32.f32 %v3211
        %v3724 = vcvt.s32.f32 %v3212
        %v3725 = vcvt.s32.f32 %v3213
        %v3726 = vcvt.s32.f32 %v3214
        %v3727 = vcvt.s32.f32 %v3215
        %v3728 = vcvt.s32.f32 %v3216
        %v3729 = vcvt.s32.f32 %v3217
        %v3730 = vcvt.s32.f32 %v3218
        %v3731 = vcvt.s32.f32 %v3219
        %v3732 = vcvt.s32.f32 %v3220
        %v3733 = vcvt.s32.f32 %v3221
        %v3734 = vcvt.s32.f32 %v3222
        %v3735 = vcvt.s32.f32 %v3223
        %v3736 = vcvt.s32.f32 %v3224
        %v3737 = vcvt.s32.f32 %v3225
        %v3738 = vcvt.s32.f32 %v3226
        %v3739 = vcvt.s32.f32 %v3227
        %v3740 = vcvt.s32.f32 %v3228
        %v3741 = vcvt.s32.f32 %v3229
        %v3742 = vcvt.s32.f32 %v3230
        %v3743 = vcvt.s32.f32 %v3231
        %v3744 = vcvt.s32.f32 %v3232
        %v3745 = vcvt.s32.f32 %v3233
        %v3746 = vcvt.s32.f32 %v3234
        %v3747 = vcvt.s32.f32 %v3235
        %v3748 = vcvt.s32.f32 %v3236
        %v3749 = vcvt.s32.f32 %v3237
        %v3750 = vcvt.s32.f32 %v3238
        %v3751 = vcvt.s32.f32 %v3239
        %v3752 = vcvt.s32.f32 %v3240
        %v3753 = vcvt.s32.f32 %v3241
        %v3754 = vcvt.s32.f32 %v3242
        %v3755 = vcvt.s32.f32 %v3243
        %v3756 = vcvt.s32.f32 %v3244
        %v3757 = vcvt.s32.f32 %v3245
        %v3758 = vcvt.s32.f32 %v3246
        %v3759 = vcvt.s32.f32 %v3247
        %v3760 = vcvt.s32.f32 %v3248
        %v3761 = vcvt.s32.f32 %v3249
        %v3762 = vcvt.s32.f32 %v3250
        %v3763 = vcvt.s32.f32 %v3251
        %v3764 = vcvt.s32.f32 %v3252
        %v3765 = vcvt.s32.f32 %v3253
        %v3766 = vcvt.s32.f32 %v3254
        %v3767 = vcvt.s32.f32 %v3255
        %v3768 = vcvt.s32.f32 %v3256
        %v3769 = vcvt.s32.f32 %v3257
        %v3770 = vcvt.s32.f32 %v3258
        %v3771 = vcvt.s32.f32 %v3259
        %v3772 = vcvt.s32.f32 %v3260
        %v3773 = vcvt.s32.f32 %v3261
        %v3774 = vcvt.s32.f32 %v3262
        %v3775 = vcvt.s32.f32 %v3263
        %v3776 = vcvt.s32.f32 %v3264
        %v3777 = vcvt.s32.f32 %v3265
        %v3778 = vcvt.s32.f32 %v3266
        %v3779 = vcvt.s32.f32 %v3267
        %v3780 = vcvt.s32.f32 %v3268
        %v3781 = vcvt.s32.f32 %v3269
        %v3782 = vcvt.s32.f32 %v3270
        %v3783 = vcvt.s32.f32 %v3271
        %v3784 = vcvt.s32.f32 %v3272
        %v3785 = vcvt.s32.f32 %v3273
        %v3786 = vcvt.s32.f32 %v3274
        %v3787 = vcvt.s32.f32 %v3275
        %v3788 = vcvt.s32.f32 %v3276
        %v3789 = vcvt.s32.f32 %v3277
        %v3790 = vcvt.s32.f32 %v3278
        %v3791 = vcvt.s32.f32 %v3279
        %v3792 = vcvt.s32.f32 %v3280
        %v3793 = vcvt.s32.f32 %v3281
        %v3794 = vcvt.s32.f32 %v3282
        %v3795 = vcvt.s32.f32 %v3283
        %v3796 = vcvt.s32.f32 %v3284
        %v3797 = vcvt.s32.f32 %v3285
        %v3798 = vcvt.s32.f32 %v3286
        %v3799 = vcvt.s32.f32 %v3287
        %v3800 = vcvt.s32.f32 %v3288
        %v3801 = vcvt.s32.f32 %v3289
        %v3802 = vcvt.s32.f32 %v3290
        %v3803 = vcvt.s32.f32 %v3291
        %v3804 = vcvt.s32.f32 %v3292
        %v3805 = vcvt.s32.f32 %v3293
        %v3806 = vcvt.s32.f32 %v3294
        %v3807 = vcvt.s32.f32 %v3295
        %v3808 = vcvt.s32.f32 %v3296
        %v3809 = vcvt.s32.f32 %v3297
        %v3810 = vcvt.s32.f32 %v3298
        %v3811 = vcvt.s32.f32 %v3299
        %v3812 = vcvt.s32.f32 %v3300
        %v3813 = vcvt.s32.f32 %v3301
        %v3814 = vcvt.s32.f32 %v3302
        %v3815 = vcvt.s32.f32 %v3303
        %v3816 = vcvt.s32.f32 %v3304
        %v3817 = vcvt.s32.f32 %v3305
        %v3818 = vcvt.s32.f32 %v3306
        %v3819 = vcvt.s32.f32 %v3307
        %v3820 = vcvt.s32.f32 %v3308
        %v3821 = vcvt.s32.f32 %v3309
        %v3822 = vcvt.s32.f32 %v3310
        %v3823 = vcvt.s32.f32 %v3311
        %v3824 = vcvt.s32.f32 %v3312
        %v3825 = vcvt.s32.f32 %v3313
        %v3826 = vcvt.s32.f32 %v3314
        %v3827 = vcvt.s32.f32 %v3315
        %v3828 = vcvt.s32.f32 %v3316
        %v3829 = vcvt.s32.f32 %v3317
        %v3830 = vcvt.s32.f32 %v3318
        %v3831 = vcvt.s32.f32 %v3319
        %v3832 = vcvt.s32.f32 %v3320
        %v3833 = vcvt.s32.f32 %v3321
        %v3834 = vcvt.s32.f32 %v3322
        %v3835 = vcvt.s32.f32 %v3323
        %v3836 = vcvt.s32.f32 %v3324
        %v3837 = vcvt.s32.f32 %v3325
        %v3838 = vcvt.s32.f32 %v3326
        %v3839 = vcvt.s32.f32 %v3327
        %v3840 = vcvt.s32.f32 %v3328
        %v3841 = vcvt.s32.f32 %v3329
        %v3842 = vcvt.s32.f32 %v3330
        %v3843 = vcvt.s32.f32 %v3331
        %v3844 = vcvt.s32.f32 %v3332
        %v3845 = vcvt.s32.f32 %v3333
        %v3846 = vcvt.s32.f32 %v3334
        %v3847 = vcvt.s32.f32 %v3335
        %v3848 = vcvt.s32.f32 %v3336
        %v3849 = vcvt.s32.f32 %v3337
        %v3850 = vcvt.s32.f32 %v3338
        %v3851 = vcvt.s32.f32 %v3339
        %v3852 = vcvt.s32.f32 %v3340
        %v3853 = vcvt.s32.f32 %v3341
        %v3854 = vcvt.s32.f32 %v3342
        %v3855 = vcvt.s32.f32 %v3343
        %v3856 = vcvt.s32.f32 %v3344
        %v3857 = vcvt.s32.f32 %v3345
        %v3858 = vcvt.s32.f32 %v3346
        %v3859 = vcvt.s32.f32 %v3347
        %v3860 = vcvt.s32.f32 %v3348
        %v3861 = vcvt.s32.f32 %v3349
        %v3862 = vcvt.s32.f32 %v3350
        %v3863 = vcvt.s32.f32 %v3351
        %v3864 = vcvt.s32.f32 %v3352
        %v3865 = vcvt.s32.f32 %v3353
        %v3866 = vcvt.s32.f32 %v3354
        %v3867 = vcvt.s32.f32 %v3355
        %v3868 = vcvt.s32.f32 %v3356
        %v3869 = vcvt.s32.f32 %v3357
        %v3870 = vcvt.s32.f32 %v3358
        %v3871 = vcvt.s32.f32 %v3359
        %v3872 = vcvt.s32.f32 %v3360
        %v3873 = vcvt.s32.f32 %v3361
        %v3874 = vcvt.s32.f32 %v3362
        %v3875 = vcvt.s32.f32 %v3363
        %v3876 = vcvt.s32.f32 %v3364
        %v3877 = vcvt.s32.f32 %v3365
        %v3878 = vcvt.s32.f32 %v3366
        %v3879 = vcvt.s32.f32 %v3367
        %v3880 = vcvt.s32.f32 %v3368
        %v3881 = vcvt.s32.f32 %v3369
        %v3882 = vcvt.s32.f32 %v3370
        %v3883 = vcvt.s32.f32 %v3371
        %v3884 = vcvt.s32.f32 %v3372
        %v3885 = vcvt.s32.f32 %v3373
        %v3886 = vcvt.s32.f32 %v3374
        %v3887 = vcvt.s32.f32 %v3375
        %v3888 = vcvt.s32.f32 %v3376
        %v3889 = vcvt.s32.f32 %v3377
        %v3890 = vcvt.s32.f32 %v3378
        %v3891 = vcvt.s32.f32 %v3379
        %v3892 = vcvt.s32.f32 %v3380
        %v3893 = vcvt.s32.f32 %v3381
        %v3894 = vcvt.s32.f32 %v3382
        %v3895 = vcvt.s32.f32 %v3383
        %v3896 = vcvt.s32.f32 %v3384
        %v3897 = vcvt.s32.f32 %v3385
        %v3898 = vcvt.s32.f32 %v3386
        %v3899 = vcvt.s32.f32 %v3387
        %v3900 = vcvt.s32.f32 %v3388
        %v3901 = vcvt.s32.f32 %v3389
        %v3902 = vcvt.s32.f32 %v3390
        %v3903 = vcvt.s32.f32 %v3391
        %v3904 = vcvt.s32.f32 %v3392
        %v3905 = vcvt.s32.f32 %v3393
        %v3906 = vcvt.s32.f32 %v3394
        %v3907 = vcvt.s32.f32 %v3395
        %v3908 = vcvt.s32.f32 %v3396
        %v3909 = vcvt.s32.f32 %v3397
        %v3910 = vcvt.s32.f32 %v3398
        %v3911 = vcvt.s32.f32 %v3399
        %v3912 = vcvt.s32.f32 %v3400
        %v3913 = vcvt.s32.f32 %v3401
        %v3914 = vcvt.s32.f32 %v3402
        %v3915 = vcvt.s32.f32 %v3403
        %v3916 = vcvt.s32.f32 %v3404
        %v3917 = vcvt.s32.f32 %v3405
        %v3918 = vcvt.s32.f32 %v3406
        %v3919 = vcvt.s32.f32 %v3407
        %v3920 = vcvt.s32.f32 %v3408
        %v3921 = vcvt.s32.f32 %v3409
        %v3922 = vcvt.s32.f32 %v3410
        %v3923 = vcvt.s32.f32 %v3411
        %v3924 = vcvt.s32.f32 %v3412
        %v3925 = vcvt.s32.f32 %v3413
        %v3926 = vcvt.s32.f32 %v3414
        %v3927 = vcvt.s32.f32 %v3415
        %v3928 = vcvt.s32.f32 %v3416
        %v3929 = vcvt.s32.f32 %v3417
        %v3930 = vcvt.s32.f32 %v3418
        %v3931 = vcvt.s32.f32 %v3419
        %v3932 = vcvt.s32.f32 %v3420
        %v3933 = vcvt.s32.f32 %v3421
        %v3934 = vcvt.s32.f32 %v3422
        %v3935 = vcvt.s32.f32 %v3423
        %v3936 = vcvt.s32.f32 %v3424
        %v3937 = vcvt.s32.f32 %v3425
        %v3938 = vcvt.s32.f32 %v3426
        %v3939 = vcvt.s32.f32 %v3427
        %v3940 = vcvt.s32.f32 %v3428
        %v3941 = vcvt.s32.f32 %v3429
        %v3942 = vcvt.s32.f32 %v3430
        %v3943 = vcvt.s32.f32 %v3431
        %v3944 = vcvt.s32.f32 %v3432
        %v3945 = vcvt.s32.f32 %v3433
        %v3946 = vcvt.s32.f32 %v3434
        %v3947 = vcvt.s32.f32 %v3435
        %v3948 = vcvt.s32.f32 %v3436
        %v3949 = vcvt.s32.f32 %v3437
        %v3950 = vcvt.s32.f32 %v3438
        %v3951 = vcvt.s32.f32 %v3439
        %v3952 = vcvt.s32.f32 %v3440
        %v3953 = vcvt.s32.f32 %v3441
        %v3954 = vcvt.s32.f32 %v3442
        %v3955 = vcvt.s32.f32 %v3443
        %v3956 = vcvt.s32.f32 %v3444
        %v3957 = vcvt.s32.f32 %v3445
        %v3958 = vcvt.s32.f32 %v3446
        %v3959 = vcvt.s32.f32 %v3447
        %v3960 = vcvt.s32.f32 %v3448
        %v3961 = vcvt.s32.f32 %v3449
        %v3962 = vcvt.s32.f32 %v3450
        %v3963 = vcvt.s32.f32 %v3451
        %v3964 = vcvt.s32.f32 %v3452
        %v3965 = vcvt.s32.f32 %v3453
        %v3966 = vcvt.s32.f32 %v3454
        %v3967 = vcvt.s32.f32 %v3455
        %v3968 = vcvt.s32.f32 %v3456
        %v3969 = vcvt.s32.f32 %v3457
        %v3970 = vcvt.s32.f32 %v3458
        %v3971 = vcvt.s32.f32 %v3459
        %v3972 = vcvt.s32.f32 %v3460
        %v3973 = vcvt.s32.f32 %v3461
        %v3974 = vcvt.s32.f32 %v3462
        %v3975 = vcvt.s32.f32 %v3463
        %v3976 = vcvt.s32.f32 %v3464
        %v3977 = vcvt.s32.f32 %v3465
        %v3978 = vcvt.s32.f32 %v3466
        %v3979 = vcvt.s32.f32 %v3467
        %v3980 = vcvt.s32.f32 %v3468
        %v3981 = vcvt.s32.f32 %v3469
        %v3982 = vcvt.s32.f32 %v3470
        %v3983 = vcvt.s32.f32 %v3471
        %v3984 = vcvt.s32.f32 %v3472
        %v3985 = vcvt.s32.f32 %v3473
        %4498 = vset.pattern.permute.xlu0 0
        %4499 = vperm.xlu0 %4498, %v3474
        %v4500 = vpop.permute.xlu0 %4499
        %4501 = vset.pattern.permute.xlu0 0
        %4502 = vperm.xlu0 %4501, %v3475
        %v4503 = vpop.permute.xlu0 %4502
        %4504 = vset.pattern.permute.xlu0 0
        %4505 = vperm.xlu0 %4504, %v3476
        %v4506 = vpop.permute.xlu0 %4505
        %4507 = vset.pattern.permute.xlu0 0
        %4508 = vperm.xlu0 %4507, %v3477
        %v4509 = vpop.permute.xlu0 %4508
        %4510 = vset.pattern.permute.xlu0 0
        %4511 = vperm.xlu0 %4510, %v3478
        %v4512 = vpop.permute.xlu0 %4511
        %4513 = vset.pattern.permute.xlu0 0
        %4514 = vperm.xlu0 %4513, %v3479
        %v4515 = vpop.permute.xlu0 %4514
        %4516 = vset.pattern.permute.xlu0 0
        %4517 = vperm.xlu0 %4516, %v3480
        %v4518 = vpop.permute.xlu0 %4517
        %4519 = vset.pattern.permute.xlu0 0
        %4520 = vperm.xlu0 %4519, %v3481
        %v4521 = vpop.permute.xlu0 %4520
        %4522 = vset.pattern.permute.xlu0 0
        %4523 = vperm.xlu0 %4522, %v3482
        %v4524 = vpop.permute.xlu0 %4523
        %4525 = vset.pattern.permute.xlu0 0
        %4526 = vperm.xlu0 %4525, %v3483
        %v4527 = vpop.permute.xlu0 %4526
        %4528 = vset.pattern.permute.xlu0 0
        %4529 = vperm.xlu0 %4528, %v3484
        %v4530 = vpop.permute.xlu0 %4529
        %4531 = vset.pattern.permute.xlu0 0
        %4532 = vperm.xlu0 %4531, %v3485
        %v4533 = vpop.permute.xlu0 %4532
        %4534 = vset.pattern.permute.xlu0 0
        %4535 = vperm.xlu0 %4534, %v3486
        %v4536 = vpop.permute.xlu0 %4535
        %4537 = vset.pattern.permute.xlu0 0
        %4538 = vperm.xlu0 %4537, %v3487
        %v4539 = vpop.permute.xlu0 %4538
        %4540 = vset.pattern.permute.xlu0 0
        %4541 = vperm.xlu0 %4540, %v3488
        %v4542 = vpop.permute.xlu0 %4541
        %4543 = vset.pattern.permute.xlu0 0
        %4544 = vperm.xlu0 %4543, %v3489
        %v4545 = vpop.permute.xlu0 %4544
        %4546 = vset.pattern.permute.xlu0 0
        %4547 = vperm.xlu0 %4546, %v3490
        %v4548 = vpop.permute.xlu0 %4547
        %4549 = vset.pattern.permute.xlu0 0
        %4550 = vperm.xlu0 %4549, %v3491
        %v4551 = vpop.permute.xlu0 %4550
        %4552 = vset.pattern.permute.xlu0 0
        %4553 = vperm.xlu0 %4552, %v3492
        %v4554 = vpop.permute.xlu0 %4553
        %4555 = vset.pattern.permute.xlu0 0
        %4556 = vperm.xlu0 %4555, %v3493
        %v4557 = vpop.permute.xlu0 %4556
        %4558 = vset.pattern.permute.xlu0 0
        %4559 = vperm.xlu0 %4558, %v3494
        %v4560 = vpop.permute.xlu0 %4559
        %4561 = vset.pattern.permute.xlu0 0
        %4562 = vperm.xlu0 %4561, %v3495
        %v4563 = vpop.permute.xlu0 %4562
        %4564 = vset.pattern.permute.xlu0 0
        %4565 = vperm.xlu0 %4564, %v3496
        %v4566 = vpop.permute.xlu0 %4565
        %4567 = vset.pattern.permute.xlu0 0
        %4568 = vperm.xlu0 %4567, %v3497
        %v4569 = vpop.permute.xlu0 %4568
        %4570 = vset.pattern.permute.xlu0 0
        %4571 = vperm.xlu0 %4570, %v3498
        %v4572 = vpop.permute.xlu0 %4571
        %4573 = vset.pattern.permute.xlu0 0
        %4574 = vperm.xlu0 %4573, %v3499
        %v4575 = vpop.permute.xlu0 %4574
        %4576 = vset.pattern.permute.xlu0 0
        %4577 = vperm.xlu0 %4576, %v3500
        %v4578 = vpop.permute.xlu0 %4577
        %4579 = vset.pattern.permute.xlu0 0
        %4580 = vperm.xlu0 %4579, %v3501
        %v4581 = vpop.permute.xlu0 %4580
        %4582 = vset.pattern.permute.xlu0 0
        %4583 = vperm.xlu0 %4582, %v3502
        %v4584 = vpop.permute.xlu0 %4583
        %4585 = vset.pattern.permute.xlu0 0
        %4586 = vperm.xlu0 %4585, %v3503
        %v4587 = vpop.permute.xlu0 %4586
        %4588 = vset.pattern.permute.xlu0 0
        %4589 = vperm.xlu0 %4588, %v3504
        %v4590 = vpop.permute.xlu0 %4589
        %4591 = vset.pattern.permute.xlu0 0
        %4592 = vperm.xlu0 %4591, %v3505
        %v4593 = vpop.permute.xlu0 %4592
        %4594 = vset.pattern.permute.xlu0 0
        %4595 = vperm.xlu0 %4594, %v3506
        %v4596 = vpop.permute.xlu0 %4595
        %4597 = vset.pattern.permute.xlu0 0
        %4598 = vperm.xlu0 %4597, %v3507
        %v4599 = vpop.permute.xlu0 %4598
        %4600 = vset.pattern.permute.xlu0 0
        %4601 = vperm.xlu0 %4600, %v3508
        %v4602 = vpop.permute.xlu0 %4601
        %4603 = vset.pattern.permute.xlu0 0
        %4604 = vperm.xlu0 %4603, %v3509
        %v4605 = vpop.permute.xlu0 %4604
        %4606 = vset.pattern.permute.xlu0 0
        %4607 = vperm.xlu0 %4606, %v3510
        %v4608 = vpop.permute.xlu0 %4607
        %4609 = vset.pattern.permute.xlu0 0
        %4610 = vperm.xlu0 %4609, %v3511
        %v4611 = vpop.permute.xlu0 %4610
        %4612 = vset.pattern.permute.xlu0 0
        %4613 = vperm.xlu0 %4612, %v3512
        %v4614 = vpop.permute.xlu0 %4613
        %4615 = vset.pattern.permute.xlu0 0
        %4616 = vperm.xlu0 %4615, %v3513
        %v4617 = vpop.permute.xlu0 %4616
        %4618 = vset.pattern.permute.xlu0 0
        %4619 = vperm.xlu0 %4618, %v3514
        %v4620 = vpop.permute.xlu0 %4619
        %4621 = vset.pattern.permute.xlu0 0
        %4622 = vperm.xlu0 %4621, %v3515
        %v4623 = vpop.permute.xlu0 %4622
        %4624 = vset.pattern.permute.xlu0 0
        %4625 = vperm.xlu0 %4624, %v3516
        %v4626 = vpop.permute.xlu0 %4625
        %4627 = vset.pattern.permute.xlu0 0
        %4628 = vperm.xlu0 %4627, %v3517
        %v4629 = vpop.permute.xlu0 %4628
        %4630 = vset.pattern.permute.xlu0 0
        %4631 = vperm.xlu0 %4630, %v3518
        %v4632 = vpop.permute.xlu0 %4631
        %4633 = vset.pattern.permute.xlu0 0
        %4634 = vperm.xlu0 %4633, %v3519
        %v4635 = vpop.permute.xlu0 %4634
        %4636 = vset.pattern.permute.xlu0 0
        %4637 = vperm.xlu0 %4636, %v3520
        %v4638 = vpop.permute.xlu0 %4637
        %4639 = vset.pattern.permute.xlu0 0
        %4640 = vperm.xlu0 %4639, %v3521
        %v4641 = vpop.permute.xlu0 %4640
        %4642 = vset.pattern.permute.xlu0 0
        %4643 = vperm.xlu0 %4642, %v3522
        %v4644 = vpop.permute.xlu0 %4643
        %4645 = vset.pattern.permute.xlu0 0
        %4646 = vperm.xlu0 %4645, %v3523
        %v4647 = vpop.permute.xlu0 %4646
        %4648 = vset.pattern.permute.xlu0 0
        %4649 = vperm.xlu0 %4648, %v3524
        %v4650 = vpop.permute.xlu0 %4649
        %4651 = vset.pattern.permute.xlu0 0
        %4652 = vperm.xlu0 %4651, %v3525
        %v4653 = vpop.permute.xlu0 %4652
        %4654 = vset.pattern.permute.xlu0 0
        %4655 = vperm.xlu0 %4654, %v3526
        %v4656 = vpop.permute.xlu0 %4655
        %4657 = vset.pattern.permute.xlu0 0
        %4658 = vperm.xlu0 %4657, %v3527
        %v4659 = vpop.permute.xlu0 %4658
        %4660 = vset.pattern.permute.xlu0 0
        %4661 = vperm.xlu0 %4660, %v3528
        %v4662 = vpop.permute.xlu0 %4661
        %4663 = vset.pattern.permute.xlu0 0
        %4664 = vperm.xlu0 %4663, %v3529
        %v4665 = vpop.permute.xlu0 %4664
        %4666 = vset.pattern.permute.xlu0 0
        %4667 = vperm.xlu0 %4666, %v3530
        %v4668 = vpop.permute.xlu0 %4667
        %4669 = vset.pattern.permute.xlu0 0
        %4670 = vperm.xlu0 %4669, %v3531
        %v4671 = vpop.permute.xlu0 %4670
        %4672 = vset.pattern.permute.xlu0 0
        %4673 = vperm.xlu0 %4672, %v3532
        %v4674 = vpop.permute.xlu0 %4673
        %4675 = vset.pattern.permute.xlu0 0
        %4676 = vperm.xlu0 %4675, %v3533
        %v4677 = vpop.permute.xlu0 %4676
        %4678 = vset.pattern.permute.xlu0 0
        %4679 = vperm.xlu0 %4678, %v3534
        %v4680 = vpop.permute.xlu0 %4679
        %4681 = vset.pattern.permute.xlu0 0
        %4682 = vperm.xlu0 %4681, %v3535
        %v4683 = vpop.permute.xlu0 %4682
        %4684 = vset.pattern.permute.xlu0 0
        %4685 = vperm.xlu0 %4684, %v3536
        %v4686 = vpop.permute.xlu0 %4685
        %4687 = vset.pattern.permute.xlu0 0
        %4688 = vperm.xlu0 %4687, %v3537
        %v4689 = vpop.permute.xlu0 %4688
        %4690 = vset.pattern.permute.xlu0 0
        %4691 = vperm.xlu0 %4690, %v3538
        %v4692 = vpop.permute.xlu0 %4691
        %4693 = vset.pattern.permute.xlu0 0
        %4694 = vperm.xlu0 %4693, %v3539
        %v4695 = vpop.permute.xlu0 %4694
        %4696 = vset.pattern.permute.xlu0 0
        %4697 = vperm.xlu0 %4696, %v3540
        %v4698 = vpop.permute.xlu0 %4697
        %4699 = vset.pattern.permute.xlu0 0
        %4700 = vperm.xlu0 %4699, %v3541
        %v4701 = vpop.permute.xlu0 %4700
        %4702 = vset.pattern.permute.xlu0 0
        %4703 = vperm.xlu0 %4702, %v3542
        %v4704 = vpop.permute.xlu0 %4703
        %4705 = vset.pattern.permute.xlu0 0
        %4706 = vperm.xlu0 %4705, %v3543
        %v4707 = vpop.permute.xlu0 %4706
        %4708 = vset.pattern.permute.xlu0 0
        %4709 = vperm.xlu0 %4708, %v3544
        %v4710 = vpop.permute.xlu0 %4709
        %4711 = vset.pattern.permute.xlu0 0
        %4712 = vperm.xlu0 %4711, %v3545
        %v4713 = vpop.permute.xlu0 %4712
        %4714 = vset.pattern.permute.xlu0 0
        %4715 = vperm.xlu0 %4714, %v3546
        %v4716 = vpop.permute.xlu0 %4715
        %4717 = vset.pattern.permute.xlu0 0
        %4718 = vperm.xlu0 %4717, %v3547
        %v4719 = vpop.permute.xlu0 %4718
        %4720 = vset.pattern.permute.xlu0 0
        %4721 = vperm.xlu0 %4720, %v3548
        %v4722 = vpop.permute.xlu0 %4721
        %4723 = vset.pattern.permute.xlu0 0
        %4724 = vperm.xlu0 %4723, %v3549
        %v4725 = vpop.permute.xlu0 %4724
        %4726 = vset.pattern.permute.xlu0 0
        %4727 = vperm.xlu0 %4726, %v3550
        %v4728 = vpop.permute.xlu0 %4727
        %4729 = vset.pattern.permute.xlu0 0
        %4730 = vperm.xlu0 %4729, %v3551
        %v4731 = vpop.permute.xlu0 %4730
        %4732 = vset.pattern.permute.xlu0 0
        %4733 = vperm.xlu0 %4732, %v3552
        %v4734 = vpop.permute.xlu0 %4733
        %4735 = vset.pattern.permute.xlu0 0
        %4736 = vperm.xlu0 %4735, %v3553
        %v4737 = vpop.permute.xlu0 %4736
        %4738 = vset.pattern.permute.xlu0 0
        %4739 = vperm.xlu0 %4738, %v3554
        %v4740 = vpop.permute.xlu0 %4739
        %4741 = vset.pattern.permute.xlu0 0
        %4742 = vperm.xlu0 %4741, %v3555
        %v4743 = vpop.permute.xlu0 %4742
        %4744 = vset.pattern.permute.xlu0 0
        %4745 = vperm.xlu0 %4744, %v3556
        %v4746 = vpop.permute.xlu0 %4745
        %4747 = vset.pattern.permute.xlu0 0
        %4748 = vperm.xlu0 %4747, %v3557
        %v4749 = vpop.permute.xlu0 %4748
        %4750 = vset.pattern.permute.xlu0 0
        %4751 = vperm.xlu0 %4750, %v3558
        %v4752 = vpop.permute.xlu0 %4751
        %4753 = vset.pattern.permute.xlu0 0
        %4754 = vperm.xlu0 %4753, %v3559
        %v4755 = vpop.permute.xlu0 %4754
        %4756 = vset.pattern.permute.xlu0 0
        %4757 = vperm.xlu0 %4756, %v3560
        %v4758 = vpop.permute.xlu0 %4757
        %4759 = vset.pattern.permute.xlu0 0
        %4760 = vperm.xlu0 %4759, %v3561
        %v4761 = vpop.permute.xlu0 %4760
        %4762 = vset.pattern.permute.xlu0 0
        %4763 = vperm.xlu0 %4762, %v3562
        %v4764 = vpop.permute.xlu0 %4763
        %4765 = vset.pattern.permute.xlu0 0
        %4766 = vperm.xlu0 %4765, %v3563
        %v4767 = vpop.permute.xlu0 %4766
        %4768 = vset.pattern.permute.xlu0 0
        %4769 = vperm.xlu0 %4768, %v3564
        %v4770 = vpop.permute.xlu0 %4769
        %4771 = vset.pattern.permute.xlu0 0
        %4772 = vperm.xlu0 %4771, %v3565
        %v4773 = vpop.permute.xlu0 %4772
        %4774 = vset.pattern.permute.xlu0 0
        %4775 = vperm.xlu0 %4774, %v3566
        %v4776 = vpop.permute.xlu0 %4775
        %4777 = vset.pattern.permute.xlu0 0
        %4778 = vperm.xlu0 %4777, %v3567
        %v4779 = vpop.permute.xlu0 %4778
        %4780 = vset.pattern.permute.xlu0 0
        %4781 = vperm.xlu0 %4780, %v3568
        %v4782 = vpop.permute.xlu0 %4781
        %4783 = vset.pattern.permute.xlu0 0
        %4784 = vperm.xlu0 %4783, %v3569
        %v4785 = vpop.permute.xlu0 %4784
        %4786 = vset.pattern.permute.xlu0 0
        %4787 = vperm.xlu0 %4786, %v3570
        %v4788 = vpop.permute.xlu0 %4787
        %4789 = vset.pattern.permute.xlu0 0
        %4790 = vperm.xlu0 %4789, %v3571
        %v4791 = vpop.permute.xlu0 %4790
        %4792 = vset.pattern.permute.xlu0 0
        %4793 = vperm.xlu0 %4792, %v3572
        %v4794 = vpop.permute.xlu0 %4793
        %4795 = vset.pattern.permute.xlu0 0
        %4796 = vperm.xlu0 %4795, %v3573
        %v4797 = vpop.permute.xlu0 %4796
        %4798 = vset.pattern.permute.xlu0 0
        %4799 = vperm.xlu0 %4798, %v3574
        %v4800 = vpop.permute.xlu0 %4799
        %4801 = vset.pattern.permute.xlu0 0
        %4802 = vperm.xlu0 %4801, %v3575
        %v4803 = vpop.permute.xlu0 %4802
        %4804 = vset.pattern.permute.xlu0 0
        %4805 = vperm.xlu0 %4804, %v3576
        %v4806 = vpop.permute.xlu0 %4805
        %4807 = vset.pattern.permute.xlu0 0
        %4808 = vperm.xlu0 %4807, %v3577
        %v4809 = vpop.permute.xlu0 %4808
        %4810 = vset.pattern.permute.xlu0 0
        %4811 = vperm.xlu0 %4810, %v3578
        %v4812 = vpop.permute.xlu0 %4811
        %4813 = vset.pattern.permute.xlu0 0
        %4814 = vperm.xlu0 %4813, %v3579
        %v4815 = vpop.permute.xlu0 %4814
        %4816 = vset.pattern.permute.xlu0 0
        %4817 = vperm.xlu0 %4816, %v3580
        %v4818 = vpop.permute.xlu0 %4817
        %4819 = vset.pattern.permute.xlu0 0
        %4820 = vperm.xlu0 %4819, %v3581
        %v4821 = vpop.permute.xlu0 %4820
        %4822 = vset.pattern.permute.xlu0 0
        %4823 = vperm.xlu0 %4822, %v3582
        %v4824 = vpop.permute.xlu0 %4823
        %4825 = vset.pattern.permute.xlu0 0
        %4826 = vperm.xlu0 %4825, %v3583
        %v4827 = vpop.permute.xlu0 %4826
        %4828 = vset.pattern.permute.xlu0 0
        %4829 = vperm.xlu0 %4828, %v3584
        %v4830 = vpop.permute.xlu0 %4829
        %4831 = vset.pattern.permute.xlu0 0
        %4832 = vperm.xlu0 %4831, %v3585
        %v4833 = vpop.permute.xlu0 %4832
        %4834 = vset.pattern.permute.xlu0 0
        %4835 = vperm.xlu0 %4834, %v3586
        %v4836 = vpop.permute.xlu0 %4835
        %4837 = vset.pattern.permute.xlu0 0
        %4838 = vperm.xlu0 %4837, %v3587
        %v4839 = vpop.permute.xlu0 %4838
        %4840 = vset.pattern.permute.xlu0 0
        %4841 = vperm.xlu0 %4840, %v3588
        %v4842 = vpop.permute.xlu0 %4841
        %4843 = vset.pattern.permute.xlu0 0
        %4844 = vperm.xlu0 %4843, %v3589
        %v4845 = vpop.permute.xlu0 %4844
        %4846 = vset.pattern.permute.xlu0 0
        %4847 = vperm.xlu0 %4846, %v3590
        %v4848 = vpop.permute.xlu0 %4847
        %4849 = vset.pattern.permute.xlu0 0
        %4850 = vperm.xlu0 %4849, %v3591
        %v4851 = vpop.permute.xlu0 %4850
        %4852 = vset.pattern.permute.xlu0 0
        %4853 = vperm.xlu0 %4852, %v3592
        %v4854 = vpop.permute.xlu0 %4853
        %4855 = vset.pattern.permute.xlu0 0
        %4856 = vperm.xlu0 %4855, %v3593
        %v4857 = vpop.permute.xlu0 %4856
        %4858 = vset.pattern.permute.xlu0 0
        %4859 = vperm.xlu0 %4858, %v3594
        %v4860 = vpop.permute.xlu0 %4859
        %4861 = vset.pattern.permute.xlu0 0
        %4862 = vperm.xlu0 %4861, %v3595
        %v4863 = vpop.permute.xlu0 %4862
        %4864 = vset.pattern.permute.xlu0 0
        %4865 = vperm.xlu0 %4864, %v3596
        %v4866 = vpop.permute.xlu0 %4865
        %4867 = vset.pattern.permute.xlu0 0
        %4868 = vperm.xlu0 %4867, %v3597
        %v4869 = vpop.permute.xlu0 %4868
        %4870 = vset.pattern.permute.xlu0 0
        %4871 = vperm.xlu0 %4870, %v3598
        %v4872 = vpop.permute.xlu0 %4871
        %4873 = vset.pattern.permute.xlu0 0
        %4874 = vperm.xlu0 %4873, %v3599
        %v4875 = vpop.permute.xlu0 %4874
        %4876 = vset.pattern.permute.xlu0 0
        %4877 = vperm.xlu0 %4876, %v3600
        %v4878 = vpop.permute.xlu0 %4877
        %4879 = vset.pattern.permute.xlu0 0
        %4880 = vperm.xlu0 %4879, %v3601
        %v4881 = vpop.permute.xlu0 %4880
        %4882 = vset.pattern.permute.xlu0 0
        %4883 = vperm.xlu0 %4882, %v3602
        %v4884 = vpop.permute.xlu0 %4883
        %4885 = vset.pattern.permute.xlu0 0
        %4886 = vperm.xlu0 %4885, %v3603
        %v4887 = vpop.permute.xlu0 %4886
        %4888 = vset.pattern.permute.xlu0 0
        %4889 = vperm.xlu0 %4888, %v3604
        %v4890 = vpop.permute.xlu0 %4889
        %4891 = vset.pattern.permute.xlu0 0
        %4892 = vperm.xlu0 %4891, %v3605
        %v4893 = vpop.permute.xlu0 %4892
        %4894 = vset.pattern.permute.xlu0 0
        %4895 = vperm.xlu0 %4894, %v3606
        %v4896 = vpop.permute.xlu0 %4895
        %4897 = vset.pattern.permute.xlu0 0
        %4898 = vperm.xlu0 %4897, %v3607
        %v4899 = vpop.permute.xlu0 %4898
        %4900 = vset.pattern.permute.xlu0 0
        %4901 = vperm.xlu0 %4900, %v3608
        %v4902 = vpop.permute.xlu0 %4901
        %4903 = vset.pattern.permute.xlu0 0
        %4904 = vperm.xlu0 %4903, %v3609
        %v4905 = vpop.permute.xlu0 %4904
        %4906 = vset.pattern.permute.xlu0 0
        %4907 = vperm.xlu0 %4906, %v3610
        %v4908 = vpop.permute.xlu0 %4907
        %4909 = vset.pattern.permute.xlu0 0
        %4910 = vperm.xlu0 %4909, %v3611
        %v4911 = vpop.permute.xlu0 %4910
        %4912 = vset.pattern.permute.xlu0 0
        %4913 = vperm.xlu0 %4912, %v3612
        %v4914 = vpop.permute.xlu0 %4913
        %4915 = vset.pattern.permute.xlu0 0
        %4916 = vperm.xlu0 %4915, %v3613
        %v4917 = vpop.permute.xlu0 %4916
        %4918 = vset.pattern.permute.xlu0 0
        %4919 = vperm.xlu0 %4918, %v3614
        %v4920 = vpop.permute.xlu0 %4919
        %4921 = vset.pattern.permute.xlu0 0
        %4922 = vperm.xlu0 %4921, %v3615
        %v4923 = vpop.permute.xlu0 %4922
        %4924 = vset.pattern.permute.xlu0 0
        %4925 = vperm.xlu0 %4924, %v3616
        %v4926 = vpop.permute.xlu0 %4925
        %4927 = vset.pattern.permute.xlu0 0
        %4928 = vperm.xlu0 %4927, %v3617
        %v4929 = vpop.permute.xlu0 %4928
        %4930 = vset.pattern.permute.xlu0 0
        %4931 = vperm.xlu0 %4930, %v3618
        %v4932 = vpop.permute.xlu0 %4931
        %4933 = vset.pattern.permute.xlu0 0
        %4934 = vperm.xlu0 %4933, %v3619
        %v4935 = vpop.permute.xlu0 %4934
        %4936 = vset.pattern.permute.xlu0 0
        %4937 = vperm.xlu0 %4936, %v3620
        %v4938 = vpop.permute.xlu0 %4937
        %4939 = vset.pattern.permute.xlu0 0
        %4940 = vperm.xlu0 %4939, %v3621
        %v4941 = vpop.permute.xlu0 %4940
        %4942 = vset.pattern.permute.xlu0 0
        %4943 = vperm.xlu0 %4942, %v3622
        %v4944 = vpop.permute.xlu0 %4943
        %4945 = vset.pattern.permute.xlu0 0
        %4946 = vperm.xlu0 %4945, %v3623
        %v4947 = vpop.permute.xlu0 %4946
        %4948 = vset.pattern.permute.xlu0 0
        %4949 = vperm.xlu0 %4948, %v3624
        %v4950 = vpop.permute.xlu0 %4949
        %4951 = vset.pattern.permute.xlu0 0
        %4952 = vperm.xlu0 %4951, %v3625
        %v4953 = vpop.permute.xlu0 %4952
        %4954 = vset.pattern.permute.xlu0 0
        %4955 = vperm.xlu0 %4954, %v3626
        %v4956 = vpop.permute.xlu0 %4955
        %4957 = vset.pattern.permute.xlu0 0
        %4958 = vperm.xlu0 %4957, %v3627
        %v4959 = vpop.permute.xlu0 %4958
        %4960 = vset.pattern.permute.xlu0 0
        %4961 = vperm.xlu0 %4960, %v3628
        %v4962 = vpop.permute.xlu0 %4961
        %4963 = vset.pattern.permute.xlu0 0
        %4964 = vperm.xlu0 %4963, %v3629
        %v4965 = vpop.permute.xlu0 %4964
        %4966 = vset.pattern.permute.xlu0 0
        %4967 = vperm.xlu0 %4966, %v3630
        %v4968 = vpop.permute.xlu0 %4967
        %4969 = vset.pattern.permute.xlu0 0
        %4970 = vperm.xlu0 %4969, %v3631
        %v4971 = vpop.permute.xlu0 %4970
        %4972 = vset.pattern.permute.xlu0 0
        %4973 = vperm.xlu0 %4972, %v3632
        %v4974 = vpop.permute.xlu0 %4973
        %4975 = vset.pattern.permute.xlu0 0
        %4976 = vperm.xlu0 %4975, %v3633
        %v4977 = vpop.permute.xlu0 %4976
        %4978 = vset.pattern.permute.xlu0 0
        %4979 = vperm.xlu0 %4978, %v3634
        %v4980 = vpop.permute.xlu0 %4979
        %4981 = vset.pattern.permute.xlu0 0
        %4982 = vperm.xlu0 %4981, %v3635
        %v4983 = vpop.permute.xlu0 %4982
        %4984 = vset.pattern.permute.xlu0 0
        %4985 = vperm.xlu0 %4984, %v3636
        %v4986 = vpop.permute.xlu0 %4985
        %4987 = vset.pattern.permute.xlu0 0
        %4988 = vperm.xlu0 %4987, %v3637
        %v4989 = vpop.permute.xlu0 %4988
        %4990 = vset.pattern.permute.xlu0 0
        %4991 = vperm.xlu0 %4990, %v3638
        %v4992 = vpop.permute.xlu0 %4991
        %4993 = vset.pattern.permute.xlu0 0
        %4994 = vperm.xlu0 %4993, %v3639
        %v4995 = vpop.permute.xlu0 %4994
        %4996 = vset.pattern.permute.xlu0 0
        %4997 = vperm.xlu0 %4996, %v3640
        %v4998 = vpop.permute.xlu0 %4997
        %4999 = vset.pattern.permute.xlu0 0
        %5000 = vperm.xlu0 %4999, %v3641
        %v5001 = vpop.permute.xlu0 %5000
        %5002 = vset.pattern.permute.xlu0 0
        %5003 = vperm.xlu0 %5002, %v3642
        %v5004 = vpop.permute.xlu0 %5003
        %5005 = vset.pattern.permute.xlu0 0
        %5006 = vperm.xlu0 %5005, %v3643
        %v5007 = vpop.permute.xlu0 %5006
        %5008 = vset.pattern.permute.xlu0 0
        %5009 = vperm.xlu0 %5008, %v3644
        %v5010 = vpop.permute.xlu0 %5009
        %5011 = vset.pattern.permute.xlu0 0
        %5012 = vperm.xlu0 %5011, %v3645
        %v5013 = vpop.permute.xlu0 %5012
        %5014 = vset.pattern.permute.xlu0 0
        %5015 = vperm.xlu0 %5014, %v3646
        %v5016 = vpop.permute.xlu0 %5015
        %5017 = vset.pattern.permute.xlu0 0
        %5018 = vperm.xlu0 %5017, %v3647
        %v5019 = vpop.permute.xlu0 %5018
        %5020 = vset.pattern.permute.xlu0 0
        %5021 = vperm.xlu0 %5020, %v3648
        %v5022 = vpop.permute.xlu0 %5021
        %5023 = vset.pattern.permute.xlu0 0
        %5024 = vperm.xlu0 %5023, %v3649
        %v5025 = vpop.permute.xlu0 %5024
        %5026 = vset.pattern.permute.xlu0 0
        %5027 = vperm.xlu0 %5026, %v3650
        %v5028 = vpop.permute.xlu0 %5027
        %5029 = vset.pattern.permute.xlu0 0
        %5030 = vperm.xlu0 %5029, %v3651
        %v5031 = vpop.permute.xlu0 %5030
        %5032 = vset.pattern.permute.xlu0 0
        %5033 = vperm.xlu0 %5032, %v3652
        %v5034 = vpop.permute.xlu0 %5033
        %5035 = vset.pattern.permute.xlu0 0
        %5036 = vperm.xlu0 %5035, %v3653
        %v5037 = vpop.permute.xlu0 %5036
        %5038 = vset.pattern.permute.xlu0 0
        %5039 = vperm.xlu0 %5038, %v3654
        %v5040 = vpop.permute.xlu0 %5039
        %5041 = vset.pattern.permute.xlu0 0
        %5042 = vperm.xlu0 %5041, %v3655
        %v5043 = vpop.permute.xlu0 %5042
        %5044 = vset.pattern.permute.xlu0 0
        %5045 = vperm.xlu0 %5044, %v3656
        %v5046 = vpop.permute.xlu0 %5045
        %5047 = vset.pattern.permute.xlu0 0
        %5048 = vperm.xlu0 %5047, %v3657
        %v5049 = vpop.permute.xlu0 %5048
        %5050 = vset.pattern.permute.xlu0 0
        %5051 = vperm.xlu0 %5050, %v3658
        %v5052 = vpop.permute.xlu0 %5051
        %5053 = vset.pattern.permute.xlu0 0
        %5054 = vperm.xlu0 %5053, %v3659
        %v5055 = vpop.permute.xlu0 %5054
        %5056 = vset.pattern.permute.xlu0 0
        %5057 = vperm.xlu0 %5056, %v3660
        %v5058 = vpop.permute.xlu0 %5057
        %5059 = vset.pattern.permute.xlu0 0
        %5060 = vperm.xlu0 %5059, %v3661
        %v5061 = vpop.permute.xlu0 %5060
        %5062 = vset.pattern.permute.xlu0 0
        %5063 = vperm.xlu0 %5062, %v3662
        %v5064 = vpop.permute.xlu0 %5063
        %5065 = vset.pattern.permute.xlu0 0
        %5066 = vperm.xlu0 %5065, %v3663
        %v5067 = vpop.permute.xlu0 %5066
        %5068 = vset.pattern.permute.xlu0 0
        %5069 = vperm.xlu0 %5068, %v3664
        %v5070 = vpop.permute.xlu0 %5069
        %5071 = vset.pattern.permute.xlu0 0
        %5072 = vperm.xlu0 %5071, %v3665
        %v5073 = vpop.permute.xlu0 %5072
        %5074 = vset.pattern.permute.xlu0 0
        %5075 = vperm.xlu0 %5074, %v3666
        %v5076 = vpop.permute.xlu0 %5075
        %5077 = vset.pattern.permute.xlu0 0
        %5078 = vperm.xlu0 %5077, %v3667
        %v5079 = vpop.permute.xlu0 %5078
        %5080 = vset.pattern.permute.xlu0 0
        %5081 = vperm.xlu0 %5080, %v3668
        %v5082 = vpop.permute.xlu0 %5081
        %5083 = vset.pattern.permute.xlu0 0
        %5084 = vperm.xlu0 %5083, %v3669
        %v5085 = vpop.permute.xlu0 %5084
        %5086 = vset.pattern.permute.xlu0 0
        %5087 = vperm.xlu0 %5086, %v3670
        %v5088 = vpop.permute.xlu0 %5087
        %5089 = vset.pattern.permute.xlu0 0
        %5090 = vperm.xlu0 %5089, %v3671
        %v5091 = vpop.permute.xlu0 %5090
        %5092 = vset.pattern.permute.xlu0 0
        %5093 = vperm.xlu0 %5092, %v3672
        %v5094 = vpop.permute.xlu0 %5093
        %5095 = vset.pattern.permute.xlu0 0
        %5096 = vperm.xlu0 %5095, %v3673
        %v5097 = vpop.permute.xlu0 %5096
        %5098 = vset.pattern.permute.xlu0 0
        %5099 = vperm.xlu0 %5098, %v3674
        %v5100 = vpop.permute.xlu0 %5099
        %5101 = vset.pattern.permute.xlu0 0
        %5102 = vperm.xlu0 %5101, %v3675
        %v5103 = vpop.permute.xlu0 %5102
        %5104 = vset.pattern.permute.xlu0 0
        %5105 = vperm.xlu0 %5104, %v3676
        %v5106 = vpop.permute.xlu0 %5105
        %5107 = vset.pattern.permute.xlu0 0
        %5108 = vperm.xlu0 %5107, %v3677
        %v5109 = vpop.permute.xlu0 %5108
        %5110 = vset.pattern.permute.xlu0 0
        %5111 = vperm.xlu0 %5110, %v3678
        %v5112 = vpop.permute.xlu0 %5111
        %5113 = vset.pattern.permute.xlu0 0
        %5114 = vperm.xlu0 %5113, %v3679
        %v5115 = vpop.permute.xlu0 %5114
        %5116 = vset.pattern.permute.xlu0 0
        %5117 = vperm.xlu0 %5116, %v3680
        %v5118 = vpop.permute.xlu0 %5117
        %5119 = vset.pattern.permute.xlu0 0
        %5120 = vperm.xlu0 %5119, %v3681
        %v5121 = vpop.permute.xlu0 %5120
        %5122 = vset.pattern.permute.xlu0 0
        %5123 = vperm.xlu0 %5122, %v3682
        %v5124 = vpop.permute.xlu0 %5123
        %5125 = vset.pattern.permute.xlu0 0
        %5126 = vperm.xlu0 %5125, %v3683
        %v5127 = vpop.permute.xlu0 %5126
        %5128 = vset.pattern.permute.xlu0 0
        %5129 = vperm.xlu0 %5128, %v3684
        %v5130 = vpop.permute.xlu0 %5129
        %5131 = vset.pattern.permute.xlu0 0
        %5132 = vperm.xlu0 %5131, %v3685
        %v5133 = vpop.permute.xlu0 %5132
        %5134 = vset.pattern.permute.xlu0 0
        %5135 = vperm.xlu0 %5134, %v3686
        %v5136 = vpop.permute.xlu0 %5135
        %5137 = vset.pattern.permute.xlu0 0
        %5138 = vperm.xlu0 %5137, %v3687
        %v5139 = vpop.permute.xlu0 %5138
        %5140 = vset.pattern.permute.xlu0 0
        %5141 = vperm.xlu0 %5140, %v3688
        %v5142 = vpop.permute.xlu0 %5141
        %5143 = vset.pattern.permute.xlu0 0
        %5144 = vperm.xlu0 %5143, %v3689
        %v5145 = vpop.permute.xlu0 %5144
        %5146 = vset.pattern.permute.xlu0 0
        %5147 = vperm.xlu0 %5146, %v3690
        %v5148 = vpop.permute.xlu0 %5147
        %5149 = vset.pattern.permute.xlu0 0
        %5150 = vperm.xlu0 %5149, %v3691
        %v5151 = vpop.permute.xlu0 %5150
        %5152 = vset.pattern.permute.xlu0 0
        %5153 = vperm.xlu0 %5152, %v3692
        %v5154 = vpop.permute.xlu0 %5153
        %5155 = vset.pattern.permute.xlu0 0
        %5156 = vperm.xlu0 %5155, %v3693
        %v5157 = vpop.permute.xlu0 %5156
        %5158 = vset.pattern.permute.xlu0 0
        %5159 = vperm.xlu0 %5158, %v3694
        %v5160 = vpop.permute.xlu0 %5159
        %5161 = vset.pattern.permute.xlu0 0
        %5162 = vperm.xlu0 %5161, %v3695
        %v5163 = vpop.permute.xlu0 %5162
        %5164 = vset.pattern.permute.xlu0 0
        %5165 = vperm.xlu0 %5164, %v3696
        %v5166 = vpop.permute.xlu0 %5165
        %5167 = vset.pattern.permute.xlu0 0
        %5168 = vperm.xlu0 %5167, %v3697
        %v5169 = vpop.permute.xlu0 %5168
        %5170 = vset.pattern.permute.xlu0 0
        %5171 = vperm.xlu0 %5170, %v3698
        %v5172 = vpop.permute.xlu0 %5171
        %5173 = vset.pattern.permute.xlu0 0
        %5174 = vperm.xlu0 %5173, %v3699
        %v5175 = vpop.permute.xlu0 %5174
        %5176 = vset.pattern.permute.xlu0 0
        %5177 = vperm.xlu0 %5176, %v3700
        %v5178 = vpop.permute.xlu0 %5177
        %5179 = vset.pattern.permute.xlu0 0
        %5180 = vperm.xlu0 %5179, %v3701
        %v5181 = vpop.permute.xlu0 %5180
        %5182 = vset.pattern.permute.xlu0 0
        %5183 = vperm.xlu0 %5182, %v3702
        %v5184 = vpop.permute.xlu0 %5183
        %5185 = vset.pattern.permute.xlu0 0
        %5186 = vperm.xlu0 %5185, %v3703
        %v5187 = vpop.permute.xlu0 %5186
        %5188 = vset.pattern.permute.xlu0 0
        %5189 = vperm.xlu0 %5188, %v3704
        %v5190 = vpop.permute.xlu0 %5189
        %5191 = vset.pattern.permute.xlu0 0
        %5192 = vperm.xlu0 %5191, %v3705
        %v5193 = vpop.permute.xlu0 %5192
        %5194 = vset.pattern.permute.xlu0 0
        %5195 = vperm.xlu0 %5194, %v3706
        %v5196 = vpop.permute.xlu0 %5195
        %5197 = vset.pattern.permute.xlu0 0
        %5198 = vperm.xlu0 %5197, %v3707
        %v5199 = vpop.permute.xlu0 %5198
        %5200 = vset.pattern.permute.xlu0 0
        %5201 = vperm.xlu0 %5200, %v3708
        %v5202 = vpop.permute.xlu0 %5201
        %5203 = vset.pattern.permute.xlu0 0
        %5204 = vperm.xlu0 %5203, %v3709
        %v5205 = vpop.permute.xlu0 %5204
        %5206 = vset.pattern.permute.xlu0 0
        %5207 = vperm.xlu0 %5206, %v3710
        %v5208 = vpop.permute.xlu0 %5207
        %5209 = vset.pattern.permute.xlu0 0
        %5210 = vperm.xlu0 %5209, %v3711
        %v5211 = vpop.permute.xlu0 %5210
        %5212 = vset.pattern.permute.xlu0 0
        %5213 = vperm.xlu0 %5212, %v3712
        %v5214 = vpop.permute.xlu0 %5213
        %5215 = vset.pattern.permute.xlu0 0
        %5216 = vperm.xlu0 %5215, %v3713
        %v5217 = vpop.permute.xlu0 %5216
        %5218 = vset.pattern.permute.xlu0 0
        %5219 = vperm.xlu0 %5218, %v3714
        %v5220 = vpop.permute.xlu0 %5219
        %5221 = vset.pattern.permute.xlu0 0
        %5222 = vperm.xlu0 %5221, %v3715
        %v5223 = vpop.permute.xlu0 %5222
        %5224 = vset.pattern.permute.xlu0 0
        %5225 = vperm.xlu0 %5224, %v3716
        %v5226 = vpop.permute.xlu0 %5225
        %5227 = vset.pattern.permute.xlu0 0
        %5228 = vperm.xlu0 %5227, %v3717
        %v5229 = vpop.permute.xlu0 %5228
        %5230 = vset.pattern.permute.xlu0 0
        %5231 = vperm.xlu0 %5230, %v3718
        %v5232 = vpop.permute.xlu0 %5231
        %5233 = vset.pattern.permute.xlu0 0
        %5234 = vperm.xlu0 %5233, %v3719
        %v5235 = vpop.permute.xlu0 %5234
        %5236 = vset.pattern.permute.xlu0 0
        %5237 = vperm.xlu0 %5236, %v3720
        %v5238 = vpop.permute.xlu0 %5237
        %5239 = vset.pattern.permute.xlu0 0
        %5240 = vperm.xlu0 %5239, %v3721
        %v5241 = vpop.permute.xlu0 %5240
        %5242 = vset.pattern.permute.xlu0 0
        %5243 = vperm.xlu0 %5242, %v3722
        %v5244 = vpop.permute.xlu0 %5243
        %5245 = vset.pattern.permute.xlu0 0
        %5246 = vperm.xlu0 %5245, %v3723
        %v5247 = vpop.permute.xlu0 %5246
        %5248 = vset.pattern.permute.xlu0 0
        %5249 = vperm.xlu0 %5248, %v3724
        %v5250 = vpop.permute.xlu0 %5249
        %5251 = vset.pattern.permute.xlu0 0
        %5252 = vperm.xlu0 %5251, %v3725
        %v5253 = vpop.permute.xlu0 %5252
        %5254 = vset.pattern.permute.xlu0 0
        %5255 = vperm.xlu0 %5254, %v3726
        %v5256 = vpop.permute.xlu0 %5255
        %5257 = vset.pattern.permute.xlu0 0
        %5258 = vperm.xlu0 %5257, %v3727
        %v5259 = vpop.permute.xlu0 %5258
        %5260 = vset.pattern.permute.xlu0 0
        %5261 = vperm.xlu0 %5260, %v3728
        %v5262 = vpop.permute.xlu0 %5261
        %5263 = vset.pattern.permute.xlu0 0
        %5264 = vperm.xlu0 %5263, %v3729
        %v5265 = vpop.permute.xlu0 %5264
        %5266 = vset.pattern.permute.xlu0 0
        %5267 = vperm.xlu0 %5266, %v3730
        %v5268 = vpop.permute.xlu0 %5267
        %5269 = vset.pattern.permute.xlu0 0
        %5270 = vperm.xlu0 %5269, %v3731
        %v5271 = vpop.permute.xlu0 %5270
        %5272 = vset.pattern.permute.xlu0 0
        %5273 = vperm.xlu0 %5272, %v3732
        %v5274 = vpop.permute.xlu0 %5273
        %5275 = vset.pattern.permute.xlu0 0
        %5276 = vperm.xlu0 %5275, %v3733
        %v5277 = vpop.permute.xlu0 %5276
        %5278 = vset.pattern.permute.xlu0 0
        %5279 = vperm.xlu0 %5278, %v3734
        %v5280 = vpop.permute.xlu0 %5279
        %5281 = vset.pattern.permute.xlu0 0
        %5282 = vperm.xlu0 %5281, %v3735
        %v5283 = vpop.permute.xlu0 %5282
        %5284 = vset.pattern.permute.xlu0 0
        %5285 = vperm.xlu0 %5284, %v3736
        %v5286 = vpop.permute.xlu0 %5285
        %5287 = vset.pattern.permute.xlu0 0
        %5288 = vperm.xlu0 %5287, %v3737
        %v5289 = vpop.permute.xlu0 %5288
        %5290 = vset.pattern.permute.xlu0 0
        %5291 = vperm.xlu0 %5290, %v3738
        %v5292 = vpop.permute.xlu0 %5291
        %5293 = vset.pattern.permute.xlu0 0
        %5294 = vperm.xlu0 %5293, %v3739
        %v5295 = vpop.permute.xlu0 %5294
        %5296 = vset.pattern.permute.xlu0 0
        %5297 = vperm.xlu0 %5296, %v3740
        %v5298 = vpop.permute.xlu0 %5297
        %5299 = vset.pattern.permute.xlu0 0
        %5300 = vperm.xlu0 %5299, %v3741
        %v5301 = vpop.permute.xlu0 %5300
        %5302 = vset.pattern.permute.xlu0 0
        %5303 = vperm.xlu0 %5302, %v3742
        %v5304 = vpop.permute.xlu0 %5303
        %5305 = vset.pattern.permute.xlu0 0
        %5306 = vperm.xlu0 %5305, %v3743
        %v5307 = vpop.permute.xlu0 %5306
        %5308 = vset.pattern.permute.xlu0 0
        %5309 = vperm.xlu0 %5308, %v3744
        %v5310 = vpop.permute.xlu0 %5309
        %5311 = vset.pattern.permute.xlu0 0
        %5312 = vperm.xlu0 %5311, %v3745
        %v5313 = vpop.permute.xlu0 %5312
        %5314 = vset.pattern.permute.xlu0 0
        %5315 = vperm.xlu0 %5314, %v3746
        %v5316 = vpop.permute.xlu0 %5315
        %5317 = vset.pattern.permute.xlu0 0
        %5318 = vperm.xlu0 %5317, %v3747
        %v5319 = vpop.permute.xlu0 %5318
        %5320 = vset.pattern.permute.xlu0 0
        %5321 = vperm.xlu0 %5320, %v3748
        %v5322 = vpop.permute.xlu0 %5321
        %5323 = vset.pattern.permute.xlu0 0
        %5324 = vperm.xlu0 %5323, %v3749
        %v5325 = vpop.permute.xlu0 %5324
        %5326 = vset.pattern.permute.xlu0 0
        %5327 = vperm.xlu0 %5326, %v3750
        %v5328 = vpop.permute.xlu0 %5327
        %5329 = vset.pattern.permute.xlu0 0
        %5330 = vperm.xlu0 %5329, %v3751
        %v5331 = vpop.permute.xlu0 %5330
        %5332 = vset.pattern.permute.xlu0 0
        %5333 = vperm.xlu0 %5332, %v3752
        %v5334 = vpop.permute.xlu0 %5333
        %5335 = vset.pattern.permute.xlu0 0
        %5336 = vperm.xlu0 %5335, %v3753
        %v5337 = vpop.permute.xlu0 %5336
        %5338 = vset.pattern.permute.xlu0 0
        %5339 = vperm.xlu0 %5338, %v3754
        %v5340 = vpop.permute.xlu0 %5339
        %5341 = vset.pattern.permute.xlu0 0
        %5342 = vperm.xlu0 %5341, %v3755
        %v5343 = vpop.permute.xlu0 %5342
        %5344 = vset.pattern.permute.xlu0 0
        %5345 = vperm.xlu0 %5344, %v3756
        %v5346 = vpop.permute.xlu0 %5345
        %5347 = vset.pattern.permute.xlu0 0
        %5348 = vperm.xlu0 %5347, %v3757
        %v5349 = vpop.permute.xlu0 %5348
        %5350 = vset.pattern.permute.xlu0 0
        %5351 = vperm.xlu0 %5350, %v3758
        %v5352 = vpop.permute.xlu0 %5351
        %5353 = vset.pattern.permute.xlu0 0
        %5354 = vperm.xlu0 %5353, %v3759
        %v5355 = vpop.permute.xlu0 %5354
        %5356 = vset.pattern.permute.xlu0 0
        %5357 = vperm.xlu0 %5356, %v3760
        %v5358 = vpop.permute.xlu0 %5357
        %5359 = vset.pattern.permute.xlu0 0
        %5360 = vperm.xlu0 %5359, %v3761
        %v5361 = vpop.permute.xlu0 %5360
        %5362 = vset.pattern.permute.xlu0 0
        %5363 = vperm.xlu0 %5362, %v3762
        %v5364 = vpop.permute.xlu0 %5363
        %5365 = vset.pattern.permute.xlu0 0
        %5366 = vperm.xlu0 %5365, %v3763
        %v5367 = vpop.permute.xlu0 %5366
        %5368 = vset.pattern.permute.xlu0 0
        %5369 = vperm.xlu0 %5368, %v3764
        %v5370 = vpop.permute.xlu0 %5369
        %5371 = vset.pattern.permute.xlu0 0
        %5372 = vperm.xlu0 %5371, %v3765
        %v5373 = vpop.permute.xlu0 %5372
        %5374 = vset.pattern.permute.xlu0 0
        %5375 = vperm.xlu0 %5374, %v3766
        %v5376 = vpop.permute.xlu0 %5375
        %5377 = vset.pattern.permute.xlu0 0
        %5378 = vperm.xlu0 %5377, %v3767
        %v5379 = vpop.permute.xlu0 %5378
        %5380 = vset.pattern.permute.xlu0 0
        %5381 = vperm.xlu0 %5380, %v3768
        %v5382 = vpop.permute.xlu0 %5381
        %5383 = vset.pattern.permute.xlu0 0
        %5384 = vperm.xlu0 %5383, %v3769
        %v5385 = vpop.permute.xlu0 %5384
        %5386 = vset.pattern.permute.xlu0 0
        %5387 = vperm.xlu0 %5386, %v3770
        %v5388 = vpop.permute.xlu0 %5387
        %5389 = vset.pattern.permute.xlu0 0
        %5390 = vperm.xlu0 %5389, %v3771
        %v5391 = vpop.permute.xlu0 %5390
        %5392 = vset.pattern.permute.xlu0 0
        %5393 = vperm.xlu0 %5392, %v3772
        %v5394 = vpop.permute.xlu0 %5393
        %5395 = vset.pattern.permute.xlu0 0
        %5396 = vperm.xlu0 %5395, %v3773
        %v5397 = vpop.permute.xlu0 %5396
        %5398 = vset.pattern.permute.xlu0 0
        %5399 = vperm.xlu0 %5398, %v3774
        %v5400 = vpop.permute.xlu0 %5399
        %5401 = vset.pattern.permute.xlu0 0
        %5402 = vperm.xlu0 %5401, %v3775
        %v5403 = vpop.permute.xlu0 %5402
        %5404 = vset.pattern.permute.xlu0 0
        %5405 = vperm.xlu0 %5404, %v3776
        %v5406 = vpop.permute.xlu0 %5405
        %5407 = vset.pattern.permute.xlu0 0
        %5408 = vperm.xlu0 %5407, %v3777
        %v5409 = vpop.permute.xlu0 %5408
        %5410 = vset.pattern.permute.xlu0 0
        %5411 = vperm.xlu0 %5410, %v3778
        %v5412 = vpop.permute.xlu0 %5411
        %5413 = vset.pattern.permute.xlu0 0
        %5414 = vperm.xlu0 %5413, %v3779
        %v5415 = vpop.permute.xlu0 %5414
        %5416 = vset.pattern.permute.xlu0 0
        %5417 = vperm.xlu0 %5416, %v3780
        %v5418 = vpop.permute.xlu0 %5417
        %5419 = vset.pattern.permute.xlu0 0
        %5420 = vperm.xlu0 %5419, %v3781
        %v5421 = vpop.permute.xlu0 %5420
        %5422 = vset.pattern.permute.xlu0 0
        %5423 = vperm.xlu0 %5422, %v3782
        %v5424 = vpop.permute.xlu0 %5423
        %5425 = vset.pattern.permute.xlu0 0
        %5426 = vperm.xlu0 %5425, %v3783
        %v5427 = vpop.permute.xlu0 %5426
        %5428 = vset.pattern.permute.xlu0 0
        %5429 = vperm.xlu0 %5428, %v3784
        %v5430 = vpop.permute.xlu0 %5429
        %5431 = vset.pattern.permute.xlu0 0
        %5432 = vperm.xlu0 %5431, %v3785
        %v5433 = vpop.permute.xlu0 %5432
        %5434 = vset.pattern.permute.xlu0 0
        %5435 = vperm.xlu0 %5434, %v3786
        %v5436 = vpop.permute.xlu0 %5435
        %5437 = vset.pattern.permute.xlu0 0
        %5438 = vperm.xlu0 %5437, %v3787
        %v5439 = vpop.permute.xlu0 %5438
        %5440 = vset.pattern.permute.xlu0 0
        %5441 = vperm.xlu0 %5440, %v3788
        %v5442 = vpop.permute.xlu0 %5441
        %5443 = vset.pattern.permute.xlu0 0
        %5444 = vperm.xlu0 %5443, %v3789
        %v5445 = vpop.permute.xlu0 %5444
        %5446 = vset.pattern.permute.xlu0 0
        %5447 = vperm.xlu0 %5446, %v3790
        %v5448 = vpop.permute.xlu0 %5447
        %5449 = vset.pattern.permute.xlu0 0
        %5450 = vperm.xlu0 %5449, %v3791
        %v5451 = vpop.permute.xlu0 %5450
        %5452 = vset.pattern.permute.xlu0 0
        %5453 = vperm.xlu0 %5452, %v3792
        %v5454 = vpop.permute.xlu0 %5453
        %5455 = vset.pattern.permute.xlu0 0
        %5456 = vperm.xlu0 %5455, %v3793
        %v5457 = vpop.permute.xlu0 %5456
        %5458 = vset.pattern.permute.xlu0 0
        %5459 = vperm.xlu0 %5458, %v3794
        %v5460 = vpop.permute.xlu0 %5459
        %5461 = vset.pattern.permute.xlu0 0
        %5462 = vperm.xlu0 %5461, %v3795
        %v5463 = vpop.permute.xlu0 %5462
        %5464 = vset.pattern.permute.xlu0 0
        %5465 = vperm.xlu0 %5464, %v3796
        %v5466 = vpop.permute.xlu0 %5465
        %5467 = vset.pattern.permute.xlu0 0
        %5468 = vperm.xlu0 %5467, %v3797
        %v5469 = vpop.permute.xlu0 %5468
        %5470 = vset.pattern.permute.xlu0 0
        %5471 = vperm.xlu0 %5470, %v3798
        %v5472 = vpop.permute.xlu0 %5471
        %5473 = vset.pattern.permute.xlu0 0
        %5474 = vperm.xlu0 %5473, %v3799
        %v5475 = vpop.permute.xlu0 %5474
        %5476 = vset.pattern.permute.xlu0 0
        %5477 = vperm.xlu0 %5476, %v3800
        %v5478 = vpop.permute.xlu0 %5477
        %5479 = vset.pattern.permute.xlu0 0
        %5480 = vperm.xlu0 %5479, %v3801
        %v5481 = vpop.permute.xlu0 %5480
        %5482 = vset.pattern.permute.xlu0 0
        %5483 = vperm.xlu0 %5482, %v3802
        %v5484 = vpop.permute.xlu0 %5483
        %5485 = vset.pattern.permute.xlu0 0
        %5486 = vperm.xlu0 %5485, %v3803
        %v5487 = vpop.permute.xlu0 %5486
        %5488 = vset.pattern.permute.xlu0 0
        %5489 = vperm.xlu0 %5488, %v3804
        %v5490 = vpop.permute.xlu0 %5489
        %5491 = vset.pattern.permute.xlu0 0
        %5492 = vperm.xlu0 %5491, %v3805
        %v5493 = vpop.permute.xlu0 %5492
        %5494 = vset.pattern.permute.xlu0 0
        %5495 = vperm.xlu0 %5494, %v3806
        %v5496 = vpop.permute.xlu0 %5495
        %5497 = vset.pattern.permute.xlu0 0
        %5498 = vperm.xlu0 %5497, %v3807
        %v5499 = vpop.permute.xlu0 %5498
        %5500 = vset.pattern.permute.xlu0 0
        %5501 = vperm.xlu0 %5500, %v3808
        %v5502 = vpop.permute.xlu0 %5501
        %5503 = vset.pattern.permute.xlu0 0
        %5504 = vperm.xlu0 %5503, %v3809
        %v5505 = vpop.permute.xlu0 %5504
        %5506 = vset.pattern.permute.xlu0 0
        %5507 = vperm.xlu0 %5506, %v3810
        %v5508 = vpop.permute.xlu0 %5507
        %5509 = vset.pattern.permute.xlu0 0
        %5510 = vperm.xlu0 %5509, %v3811
        %v5511 = vpop.permute.xlu0 %5510
        %5512 = vset.pattern.permute.xlu0 0
        %5513 = vperm.xlu0 %5512, %v3812
        %v5514 = vpop.permute.xlu0 %5513
        %5515 = vset.pattern.permute.xlu0 0
        %5516 = vperm.xlu0 %5515, %v3813
        %v5517 = vpop.permute.xlu0 %5516
        %5518 = vset.pattern.permute.xlu0 0
        %5519 = vperm.xlu0 %5518, %v3814
        %v5520 = vpop.permute.xlu0 %5519
        %5521 = vset.pattern.permute.xlu0 0
        %5522 = vperm.xlu0 %5521, %v3815
        %v5523 = vpop.permute.xlu0 %5522
        %5524 = vset.pattern.permute.xlu0 0
        %5525 = vperm.xlu0 %5524, %v3816
        %v5526 = vpop.permute.xlu0 %5525
        %5527 = vset.pattern.permute.xlu0 0
        %5528 = vperm.xlu0 %5527, %v3817
        %v5529 = vpop.permute.xlu0 %5528
        %5530 = vset.pattern.permute.xlu0 0
        %5531 = vperm.xlu0 %5530, %v3818
        %v5532 = vpop.permute.xlu0 %5531
        %5533 = vset.pattern.permute.xlu0 0
        %5534 = vperm.xlu0 %5533, %v3819
        %v5535 = vpop.permute.xlu0 %5534
        %5536 = vset.pattern.permute.xlu0 0
        %5537 = vperm.xlu0 %5536, %v3820
        %v5538 = vpop.permute.xlu0 %5537
        %5539 = vset.pattern.permute.xlu0 0
        %5540 = vperm.xlu0 %5539, %v3821
        %v5541 = vpop.permute.xlu0 %5540
        %5542 = vset.pattern.permute.xlu0 0
        %5543 = vperm.xlu0 %5542, %v3822
        %v5544 = vpop.permute.xlu0 %5543
        %5545 = vset.pattern.permute.xlu0 0
        %5546 = vperm.xlu0 %5545, %v3823
        %v5547 = vpop.permute.xlu0 %5546
        %5548 = vset.pattern.permute.xlu0 0
        %5549 = vperm.xlu0 %5548, %v3824
        %v5550 = vpop.permute.xlu0 %5549
        %5551 = vset.pattern.permute.xlu0 0
        %5552 = vperm.xlu0 %5551, %v3825
        %v5553 = vpop.permute.xlu0 %5552
        %5554 = vset.pattern.permute.xlu0 0
        %5555 = vperm.xlu0 %5554, %v3826
        %v5556 = vpop.permute.xlu0 %5555
        %5557 = vset.pattern.permute.xlu0 0
        %5558 = vperm.xlu0 %5557, %v3827
        %v5559 = vpop.permute.xlu0 %5558
        %5560 = vset.pattern.permute.xlu0 0
        %5561 = vperm.xlu0 %5560, %v3828
        %v5562 = vpop.permute.xlu0 %5561
        %5563 = vset.pattern.permute.xlu0 0
        %5564 = vperm.xlu0 %5563, %v3829
        %v5565 = vpop.permute.xlu0 %5564
        %5566 = vset.pattern.permute.xlu0 0
        %5567 = vperm.xlu0 %5566, %v3830
        %v5568 = vpop.permute.xlu0 %5567
        %5569 = vset.pattern.permute.xlu0 0
        %5570 = vperm.xlu0 %5569, %v3831
        %v5571 = vpop.permute.xlu0 %5570
        %5572 = vset.pattern.permute.xlu0 0
        %5573 = vperm.xlu0 %5572, %v3832
        %v5574 = vpop.permute.xlu0 %5573
        %5575 = vset.pattern.permute.xlu0 0
        %5576 = vperm.xlu0 %5575, %v3833
        %v5577 = vpop.permute.xlu0 %5576
        %5578 = vset.pattern.permute.xlu0 0
        %5579 = vperm.xlu0 %5578, %v3834
        %v5580 = vpop.permute.xlu0 %5579
        %5581 = vset.pattern.permute.xlu0 0
        %5582 = vperm.xlu0 %5581, %v3835
        %v5583 = vpop.permute.xlu0 %5582
        %5584 = vset.pattern.permute.xlu0 0
        %5585 = vperm.xlu0 %5584, %v3836
        %v5586 = vpop.permute.xlu0 %5585
        %5587 = vset.pattern.permute.xlu0 0
        %5588 = vperm.xlu0 %5587, %v3837
        %v5589 = vpop.permute.xlu0 %5588
        %5590 = vset.pattern.permute.xlu0 0
        %5591 = vperm.xlu0 %5590, %v3838
        %v5592 = vpop.permute.xlu0 %5591
        %5593 = vset.pattern.permute.xlu0 0
        %5594 = vperm.xlu0 %5593, %v3839
        %v5595 = vpop.permute.xlu0 %5594
        %5596 = vset.pattern.permute.xlu0 0
        %5597 = vperm.xlu0 %5596, %v3840
        %v5598 = vpop.permute.xlu0 %5597
        %5599 = vset.pattern.permute.xlu0 0
        %5600 = vperm.xlu0 %5599, %v3841
        %v5601 = vpop.permute.xlu0 %5600
        %5602 = vset.pattern.permute.xlu0 0
        %5603 = vperm.xlu0 %5602, %v3842
        %v5604 = vpop.permute.xlu0 %5603
        %5605 = vset.pattern.permute.xlu0 0
        %5606 = vperm.xlu0 %5605, %v3843
        %v5607 = vpop.permute.xlu0 %5606
        %5608 = vset.pattern.permute.xlu0 0
        %5609 = vperm.xlu0 %5608, %v3844
        %v5610 = vpop.permute.xlu0 %5609
        %5611 = vset.pattern.permute.xlu0 0
        %5612 = vperm.xlu0 %5611, %v3845
        %v5613 = vpop.permute.xlu0 %5612
        %5614 = vset.pattern.permute.xlu0 0
        %5615 = vperm.xlu0 %5614, %v3846
        %v5616 = vpop.permute.xlu0 %5615
        %5617 = vset.pattern.permute.xlu0 0
        %5618 = vperm.xlu0 %5617, %v3847
        %v5619 = vpop.permute.xlu0 %5618
        %5620 = vset.pattern.permute.xlu0 0
        %5621 = vperm.xlu0 %5620, %v3848
        %v5622 = vpop.permute.xlu0 %5621
        %5623 = vset.pattern.permute.xlu0 0
        %5624 = vperm.xlu0 %5623, %v3849
        %v5625 = vpop.permute.xlu0 %5624
        %5626 = vset.pattern.permute.xlu0 0
        %5627 = vperm.xlu0 %5626, %v3850
        %v5628 = vpop.permute.xlu0 %5627
        %5629 = vset.pattern.permute.xlu0 0
        %5630 = vperm.xlu0 %5629, %v3851
        %v5631 = vpop.permute.xlu0 %5630
        %5632 = vset.pattern.permute.xlu0 0
        %5633 = vperm.xlu0 %5632, %v3852
        %v5634 = vpop.permute.xlu0 %5633
        %5635 = vset.pattern.permute.xlu0 0
        %5636 = vperm.xlu0 %5635, %v3853
        %v5637 = vpop.permute.xlu0 %5636
        %5638 = vset.pattern.permute.xlu0 0
        %5639 = vperm.xlu0 %5638, %v3854
        %v5640 = vpop.permute.xlu0 %5639
        %5641 = vset.pattern.permute.xlu0 0
        %5642 = vperm.xlu0 %5641, %v3855
        %v5643 = vpop.permute.xlu0 %5642
        %5644 = vset.pattern.permute.xlu0 0
        %5645 = vperm.xlu0 %5644, %v3856
        %v5646 = vpop.permute.xlu0 %5645
        %5647 = vset.pattern.permute.xlu0 0
        %5648 = vperm.xlu0 %5647, %v3857
        %v5649 = vpop.permute.xlu0 %5648
        %5650 = vset.pattern.permute.xlu0 0
        %5651 = vperm.xlu0 %5650, %v3858
        %v5652 = vpop.permute.xlu0 %5651
        %5653 = vset.pattern.permute.xlu0 0
        %5654 = vperm.xlu0 %5653, %v3859
        %v5655 = vpop.permute.xlu0 %5654
        %5656 = vset.pattern.permute.xlu0 0
        %5657 = vperm.xlu0 %5656, %v3860
        %v5658 = vpop.permute.xlu0 %5657
        %5659 = vset.pattern.permute.xlu0 0
        %5660 = vperm.xlu0 %5659, %v3861
        %v5661 = vpop.permute.xlu0 %5660
        %5662 = vset.pattern.permute.xlu0 0
        %5663 = vperm.xlu0 %5662, %v3862
        %v5664 = vpop.permute.xlu0 %5663
        %5665 = vset.pattern.permute.xlu0 0
        %5666 = vperm.xlu0 %5665, %v3863
        %v5667 = vpop.permute.xlu0 %5666
        %5668 = vset.pattern.permute.xlu0 0
        %5669 = vperm.xlu0 %5668, %v3864
        %v5670 = vpop.permute.xlu0 %5669
        %5671 = vset.pattern.permute.xlu0 0
        %5672 = vperm.xlu0 %5671, %v3865
        %v5673 = vpop.permute.xlu0 %5672
        %5674 = vset.pattern.permute.xlu0 0
        %5675 = vperm.xlu0 %5674, %v3866
        %v5676 = vpop.permute.xlu0 %5675
        %5677 = vset.pattern.permute.xlu0 0
        %5678 = vperm.xlu0 %5677, %v3867
        %v5679 = vpop.permute.xlu0 %5678
        %5680 = vset.pattern.permute.xlu0 0
        %5681 = vperm.xlu0 %5680, %v3868
        %v5682 = vpop.permute.xlu0 %5681
        %5683 = vset.pattern.permute.xlu0 0
        %5684 = vperm.xlu0 %5683, %v3869
        %v5685 = vpop.permute.xlu0 %5684
        %5686 = vset.pattern.permute.xlu0 0
        %5687 = vperm.xlu0 %5686, %v3870
        %v5688 = vpop.permute.xlu0 %5687
        %5689 = vset.pattern.permute.xlu0 0
        %5690 = vperm.xlu0 %5689, %v3871
        %v5691 = vpop.permute.xlu0 %5690
        %5692 = vset.pattern.permute.xlu0 0
        %5693 = vperm.xlu0 %5692, %v3872
        %v5694 = vpop.permute.xlu0 %5693
        %5695 = vset.pattern.permute.xlu0 0
        %5696 = vperm.xlu0 %5695, %v3873
        %v5697 = vpop.permute.xlu0 %5696
        %5698 = vset.pattern.permute.xlu0 0
        %5699 = vperm.xlu0 %5698, %v3874
        %v5700 = vpop.permute.xlu0 %5699
        %5701 = vset.pattern.permute.xlu0 0
        %5702 = vperm.xlu0 %5701, %v3875
        %v5703 = vpop.permute.xlu0 %5702
        %5704 = vset.pattern.permute.xlu0 0
        %5705 = vperm.xlu0 %5704, %v3876
        %v5706 = vpop.permute.xlu0 %5705
        %5707 = vset.pattern.permute.xlu0 0
        %5708 = vperm.xlu0 %5707, %v3877
        %v5709 = vpop.permute.xlu0 %5708
        %5710 = vset.pattern.permute.xlu0 0
        %5711 = vperm.xlu0 %5710, %v3878
        %v5712 = vpop.permute.xlu0 %5711
        %5713 = vset.pattern.permute.xlu0 0
        %5714 = vperm.xlu0 %5713, %v3879
        %v5715 = vpop.permute.xlu0 %5714
        %5716 = vset.pattern.permute.xlu0 0
        %5717 = vperm.xlu0 %5716, %v3880
        %v5718 = vpop.permute.xlu0 %5717
        %5719 = vset.pattern.permute.xlu0 0
        %5720 = vperm.xlu0 %5719, %v3881
        %v5721 = vpop.permute.xlu0 %5720
        %5722 = vset.pattern.permute.xlu0 0
        %5723 = vperm.xlu0 %5722, %v3882
        %v5724 = vpop.permute.xlu0 %5723
        %5725 = vset.pattern.permute.xlu0 0
        %5726 = vperm.xlu0 %5725, %v3883
        %v5727 = vpop.permute.xlu0 %5726
        %5728 = vset.pattern.permute.xlu0 0
        %5729 = vperm.xlu0 %5728, %v3884
        %v5730 = vpop.permute.xlu0 %5729
        %5731 = vset.pattern.permute.xlu0 0
        %5732 = vperm.xlu0 %5731, %v3885
        %v5733 = vpop.permute.xlu0 %5732
        %5734 = vset.pattern.permute.xlu0 0
        %5735 = vperm.xlu0 %5734, %v3886
        %v5736 = vpop.permute.xlu0 %5735
        %5737 = vset.pattern.permute.xlu0 0
        %5738 = vperm.xlu0 %5737, %v3887
        %v5739 = vpop.permute.xlu0 %5738
        %5740 = vset.pattern.permute.xlu0 0
        %5741 = vperm.xlu0 %5740, %v3888
        %v5742 = vpop.permute.xlu0 %5741
        %5743 = vset.pattern.permute.xlu0 0
        %5744 = vperm.xlu0 %5743, %v3889
        %v5745 = vpop.permute.xlu0 %5744
        %5746 = vset.pattern.permute.xlu0 0
        %5747 = vperm.xlu0 %5746, %v3890
        %v5748 = vpop.permute.xlu0 %5747
        %5749 = vset.pattern.permute.xlu0 0
        %5750 = vperm.xlu0 %5749, %v3891
        %v5751 = vpop.permute.xlu0 %5750
        %5752 = vset.pattern.permute.xlu0 0
        %5753 = vperm.xlu0 %5752, %v3892
        %v5754 = vpop.permute.xlu0 %5753
        %5755 = vset.pattern.permute.xlu0 0
        %5756 = vperm.xlu0 %5755, %v3893
        %v5757 = vpop.permute.xlu0 %5756
        %5758 = vset.pattern.permute.xlu0 0
        %5759 = vperm.xlu0 %5758, %v3894
        %v5760 = vpop.permute.xlu0 %5759
        %5761 = vset.pattern.permute.xlu0 0
        %5762 = vperm.xlu0 %5761, %v3895
        %v5763 = vpop.permute.xlu0 %5762
        %5764 = vset.pattern.permute.xlu0 0
        %5765 = vperm.xlu0 %5764, %v3896
        %v5766 = vpop.permute.xlu0 %5765
        %5767 = vset.pattern.permute.xlu0 0
        %5768 = vperm.xlu0 %5767, %v3897
        %v5769 = vpop.permute.xlu0 %5768
        %5770 = vset.pattern.permute.xlu0 0
        %5771 = vperm.xlu0 %5770, %v3898
        %v5772 = vpop.permute.xlu0 %5771
        %5773 = vset.pattern.permute.xlu0 0
        %5774 = vperm.xlu0 %5773, %v3899
        %v5775 = vpop.permute.xlu0 %5774
        %5776 = vset.pattern.permute.xlu0 0
        %5777 = vperm.xlu0 %5776, %v3900
        %v5778 = vpop.permute.xlu0 %5777
        %5779 = vset.pattern.permute.xlu0 0
        %5780 = vperm.xlu0 %5779, %v3901
        %v5781 = vpop.permute.xlu0 %5780
        %5782 = vset.pattern.permute.xlu0 0
        %5783 = vperm.xlu0 %5782, %v3902
        %v5784 = vpop.permute.xlu0 %5783
        %5785 = vset.pattern.permute.xlu0 0
        %5786 = vperm.xlu0 %5785, %v3903
        %v5787 = vpop.permute.xlu0 %5786
        %5788 = vset.pattern.permute.xlu0 0
        %5789 = vperm.xlu0 %5788, %v3904
        %v5790 = vpop.permute.xlu0 %5789
        %5791 = vset.pattern.permute.xlu0 0
        %5792 = vperm.xlu0 %5791, %v3905
        %v5793 = vpop.permute.xlu0 %5792
        %5794 = vset.pattern.permute.xlu0 0
        %5795 = vperm.xlu0 %5794, %v3906
        %v5796 = vpop.permute.xlu0 %5795
        %5797 = vset.pattern.permute.xlu0 0
        %5798 = vperm.xlu0 %5797, %v3907
        %v5799 = vpop.permute.xlu0 %5798
        %5800 = vset.pattern.permute.xlu0 0
        %5801 = vperm.xlu0 %5800, %v3908
        %v5802 = vpop.permute.xlu0 %5801
        %5803 = vset.pattern.permute.xlu0 0
        %5804 = vperm.xlu0 %5803, %v3909
        %v5805 = vpop.permute.xlu0 %5804
        %5806 = vset.pattern.permute.xlu0 0
        %5807 = vperm.xlu0 %5806, %v3910
        %v5808 = vpop.permute.xlu0 %5807
        %5809 = vset.pattern.permute.xlu0 0
        %5810 = vperm.xlu0 %5809, %v3911
        %v5811 = vpop.permute.xlu0 %5810
        %5812 = vset.pattern.permute.xlu0 0
        %5813 = vperm.xlu0 %5812, %v3912
        %v5814 = vpop.permute.xlu0 %5813
        %5815 = vset.pattern.permute.xlu0 0
        %5816 = vperm.xlu0 %5815, %v3913
        %v5817 = vpop.permute.xlu0 %5816
        %5818 = vset.pattern.permute.xlu0 0
        %5819 = vperm.xlu0 %5818, %v3914
        %v5820 = vpop.permute.xlu0 %5819
        %5821 = vset.pattern.permute.xlu0 0
        %5822 = vperm.xlu0 %5821, %v3915
        %v5823 = vpop.permute.xlu0 %5822
        %5824 = vset.pattern.permute.xlu0 0
        %5825 = vperm.xlu0 %5824, %v3916
        %v5826 = vpop.permute.xlu0 %5825
        %5827 = vset.pattern.permute.xlu0 0
        %5828 = vperm.xlu0 %5827, %v3917
        %v5829 = vpop.permute.xlu0 %5828
        %5830 = vset.pattern.permute.xlu0 0
        %5831 = vperm.xlu0 %5830, %v3918
        %v5832 = vpop.permute.xlu0 %5831
        %5833 = vset.pattern.permute.xlu0 0
        %5834 = vperm.xlu0 %5833, %v3919
        %v5835 = vpop.permute.xlu0 %5834
        %5836 = vset.pattern.permute.xlu0 0
        %5837 = vperm.xlu0 %5836, %v3920
        %v5838 = vpop.permute.xlu0 %5837
        %5839 = vset.pattern.permute.xlu0 0
        %5840 = vperm.xlu0 %5839, %v3921
        %v5841 = vpop.permute.xlu0 %5840
        %5842 = vset.pattern.permute.xlu0 0
        %5843 = vperm.xlu0 %5842, %v3922
        %v5844 = vpop.permute.xlu0 %5843
        %5845 = vset.pattern.permute.xlu0 0
        %5846 = vperm.xlu0 %5845, %v3923
        %v5847 = vpop.permute.xlu0 %5846
        %5848 = vset.pattern.permute.xlu0 0
        %5849 = vperm.xlu0 %5848, %v3924
        %v5850 = vpop.permute.xlu0 %5849
        %5851 = vset.pattern.permute.xlu0 0
        %5852 = vperm.xlu0 %5851, %v3925
        %v5853 = vpop.permute.xlu0 %5852
        %5854 = vset.pattern.permute.xlu0 0
        %5855 = vperm.xlu0 %5854, %v3926
        %v5856 = vpop.permute.xlu0 %5855
        %5857 = vset.pattern.permute.xlu0 0
        %5858 = vperm.xlu0 %5857, %v3927
        %v5859 = vpop.permute.xlu0 %5858
        %5860 = vset.pattern.permute.xlu0 0
        %5861 = vperm.xlu0 %5860, %v3928
        %v5862 = vpop.permute.xlu0 %5861
        %5863 = vset.pattern.permute.xlu0 0
        %5864 = vperm.xlu0 %5863, %v3929
        %v5865 = vpop.permute.xlu0 %5864
        %5866 = vset.pattern.permute.xlu0 0
        %5867 = vperm.xlu0 %5866, %v3930
        %v5868 = vpop.permute.xlu0 %5867
        %5869 = vset.pattern.permute.xlu0 0
        %5870 = vperm.xlu0 %5869, %v3931
        %v5871 = vpop.permute.xlu0 %5870
        %5872 = vset.pattern.permute.xlu0 0
        %5873 = vperm.xlu0 %5872, %v3932
        %v5874 = vpop.permute.xlu0 %5873
        %5875 = vset.pattern.permute.xlu0 0
        %5876 = vperm.xlu0 %5875, %v3933
        %v5877 = vpop.permute.xlu0 %5876
        %5878 = vset.pattern.permute.xlu0 0
        %5879 = vperm.xlu0 %5878, %v3934
        %v5880 = vpop.permute.xlu0 %5879
        %5881 = vset.pattern.permute.xlu0 0
        %5882 = vperm.xlu0 %5881, %v3935
        %v5883 = vpop.permute.xlu0 %5882
        %5884 = vset.pattern.permute.xlu0 0
        %5885 = vperm.xlu0 %5884, %v3936
        %v5886 = vpop.permute.xlu0 %5885
        %5887 = vset.pattern.permute.xlu0 0
        %5888 = vperm.xlu0 %5887, %v3937
        %v5889 = vpop.permute.xlu0 %5888
        %5890 = vset.pattern.permute.xlu0 0
        %5891 = vperm.xlu0 %5890, %v3938
        %v5892 = vpop.permute.xlu0 %5891
        %5893 = vset.pattern.permute.xlu0 0
        %5894 = vperm.xlu0 %5893, %v3939
        %v5895 = vpop.permute.xlu0 %5894
        %5896 = vset.pattern.permute.xlu0 0
        %5897 = vperm.xlu0 %5896, %v3940
        %v5898 = vpop.permute.xlu0 %5897
        %5899 = vset.pattern.permute.xlu0 0
        %5900 = vperm.xlu0 %5899, %v3941
        %v5901 = vpop.permute.xlu0 %5900
        %5902 = vset.pattern.permute.xlu0 0
        %5903 = vperm.xlu0 %5902, %v3942
        %v5904 = vpop.permute.xlu0 %5903
        %5905 = vset.pattern.permute.xlu0 0
        %5906 = vperm.xlu0 %5905, %v3943
        %v5907 = vpop.permute.xlu0 %5906
        %5908 = vset.pattern.permute.xlu0 0
        %5909 = vperm.xlu0 %5908, %v3944
        %v5910 = vpop.permute.xlu0 %5909
        %5911 = vset.pattern.permute.xlu0 0
        %5912 = vperm.xlu0 %5911, %v3945
        %v5913 = vpop.permute.xlu0 %5912
        %5914 = vset.pattern.permute.xlu0 0
        %5915 = vperm.xlu0 %5914, %v3946
        %v5916 = vpop.permute.xlu0 %5915
        %5917 = vset.pattern.permute.xlu0 0
        %5918 = vperm.xlu0 %5917, %v3947
        %v5919 = vpop.permute.xlu0 %5918
        %5920 = vset.pattern.permute.xlu0 0
        %5921 = vperm.xlu0 %5920, %v3948
        %v5922 = vpop.permute.xlu0 %5921
        %5923 = vset.pattern.permute.xlu0 0
        %5924 = vperm.xlu0 %5923, %v3949
        %v5925 = vpop.permute.xlu0 %5924
        %5926 = vset.pattern.permute.xlu0 0
        %5927 = vperm.xlu0 %5926, %v3950
        %v5928 = vpop.permute.xlu0 %5927
        %5929 = vset.pattern.permute.xlu0 0
        %5930 = vperm.xlu0 %5929, %v3951
        %v5931 = vpop.permute.xlu0 %5930
        %5932 = vset.pattern.permute.xlu0 0
        %5933 = vperm.xlu0 %5932, %v3952
        %v5934 = vpop.permute.xlu0 %5933
        %5935 = vset.pattern.permute.xlu0 0
        %5936 = vperm.xlu0 %5935, %v3953
        %v5937 = vpop.permute.xlu0 %5936
        %5938 = vset.pattern.permute.xlu0 0
        %5939 = vperm.xlu0 %5938, %v3954
        %v5940 = vpop.permute.xlu0 %5939
        %5941 = vset.pattern.permute.xlu0 0
        %5942 = vperm.xlu0 %5941, %v3955
        %v5943 = vpop.permute.xlu0 %5942
        %5944 = vset.pattern.permute.xlu0 0
        %5945 = vperm.xlu0 %5944, %v3956
        %v5946 = vpop.permute.xlu0 %5945
        %5947 = vset.pattern.permute.xlu0 0
        %5948 = vperm.xlu0 %5947, %v3957
        %v5949 = vpop.permute.xlu0 %5948
        %5950 = vset.pattern.permute.xlu0 0
        %5951 = vperm.xlu0 %5950, %v3958
        %v5952 = vpop.permute.xlu0 %5951
        %5953 = vset.pattern.permute.xlu0 0
        %5954 = vperm.xlu0 %5953, %v3959
        %v5955 = vpop.permute.xlu0 %5954
        %5956 = vset.pattern.permute.xlu0 0
        %5957 = vperm.xlu0 %5956, %v3960
        %v5958 = vpop.permute.xlu0 %5957
        %5959 = vset.pattern.permute.xlu0 0
        %5960 = vperm.xlu0 %5959, %v3961
        %v5961 = vpop.permute.xlu0 %5960
        %5962 = vset.pattern.permute.xlu0 0
        %5963 = vperm.xlu0 %5962, %v3962
        %v5964 = vpop.permute.xlu0 %5963
        %5965 = vset.pattern.permute.xlu0 0
        %5966 = vperm.xlu0 %5965, %v3963
        %v5967 = vpop.permute.xlu0 %5966
        %5968 = vset.pattern.permute.xlu0 0
        %5969 = vperm.xlu0 %5968, %v3964
        %v5970 = vpop.permute.xlu0 %5969
        %5971 = vset.pattern.permute.xlu0 0
        %5972 = vperm.xlu0 %5971, %v3965
        %v5973 = vpop.permute.xlu0 %5972
        %5974 = vset.pattern.permute.xlu0 0
        %5975 = vperm.xlu0 %5974, %v3966
        %v5976 = vpop.permute.xlu0 %5975
        %5977 = vset.pattern.permute.xlu0 0
        %5978 = vperm.xlu0 %5977, %v3967
        %v5979 = vpop.permute.xlu0 %5978
        %5980 = vset.pattern.permute.xlu0 0
        %5981 = vperm.xlu0 %5980, %v3968
        %v5982 = vpop.permute.xlu0 %5981
        %5983 = vset.pattern.permute.xlu0 0
        %5984 = vperm.xlu0 %5983, %v3969
        %v5985 = vpop.permute.xlu0 %5984
        %5986 = vset.pattern.permute.xlu0 0
        %5987 = vperm.xlu0 %5986, %v3970
        %v5988 = vpop.permute.xlu0 %5987
        %5989 = vset.pattern.permute.xlu0 0
        %5990 = vperm.xlu0 %5989, %v3971
        %v5991 = vpop.permute.xlu0 %5990
        %5992 = vset.pattern.permute.xlu0 0
        %5993 = vperm.xlu0 %5992, %v3972
        %v5994 = vpop.permute.xlu0 %5993
        %5995 = vset.pattern.permute.xlu0 0
        %5996 = vperm.xlu0 %5995, %v3973
        %v5997 = vpop.permute.xlu0 %5996
        %5998 = vset.pattern.permute.xlu0 0
        %5999 = vperm.xlu0 %5998, %v3974
        %v6000 = vpop.permute.xlu0 %5999
        %6001 = vset.pattern.permute.xlu0 0
        %6002 = vperm.xlu0 %6001, %v3975
        %v6003 = vpop.permute.xlu0 %6002
        %6004 = vset.pattern.permute.xlu0 0
        %6005 = vperm.xlu0 %6004, %v3976
        %v6006 = vpop.permute.xlu0 %6005
        %6007 = vset.pattern.permute.xlu0 0
        %6008 = vperm.xlu0 %6007, %v3977
        %v6009 = vpop.permute.xlu0 %6008
        %6010 = vset.pattern.permute.xlu0 0
        %6011 = vperm.xlu0 %6010, %v3978
        %v6012 = vpop.permute.xlu0 %6011
        %6013 = vset.pattern.permute.xlu0 0
        %6014 = vperm.xlu0 %6013, %v3979
        %v6015 = vpop.permute.xlu0 %6014
        %6016 = vset.pattern.permute.xlu0 0
        %6017 = vperm.xlu0 %6016, %v3980
        %v6018 = vpop.permute.xlu0 %6017
        %6019 = vset.pattern.permute.xlu0 0
        %6020 = vperm.xlu0 %6019, %v3981
        %v6021 = vpop.permute.xlu0 %6020
        %6022 = vset.pattern.permute.xlu0 0
        %6023 = vperm.xlu0 %6022, %v3982
        %v6024 = vpop.permute.xlu0 %6023
        %6025 = vset.pattern.permute.xlu0 0
        %6026 = vperm.xlu0 %6025, %v3983
        %v6027 = vpop.permute.xlu0 %6026
        %6028 = vset.pattern.permute.xlu0 0
        %6029 = vperm.xlu0 %6028, %v3984
        %v6030 = vpop.permute.xlu0 %6029
        %6031 = vset.pattern.permute.xlu0 0
        %6032 = vperm.xlu0 %6031, %v3985
        %v6033 = vpop.permute.xlu0 %6032
        %v6034 = vperm.slane %v4500, %v1095
        %v6035 = vperm.slane %v4503, %v1095
        %v6036 = vperm.slane %v4506, %v1095
        %v6037 = vperm.slane %v4509, %v1095
        %v6038 = vperm.slane %v4512, %v1095
        %v6039 = vperm.slane %v4515, %v1095
        %v6040 = vperm.slane %v4518, %v1095
        %v6041 = vperm.slane %v4521, %v1095
        %v6042 = vperm.slane %v4524, %v1095
        %v6043 = vperm.slane %v4527, %v1095
        %v6044 = vperm.slane %v4530, %v1095
        %v6045 = vperm.slane %v4533, %v1095
        %v6046 = vperm.slane %v4536, %v1095
        %v6047 = vperm.slane %v4539, %v1095
        %v6048 = vperm.slane %v4542, %v1095
        %v6049 = vperm.slane %v4545, %v1095
        %v6050 = vperm.slane %v4548, %v1095
        %v6051 = vperm.slane %v4551, %v1095
        %v6052 = vperm.slane %v4554, %v1095
        %v6053 = vperm.slane %v4557, %v1095
        %v6054 = vperm.slane %v4560, %v1095
        %v6055 = vperm.slane %v4563, %v1095
        %v6056 = vperm.slane %v4566, %v1095
        %v6057 = vperm.slane %v4569, %v1095
        %v6058 = vperm.slane %v4572, %v1095
        %v6059 = vperm.slane %v4575, %v1095
        %v6060 = vperm.slane %v4578, %v1095
        %v6061 = vperm.slane %v4581, %v1095
        %v6062 = vperm.slane %v4584, %v1095
        %v6063 = vperm.slane %v4587, %v1095
        %v6064 = vperm.slane %v4590, %v1095
        %v6065 = vperm.slane %v4593, %v1095
        %v6066 = vperm.slane %v4596, %v1095
        %v6067 = vperm.slane %v4599, %v1095
        %v6068 = vperm.slane %v4602, %v1095
        %v6069 = vperm.slane %v4605, %v1095
        %v6070 = vperm.slane %v4608, %v1095
        %v6071 = vperm.slane %v4611, %v1095
        %v6072 = vperm.slane %v4614, %v1095
        %v6073 = vperm.slane %v4617, %v1095
        %v6074 = vperm.slane %v4620, %v1095
        %v6075 = vperm.slane %v4623, %v1095
        %v6076 = vperm.slane %v4626, %v1095
        %v6077 = vperm.slane %v4629, %v1095
        %v6078 = vperm.slane %v4632, %v1095
        %v6079 = vperm.slane %v4635, %v1095
        %v6080 = vperm.slane %v4638, %v1095
        %v6081 = vperm.slane %v4641, %v1095
        %v6082 = vperm.slane %v4644, %v1095
        %v6083 = vperm.slane %v4647, %v1095
        %v6084 = vperm.slane %v4650, %v1095
        %v6085 = vperm.slane %v4653, %v1095
        %v6086 = vperm.slane %v4656, %v1095
        %v6087 = vperm.slane %v4659, %v1095
        %v6088 = vperm.slane %v4662, %v1095
        %v6089 = vperm.slane %v4665, %v1095
        %v6090 = vperm.slane %v4668, %v1095
        %v6091 = vperm.slane %v4671, %v1095
        %v6092 = vperm.slane %v4674, %v1095
        %v6093 = vperm.slane %v4677, %v1095
        %v6094 = vperm.slane %v4680, %v1095
        %v6095 = vperm.slane %v4683, %v1095
        %v6096 = vperm.slane %v4686, %v1095
        %v6097 = vperm.slane %v4689, %v1095
        %v6098 = vperm.slane %v4692, %v1095
        %v6099 = vperm.slane %v4695, %v1095
        %v6100 = vperm.slane %v4698, %v1095
        %v6101 = vperm.slane %v4701, %v1095
        %v6102 = vperm.slane %v4704, %v1095
        %v6103 = vperm.slane %v4707, %v1095
        %v6104 = vperm.slane %v4710, %v1095
        %v6105 = vperm.slane %v4713, %v1095
        %v6106 = vperm.slane %v4716, %v1095
        %v6107 = vperm.slane %v4719, %v1095
        %v6108 = vperm.slane %v4722, %v1095
        %v6109 = vperm.slane %v4725, %v1095
        %v6110 = vperm.slane %v4728, %v1095
        %v6111 = vperm.slane %v4731, %v1095
        %v6112 = vperm.slane %v4734, %v1095
        %v6113 = vperm.slane %v4737, %v1095
        %v6114 = vperm.slane %v4740, %v1095
        %v6115 = vperm.slane %v4743, %v1095
        %v6116 = vperm.slane %v4746, %v1095
        %v6117 = vperm.slane %v4749, %v1095
        %v6118 = vperm.slane %v4752, %v1095
        %v6119 = vperm.slane %v4755, %v1095
        %v6120 = vperm.slane %v4758, %v1095
        %v6121 = vperm.slane %v4761, %v1095
        %v6122 = vperm.slane %v4764, %v1095
        %v6123 = vperm.slane %v4767, %v1095
        %v6124 = vperm.slane %v4770, %v1095
        %v6125 = vperm.slane %v4773, %v1095
        %v6126 = vperm.slane %v4776, %v1095
        %v6127 = vperm.slane %v4779, %v1095
        %v6128 = vperm.slane %v4782, %v1095
        %v6129 = vperm.slane %v4785, %v1095
        %v6130 = vperm.slane %v4788, %v1095
        %v6131 = vperm.slane %v4791, %v1095
        %v6132 = vperm.slane %v4794, %v1095
        %v6133 = vperm.slane %v4797, %v1095
        %v6134 = vperm.slane %v4800, %v1095
        %v6135 = vperm.slane %v4803, %v1095
        %v6136 = vperm.slane %v4806, %v1095
        %v6137 = vperm.slane %v4809, %v1095
        %v6138 = vperm.slane %v4812, %v1095
        %v6139 = vperm.slane %v4815, %v1095
        %v6140 = vperm.slane %v4818, %v1095
        %v6141 = vperm.slane %v4821, %v1095
        %v6142 = vperm.slane %v4824, %v1095
        %v6143 = vperm.slane %v4827, %v1095
        %v6144 = vperm.slane %v4830, %v1095
        %v6145 = vperm.slane %v4833, %v1095
        %v6146 = vperm.slane %v4836, %v1095
        %v6147 = vperm.slane %v4839, %v1095
        %v6148 = vperm.slane %v4842, %v1095
        %v6149 = vperm.slane %v4845, %v1095
        %v6150 = vperm.slane %v4848, %v1095
        %v6151 = vperm.slane %v4851, %v1095
        %v6152 = vperm.slane %v4854, %v1095
        %v6153 = vperm.slane %v4857, %v1095
        %v6154 = vperm.slane %v4860, %v1095
        %v6155 = vperm.slane %v4863, %v1095
        %v6156 = vperm.slane %v4866, %v1095
        %v6157 = vperm.slane %v4869, %v1095
        %v6158 = vperm.slane %v4872, %v1095
        %v6159 = vperm.slane %v4875, %v1095
        %v6160 = vperm.slane %v4878, %v1095
        %v6161 = vperm.slane %v4881, %v1095
        %v6162 = vperm.slane %v4884, %v1095
        %v6163 = vperm.slane %v4887, %v1095
        %v6164 = vperm.slane %v4890, %v1095
        %v6165 = vperm.slane %v4893, %v1095
        %v6166 = vperm.slane %v4896, %v1095
        %v6167 = vperm.slane %v4899, %v1095
        %v6168 = vperm.slane %v4902, %v1095
        %v6169 = vperm.slane %v4905, %v1095
        %v6170 = vperm.slane %v4908, %v1095
        %v6171 = vperm.slane %v4911, %v1095
        %v6172 = vperm.slane %v4914, %v1095
        %v6173 = vperm.slane %v4917, %v1095
        %v6174 = vperm.slane %v4920, %v1095
        %v6175 = vperm.slane %v4923, %v1095
        %v6176 = vperm.slane %v4926, %v1095
        %v6177 = vperm.slane %v4929, %v1095
        %v6178 = vperm.slane %v4932, %v1095
        %v6179 = vperm.slane %v4935, %v1095
        %v6180 = vperm.slane %v4938, %v1095
        %v6181 = vperm.slane %v4941, %v1095
        %v6182 = vperm.slane %v4944, %v1095
        %v6183 = vperm.slane %v4947, %v1095
        %v6184 = vperm.slane %v4950, %v1095
        %v6185 = vperm.slane %v4953, %v1095
        %v6186 = vperm.slane %v4956, %v1095
        %v6187 = vperm.slane %v4959, %v1095
        %v6188 = vperm.slane %v4962, %v1095
        %v6189 = vperm.slane %v4965, %v1095
        %v6190 = vperm.slane %v4968, %v1095
        %v6191 = vperm.slane %v4971, %v1095
        %v6192 = vperm.slane %v4974, %v1095
        %v6193 = vperm.slane %v4977, %v1095
        %v6194 = vperm.slane %v4980, %v1095
        %v6195 = vperm.slane %v4983, %v1095
        %v6196 = vperm.slane %v4986, %v1095
        %v6197 = vperm.slane %v4989, %v1095
        %v6198 = vperm.slane %v4992, %v1095
        %v6199 = vperm.slane %v4995, %v1095
        %v6200 = vperm.slane %v4998, %v1095
        %v6201 = vperm.slane %v5001, %v1095
        %v6202 = vperm.slane %v5004, %v1095
        %v6203 = vperm.slane %v5007, %v1095
        %v6204 = vperm.slane %v5010, %v1095
        %v6205 = vperm.slane %v5013, %v1095
        %v6206 = vperm.slane %v5016, %v1095
        %v6207 = vperm.slane %v5019, %v1095
        %v6208 = vperm.slane %v5022, %v1095
        %v6209 = vperm.slane %v5025, %v1095
        %v6210 = vperm.slane %v5028, %v1095
        %v6211 = vperm.slane %v5031, %v1095
        %v6212 = vperm.slane %v5034, %v1095
        %v6213 = vperm.slane %v5037, %v1095
        %v6214 = vperm.slane %v5040, %v1095
        %v6215 = vperm.slane %v5043, %v1095
        %v6216 = vperm.slane %v5046, %v1095
        %v6217 = vperm.slane %v5049, %v1095
        %v6218 = vperm.slane %v5052, %v1095
        %v6219 = vperm.slane %v5055, %v1095
        %v6220 = vperm.slane %v5058, %v1095
        %v6221 = vperm.slane %v5061, %v1095
        %v6222 = vperm.slane %v5064, %v1095
        %v6223 = vperm.slane %v5067, %v1095
        %v6224 = vperm.slane %v5070, %v1095
        %v6225 = vperm.slane %v5073, %v1095
        %v6226 = vperm.slane %v5076, %v1095
        %v6227 = vperm.slane %v5079, %v1095
        %v6228 = vperm.slane %v5082, %v1095
        %v6229 = vperm.slane %v5085, %v1095
        %v6230 = vperm.slane %v5088, %v1095
        %v6231 = vperm.slane %v5091, %v1095
        %v6232 = vperm.slane %v5094, %v1095
        %v6233 = vperm.slane %v5097, %v1095
        %v6234 = vperm.slane %v5100, %v1095
        %v6235 = vperm.slane %v5103, %v1095
        %v6236 = vperm.slane %v5106, %v1095
        %v6237 = vperm.slane %v5109, %v1095
        %v6238 = vperm.slane %v5112, %v1095
        %v6239 = vperm.slane %v5115, %v1095
        %v6240 = vperm.slane %v5118, %v1095
        %v6241 = vperm.slane %v5121, %v1095
        %v6242 = vperm.slane %v5124, %v1095
        %v6243 = vperm.slane %v5127, %v1095
        %v6244 = vperm.slane %v5130, %v1095
        %v6245 = vperm.slane %v5133, %v1095
        %v6246 = vperm.slane %v5136, %v1095
        %v6247 = vperm.slane %v5139, %v1095
        %v6248 = vperm.slane %v5142, %v1095
        %v6249 = vperm.slane %v5145, %v1095
        %v6250 = vperm.slane %v5148, %v1095
        %v6251 = vperm.slane %v5151, %v1095
        %v6252 = vperm.slane %v5154, %v1095
        %v6253 = vperm.slane %v5157, %v1095
        %v6254 = vperm.slane %v5160, %v1095
        %v6255 = vperm.slane %v5163, %v1095
        %v6256 = vperm.slane %v5166, %v1095
        %v6257 = vperm.slane %v5169, %v1095
        %v6258 = vperm.slane %v5172, %v1095
        %v6259 = vperm.slane %v5175, %v1095
        %v6260 = vperm.slane %v5178, %v1095
        %v6261 = vperm.slane %v5181, %v1095
        %v6262 = vperm.slane %v5184, %v1095
        %v6263 = vperm.slane %v5187, %v1095
        %v6264 = vperm.slane %v5190, %v1095
        %v6265 = vperm.slane %v5193, %v1095
        %v6266 = vperm.slane %v5196, %v1095
        %v6267 = vperm.slane %v5199, %v1095
        %v6268 = vperm.slane %v5202, %v1095
        %v6269 = vperm.slane %v5205, %v1095
        %v6270 = vperm.slane %v5208, %v1095
        %v6271 = vperm.slane %v5211, %v1095
        %v6272 = vperm.slane %v5214, %v1095
        %v6273 = vperm.slane %v5217, %v1095
        %v6274 = vperm.slane %v5220, %v1095
        %v6275 = vperm.slane %v5223, %v1095
        %v6276 = vperm.slane %v5226, %v1095
        %v6277 = vperm.slane %v5229, %v1095
        %v6278 = vperm.slane %v5232, %v1095
        %v6279 = vperm.slane %v5235, %v1095
        %v6280 = vperm.slane %v5238, %v1095
        %v6281 = vperm.slane %v5241, %v1095
        %v6282 = vperm.slane %v5244, %v1095
        %v6283 = vperm.slane %v5247, %v1095
        %v6284 = vperm.slane %v5250, %v1095
        %v6285 = vperm.slane %v5253, %v1095
        %v6286 = vperm.slane %v5256, %v1095
        %v6287 = vperm.slane %v5259, %v1095
        %v6288 = vperm.slane %v5262, %v1095
        %v6289 = vperm.slane %v5265, %v1095
        %v6290 = vperm.slane %v5268, %v1095
        %v6291 = vperm.slane %v5271, %v1095
        %v6292 = vperm.slane %v5274, %v1095
        %v6293 = vperm.slane %v5277, %v1095
        %v6294 = vperm.slane %v5280, %v1095
        %v6295 = vperm.slane %v5283, %v1095
        %v6296 = vperm.slane %v5286, %v1095
        %v6297 = vperm.slane %v5289, %v1095
        %v6298 = vperm.slane %v5292, %v1095
        %v6299 = vperm.slane %v5295, %v1095
        %v6300 = vperm.slane %v5298, %v1095
        %v6301 = vperm.slane %v5301, %v1095
        %v6302 = vperm.slane %v5304, %v1095
        %v6303 = vperm.slane %v5307, %v1095
        %v6304 = vperm.slane %v5310, %v1095
        %v6305 = vperm.slane %v5313, %v1095
        %v6306 = vperm.slane %v5316, %v1095
        %v6307 = vperm.slane %v5319, %v1095
        %v6308 = vperm.slane %v5322, %v1095
        %v6309 = vperm.slane %v5325, %v1095
        %v6310 = vperm.slane %v5328, %v1095
        %v6311 = vperm.slane %v5331, %v1095
        %v6312 = vperm.slane %v5334, %v1095
        %v6313 = vperm.slane %v5337, %v1095
        %v6314 = vperm.slane %v5340, %v1095
        %v6315 = vperm.slane %v5343, %v1095
        %v6316 = vperm.slane %v5346, %v1095
        %v6317 = vperm.slane %v5349, %v1095
        %v6318 = vperm.slane %v5352, %v1095
        %v6319 = vperm.slane %v5355, %v1095
        %v6320 = vperm.slane %v5358, %v1095
        %v6321 = vperm.slane %v5361, %v1095
        %v6322 = vperm.slane %v5364, %v1095
        %v6323 = vperm.slane %v5367, %v1095
        %v6324 = vperm.slane %v5370, %v1095
        %v6325 = vperm.slane %v5373, %v1095
        %v6326 = vperm.slane %v5376, %v1095
        %v6327 = vperm.slane %v5379, %v1095
        %v6328 = vperm.slane %v5382, %v1095
        %v6329 = vperm.slane %v5385, %v1095
        %v6330 = vperm.slane %v5388, %v1095
        %v6331 = vperm.slane %v5391, %v1095
        %v6332 = vperm.slane %v5394, %v1095
        %v6333 = vperm.slane %v5397, %v1095
        %v6334 = vperm.slane %v5400, %v1095
        %v6335 = vperm.slane %v5403, %v1095
        %v6336 = vperm.slane %v5406, %v1095
        %v6337 = vperm.slane %v5409, %v1095
        %v6338 = vperm.slane %v5412, %v1095
        %v6339 = vperm.slane %v5415, %v1095
        %v6340 = vperm.slane %v5418, %v1095
        %v6341 = vperm.slane %v5421, %v1095
        %v6342 = vperm.slane %v5424, %v1095
        %v6343 = vperm.slane %v5427, %v1095
        %v6344 = vperm.slane %v5430, %v1095
        %v6345 = vperm.slane %v5433, %v1095
        %v6346 = vperm.slane %v5436, %v1095
        %v6347 = vperm.slane %v5439, %v1095
        %v6348 = vperm.slane %v5442, %v1095
        %v6349 = vperm.slane %v5445, %v1095
        %v6350 = vperm.slane %v5448, %v1095
        %v6351 = vperm.slane %v5451, %v1095
        %v6352 = vperm.slane %v5454, %v1095
        %v6353 = vperm.slane %v5457, %v1095
        %v6354 = vperm.slane %v5460, %v1095
        %v6355 = vperm.slane %v5463, %v1095
        %v6356 = vperm.slane %v5466, %v1095
        %v6357 = vperm.slane %v5469, %v1095
        %v6358 = vperm.slane %v5472, %v1095
        %v6359 = vperm.slane %v5475, %v1095
        %v6360 = vperm.slane %v5478, %v1095
        %v6361 = vperm.slane %v5481, %v1095
        %v6362 = vperm.slane %v5484, %v1095
        %v6363 = vperm.slane %v5487, %v1095
        %v6364 = vperm.slane %v5490, %v1095
        %v6365 = vperm.slane %v5493, %v1095
        %v6366 = vperm.slane %v5496, %v1095
        %v6367 = vperm.slane %v5499, %v1095
        %v6368 = vperm.slane %v5502, %v1095
        %v6369 = vperm.slane %v5505, %v1095
        %v6370 = vperm.slane %v5508, %v1095
        %v6371 = vperm.slane %v5511, %v1095
        %v6372 = vperm.slane %v5514, %v1095
        %v6373 = vperm.slane %v5517, %v1095
        %v6374 = vperm.slane %v5520, %v1095
        %v6375 = vperm.slane %v5523, %v1095
        %v6376 = vperm.slane %v5526, %v1095
        %v6377 = vperm.slane %v5529, %v1095
        %v6378 = vperm.slane %v5532, %v1095
        %v6379 = vperm.slane %v5535, %v1095
        %v6380 = vperm.slane %v5538, %v1095
        %v6381 = vperm.slane %v5541, %v1095
        %v6382 = vperm.slane %v5544, %v1095
        %v6383 = vperm.slane %v5547, %v1095
        %v6384 = vperm.slane %v5550, %v1095
        %v6385 = vperm.slane %v5553, %v1095
        %v6386 = vperm.slane %v5556, %v1095
        %v6387 = vperm.slane %v5559, %v1095
        %v6388 = vperm.slane %v5562, %v1095
        %v6389 = vperm.slane %v5565, %v1095
        %v6390 = vperm.slane %v5568, %v1095
        %v6391 = vperm.slane %v5571, %v1095
        %v6392 = vperm.slane %v5574, %v1095
        %v6393 = vperm.slane %v5577, %v1095
        %v6394 = vperm.slane %v5580, %v1095
        %v6395 = vperm.slane %v5583, %v1095
        %v6396 = vperm.slane %v5586, %v1095
        %v6397 = vperm.slane %v5589, %v1095
        %v6398 = vperm.slane %v5592, %v1095
        %v6399 = vperm.slane %v5595, %v1095
        %v6400 = vperm.slane %v5598, %v1095
        %v6401 = vperm.slane %v5601, %v1095
        %v6402 = vperm.slane %v5604, %v1095
        %v6403 = vperm.slane %v5607, %v1095
        %v6404 = vperm.slane %v5610, %v1095
        %v6405 = vperm.slane %v5613, %v1095
        %v6406 = vperm.slane %v5616, %v1095
        %v6407 = vperm.slane %v5619, %v1095
        %v6408 = vperm.slane %v5622, %v1095
        %v6409 = vperm.slane %v5625, %v1095
        %v6410 = vperm.slane %v5628, %v1095
        %v6411 = vperm.slane %v5631, %v1095
        %v6412 = vperm.slane %v5634, %v1095
        %v6413 = vperm.slane %v5637, %v1095
        %v6414 = vperm.slane %v5640, %v1095
        %v6415 = vperm.slane %v5643, %v1095
        %v6416 = vperm.slane %v5646, %v1095
        %v6417 = vperm.slane %v5649, %v1095
        %v6418 = vperm.slane %v5652, %v1095
        %v6419 = vperm.slane %v5655, %v1095
        %v6420 = vperm.slane %v5658, %v1095
        %v6421 = vperm.slane %v5661, %v1095
        %v6422 = vperm.slane %v5664, %v1095
        %v6423 = vperm.slane %v5667, %v1095
        %v6424 = vperm.slane %v5670, %v1095
        %v6425 = vperm.slane %v5673, %v1095
        %v6426 = vperm.slane %v5676, %v1095
        %v6427 = vperm.slane %v5679, %v1095
        %v6428 = vperm.slane %v5682, %v1095
        %v6429 = vperm.slane %v5685, %v1095
        %v6430 = vperm.slane %v5688, %v1095
        %v6431 = vperm.slane %v5691, %v1095
        %v6432 = vperm.slane %v5694, %v1095
        %v6433 = vperm.slane %v5697, %v1095
        %v6434 = vperm.slane %v5700, %v1095
        %v6435 = vperm.slane %v5703, %v1095
        %v6436 = vperm.slane %v5706, %v1095
        %v6437 = vperm.slane %v5709, %v1095
        %v6438 = vperm.slane %v5712, %v1095
        %v6439 = vperm.slane %v5715, %v1095
        %v6440 = vperm.slane %v5718, %v1095
        %v6441 = vperm.slane %v5721, %v1095
        %v6442 = vperm.slane %v5724, %v1095
        %v6443 = vperm.slane %v5727, %v1095
        %v6444 = vperm.slane %v5730, %v1095
        %v6445 = vperm.slane %v5733, %v1095
        %v6446 = vperm.slane %v5736, %v1095
        %v6447 = vperm.slane %v5739, %v1095
        %v6448 = vperm.slane %v5742, %v1095
        %v6449 = vperm.slane %v5745, %v1095
        %v6450 = vperm.slane %v5748, %v1095
        %v6451 = vperm.slane %v5751, %v1095
        %v6452 = vperm.slane %v5754, %v1095
        %v6453 = vperm.slane %v5757, %v1095
        %v6454 = vperm.slane %v5760, %v1095
        %v6455 = vperm.slane %v5763, %v1095
        %v6456 = vperm.slane %v5766, %v1095
        %v6457 = vperm.slane %v5769, %v1095
        %v6458 = vperm.slane %v5772, %v1095
        %v6459 = vperm.slane %v5775, %v1095
        %v6460 = vperm.slane %v5778, %v1095
        %v6461 = vperm.slane %v5781, %v1095
        %v6462 = vperm.slane %v5784, %v1095
        %v6463 = vperm.slane %v5787, %v1095
        %v6464 = vperm.slane %v5790, %v1095
        %v6465 = vperm.slane %v5793, %v1095
        %v6466 = vperm.slane %v5796, %v1095
        %v6467 = vperm.slane %v5799, %v1095
        %v6468 = vperm.slane %v5802, %v1095
        %v6469 = vperm.slane %v5805, %v1095
        %v6470 = vperm.slane %v5808, %v1095
        %v6471 = vperm.slane %v5811, %v1095
        %v6472 = vperm.slane %v5814, %v1095
        %v6473 = vperm.slane %v5817, %v1095
        %v6474 = vperm.slane %v5820, %v1095
        %v6475 = vperm.slane %v5823, %v1095
        %v6476 = vperm.slane %v5826, %v1095
        %v6477 = vperm.slane %v5829, %v1095
        %v6478 = vperm.slane %v5832, %v1095
        %v6479 = vperm.slane %v5835, %v1095
        %v6480 = vperm.slane %v5838, %v1095
        %v6481 = vperm.slane %v5841, %v1095
        %v6482 = vperm.slane %v5844, %v1095
        %v6483 = vperm.slane %v5847, %v1095
        %v6484 = vperm.slane %v5850, %v1095
        %v6485 = vperm.slane %v5853, %v1095
        %v6486 = vperm.slane %v5856, %v1095
        %v6487 = vperm.slane %v5859, %v1095
        %v6488 = vperm.slane %v5862, %v1095
        %v6489 = vperm.slane %v5865, %v1095
        %v6490 = vperm.slane %v5868, %v1095
        %v6491 = vperm.slane %v5871, %v1095
        %v6492 = vperm.slane %v5874, %v1095
        %v6493 = vperm.slane %v5877, %v1095
        %v6494 = vperm.slane %v5880, %v1095
        %v6495 = vperm.slane %v5883, %v1095
        %v6496 = vperm.slane %v5886, %v1095
        %v6497 = vperm.slane %v5889, %v1095
        %v6498 = vperm.slane %v5892, %v1095
        %v6499 = vperm.slane %v5895, %v1095
        %v6500 = vperm.slane %v5898, %v1095
        %v6501 = vperm.slane %v5901, %v1095
        %v6502 = vperm.slane %v5904, %v1095
        %v6503 = vperm.slane %v5907, %v1095
        %v6504 = vperm.slane %v5910, %v1095
        %v6505 = vperm.slane %v5913, %v1095
        %v6506 = vperm.slane %v5916, %v1095
        %v6507 = vperm.slane %v5919, %v1095
        %v6508 = vperm.slane %v5922, %v1095
        %v6509 = vperm.slane %v5925, %v1095
        %v6510 = vperm.slane %v5928, %v1095
        %v6511 = vperm.slane %v5931, %v1095
        %v6512 = vperm.slane %v5934, %v1095
        %v6513 = vperm.slane %v5937, %v1095
        %v6514 = vperm.slane %v5940, %v1095
        %v6515 = vperm.slane %v5943, %v1095
        %v6516 = vperm.slane %v5946, %v1095
        %v6517 = vperm.slane %v5949, %v1095
        %v6518 = vperm.slane %v5952, %v1095
        %v6519 = vperm.slane %v5955, %v1095
        %v6520 = vperm.slane %v5958, %v1095
        %v6521 = vperm.slane %v5961, %v1095
        %v6522 = vperm.slane %v5964, %v1095
        %v6523 = vperm.slane %v5967, %v1095
        %v6524 = vperm.slane %v5970, %v1095
        %v6525 = vperm.slane %v5973, %v1095
        %v6526 = vperm.slane %v5976, %v1095
        %v6527 = vperm.slane %v5979, %v1095
        %v6528 = vperm.slane %v5982, %v1095
        %v6529 = vperm.slane %v5985, %v1095
        %v6530 = vperm.slane %v5988, %v1095
        %v6531 = vperm.slane %v5991, %v1095
        %v6532 = vperm.slane %v5994, %v1095
        %v6533 = vperm.slane %v5997, %v1095
        %v6534 = vperm.slane %v6000, %v1095
        %v6535 = vperm.slane %v6003, %v1095
        %v6536 = vperm.slane %v6006, %v1095
        %v6537 = vperm.slane %v6009, %v1095
        %v6538 = vperm.slane %v6012, %v1095
        %v6539 = vperm.slane %v6015, %v1095
        %v6540 = vperm.slane %v6018, %v1095
        %v6541 = vperm.slane %v6021, %v1095
        %v6542 = vperm.slane %v6024, %v1095
        %v6543 = vperm.slane %v6027, %v1095
        %v6544 = vperm.slane %v6030, %v1095
        %v6545 = vperm.slane %v6033, %v1095
        %vm6546 = vcmask 1041409
        %v6547 = vsel %vm6546, %v6035, %v6034
        %vm6548 = vcmask 1042434
        %v6549 = vsel %vm6548, %v6036, %v6547
        %vm6550 = vcmask 1043459
        %v6551 = vsel %vm6550, %v6037, %v6549
        %vm6552 = vcmask 1044484
        %v6553 = vsel %vm6552, %v6038, %v6551
        %vm6554 = vcmask 1045509
        %v6555 = vsel %vm6554, %v6039, %v6553
        %vm6556 = vcmask 1046534
        %v6557 = vsel %vm6556, %v6040, %v6555
        %vm6558 = vcmask 1047559
        %v6559 = vsel %vm6558, %v6041, %v6557
        %v6560 = vsel %vm6546, %v6043, %v6042
        %v6561 = vsel %vm6548, %v6044, %v6560
        %v6562 = vsel %vm6550, %v6045, %v6561
        %v6563 = vsel %vm6552, %v6046, %v6562
        %v6564 = vsel %vm6554, %v6047, %v6563
        %v6565 = vsel %vm6556, %v6048, %v6564
        %v6566 = vsel %vm6558, %v6049, %v6565
        %v6567 = vsel %vm6546, %v6051, %v6050
        %v6568 = vsel %vm6548, %v6052, %v6567
        %v6569 = vsel %vm6550, %v6053, %v6568
        %v6570 = vsel %vm6552, %v6054, %v6569
        %v6571 = vsel %vm6554, %v6055, %v6570
        %v6572 = vsel %vm6556, %v6056, %v6571
        %v6573 = vsel %vm6558, %v6057, %v6572
        %v6574 = vsel %vm6546, %v6059, %v6058
        %v6575 = vsel %vm6548, %v6060, %v6574
        %v6576 = vsel %vm6550, %v6061, %v6575
        %v6577 = vsel %vm6552, %v6062, %v6576
        %v6578 = vsel %vm6554, %v6063, %v6577
        %v6579 = vsel %vm6556, %v6064, %v6578
        %v6580 = vsel %vm6558, %v6065, %v6579
        %v6581 = vsel %vm6546, %v6067, %v6066
        %v6582 = vsel %vm6548, %v6068, %v6581
        %v6583 = vsel %vm6550, %v6069, %v6582
        %v6584 = vsel %vm6552, %v6070, %v6583
        %v6585 = vsel %vm6554, %v6071, %v6584
        %v6586 = vsel %vm6556, %v6072, %v6585
        %v6587 = vsel %vm6558, %v6073, %v6586
        %v6588 = vsel %vm6546, %v6075, %v6074
        %v6589 = vsel %vm6548, %v6076, %v6588
        %v6590 = vsel %vm6550, %v6077, %v6589
        %v6591 = vsel %vm6552, %v6078, %v6590
        %v6592 = vsel %vm6554, %v6079, %v6591
        %v6593 = vsel %vm6556, %v6080, %v6592
        %v6594 = vsel %vm6558, %v6081, %v6593
        %v6595 = vsel %vm6546, %v6083, %v6082
        %v6596 = vsel %vm6548, %v6084, %v6595
        %v6597 = vsel %vm6550, %v6085, %v6596
        %v6598 = vsel %vm6552, %v6086, %v6597
        %v6599 = vsel %vm6554, %v6087, %v6598
        %v6600 = vsel %vm6556, %v6088, %v6599
        %v6601 = vsel %vm6558, %v6089, %v6600
        %v6602 = vsel %vm6546, %v6091, %v6090
        %v6603 = vsel %vm6548, %v6092, %v6602
        %v6604 = vsel %vm6550, %v6093, %v6603
        %v6605 = vsel %vm6552, %v6094, %v6604
        %v6606 = vsel %vm6554, %v6095, %v6605
        %v6607 = vsel %vm6556, %v6096, %v6606
        %v6608 = vsel %vm6558, %v6097, %v6607
        %v6609 = vsel %vm6546, %v6099, %v6098
        %v6610 = vsel %vm6548, %v6100, %v6609
        %v6611 = vsel %vm6550, %v6101, %v6610
        %v6612 = vsel %vm6552, %v6102, %v6611
        %v6613 = vsel %vm6554, %v6103, %v6612
        %v6614 = vsel %vm6556, %v6104, %v6613
        %v6615 = vsel %vm6558, %v6105, %v6614
        %v6616 = vsel %vm6546, %v6107, %v6106
        %v6617 = vsel %vm6548, %v6108, %v6616
        %v6618 = vsel %vm6550, %v6109, %v6617
        %v6619 = vsel %vm6552, %v6110, %v6618
        %v6620 = vsel %vm6554, %v6111, %v6619
        %v6621 = vsel %vm6556, %v6112, %v6620
        %v6622 = vsel %vm6558, %v6113, %v6621
        %v6623 = vsel %vm6546, %v6115, %v6114
        %v6624 = vsel %vm6548, %v6116, %v6623
        %v6625 = vsel %vm6550, %v6117, %v6624
        %v6626 = vsel %vm6552, %v6118, %v6625
        %v6627 = vsel %vm6554, %v6119, %v6626
        %v6628 = vsel %vm6556, %v6120, %v6627
        %v6629 = vsel %vm6558, %v6121, %v6628
        %v6630 = vsel %vm6546, %v6123, %v6122
        %v6631 = vsel %vm6548, %v6124, %v6630
        %v6632 = vsel %vm6550, %v6125, %v6631
        %v6633 = vsel %vm6552, %v6126, %v6632
        %v6634 = vsel %vm6554, %v6127, %v6633
        %v6635 = vsel %vm6556, %v6128, %v6634
        %v6636 = vsel %vm6558, %v6129, %v6635
        %v6637 = vsel %vm6546, %v6131, %v6130
        %v6638 = vsel %vm6548, %v6132, %v6637
        %v6639 = vsel %vm6550, %v6133, %v6638
        %v6640 = vsel %vm6552, %v6134, %v6639
        %v6641 = vsel %vm6554, %v6135, %v6640
        %v6642 = vsel %vm6556, %v6136, %v6641
        %v6643 = vsel %vm6558, %v6137, %v6642
        %v6644 = vsel %vm6546, %v6139, %v6138
        %v6645 = vsel %vm6548, %v6140, %v6644
        %v6646 = vsel %vm6550, %v6141, %v6645
        %v6647 = vsel %vm6552, %v6142, %v6646
        %v6648 = vsel %vm6554, %v6143, %v6647
        %v6649 = vsel %vm6556, %v6144, %v6648
        %v6650 = vsel %vm6558, %v6145, %v6649
        %v6651 = vsel %vm6546, %v6147, %v6146
        %v6652 = vsel %vm6548, %v6148, %v6651
        %v6653 = vsel %vm6550, %v6149, %v6652
        %v6654 = vsel %vm6552, %v6150, %v6653
        %v6655 = vsel %vm6554, %v6151, %v6654
        %v6656 = vsel %vm6556, %v6152, %v6655
        %v6657 = vsel %vm6558, %v6153, %v6656
        %v6658 = vsel %vm6546, %v6155, %v6154
        %v6659 = vsel %vm6548, %v6156, %v6658
        %v6660 = vsel %vm6550, %v6157, %v6659
        %v6661 = vsel %vm6552, %v6158, %v6660
        %v6662 = vsel %vm6554, %v6159, %v6661
        %v6663 = vsel %vm6556, %v6160, %v6662
        %v6664 = vsel %vm6558, %v6161, %v6663
        %v6665 = vsel %vm6546, %v6163, %v6162
        %v6666 = vsel %vm6548, %v6164, %v6665
        %v6667 = vsel %vm6550, %v6165, %v6666
        %v6668 = vsel %vm6552, %v6166, %v6667
        %v6669 = vsel %vm6554, %v6167, %v6668
        %v6670 = vsel %vm6556, %v6168, %v6669
        %v6671 = vsel %vm6558, %v6169, %v6670
        %v6672 = vsel %vm6546, %v6171, %v6170
        %v6673 = vsel %vm6548, %v6172, %v6672
        %v6674 = vsel %vm6550, %v6173, %v6673
        %v6675 = vsel %vm6552, %v6174, %v6674
        %v6676 = vsel %vm6554, %v6175, %v6675
        %v6677 = vsel %vm6556, %v6176, %v6676
        %v6678 = vsel %vm6558, %v6177, %v6677
        %v6679 = vsel %vm6546, %v6179, %v6178
        %v6680 = vsel %vm6548, %v6180, %v6679
        %v6681 = vsel %vm6550, %v6181, %v6680
        %v6682 = vsel %vm6552, %v6182, %v6681
        %v6683 = vsel %vm6554, %v6183, %v6682
        %v6684 = vsel %vm6556, %v6184, %v6683
        %v6685 = vsel %vm6558, %v6185, %v6684
        %v6686 = vsel %vm6546, %v6187, %v6186
        %v6687 = vsel %vm6548, %v6188, %v6686
        %v6688 = vsel %vm6550, %v6189, %v6687
        %v6689 = vsel %vm6552, %v6190, %v6688
        %v6690 = vsel %vm6554, %v6191, %v6689
        %v6691 = vsel %vm6556, %v6192, %v6690
        %v6692 = vsel %vm6558, %v6193, %v6691
        %v6693 = vsel %vm6546, %v6195, %v6194
        %v6694 = vsel %vm6548, %v6196, %v6693
        %v6695 = vsel %vm6550, %v6197, %v6694
        %v6696 = vsel %vm6552, %v6198, %v6695
        %v6697 = vsel %vm6554, %v6199, %v6696
        %v6698 = vsel %vm6556, %v6200, %v6697
        %v6699 = vsel %vm6558, %v6201, %v6698
        %v6700 = vsel %vm6546, %v6203, %v6202
        %v6701 = vsel %vm6548, %v6204, %v6700
        %v6702 = vsel %vm6550, %v6205, %v6701
        %v6703 = vsel %vm6552, %v6206, %v6702
        %v6704 = vsel %vm6554, %v6207, %v6703
        %v6705 = vsel %vm6556, %v6208, %v6704
        %v6706 = vsel %vm6558, %v6209, %v6705
        %v6707 = vsel %vm6546, %v6211, %v6210
        %v6708 = vsel %vm6548, %v6212, %v6707
        %v6709 = vsel %vm6550, %v6213, %v6708
        %v6710 = vsel %vm6552, %v6214, %v6709
        %v6711 = vsel %vm6554, %v6215, %v6710
        %v6712 = vsel %vm6556, %v6216, %v6711
        %v6713 = vsel %vm6558, %v6217, %v6712
        %v6714 = vsel %vm6546, %v6219, %v6218
        %v6715 = vsel %vm6548, %v6220, %v6714
        %v6716 = vsel %vm6550, %v6221, %v6715
        %v6717 = vsel %vm6552, %v6222, %v6716
        %v6718 = vsel %vm6554, %v6223, %v6717
        %v6719 = vsel %vm6556, %v6224, %v6718
        %v6720 = vsel %vm6558, %v6225, %v6719
        %v6721 = vsel %vm6546, %v6227, %v6226
        %v6722 = vsel %vm6548, %v6228, %v6721
        %v6723 = vsel %vm6550, %v6229, %v6722
        %v6724 = vsel %vm6552, %v6230, %v6723
        %v6725 = vsel %vm6554, %v6231, %v6724
        %v6726 = vsel %vm6556, %v6232, %v6725
        %v6727 = vsel %vm6558, %v6233, %v6726
        %v6728 = vsel %vm6546, %v6235, %v6234
        %v6729 = vsel %vm6548, %v6236, %v6728
        %v6730 = vsel %vm6550, %v6237, %v6729
        %v6731 = vsel %vm6552, %v6238, %v6730
        %v6732 = vsel %vm6554, %v6239, %v6731
        %v6733 = vsel %vm6556, %v6240, %v6732
        %v6734 = vsel %vm6558, %v6241, %v6733
        %v6735 = vsel %vm6546, %v6243, %v6242
        %v6736 = vsel %vm6548, %v6244, %v6735
        %v6737 = vsel %vm6550, %v6245, %v6736
        %v6738 = vsel %vm6552, %v6246, %v6737
        %v6739 = vsel %vm6554, %v6247, %v6738
        %v6740 = vsel %vm6556, %v6248, %v6739
        %v6741 = vsel %vm6558, %v6249, %v6740
        %v6742 = vsel %vm6546, %v6251, %v6250
        %v6743 = vsel %vm6548, %v6252, %v6742
        %v6744 = vsel %vm6550, %v6253, %v6743
        %v6745 = vsel %vm6552, %v6254, %v6744
        %v6746 = vsel %vm6554, %v6255, %v6745
        %v6747 = vsel %vm6556, %v6256, %v6746
        %v6748 = vsel %vm6558, %v6257, %v6747
        %v6749 = vsel %vm6546, %v6259, %v6258
        %v6750 = vsel %vm6548, %v6260, %v6749
        %v6751 = vsel %vm6550, %v6261, %v6750
        %v6752 = vsel %vm6552, %v6262, %v6751
        %v6753 = vsel %vm6554, %v6263, %v6752
        %v6754 = vsel %vm6556, %v6264, %v6753
        %v6755 = vsel %vm6558, %v6265, %v6754
        %v6756 = vsel %vm6546, %v6267, %v6266
        %v6757 = vsel %vm6548, %v6268, %v6756
        %v6758 = vsel %vm6550, %v6269, %v6757
        %v6759 = vsel %vm6552, %v6270, %v6758
        %v6760 = vsel %vm6554, %v6271, %v6759
        %v6761 = vsel %vm6556, %v6272, %v6760
        %v6762 = vsel %vm6558, %v6273, %v6761
        %v6763 = vsel %vm6546, %v6275, %v6274
        %v6764 = vsel %vm6548, %v6276, %v6763
        %v6765 = vsel %vm6550, %v6277, %v6764
        %v6766 = vsel %vm6552, %v6278, %v6765
        %v6767 = vsel %vm6554, %v6279, %v6766
        %v6768 = vsel %vm6556, %v6280, %v6767
        %v6769 = vsel %vm6558, %v6281, %v6768
        %v6770 = vsel %vm6546, %v6283, %v6282
        %v6771 = vsel %vm6548, %v6284, %v6770
        %v6772 = vsel %vm6550, %v6285, %v6771
        %v6773 = vsel %vm6552, %v6286, %v6772
        %v6774 = vsel %vm6554, %v6287, %v6773
        %v6775 = vsel %vm6556, %v6288, %v6774
        %v6776 = vsel %vm6558, %v6289, %v6775
        %v6777 = vsel %vm6546, %v6291, %v6290
        %v6778 = vsel %vm6548, %v6292, %v6777
        %v6779 = vsel %vm6550, %v6293, %v6778
        %v6780 = vsel %vm6552, %v6294, %v6779
        %v6781 = vsel %vm6554, %v6295, %v6780
        %v6782 = vsel %vm6556, %v6296, %v6781
        %v6783 = vsel %vm6558, %v6297, %v6782
        %v6784 = vsel %vm6546, %v6299, %v6298
        %v6785 = vsel %vm6548, %v6300, %v6784
        %v6786 = vsel %vm6550, %v6301, %v6785
        %v6787 = vsel %vm6552, %v6302, %v6786
        %v6788 = vsel %vm6554, %v6303, %v6787
        %v6789 = vsel %vm6556, %v6304, %v6788
        %v6790 = vsel %vm6558, %v6305, %v6789
        %v6791 = vsel %vm6546, %v6307, %v6306
        %v6792 = vsel %vm6548, %v6308, %v6791
        %v6793 = vsel %vm6550, %v6309, %v6792
        %v6794 = vsel %vm6552, %v6310, %v6793
        %v6795 = vsel %vm6554, %v6311, %v6794
        %v6796 = vsel %vm6556, %v6312, %v6795
        %v6797 = vsel %vm6558, %v6313, %v6796
        %v6798 = vsel %vm6546, %v6315, %v6314
        %v6799 = vsel %vm6548, %v6316, %v6798
        %v6800 = vsel %vm6550, %v6317, %v6799
        %v6801 = vsel %vm6552, %v6318, %v6800
        %v6802 = vsel %vm6554, %v6319, %v6801
        %v6803 = vsel %vm6556, %v6320, %v6802
        %v6804 = vsel %vm6558, %v6321, %v6803
        %v6805 = vsel %vm6546, %v6323, %v6322
        %v6806 = vsel %vm6548, %v6324, %v6805
        %v6807 = vsel %vm6550, %v6325, %v6806
        %v6808 = vsel %vm6552, %v6326, %v6807
        %v6809 = vsel %vm6554, %v6327, %v6808
        %v6810 = vsel %vm6556, %v6328, %v6809
        %v6811 = vsel %vm6558, %v6329, %v6810
        %v6812 = vsel %vm6546, %v6331, %v6330
        %v6813 = vsel %vm6548, %v6332, %v6812
        %v6814 = vsel %vm6550, %v6333, %v6813
        %v6815 = vsel %vm6552, %v6334, %v6814
        %v6816 = vsel %vm6554, %v6335, %v6815
        %v6817 = vsel %vm6556, %v6336, %v6816
        %v6818 = vsel %vm6558, %v6337, %v6817
        %v6819 = vsel %vm6546, %v6339, %v6338
        %v6820 = vsel %vm6548, %v6340, %v6819
        %v6821 = vsel %vm6550, %v6341, %v6820
        %v6822 = vsel %vm6552, %v6342, %v6821
        %v6823 = vsel %vm6554, %v6343, %v6822
        %v6824 = vsel %vm6556, %v6344, %v6823
        %v6825 = vsel %vm6558, %v6345, %v6824
        %v6826 = vsel %vm6546, %v6347, %v6346
        %v6827 = vsel %vm6548, %v6348, %v6826
        %v6828 = vsel %vm6550, %v6349, %v6827
        %v6829 = vsel %vm6552, %v6350, %v6828
        %v6830 = vsel %vm6554, %v6351, %v6829
        %v6831 = vsel %vm6556, %v6352, %v6830
        %v6832 = vsel %vm6558, %v6353, %v6831
        %v6833 = vsel %vm6546, %v6355, %v6354
        %v6834 = vsel %vm6548, %v6356, %v6833
        %v6835 = vsel %vm6550, %v6357, %v6834
        %v6836 = vsel %vm6552, %v6358, %v6835
        %v6837 = vsel %vm6554, %v6359, %v6836
        %v6838 = vsel %vm6556, %v6360, %v6837
        %v6839 = vsel %vm6558, %v6361, %v6838
        %v6840 = vsel %vm6546, %v6363, %v6362
        %v6841 = vsel %vm6548, %v6364, %v6840
        %v6842 = vsel %vm6550, %v6365, %v6841
        %v6843 = vsel %vm6552, %v6366, %v6842
        %v6844 = vsel %vm6554, %v6367, %v6843
        %v6845 = vsel %vm6556, %v6368, %v6844
        %v6846 = vsel %vm6558, %v6369, %v6845
        %v6847 = vsel %vm6546, %v6371, %v6370
        %v6848 = vsel %vm6548, %v6372, %v6847
        %v6849 = vsel %vm6550, %v6373, %v6848
        %v6850 = vsel %vm6552, %v6374, %v6849
        %v6851 = vsel %vm6554, %v6375, %v6850
        %v6852 = vsel %vm6556, %v6376, %v6851
        %v6853 = vsel %vm6558, %v6377, %v6852
        %v6854 = vsel %vm6546, %v6379, %v6378
        %v6855 = vsel %vm6548, %v6380, %v6854
        %v6856 = vsel %vm6550, %v6381, %v6855
        %v6857 = vsel %vm6552, %v6382, %v6856
        %v6858 = vsel %vm6554, %v6383, %v6857
        %v6859 = vsel %vm6556, %v6384, %v6858
        %v6860 = vsel %vm6558, %v6385, %v6859
        %v6861 = vsel %vm6546, %v6387, %v6386
        %v6862 = vsel %vm6548, %v6388, %v6861
        %v6863 = vsel %vm6550, %v6389, %v6862
        %v6864 = vsel %vm6552, %v6390, %v6863
        %v6865 = vsel %vm6554, %v6391, %v6864
        %v6866 = vsel %vm6556, %v6392, %v6865
        %v6867 = vsel %vm6558, %v6393, %v6866
        %v6868 = vsel %vm6546, %v6395, %v6394
        %v6869 = vsel %vm6548, %v6396, %v6868
        %v6870 = vsel %vm6550, %v6397, %v6869
        %v6871 = vsel %vm6552, %v6398, %v6870
        %v6872 = vsel %vm6554, %v6399, %v6871
        %v6873 = vsel %vm6556, %v6400, %v6872
        %v6874 = vsel %vm6558, %v6401, %v6873
        %v6875 = vsel %vm6546, %v6403, %v6402
        %v6876 = vsel %vm6548, %v6404, %v6875
        %v6877 = vsel %vm6550, %v6405, %v6876
        %v6878 = vsel %vm6552, %v6406, %v6877
        %v6879 = vsel %vm6554, %v6407, %v6878
        %v6880 = vsel %vm6556, %v6408, %v6879
        %v6881 = vsel %vm6558, %v6409, %v6880
        %v6882 = vsel %vm6546, %v6411, %v6410
        %v6883 = vsel %vm6548, %v6412, %v6882
        %v6884 = vsel %vm6550, %v6413, %v6883
        %v6885 = vsel %vm6552, %v6414, %v6884
        %v6886 = vsel %vm6554, %v6415, %v6885
        %v6887 = vsel %vm6556, %v6416, %v6886
        %v6888 = vsel %vm6558, %v6417, %v6887
        %v6889 = vsel %vm6546, %v6419, %v6418
        %v6890 = vsel %vm6548, %v6420, %v6889
        %v6891 = vsel %vm6550, %v6421, %v6890
        %v6892 = vsel %vm6552, %v6422, %v6891
        %v6893 = vsel %vm6554, %v6423, %v6892
        %v6894 = vsel %vm6556, %v6424, %v6893
        %v6895 = vsel %vm6558, %v6425, %v6894
        %v6896 = vsel %vm6546, %v6427, %v6426
        %v6897 = vsel %vm6548, %v6428, %v6896
        %v6898 = vsel %vm6550, %v6429, %v6897
        %v6899 = vsel %vm6552, %v6430, %v6898
        %v6900 = vsel %vm6554, %v6431, %v6899
        %v6901 = vsel %vm6556, %v6432, %v6900
        %v6902 = vsel %vm6558, %v6433, %v6901
        %v6903 = vsel %vm6546, %v6435, %v6434
        %v6904 = vsel %vm6548, %v6436, %v6903
        %v6905 = vsel %vm6550, %v6437, %v6904
        %v6906 = vsel %vm6552, %v6438, %v6905
        %v6907 = vsel %vm6554, %v6439, %v6906
        %v6908 = vsel %vm6556, %v6440, %v6907
        %v6909 = vsel %vm6558, %v6441, %v6908
        %v6910 = vsel %vm6546, %v6443, %v6442
        %v6911 = vsel %vm6548, %v6444, %v6910
        %v6912 = vsel %vm6550, %v6445, %v6911
        %v6913 = vsel %vm6552, %v6446, %v6912
        %v6914 = vsel %vm6554, %v6447, %v6913
        %v6915 = vsel %vm6556, %v6448, %v6914
        %v6916 = vsel %vm6558, %v6449, %v6915
        %v6917 = vsel %vm6546, %v6451, %v6450
        %v6918 = vsel %vm6548, %v6452, %v6917
        %v6919 = vsel %vm6550, %v6453, %v6918
        %v6920 = vsel %vm6552, %v6454, %v6919
        %v6921 = vsel %vm6554, %v6455, %v6920
        %v6922 = vsel %vm6556, %v6456, %v6921
        %v6923 = vsel %vm6558, %v6457, %v6922
        %v6924 = vsel %vm6546, %v6459, %v6458
        %v6925 = vsel %vm6548, %v6460, %v6924
        %v6926 = vsel %vm6550, %v6461, %v6925
        %v6927 = vsel %vm6552, %v6462, %v6926
        %v6928 = vsel %vm6554, %v6463, %v6927
        %v6929 = vsel %vm6556, %v6464, %v6928
        %v6930 = vsel %vm6558, %v6465, %v6929
        %v6931 = vsel %vm6546, %v6467, %v6466
        %v6932 = vsel %vm6548, %v6468, %v6931
        %v6933 = vsel %vm6550, %v6469, %v6932
        %v6934 = vsel %vm6552, %v6470, %v6933
        %v6935 = vsel %vm6554, %v6471, %v6934
        %v6936 = vsel %vm6556, %v6472, %v6935
        %v6937 = vsel %vm6558, %v6473, %v6936
        %v6938 = vsel %vm6546, %v6475, %v6474
        %v6939 = vsel %vm6548, %v6476, %v6938
        %v6940 = vsel %vm6550, %v6477, %v6939
        %v6941 = vsel %vm6552, %v6478, %v6940
        %v6942 = vsel %vm6554, %v6479, %v6941
        %v6943 = vsel %vm6556, %v6480, %v6942
        %v6944 = vsel %vm6558, %v6481, %v6943
        %v6945 = vsel %vm6546, %v6483, %v6482
        %v6946 = vsel %vm6548, %v6484, %v6945
        %v6947 = vsel %vm6550, %v6485, %v6946
        %v6948 = vsel %vm6552, %v6486, %v6947
        %v6949 = vsel %vm6554, %v6487, %v6948
        %v6950 = vsel %vm6556, %v6488, %v6949
        %v6951 = vsel %vm6558, %v6489, %v6950
        %v6952 = vsel %vm6546, %v6491, %v6490
        %v6953 = vsel %vm6548, %v6492, %v6952
        %v6954 = vsel %vm6550, %v6493, %v6953
        %v6955 = vsel %vm6552, %v6494, %v6954
        %v6956 = vsel %vm6554, %v6495, %v6955
        %v6957 = vsel %vm6556, %v6496, %v6956
        %v6958 = vsel %vm6558, %v6497, %v6957
        %v6959 = vsel %vm6546, %v6499, %v6498
        %v6960 = vsel %vm6548, %v6500, %v6959
        %v6961 = vsel %vm6550, %v6501, %v6960
        %v6962 = vsel %vm6552, %v6502, %v6961
        %v6963 = vsel %vm6554, %v6503, %v6962
        %v6964 = vsel %vm6556, %v6504, %v6963
        %v6965 = vsel %vm6558, %v6505, %v6964
        %v6966 = vsel %vm6546, %v6507, %v6506
        %v6967 = vsel %vm6548, %v6508, %v6966
        %v6968 = vsel %vm6550, %v6509, %v6967
        %v6969 = vsel %vm6552, %v6510, %v6968
        %v6970 = vsel %vm6554, %v6511, %v6969
        %v6971 = vsel %vm6556, %v6512, %v6970
        %v6972 = vsel %vm6558, %v6513, %v6971
        %v6973 = vsel %vm6546, %v6515, %v6514
        %v6974 = vsel %vm6548, %v6516, %v6973
        %v6975 = vsel %vm6550, %v6517, %v6974
        %v6976 = vsel %vm6552, %v6518, %v6975
        %v6977 = vsel %vm6554, %v6519, %v6976
        %v6978 = vsel %vm6556, %v6520, %v6977
        %v6979 = vsel %vm6558, %v6521, %v6978
        %v6980 = vsel %vm6546, %v6523, %v6522
        %v6981 = vsel %vm6548, %v6524, %v6980
        %v6982 = vsel %vm6550, %v6525, %v6981
        %v6983 = vsel %vm6552, %v6526, %v6982
        %v6984 = vsel %vm6554, %v6527, %v6983
        %v6985 = vsel %vm6556, %v6528, %v6984
        %v6986 = vsel %vm6558, %v6529, %v6985
        %v6987 = vsel %vm6546, %v6531, %v6530
        %v6988 = vsel %vm6548, %v6532, %v6987
        %v6989 = vsel %vm6550, %v6533, %v6988
        %v6990 = vsel %vm6552, %v6534, %v6989
        %v6991 = vsel %vm6554, %v6535, %v6990
        %v6992 = vsel %vm6556, %v6536, %v6991
        %v6993 = vsel %vm6558, %v6537, %v6992
        %v6994 = vsel %vm6546, %v6539, %v6538
        %v6995 = vsel %vm6548, %v6540, %v6994
        %v6996 = vsel %vm6550, %v6541, %v6995
        %v6997 = vsel %vm6552, %v6542, %v6996
        %v6998 = vsel %vm6554, %v6543, %v6997
        %v6999 = vsel %vm6556, %v6544, %v6998
        %v7000 = vsel %vm6558, %v6545, %v6999
        %v7065 = vmul.f32 %v1096, %v6559
        %v7066 = vmul.f32 %v1097, %v6566
        %v7067 = vmul.f32 %v1098, %v6573
        %v7068 = vmul.f32 %v1099, %v6580
        %v7069 = vmul.f32 %v1100, %v6587
        %v7070 = vmul.f32 %v1101, %v6594
        %v7071 = vmul.f32 %v1102, %v6601
        %v7072 = vmul.f32 %v1103, %v6608
        %v7073 = vmul.f32 %v1104, %v6615
        %v7074 = vmul.f32 %v1105, %v6622
        %v7075 = vmul.f32 %v1106, %v6629
        %v7076 = vmul.f32 %v1107, %v6636
        %v7077 = vmul.f32 %v1108, %v6643
        %v7078 = vmul.f32 %v1109, %v6650
        %v7079 = vmul.f32 %v1110, %v6657
        %v7080 = vmul.f32 %v1111, %v6664
        %v7081 = vmul.f32 %v1112, %v6671
        %v7082 = vmul.f32 %v1113, %v6678
        %v7083 = vmul.f32 %v1114, %v6685
        %v7084 = vmul.f32 %v1115, %v6692
        %v7085 = vmul.f32 %v1116, %v6699
        %v7086 = vmul.f32 %v1117, %v6706
        %v7087 = vmul.f32 %v1118, %v6713
        %v7088 = vmul.f32 %v1119, %v6720
        %v7089 = vmul.f32 %v1120, %v6727
        %v7090 = vmul.f32 %v1121, %v6734
        %v7091 = vmul.f32 %v1122, %v6741
        %v7092 = vmul.f32 %v1123, %v6748
        %v7093 = vmul.f32 %v1124, %v6755
        %v7094 = vmul.f32 %v1125, %v6762
        %v7095 = vmul.f32 %v1126, %v6769
        %v7096 = vmul.f32 %v1127, %v6776
        %v7097 = vmul.f32 %v1128, %v6783
        %v7098 = vmul.f32 %v1129, %v6790
        %v7099 = vmul.f32 %v1130, %v6797
        %v7100 = vmul.f32 %v1131, %v6804
        %v7101 = vmul.f32 %v1132, %v6811
        %v7102 = vmul.f32 %v1133, %v6818
        %v7103 = vmul.f32 %v1134, %v6825
        %v7104 = vmul.f32 %v1135, %v6832
        %v7105 = vmul.f32 %v1136, %v6839
        %v7106 = vmul.f32 %v1137, %v6846
        %v7107 = vmul.f32 %v1138, %v6853
        %v7108 = vmul.f32 %v1139, %v6860
        %v7109 = vmul.f32 %v1140, %v6867
        %v7110 = vmul.f32 %v1141, %v6874
        %v7111 = vmul.f32 %v1142, %v6881
        %v7112 = vmul.f32 %v1143, %v6888
        %v7113 = vmul.f32 %v1144, %v6895
        %v7114 = vmul.f32 %v1145, %v6902
        %v7115 = vmul.f32 %v1146, %v6909
        %v7116 = vmul.f32 %v1147, %v6916
        %v7117 = vmul.f32 %v1148, %v6923
        %v7118 = vmul.f32 %v1149, %v6930
        %v7119 = vmul.f32 %v1150, %v6937
        %v7120 = vmul.f32 %v1151, %v6944
        %v7121 = vmul.f32 %v1152, %v6951
        %v7122 = vmul.f32 %v1153, %v6958
        %v7123 = vmul.f32 %v1154, %v6965
        %v7124 = vmul.f32 %v1155, %v6972
        %v7125 = vmul.f32 %v1156, %v6979
        %v7126 = vmul.f32 %v1157, %v6986
        %v7127 = vmul.f32 %v1158, %v6993
        %v7128 = vmul.f32 %v1159, %v7000
        %v7129 = vsel %vm311, %v7065, 0.0
        %7130 = vadd.xlane.f32.xlu0 %v7129
        %v7131 = vpop.xlane.xlu0 %7130
        %v7132 = vsel %vm311, %v7066, 0.0
        %7133 = vadd.xlane.f32.xlu0 %v7132
        %v7134 = vpop.xlane.xlu0 %7133
        %v7135 = vsel %vm311, %v7067, 0.0
        %7136 = vadd.xlane.f32.xlu0 %v7135
        %v7137 = vpop.xlane.xlu0 %7136
        %v7138 = vsel %vm311, %v7068, 0.0
        %7139 = vadd.xlane.f32.xlu0 %v7138
        %v7140 = vpop.xlane.xlu0 %7139
        %v7141 = vsel %vm311, %v7069, 0.0
        %7142 = vadd.xlane.f32.xlu0 %v7141
        %v7143 = vpop.xlane.xlu0 %7142
        %v7144 = vsel %vm311, %v7070, 0.0
        %7145 = vadd.xlane.f32.xlu0 %v7144
        %v7146 = vpop.xlane.xlu0 %7145
        %v7147 = vsel %vm311, %v7071, 0.0
        %7148 = vadd.xlane.f32.xlu0 %v7147
        %v7149 = vpop.xlane.xlu0 %7148
        %v7150 = vsel %vm311, %v7072, 0.0
        %7151 = vadd.xlane.f32.xlu0 %v7150
        %v7152 = vpop.xlane.xlu0 %7151
        %v7153 = vsel %vm311, %v7073, 0.0
        %7154 = vadd.xlane.f32.xlu0 %v7153
        %v7155 = vpop.xlane.xlu0 %7154
        %v7156 = vsel %vm311, %v7074, 0.0
        %7157 = vadd.xlane.f32.xlu0 %v7156
        %v7158 = vpop.xlane.xlu0 %7157
        %v7159 = vsel %vm311, %v7075, 0.0
        %7160 = vadd.xlane.f32.xlu0 %v7159
        %v7161 = vpop.xlane.xlu0 %7160
        %v7162 = vsel %vm311, %v7076, 0.0
        %7163 = vadd.xlane.f32.xlu0 %v7162
        %v7164 = vpop.xlane.xlu0 %7163
        %v7165 = vsel %vm311, %v7077, 0.0
        %7166 = vadd.xlane.f32.xlu0 %v7165
        %v7167 = vpop.xlane.xlu0 %7166
        %v7168 = vsel %vm311, %v7078, 0.0
        %7169 = vadd.xlane.f32.xlu0 %v7168
        %v7170 = vpop.xlane.xlu0 %7169
        %v7171 = vsel %vm311, %v7079, 0.0
        %7172 = vadd.xlane.f32.xlu0 %v7171
        %v7173 = vpop.xlane.xlu0 %7172
        %v7174 = vsel %vm311, %v7080, 0.0
        %7175 = vadd.xlane.f32.xlu0 %v7174
        %v7176 = vpop.xlane.xlu0 %7175
        %v7177 = vsel %vm311, %v7081, 0.0
        %7178 = vadd.xlane.f32.xlu0 %v7177
        %v7179 = vpop.xlane.xlu0 %7178
        %v7180 = vsel %vm311, %v7082, 0.0
        %7181 = vadd.xlane.f32.xlu0 %v7180
        %v7182 = vpop.xlane.xlu0 %7181
        %v7183 = vsel %vm311, %v7083, 0.0
        %7184 = vadd.xlane.f32.xlu0 %v7183
        %v7185 = vpop.xlane.xlu0 %7184
        %v7186 = vsel %vm311, %v7084, 0.0
        %7187 = vadd.xlane.f32.xlu0 %v7186
        %v7188 = vpop.xlane.xlu0 %7187
        %v7189 = vsel %vm311, %v7085, 0.0
        %7190 = vadd.xlane.f32.xlu0 %v7189
        %v7191 = vpop.xlane.xlu0 %7190
        %v7192 = vsel %vm311, %v7086, 0.0
        %7193 = vadd.xlane.f32.xlu0 %v7192
        %v7194 = vpop.xlane.xlu0 %7193
        %v7195 = vsel %vm311, %v7087, 0.0
        %7196 = vadd.xlane.f32.xlu0 %v7195
        %v7197 = vpop.xlane.xlu0 %7196
        %v7198 = vsel %vm311, %v7088, 0.0
        %7199 = vadd.xlane.f32.xlu0 %v7198
        %v7200 = vpop.xlane.xlu0 %7199
        %v7201 = vsel %vm311, %v7089, 0.0
        %7202 = vadd.xlane.f32.xlu0 %v7201
        %v7203 = vpop.xlane.xlu0 %7202
        %v7204 = vsel %vm311, %v7090, 0.0
        %7205 = vadd.xlane.f32.xlu0 %v7204
        %v7206 = vpop.xlane.xlu0 %7205
        %v7207 = vsel %vm311, %v7091, 0.0
        %7208 = vadd.xlane.f32.xlu0 %v7207
        %v7209 = vpop.xlane.xlu0 %7208
        %v7210 = vsel %vm311, %v7092, 0.0
        %7211 = vadd.xlane.f32.xlu0 %v7210
        %v7212 = vpop.xlane.xlu0 %7211
        %v7213 = vsel %vm311, %v7093, 0.0
        %7214 = vadd.xlane.f32.xlu0 %v7213
        %v7215 = vpop.xlane.xlu0 %7214
        %v7216 = vsel %vm311, %v7094, 0.0
        %7217 = vadd.xlane.f32.xlu0 %v7216
        %v7218 = vpop.xlane.xlu0 %7217
        %v7219 = vsel %vm311, %v7095, 0.0
        %7220 = vadd.xlane.f32.xlu0 %v7219
        %v7221 = vpop.xlane.xlu0 %7220
        %v7222 = vsel %vm311, %v7096, 0.0
        %7223 = vadd.xlane.f32.xlu0 %v7222
        %v7224 = vpop.xlane.xlu0 %7223
        %v7225 = vsel %vm311, %v7097, 0.0
        %7226 = vadd.xlane.f32.xlu0 %v7225
        %v7227 = vpop.xlane.xlu0 %7226
        %v7228 = vsel %vm311, %v7098, 0.0
        %7229 = vadd.xlane.f32.xlu0 %v7228
        %v7230 = vpop.xlane.xlu0 %7229
        %v7231 = vsel %vm311, %v7099, 0.0
        %7232 = vadd.xlane.f32.xlu0 %v7231
        %v7233 = vpop.xlane.xlu0 %7232
        %v7234 = vsel %vm311, %v7100, 0.0
        %7235 = vadd.xlane.f32.xlu0 %v7234
        %v7236 = vpop.xlane.xlu0 %7235
        %v7237 = vsel %vm311, %v7101, 0.0
        %7238 = vadd.xlane.f32.xlu0 %v7237
        %v7239 = vpop.xlane.xlu0 %7238
        %v7240 = vsel %vm311, %v7102, 0.0
        %7241 = vadd.xlane.f32.xlu0 %v7240
        %v7242 = vpop.xlane.xlu0 %7241
        %v7243 = vsel %vm311, %v7103, 0.0
        %7244 = vadd.xlane.f32.xlu0 %v7243
        %v7245 = vpop.xlane.xlu0 %7244
        %v7246 = vsel %vm311, %v7104, 0.0
        %7247 = vadd.xlane.f32.xlu0 %v7246
        %v7248 = vpop.xlane.xlu0 %7247
        %v7249 = vsel %vm311, %v7105, 0.0
        %7250 = vadd.xlane.f32.xlu0 %v7249
        %v7251 = vpop.xlane.xlu0 %7250
        %v7252 = vsel %vm311, %v7106, 0.0
        %7253 = vadd.xlane.f32.xlu0 %v7252
        %v7254 = vpop.xlane.xlu0 %7253
        %v7255 = vsel %vm311, %v7107, 0.0
        %7256 = vadd.xlane.f32.xlu0 %v7255
        %v7257 = vpop.xlane.xlu0 %7256
        %v7258 = vsel %vm311, %v7108, 0.0
        %7259 = vadd.xlane.f32.xlu0 %v7258
        %v7260 = vpop.xlane.xlu0 %7259
        %v7261 = vsel %vm311, %v7109, 0.0
        %7262 = vadd.xlane.f32.xlu0 %v7261
        %v7263 = vpop.xlane.xlu0 %7262
        %v7264 = vsel %vm311, %v7110, 0.0
        %7265 = vadd.xlane.f32.xlu0 %v7264
        %v7266 = vpop.xlane.xlu0 %7265
        %v7267 = vsel %vm311, %v7111, 0.0
        %7268 = vadd.xlane.f32.xlu0 %v7267
        %v7269 = vpop.xlane.xlu0 %7268
        %v7270 = vsel %vm311, %v7112, 0.0
        %7271 = vadd.xlane.f32.xlu0 %v7270
        %v7272 = vpop.xlane.xlu0 %7271
        %v7273 = vsel %vm311, %v7113, 0.0
        %7274 = vadd.xlane.f32.xlu0 %v7273
        %v7275 = vpop.xlane.xlu0 %7274
        %v7276 = vsel %vm311, %v7114, 0.0
        %7277 = vadd.xlane.f32.xlu0 %v7276
        %v7278 = vpop.xlane.xlu0 %7277
        %v7279 = vsel %vm311, %v7115, 0.0
        %7280 = vadd.xlane.f32.xlu0 %v7279
        %v7281 = vpop.xlane.xlu0 %7280
        %v7282 = vsel %vm311, %v7116, 0.0
        %7283 = vadd.xlane.f32.xlu0 %v7282
        %v7284 = vpop.xlane.xlu0 %7283
        %v7285 = vsel %vm311, %v7117, 0.0
        %7286 = vadd.xlane.f32.xlu0 %v7285
        %v7287 = vpop.xlane.xlu0 %7286
        %v7288 = vsel %vm311, %v7118, 0.0
        %7289 = vadd.xlane.f32.xlu0 %v7288
        %v7290 = vpop.xlane.xlu0 %7289
        %v7291 = vsel %vm311, %v7119, 0.0
        %7292 = vadd.xlane.f32.xlu0 %v7291
        %v7293 = vpop.xlane.xlu0 %7292
        %v7294 = vsel %vm311, %v7120, 0.0
        %7295 = vadd.xlane.f32.xlu0 %v7294
        %v7296 = vpop.xlane.xlu0 %7295
        %v7297 = vsel %vm311, %v7121, 0.0
        %7298 = vadd.xlane.f32.xlu0 %v7297
        %v7299 = vpop.xlane.xlu0 %7298
        %v7300 = vsel %vm311, %v7122, 0.0
        %7301 = vadd.xlane.f32.xlu0 %v7300
        %v7302 = vpop.xlane.xlu0 %7301
        %v7303 = vsel %vm311, %v7123, 0.0
        %7304 = vadd.xlane.f32.xlu0 %v7303
        %v7305 = vpop.xlane.xlu0 %7304
        %v7306 = vsel %vm311, %v7124, 0.0
        %7307 = vadd.xlane.f32.xlu0 %v7306
        %v7308 = vpop.xlane.xlu0 %7307
        %v7309 = vsel %vm311, %v7125, 0.0
        %7310 = vadd.xlane.f32.xlu0 %v7309
        %v7311 = vpop.xlane.xlu0 %7310
        %v7312 = vsel %vm311, %v7126, 0.0
        %7313 = vadd.xlane.f32.xlu0 %v7312
        %v7314 = vpop.xlane.xlu0 %7313
        %v7315 = vsel %vm311, %v7127, 0.0
        %7316 = vadd.xlane.f32.xlu0 %v7315
        %v7317 = vpop.xlane.xlu0 %7316
        %v7318 = vsel %vm311, %v7128, 0.0
        %7319 = vadd.xlane.f32.xlu0 %v7318
        %v7320 = vpop.xlane.xlu0 %7319
        %vm7321 = vcmp.le.s32.totalorder %v1093, %v1095
        %v7322 = vsel %vm7321, 1, 0
        %v7323 = vcvt.s32.f32 %v7322
        %v7324 = vmul.f32 %v7131, %v7131
        %v7325 = vmul.f32 %v7134, %v7134
        %v7326 = vmul.f32 %v7137, %v7137
        %v7327 = vmul.f32 %v7140, %v7140
        %v7328 = vmul.f32 %v7143, %v7143
        %v7329 = vmul.f32 %v7146, %v7146
        %v7330 = vmul.f32 %v7149, %v7149
        %v7331 = vmul.f32 %v7152, %v7152
        %v7332 = vmul.f32 %v7155, %v7155
        %v7333 = vmul.f32 %v7158, %v7158
        %v7334 = vmul.f32 %v7161, %v7161
        %v7335 = vmul.f32 %v7164, %v7164
        %v7336 = vmul.f32 %v7167, %v7167
        %v7337 = vmul.f32 %v7170, %v7170
        %v7338 = vmul.f32 %v7173, %v7173
        %v7339 = vmul.f32 %v7176, %v7176
        %v7340 = vmul.f32 %v7179, %v7179
        %v7341 = vmul.f32 %v7182, %v7182
        %v7342 = vmul.f32 %v7185, %v7185
        %v7343 = vmul.f32 %v7188, %v7188
        %v7344 = vmul.f32 %v7191, %v7191
        %v7345 = vmul.f32 %v7194, %v7194
        %v7346 = vmul.f32 %v7197, %v7197
        %v7347 = vmul.f32 %v7200, %v7200
        %v7348 = vmul.f32 %v7203, %v7203
        %v7349 = vmul.f32 %v7206, %v7206
        %v7350 = vmul.f32 %v7209, %v7209
        %v7351 = vmul.f32 %v7212, %v7212
        %v7352 = vmul.f32 %v7215, %v7215
        %v7353 = vmul.f32 %v7218, %v7218
        %v7354 = vmul.f32 %v7221, %v7221
        %v7355 = vmul.f32 %v7224, %v7224
        %v7356 = vmul.f32 %v7227, %v7227
        %v7357 = vmul.f32 %v7230, %v7230
        %v7358 = vmul.f32 %v7233, %v7233
        %v7359 = vmul.f32 %v7236, %v7236
        %v7360 = vmul.f32 %v7239, %v7239
        %v7361 = vmul.f32 %v7242, %v7242
        %v7362 = vmul.f32 %v7245, %v7245
        %v7363 = vmul.f32 %v7248, %v7248
        %v7364 = vmul.f32 %v7251, %v7251
        %v7365 = vmul.f32 %v7254, %v7254
        %v7366 = vmul.f32 %v7257, %v7257
        %v7367 = vmul.f32 %v7260, %v7260
        %v7368 = vmul.f32 %v7263, %v7263
        %v7369 = vmul.f32 %v7266, %v7266
        %v7370 = vmul.f32 %v7269, %v7269
        %v7371 = vmul.f32 %v7272, %v7272
        %v7372 = vmul.f32 %v7275, %v7275
        %v7373 = vmul.f32 %v7278, %v7278
        %v7374 = vmul.f32 %v7281, %v7281
        %v7375 = vmul.f32 %v7284, %v7284
        %v7376 = vmul.f32 %v7287, %v7287
        %v7377 = vmul.f32 %v7290, %v7290
        %v7378 = vmul.f32 %v7293, %v7293
        %v7379 = vmul.f32 %v7296, %v7296
        %v7380 = vmul.f32 %v7299, %v7299
        %v7381 = vmul.f32 %v7302, %v7302
        %v7382 = vmul.f32 %v7305, %v7305
        %v7383 = vmul.f32 %v7308, %v7308
        %v7384 = vmul.f32 %v7311, %v7311
        %v7385 = vmul.f32 %v7314, %v7314
        %v7386 = vmul.f32 %v7317, %v7317
        %v7387 = vmul.f32 %v7320, %v7320
        %v7452 = vperm.slane %v7131, %v1095
        %v7453 = vperm.slane %v7134, %v1095
        %v7454 = vperm.slane %v7137, %v1095
        %v7455 = vperm.slane %v7140, %v1095
        %v7456 = vperm.slane %v7143, %v1095
        %v7457 = vperm.slane %v7146, %v1095
        %v7458 = vperm.slane %v7149, %v1095
        %v7459 = vperm.slane %v7152, %v1095
        %v7460 = vperm.slane %v7155, %v1095
        %v7461 = vperm.slane %v7158, %v1095
        %v7462 = vperm.slane %v7161, %v1095
        %v7463 = vperm.slane %v7164, %v1095
        %v7464 = vperm.slane %v7167, %v1095
        %v7465 = vperm.slane %v7170, %v1095
        %v7466 = vperm.slane %v7173, %v1095
        %v7467 = vperm.slane %v7176, %v1095
        %v7468 = vperm.slane %v7179, %v1095
        %v7469 = vperm.slane %v7182, %v1095
        %v7470 = vperm.slane %v7185, %v1095
        %v7471 = vperm.slane %v7188, %v1095
        %v7472 = vperm.slane %v7191, %v1095
        %v7473 = vperm.slane %v7194, %v1095
        %v7474 = vperm.slane %v7197, %v1095
        %v7475 = vperm.slane %v7200, %v1095
        %v7476 = vperm.slane %v7203, %v1095
        %v7477 = vperm.slane %v7206, %v1095
        %v7478 = vperm.slane %v7209, %v1095
        %v7479 = vperm.slane %v7212, %v1095
        %v7480 = vperm.slane %v7215, %v1095
        %v7481 = vperm.slane %v7218, %v1095
        %v7482 = vperm.slane %v7221, %v1095
        %v7483 = vperm.slane %v7224, %v1095
        %v7484 = vperm.slane %v7227, %v1095
        %v7485 = vperm.slane %v7230, %v1095
        %v7486 = vperm.slane %v7233, %v1095
        %v7487 = vperm.slane %v7236, %v1095
        %v7488 = vperm.slane %v7239, %v1095
        %v7489 = vperm.slane %v7242, %v1095
        %v7490 = vperm.slane %v7245, %v1095
        %v7491 = vperm.slane %v7248, %v1095
        %v7492 = vperm.slane %v7251, %v1095
        %v7493 = vperm.slane %v7254, %v1095
        %v7494 = vperm.slane %v7257, %v1095
        %v7495 = vperm.slane %v7260, %v1095
        %v7496 = vperm.slane %v7263, %v1095
        %v7497 = vperm.slane %v7266, %v1095
        %v7498 = vperm.slane %v7269, %v1095
        %v7499 = vperm.slane %v7272, %v1095
        %v7500 = vperm.slane %v7275, %v1095
        %v7501 = vperm.slane %v7278, %v1095
        %v7502 = vperm.slane %v7281, %v1095
        %v7503 = vperm.slane %v7284, %v1095
        %v7504 = vperm.slane %v7287, %v1095
        %v7505 = vperm.slane %v7290, %v1095
        %v7506 = vperm.slane %v7293, %v1095
        %v7507 = vperm.slane %v7296, %v1095
        %v7508 = vperm.slane %v7299, %v1095
        %v7509 = vperm.slane %v7302, %v1095
        %v7510 = vperm.slane %v7305, %v1095
        %v7511 = vperm.slane %v7308, %v1095
        %v7512 = vperm.slane %v7311, %v1095
        %v7513 = vperm.slane %v7314, %v1095
        %v7514 = vperm.slane %v7317, %v1095
        %v7515 = vperm.slane %v7320, %v1095
        %v7516 = vsel %vm6546, %v7453, %v7452
        %v7517 = vsel %vm6548, %v7454, %v7516
        %v7518 = vsel %vm6550, %v7455, %v7517
        %v7519 = vsel %vm6552, %v7456, %v7518
        %v7520 = vsel %vm6554, %v7457, %v7519
        %v7521 = vsel %vm6556, %v7458, %v7520
        %v7522 = vsel %vm6558, %v7459, %v7521
        %v7523 = vsel %vm6546, %v7461, %v7460
        %v7524 = vsel %vm6548, %v7462, %v7523
        %v7525 = vsel %vm6550, %v7463, %v7524
        %v7526 = vsel %vm6552, %v7464, %v7525
        %v7527 = vsel %vm6554, %v7465, %v7526
        %v7528 = vsel %vm6556, %v7466, %v7527
        %v7529 = vsel %vm6558, %v7467, %v7528
        %v7530 = vsel %vm6546, %v7469, %v7468
        %v7531 = vsel %vm6548, %v7470, %v7530
        %v7532 = vsel %vm6550, %v7471, %v7531
        %v7533 = vsel %vm6552, %v7472, %v7532
        %v7534 = vsel %vm6554, %v7473, %v7533
        %v7535 = vsel %vm6556, %v7474, %v7534
        %v7536 = vsel %vm6558, %v7475, %v7535
        %v7537 = vsel %vm6546, %v7477, %v7476
        %v7538 = vsel %vm6548, %v7478, %v7537
        %v7539 = vsel %vm6550, %v7479, %v7538
        %v7540 = vsel %vm6552, %v7480, %v7539
        %v7541 = vsel %vm6554, %v7481, %v7540
        %v7542 = vsel %vm6556, %v7482, %v7541
        %v7543 = vsel %vm6558, %v7483, %v7542
        %v7544 = vsel %vm6546, %v7485, %v7484
        %v7545 = vsel %vm6548, %v7486, %v7544
        %v7546 = vsel %vm6550, %v7487, %v7545
        %v7547 = vsel %vm6552, %v7488, %v7546
        %v7548 = vsel %vm6554, %v7489, %v7547
        %v7549 = vsel %vm6556, %v7490, %v7548
        %v7550 = vsel %vm6558, %v7491, %v7549
        %v7551 = vsel %vm6546, %v7493, %v7492
        %v7552 = vsel %vm6548, %v7494, %v7551
        %v7553 = vsel %vm6550, %v7495, %v7552
        %v7554 = vsel %vm6552, %v7496, %v7553
        %v7555 = vsel %vm6554, %v7497, %v7554
        %v7556 = vsel %vm6556, %v7498, %v7555
        %v7557 = vsel %vm6558, %v7499, %v7556
        %v7558 = vsel %vm6546, %v7501, %v7500
        %v7559 = vsel %vm6548, %v7502, %v7558
        %v7560 = vsel %vm6550, %v7503, %v7559
        %v7561 = vsel %vm6552, %v7504, %v7560
        %v7562 = vsel %vm6554, %v7505, %v7561
        %v7563 = vsel %vm6556, %v7506, %v7562
        %v7564 = vsel %vm6558, %v7507, %v7563
        %v7565 = vsel %vm6546, %v7509, %v7508
        %v7566 = vsel %vm6548, %v7510, %v7565
        %v7567 = vsel %vm6550, %v7511, %v7566
        %v7568 = vsel %vm6552, %v7512, %v7567
        %v7569 = vsel %vm6554, %v7513, %v7568
        %v7570 = vsel %vm6556, %v7514, %v7569
        %v7571 = vsel %vm6558, %v7515, %v7570
        %v7636 = vperm.slane %v7324, %v1095
        %v7637 = vperm.slane %v7325, %v1095
        %v7638 = vperm.slane %v7326, %v1095
        %v7639 = vperm.slane %v7327, %v1095
        %v7640 = vperm.slane %v7328, %v1095
        %v7641 = vperm.slane %v7329, %v1095
        %v7642 = vperm.slane %v7330, %v1095
        %v7643 = vperm.slane %v7331, %v1095
        %v7644 = vperm.slane %v7332, %v1095
        %v7645 = vperm.slane %v7333, %v1095
        %v7646 = vperm.slane %v7334, %v1095
        %v7647 = vperm.slane %v7335, %v1095
        %v7648 = vperm.slane %v7336, %v1095
        %v7649 = vperm.slane %v7337, %v1095
        %v7650 = vperm.slane %v7338, %v1095
        %v7651 = vperm.slane %v7339, %v1095
        %v7652 = vperm.slane %v7340, %v1095
        %v7653 = vperm.slane %v7341, %v1095
        %v7654 = vperm.slane %v7342, %v1095
        %v7655 = vperm.slane %v7343, %v1095
        %v7656 = vperm.slane %v7344, %v1095
        %v7657 = vperm.slane %v7345, %v1095
        %v7658 = vperm.slane %v7346, %v1095
        %v7659 = vperm.slane %v7347, %v1095
        %v7660 = vperm.slane %v7348, %v1095
        %v7661 = vperm.slane %v7349, %v1095
        %v7662 = vperm.slane %v7350, %v1095
        %v7663 = vperm.slane %v7351, %v1095
        %v7664 = vperm.slane %v7352, %v1095
        %v7665 = vperm.slane %v7353, %v1095
        %v7666 = vperm.slane %v7354, %v1095
        %v7667 = vperm.slane %v7355, %v1095
        %v7668 = vperm.slane %v7356, %v1095
        %v7669 = vperm.slane %v7357, %v1095
        %v7670 = vperm.slane %v7358, %v1095
        %v7671 = vperm.slane %v7359, %v1095
        %v7672 = vperm.slane %v7360, %v1095
        %v7673 = vperm.slane %v7361, %v1095
        %v7674 = vperm.slane %v7362, %v1095
        %v7675 = vperm.slane %v7363, %v1095
        %v7676 = vperm.slane %v7364, %v1095
        %v7677 = vperm.slane %v7365, %v1095
        %v7678 = vperm.slane %v7366, %v1095
        %v7679 = vperm.slane %v7367, %v1095
        %v7680 = vperm.slane %v7368, %v1095
        %v7681 = vperm.slane %v7369, %v1095
        %v7682 = vperm.slane %v7370, %v1095
        %v7683 = vperm.slane %v7371, %v1095
        %v7684 = vperm.slane %v7372, %v1095
        %v7685 = vperm.slane %v7373, %v1095
        %v7686 = vperm.slane %v7374, %v1095
        %v7687 = vperm.slane %v7375, %v1095
        %v7688 = vperm.slane %v7376, %v1095
        %v7689 = vperm.slane %v7377, %v1095
        %v7690 = vperm.slane %v7378, %v1095
        %v7691 = vperm.slane %v7379, %v1095
        %v7692 = vperm.slane %v7380, %v1095
        %v7693 = vperm.slane %v7381, %v1095
        %v7694 = vperm.slane %v7382, %v1095
        %v7695 = vperm.slane %v7383, %v1095
        %v7696 = vperm.slane %v7384, %v1095
        %v7697 = vperm.slane %v7385, %v1095
        %v7698 = vperm.slane %v7386, %v1095
        %v7699 = vperm.slane %v7387, %v1095
        %v7700 = vsel %vm6546, %v7637, %v7636
        %v7701 = vsel %vm6548, %v7638, %v7700
        %v7702 = vsel %vm6550, %v7639, %v7701
        %v7703 = vsel %vm6552, %v7640, %v7702
        %v7704 = vsel %vm6554, %v7641, %v7703
        %v7705 = vsel %vm6556, %v7642, %v7704
        %v7706 = vsel %vm6558, %v7643, %v7705
        %v7707 = vsel %vm6546, %v7645, %v7644
        %v7708 = vsel %vm6548, %v7646, %v7707
        %v7709 = vsel %vm6550, %v7647, %v7708
        %v7710 = vsel %vm6552, %v7648, %v7709
        %v7711 = vsel %vm6554, %v7649, %v7710
        %v7712 = vsel %vm6556, %v7650, %v7711
        %v7713 = vsel %vm6558, %v7651, %v7712
        %v7714 = vsel %vm6546, %v7653, %v7652
        %v7715 = vsel %vm6548, %v7654, %v7714
        %v7716 = vsel %vm6550, %v7655, %v7715
        %v7717 = vsel %vm6552, %v7656, %v7716
        %v7718 = vsel %vm6554, %v7657, %v7717
        %v7719 = vsel %vm6556, %v7658, %v7718
        %v7720 = vsel %vm6558, %v7659, %v7719
        %v7721 = vsel %vm6546, %v7661, %v7660
        %v7722 = vsel %vm6548, %v7662, %v7721
        %v7723 = vsel %vm6550, %v7663, %v7722
        %v7724 = vsel %vm6552, %v7664, %v7723
        %v7725 = vsel %vm6554, %v7665, %v7724
        %v7726 = vsel %vm6556, %v7666, %v7725
        %v7727 = vsel %vm6558, %v7667, %v7726
        %v7728 = vsel %vm6546, %v7669, %v7668
        %v7729 = vsel %vm6548, %v7670, %v7728
        %v7730 = vsel %vm6550, %v7671, %v7729
        %v7731 = vsel %vm6552, %v7672, %v7730
        %v7732 = vsel %vm6554, %v7673, %v7731
        %v7733 = vsel %vm6556, %v7674, %v7732
        %v7734 = vsel %vm6558, %v7675, %v7733
        %v7735 = vsel %vm6546, %v7677, %v7676
        %v7736 = vsel %vm6548, %v7678, %v7735
        %v7737 = vsel %vm6550, %v7679, %v7736
        %v7738 = vsel %vm6552, %v7680, %v7737
        %v7739 = vsel %vm6554, %v7681, %v7738
        %v7740 = vsel %vm6556, %v7682, %v7739
        %v7741 = vsel %vm6558, %v7683, %v7740
        %v7742 = vsel %vm6546, %v7685, %v7684
        %v7743 = vsel %vm6548, %v7686, %v7742
        %v7744 = vsel %vm6550, %v7687, %v7743
        %v7745 = vsel %vm6552, %v7688, %v7744
        %v7746 = vsel %vm6554, %v7689, %v7745
        %v7747 = vsel %vm6556, %v7690, %v7746
        %v7748 = vsel %vm6558, %v7691, %v7747
        %v7749 = vsel %vm6546, %v7693, %v7692
        %v7750 = vsel %vm6548, %v7694, %v7749
        %v7751 = vsel %vm6550, %v7695, %v7750
        %v7752 = vsel %vm6552, %v7696, %v7751
        %v7753 = vsel %vm6554, %v7697, %v7752
        %v7754 = vsel %vm6556, %v7698, %v7753
        %v7755 = vsel %vm6558, %v7699, %v7754
        %v7756 = vsel %vm311, %v7522, 0
        %v7758 = vsel %vm311, %v7529, 0
        %v7760 = vsel %vm311, %v7536, 0
        %v7762 = vsel %vm311, %v7543, 0
        %v7764 = vsel %vm311, %v7550, 0
        %v7766 = vsel %vm311, %v7557, 0
        %v7768 = vsel %vm311, %v7564, 0
        %v7770 = vsel %vm311, %v7571, 0
        %v7772 = vsel %vm311, %v7706, 0
        %v7774 = vsel %vm311, %v7713, 0
        %v7776 = vsel %vm311, %v7720, 0
        %v7778 = vsel %vm311, %v7727, 0
        %v7780 = vsel %vm311, %v7734, 0
        %v7782 = vsel %vm311, %v7741, 0
        %v7784 = vsel %vm311, %v7748, 0
        %v7786 = vsel %vm311, %v7755, 0
        %7788 = vmatpush.msra.mxu0 0.0
        %7789 = vmatpush.msra.mxu0 0.0
        %7790 = vmatpush.msra.mxu0 0.0
        %7791 = vmatpush.msra.mxu0 0.0
        %7792 = vmatpush.msra.mxu0 0.0
        %7793 = vmatpush.msra.mxu0 0.0
        %7794 = vmatpush.msra.mxu0 0.0
        %7795 = vmatpush.msra.mxu0 0.0
        %7796 = vmatpush.msra.mxu0 0.0
        %7797 = vmatpush.msra.mxu0 0.0
        %7798 = vmatpush.msra.mxu0 0.0
        %7799 = vmatpush.msra.mxu0 0.0
        %7800 = vmatpush.msra.mxu0 0.0
        %7801 = vmatpush.msra.mxu0 0.0
        %7802 = vmatpush.msra.mxu0 0.0
        %7803 = vmatpush.msra.mxu0 %v7323
        %7804 = vmatmul.f32.gmra.mxu0 %v7756
        %v7805 = vpop.f32.mrf.mxu0
        %v7806 = vadd.f32 0.0, %v7805
        %7807 = vmatmul.f32.gmra.mxu0 %v7758
        %v7808 = vpop.f32.mrf.mxu0
        %v7809 = vadd.f32 0.0, %v7808
        %7810 = vmatmul.f32.gmra.mxu0 %v7760
        %v7811 = vpop.f32.mrf.mxu0
        %v7812 = vadd.f32 0.0, %v7811
        %7813 = vmatmul.f32.gmra.mxu0 %v7762
        %v7814 = vpop.f32.mrf.mxu0
        %v7815 = vadd.f32 0.0, %v7814
        %7816 = vmatmul.f32.gmra.mxu0 %v7764
        %v7817 = vpop.f32.mrf.mxu0
        %v7818 = vadd.f32 0.0, %v7817
        %7819 = vmatmul.f32.gmra.mxu0 %v7766
        %v7820 = vpop.f32.mrf.mxu0
        %v7821 = vadd.f32 0.0, %v7820
        %7822 = vmatmul.f32.gmra.mxu0 %v7768
        %v7823 = vpop.f32.mrf.mxu0
        %v7824 = vadd.f32 0.0, %v7823
        %7825 = vmatmul.f32.gmra.mxu0 %v7770
        %v7826 = vpop.f32.mrf.mxu0
        %v7827 = vadd.f32 0.0, %v7826
        %7828 = vmatmul.f32.gmra.mxu0 %v7772
        %v7829 = vpop.f32.mrf.mxu0
        %v7830 = vadd.f32 0.0, %v7829
        %7831 = vmatmul.f32.gmra.mxu0 %v7774
        %v7832 = vpop.f32.mrf.mxu0
        %v7833 = vadd.f32 0.0, %v7832
        %7834 = vmatmul.f32.gmra.mxu0 %v7776
        %v7835 = vpop.f32.mrf.mxu0
        %v7836 = vadd.f32 0.0, %v7835
        %7837 = vmatmul.f32.gmra.mxu0 %v7778
        %v7838 = vpop.f32.mrf.mxu0
        %v7839 = vadd.f32 0.0, %v7838
        %7840 = vmatmul.f32.gmra.mxu0 %v7780
        %v7841 = vpop.f32.mrf.mxu0
        %v7842 = vadd.f32 0.0, %v7841
        %7843 = vmatmul.f32.gmra.mxu0 %v7782
        %v7844 = vpop.f32.mrf.mxu0
        %v7845 = vadd.f32 0.0, %v7844
        %7846 = vmatmul.f32.gmra.mxu0 %v7784
        %v7847 = vpop.f32.mrf.mxu0
        %v7848 = vadd.f32 0.0, %v7847
        %7849 = vmatmul.f32.gmra.mxu0 %v7786
        %v7850 = vpop.f32.mrf.mxu0
        %v7851 = vadd.f32 0.0, %v7850
        %7852 = vdwg.mxu0
        %v7853 = vadd.s32 %v1095, 1
        %v7854 = vcvt.s32.f32 %v7853
        %v7855 = vrcp.pop %v7854
        %v7856 = vmul.f32 %v7854, %v7855
        %v7857 = vsub.f32 1.0, %v7856
        %v7858 = vmul.f32 %v7855, %v7857
        %v7859 = vadd.f32 %v7855, %v7858
        %vm7860 = vweird.f32 %v7854
        %vm7861 = vweird.f32 %v7855
        %vm7862 = vmor %vm7860, %vm7861
        %v7863 = vsel %vm7862, %v7855, %v7859
        %v7864 = vand.u32 2147483647, %v7854
        %vm7865 = vcmp.eq.f32.partialorder %v7864, 8.507059e+37
        %v7866 = vand.u32 %v7854, 2147483648
        %v7867 = vor.u32 1.1754944e-38, %v7866
        %v7868 = vsel %vm7865, %v7867, %v7863
        %v7869 = vmul.f32 1.0, %v7868
        %v7870 = vmul.f32 %v7806, %v7869
        %v7871 = vmul.f32 %v7809, %v7869
        %v7872 = vmul.f32 %v7812, %v7869
        %v7873 = vmul.f32 %v7815, %v7869
        %v7874 = vmul.f32 %v7818, %v7869
        %v7875 = vmul.f32 %v7821, %v7869
        %v7876 = vmul.f32 %v7824, %v7869
        %v7877 = vmul.f32 %v7827, %v7869
        %v7878 = vmul.f32 %v7830, %v7869
        %v7879 = vmul.f32 %v7833, %v7869
        %v7880 = vmul.f32 %v7836, %v7869
        %v7881 = vmul.f32 %v7839, %v7869
        %v7882 = vmul.f32 %v7842, %v7869
        %v7883 = vmul.f32 %v7845, %v7869
        %v7884 = vmul.f32 %v7848, %v7869
        %v7885 = vmul.f32 %v7851, %v7869
        %v7886 = vmul.f32 %v7870, %v7870
        %v7887 = vmul.f32 %v7871, %v7871
        %v7888 = vmul.f32 %v7872, %v7872
        %v7889 = vmul.f32 %v7873, %v7873
        %v7890 = vmul.f32 %v7874, %v7874
        %v7891 = vmul.f32 %v7875, %v7875
        %v7892 = vmul.f32 %v7876, %v7876
        %v7893 = vmul.f32 %v7877, %v7877
        %v7894 = vsub.f32 %v7878, %v7886
        %v7895 = vsub.f32 %v7879, %v7887
        %v7896 = vsub.f32 %v7880, %v7888
        %v7897 = vsub.f32 %v7881, %v7889
        %v7898 = vsub.f32 %v7882, %v7890
        %v7899 = vsub.f32 %v7883, %v7891
        %v7900 = vsub.f32 %v7884, %v7892
        %v7901 = vsub.f32 %v7885, %v7893
        %v7902 = vmul.f32 %v7854, %v7894
        %v7903 = vmul.f32 %v7854, %v7895
        %v7904 = vmul.f32 %v7854, %v7896
        %v7905 = vmul.f32 %v7854, %v7897
        %v7906 = vmul.f32 %v7854, %v7898
        %v7907 = vmul.f32 %v7854, %v7899
        %v7908 = vmul.f32 %v7854, %v7900
        %v7909 = vmul.f32 %v7854, %v7901
        %v7910 = vsub.f32 1.0, %v7902
        %v7911 = vsub.f32 1.0, %v7903
        %v7912 = vsub.f32 1.0, %v7904
        %v7913 = vsub.f32 1.0, %v7905
        %v7914 = vsub.f32 1.0, %v7906
        %v7915 = vsub.f32 1.0, %v7907
        %v7916 = vsub.f32 1.0, %v7908
        %v7917 = vsub.f32 1.0, %v7909
        %v7918 = vmul.f32 %v7910, %v7869
        %v7919 = vmul.f32 %v7911, %v7869
        %v7920 = vmul.f32 %v7912, %v7869
        %v7921 = vmul.f32 %v7913, %v7869
        %v7922 = vmul.f32 %v7914, %v7869
        %v7923 = vmul.f32 %v7915, %v7869
        %v7924 = vmul.f32 %v7916, %v7869
        %v7925 = vmul.f32 %v7917, %v7869
        %v7926 = vmax.f32 %v7918, 0.0
        %v7927 = vmax.f32 %v7919, 0.0
        %v7928 = vmax.f32 %v7920, 0.0
        %v7929 = vmax.f32 %v7921, 0.0
        %v7930 = vmax.f32 %v7922, 0.0
        %v7931 = vmax.f32 %v7923, 0.0
        %v7932 = vmax.f32 %v7924, 0.0
        %v7933 = vmax.f32 %v7925, 0.0
        %v7934 = vrsqrt.pop %v7926
        %v7935 = vmul.f32 %v7934, %v7926
        %v7936 = vmul.f32 %v7935, %v7934
        %v7937 = vmul.f32 0.5, %v7936
        %v7938 = vsub.f32 1.5, %v7937
        %v7939 = vmul.f32 %v7934, %v7938
        %v7940 = vmul.f32 %v7926, %v7939
        %vm7941 = vcmp.eq.f32.partialorder %v7926, inf
        %v7942 = vsel %vm7941, %v7926, %v7940
        %vm7943 = vcmp.eq.f32.partialorder %v7926, 0.0
        %v7944 = vand.u32 %v7926, 2147483648
        %v7945 = vsel %vm7943, %v7944, %v7942
        %v7946 = vrsqrt.pop %v7927
        %v7947 = vmul.f32 %v7946, %v7927
        %v7948 = vmul.f32 %v7947, %v7946
        %v7949 = vmul.f32 0.5, %v7948
        %v7950 = vsub.f32 1.5, %v7949
        %v7951 = vmul.f32 %v7946, %v7950
        %v7952 = vmul.f32 %v7927, %v7951
        %vm7953 = vcmp.eq.f32.partialorder %v7927, inf
        %v7954 = vsel %vm7953, %v7927, %v7952
        %vm7955 = vcmp.eq.f32.partialorder %v7927, 0.0
        %v7956 = vand.u32 %v7927, 2147483648
        %v7957 = vsel %vm7955, %v7956, %v7954
        %v7958 = vrsqrt.pop %v7928
        %v7959 = vmul.f32 %v7958, %v7928
        %v7960 = vmul.f32 %v7959, %v7958
        %v7961 = vmul.f32 0.5, %v7960
        %v7962 = vsub.f32 1.5, %v7961
        %v7963 = vmul.f32 %v7958, %v7962
        %v7964 = vmul.f32 %v7928, %v7963
        %vm7965 = vcmp.eq.f32.partialorder %v7928, inf
        %v7966 = vsel %vm7965, %v7928, %v7964
        %vm7967 = vcmp.eq.f32.partialorder %v7928, 0.0
        %v7968 = vand.u32 %v7928, 2147483648
        %v7969 = vsel %vm7967, %v7968, %v7966
        %v7970 = vrsqrt.pop %v7929
        %v7971 = vmul.f32 %v7970, %v7929
        %v7972 = vmul.f32 %v7971, %v7970
        %v7973 = vmul.f32 0.5, %v7972
        %v7974 = vsub.f32 1.5, %v7973
        %v7975 = vmul.f32 %v7970, %v7974
        %v7976 = vmul.f32 %v7929, %v7975
        %vm7977 = vcmp.eq.f32.partialorder %v7929, inf
        %v7978 = vsel %vm7977, %v7929, %v7976
        %vm7979 = vcmp.eq.f32.partialorder %v7929, 0.0
        %v7980 = vand.u32 %v7929, 2147483648
        %v7981 = vsel %vm7979, %v7980, %v7978
        %v7982 = vrsqrt.pop %v7930
        %v7983 = vmul.f32 %v7982, %v7930
        %v7984 = vmul.f32 %v7983, %v7982
        %v7985 = vmul.f32 0.5, %v7984
        %v7986 = vsub.f32 1.5, %v7985
        %v7987 = vmul.f32 %v7982, %v7986
        %v7988 = vmul.f32 %v7930, %v7987
        %vm7989 = vcmp.eq.f32.partialorder %v7930, inf
        %v7990 = vsel %vm7989, %v7930, %v7988
        %vm7991 = vcmp.eq.f32.partialorder %v7930, 0.0
        %v7992 = vand.u32 %v7930, 2147483648
        %v7993 = vsel %vm7991, %v7992, %v7990
        %v7994 = vrsqrt.pop %v7931
        %v7995 = vmul.f32 %v7994, %v7931
        %v7996 = vmul.f32 %v7995, %v7994
        %v7997 = vmul.f32 0.5, %v7996
        %v7998 = vsub.f32 1.5, %v7997
        %v7999 = vmul.f32 %v7994, %v7998
        %v8000 = vmul.f32 %v7931, %v7999
        %vm8001 = vcmp.eq.f32.partialorder %v7931, inf
        %v8002 = vsel %vm8001, %v7931, %v8000
        %vm8003 = vcmp.eq.f32.partialorder %v7931, 0.0
        %v8004 = vand.u32 %v7931, 2147483648
        %v8005 = vsel %vm8003, %v8004, %v8002
        %v8006 = vrsqrt.pop %v7932
        %v8007 = vmul.f32 %v8006, %v7932
        %v8008 = vmul.f32 %v8007, %v8006
        %v8009 = vmul.f32 0.5, %v8008
        %v8010 = vsub.f32 1.5, %v8009
        %v8011 = vmul.f32 %v8006, %v8010
        %v8012 = vmul.f32 %v7932, %v8011
        %vm8013 = vcmp.eq.f32.partialorder %v7932, inf
        %v8014 = vsel %vm8013, %v7932, %v8012
        %vm8015 = vcmp.eq.f32.partialorder %v7932, 0.0
        %v8016 = vand.u32 %v7932, 2147483648
        %v8017 = vsel %vm8015, %v8016, %v8014
        %v8018 = vrsqrt.pop %v7933
        %v8019 = vmul.f32 %v8018, %v7933
        %v8020 = vmul.f32 %v8019, %v8018
        %v8021 = vmul.f32 0.5, %v8020
        %v8022 = vsub.f32 1.5, %v8021
        %v8023 = vmul.f32 %v8018, %v8022
        %v8024 = vmul.f32 %v7933, %v8023
        %vm8025 = vcmp.eq.f32.partialorder %v7933, inf
        %v8026 = vsel %vm8025, %v7933, %v8024
        %vm8027 = vcmp.eq.f32.partialorder %v7933, 0.0
        %v8028 = vand.u32 %v7933, 2147483648
        %v8029 = vsel %vm8027, %v8028, %v8026
        %v8030 = vsub.f32 %v7870, %v7945
        %v8031 = vsub.f32 %v7871, %v7957
        %v8032 = vsub.f32 %v7872, %v7969
        %v8033 = vsub.f32 %v7873, %v7981
        %v8034 = vsub.f32 %v7874, %v7993
        %v8035 = vsub.f32 %v7875, %v8005
        %v8036 = vsub.f32 %v7876, %v8017
        %v8037 = vsub.f32 %v7877, %v8029
        %vm8046 = vcmp.le.f32.partialorder %v8030, %v7522
        %vm8047 = vcmp.le.f32.partialorder %v8031, %v7529
        %vm8048 = vcmp.le.f32.partialorder %v8032, %v7536
        %vm8049 = vcmp.le.f32.partialorder %v8033, %v7543
        %vm8050 = vcmp.le.f32.partialorder %v8034, %v7550
        %vm8051 = vcmp.le.f32.partialorder %v8035, %v7557
        %vm8052 = vcmp.le.f32.partialorder %v8036, %v7564
        %vm8053 = vcmp.le.f32.partialorder %v8037, %v7571
        %v8054 = vsel %vm8046, 1, 0
        %v8055 = vsel %vm8047, 1, 0
        %v8056 = vsel %vm8048, 1, 0
        %v8057 = vsel %vm8049, 1, 0
        %v8058 = vsel %vm8050, 1, 0
        %v8059 = vsel %vm8051, 1, 0
        %v8060 = vsel %vm8052, 1, 0
        %v8061 = vsel %vm8053, 1, 0
        %v8062 = vsel %vm311, %v8054, 0
        %v8063 = vand.u32 %v8062, 65535
        %v8064 = vshrl.u32 %v8062, 16
        %v8065 = vcvt.s32.f32 %v8063
        %v8066 = vcvt.s32.f32 %v8064
        %8067 = vadd.xlane.f32.xlu0 %v8065
        %v8068 = vpop.xlane.xlu0 %8067
        %8069 = vadd.xlane.f32.xlu0 %v8066
        %v8070 = vpop.xlane.xlu0 %8069
        %v8071 = vcvt.f32.s32 %v8068
        %v8072 = vcvt.f32.s32 %v8070
        %v8073 = vshll.u32 %v8072, 16
        %v8074 = vadd.s32 %v8073, %v8071
        %v8075 = vsel %vm311, %v8055, 0
        %v8076 = vand.u32 %v8075, 65535
        %v8077 = vshrl.u32 %v8075, 16
        %v8078 = vcvt.s32.f32 %v8076
        %v8079 = vcvt.s32.f32 %v8077
        %8080 = vadd.xlane.f32.xlu0 %v8078
        %v8081 = vpop.xlane.xlu0 %8080
        %8082 = vadd.xlane.f32.xlu0 %v8079
        %v8083 = vpop.xlane.xlu0 %8082
        %v8084 = vcvt.f32.s32 %v8081
        %v8085 = vcvt.f32.s32 %v8083
        %v8086 = vshll.u32 %v8085, 16
        %v8087 = vadd.s32 %v8086, %v8084
        %v8088 = vsel %vm311, %v8056, 0
        %v8089 = vand.u32 %v8088, 65535
        %v8090 = vshrl.u32 %v8088, 16
        %v8091 = vcvt.s32.f32 %v8089
        %v8092 = vcvt.s32.f32 %v8090
        %8093 = vadd.xlane.f32.xlu0 %v8091
        %v8094 = vpop.xlane.xlu0 %8093
        %8095 = vadd.xlane.f32.xlu0 %v8092
        %v8096 = vpop.xlane.xlu0 %8095
        %v8097 = vcvt.f32.s32 %v8094
        %v8098 = vcvt.f32.s32 %v8096
        %v8099 = vshll.u32 %v8098, 16
        %v8100 = vadd.s32 %v8099, %v8097
        %v8101 = vsel %vm311, %v8057, 0
        %v8102 = vand.u32 %v8101, 65535
        %v8103 = vshrl.u32 %v8101, 16
        %v8104 = vcvt.s32.f32 %v8102
        %v8105 = vcvt.s32.f32 %v8103
        %8106 = vadd.xlane.f32.xlu0 %v8104
        %v8107 = vpop.xlane.xlu0 %8106
        %8108 = vadd.xlane.f32.xlu0 %v8105
        %v8109 = vpop.xlane.xlu0 %8108
        %v8110 = vcvt.f32.s32 %v8107
        %v8111 = vcvt.f32.s32 %v8109
        %v8112 = vshll.u32 %v8111, 16
        %v8113 = vadd.s32 %v8112, %v8110
        %v8114 = vsel %vm311, %v8058, 0
        %v8115 = vand.u32 %v8114, 65535
        %v8116 = vshrl.u32 %v8114, 16
        %v8117 = vcvt.s32.f32 %v8115
        %v8118 = vcvt.s32.f32 %v8116
        %8119 = vadd.xlane.f32.xlu0 %v8117
        %v8120 = vpop.xlane.xlu0 %8119
        %8121 = vadd.xlane.f32.xlu0 %v8118
        %v8122 = vpop.xlane.xlu0 %8121
        %v8123 = vcvt.f32.s32 %v8120
        %v8124 = vcvt.f32.s32 %v8122
        %v8125 = vshll.u32 %v8124, 16
        %v8126 = vadd.s32 %v8125, %v8123
        %v8127 = vsel %vm311, %v8059, 0
        %v8128 = vand.u32 %v8127, 65535
        %v8129 = vshrl.u32 %v8127, 16
        %v8130 = vcvt.s32.f32 %v8128
        %v8131 = vcvt.s32.f32 %v8129
        %8132 = vadd.xlane.f32.xlu0 %v8130
        %v8133 = vpop.xlane.xlu0 %8132
        %8134 = vadd.xlane.f32.xlu0 %v8131
        %v8135 = vpop.xlane.xlu0 %8134
        %v8136 = vcvt.f32.s32 %v8133
        %v8137 = vcvt.f32.s32 %v8135
        %v8138 = vshll.u32 %v8137, 16
        %v8139 = vadd.s32 %v8138, %v8136
        %v8140 = vsel %vm311, %v8060, 0
        %v8141 = vand.u32 %v8140, 65535
        %v8142 = vshrl.u32 %v8140, 16
        %v8143 = vcvt.s32.f32 %v8141
        %v8144 = vcvt.s32.f32 %v8142
        %8145 = vadd.xlane.f32.xlu0 %v8143
        %v8146 = vpop.xlane.xlu0 %8145
        %8147 = vadd.xlane.f32.xlu0 %v8144
        %v8148 = vpop.xlane.xlu0 %8147
        %v8149 = vcvt.f32.s32 %v8146
        %v8150 = vcvt.f32.s32 %v8148
        %v8151 = vshll.u32 %v8150, 16
        %v8152 = vadd.s32 %v8151, %v8149
        %v8153 = vsel %vm311, %v8061, 0
        %v8154 = vand.u32 %v8153, 65535
        %v8155 = vshrl.u32 %v8153, 16
        %v8156 = vcvt.s32.f32 %v8154
        %v8157 = vcvt.s32.f32 %v8155
        %8158 = vadd.xlane.f32.xlu0 %v8156
        %v8159 = vpop.xlane.xlu0 %8158
        %8160 = vadd.xlane.f32.xlu0 %v8157
        %v8161 = vpop.xlane.xlu0 %8160
        %v8162 = vcvt.f32.s32 %v8159
        %v8163 = vcvt.f32.s32 %v8161
        %v8164 = vshll.u32 %v8163, 16
        %v8165 = vadd.s32 %v8164, %v8162
        %vm8166 = vcmp.eq.s32.totalorder %v7853, %v8074
        %vm8167 = vcmp.eq.s32.totalorder %v7853, %v8087
        %vm8168 = vcmp.eq.s32.totalorder %v7853, %v8100
        %vm8169 = vcmp.eq.s32.totalorder %v7853, %v8113
        %vm8170 = vcmp.eq.s32.totalorder %v7853, %v8126
        %vm8171 = vcmp.eq.s32.totalorder %v7853, %v8139
        %vm8172 = vcmp.eq.s32.totalorder %v7853, %v8152
        %vm8173 = vcmp.eq.s32.totalorder %v7853, %v8165
        %v8174 = vsel %vm8166, %v8030, 0.0
        %v8175 = vsel %vm8167, %v8031, 0.0
        %v8176 = vsel %vm8168, %v8032, 0.0
        %v8177 = vsel %vm8169, %v8033, 0.0
        %v8178 = vsel %vm8170, %v8034, 0.0
        %v8179 = vsel %vm8171, %v8035, 0.0
        %v8180 = vsel %vm8172, %v8036, 0.0
        %v8181 = vsel %vm8173, %v8037, 0.0
        %v8182 = vsel %vm311, %v8174, 0.0
        %8183 = vadd.xlane.f32.xlu0 %v8182
        %v8184 = vpop.xlane.xlu0 %8183
        %v8185 = vsel %vm311, %v8175, 0.0
        %8186 = vadd.xlane.f32.xlu0 %v8185
        %v8187 = vpop.xlane.xlu0 %8186
        %v8188 = vsel %vm311, %v8176, 0.0
        %8189 = vadd.xlane.f32.xlu0 %v8188
        %v8190 = vpop.xlane.xlu0 %8189
        %v8191 = vsel %vm311, %v8177, 0.0
        %8192 = vadd.xlane.f32.xlu0 %v8191
        %v8193 = vpop.xlane.xlu0 %8192
        %v8194 = vsel %vm311, %v8178, 0.0
        %8195 = vadd.xlane.f32.xlu0 %v8194
        %v8196 = vpop.xlane.xlu0 %8195
        %v8197 = vsel %vm311, %v8179, 0.0
        %8198 = vadd.xlane.f32.xlu0 %v8197
        %v8199 = vpop.xlane.xlu0 %8198
        %v8200 = vsel %vm311, %v8180, 0.0
        %8201 = vadd.xlane.f32.xlu0 %v8200
        %v8202 = vpop.xlane.xlu0 %8201
        %v8203 = vsel %vm311, %v8181, 0.0
        %8204 = vadd.xlane.f32.xlu0 %v8203
        %v8205 = vpop.xlane.xlu0 %8204
        %v8206 = vsub.f32 %v572, %v8184
        %v8207 = vsub.f32 %v573, %v8187
        %v8208 = vsub.f32 %v574, %v8190
        %v8209 = vsub.f32 %v575, %v8193
        %v8210 = vsub.f32 %v576, %v8196
        %v8211 = vsub.f32 %v577, %v8199
        %v8212 = vsub.f32 %v578, %v8202
        %v8213 = vsub.f32 %v579, %v8205
        %v8214 = vmax.f32 %v8206, 0.0
        %v8215 = vmax.f32 %v8207, 0.0
        %v8216 = vmax.f32 %v8208, 0.0
        %v8217 = vmax.f32 %v8209, 0.0
        %v8218 = vmax.f32 %v8210, 0.0
        %v8219 = vmax.f32 %v8211, 0.0
        %v8220 = vmax.f32 %v8212, 0.0
        %v8221 = vmax.f32 %v8213, 0.0
        %v8222 = vmul.f32 %v8214, %v8214
        %v8223 = vmul.f32 %v8215, %v8215
        %v8224 = vmul.f32 %v8216, %v8216
        %v8225 = vmul.f32 %v8217, %v8217
        %v8226 = vmul.f32 %v8218, %v8218
        %v8227 = vmul.f32 %v8219, %v8219
        %v8228 = vmul.f32 %v8220, %v8220
        %v8229 = vmul.f32 %v8221, %v8221
        %v8231 = vsel %vm311, %v8222, 0
        %8233 = vmatpush.msra.mxu0 0.0
        %8234 = vmatpush.msra.mxu0 0.0
        %8235 = vmatpush.msra.mxu0 0.0
        %8236 = vmatpush.msra.mxu0 0.0
        %8237 = vmatpush.msra.mxu0 0.0
        %8238 = vmatpush.msra.mxu0 0.0
        %8239 = vmatpush.msra.mxu0 0.0
        %8240 = vmatpush.msra.mxu0 0.0
        %8241 = vmatpush.msra.mxu0 0.0
        %8242 = vmatpush.msra.mxu0 0.0
        %8243 = vmatpush.msra.mxu0 0.0
        %8244 = vmatpush.msra.mxu0 0.0
        %8245 = vmatpush.msra.mxu0 0.0
        %8246 = vmatpush.msra.mxu0 0.0
        %8247 = vmatpush.msra.mxu0 0.0
        %8248 = vmatpush.msra.mxu0 %v306
        %8249 = vmatmul.f32.gmra.mxu0 %v8231
        %v8250 = vpop.f32.mrf.mxu0
        %v8251 = vadd.f32 0.0, %v8250
        %8252 = vdwg.mxu0
        %8254 = vrot.lane.b32.xlu0 %v306, 120
        %v8255 = vpop.permute.xlu0 %8254
        %v8258 = vsel %vm311, %v8223, 0
        %8260 = vmatpush.msra.mxu0 0.0
        %8261 = vmatpush.msra.mxu0 0.0
        %8262 = vmatpush.msra.mxu0 0.0
        %8263 = vmatpush.msra.mxu0 0.0
        %8264 = vmatpush.msra.mxu0 0.0
        %8265 = vmatpush.msra.mxu0 0.0
        %8266 = vmatpush.msra.mxu0 0.0
        %8267 = vmatpush.msra.mxu0 0.0
        %8268 = vmatpush.msra.mxu0 0.0
        %8269 = vmatpush.msra.mxu0 0.0
        %8270 = vmatpush.msra.mxu0 0.0
        %8271 = vmatpush.msra.mxu0 0.0
        %8272 = vmatpush.msra.mxu0 0.0
        %8273 = vmatpush.msra.mxu0 0.0
        %8274 = vmatpush.msra.mxu0 0.0
        %8275 = vmatpush.msra.mxu0 %v8255
        %8276 = vmatmul.f32.gmra.mxu0 %v8258
        %v8277 = vpop.f32.mrf.mxu0
        %v8278 = vadd.f32 0.0, %v8277
        %8279 = vdwg.mxu0
        %8280 = vrot.lane.b32.xlu0 %v306, 112
        %v8281 = vpop.permute.xlu0 %8280
        %v8284 = vsel %vm311, %v8224, 0
        %8286 = vmatpush.msra.mxu0 0.0
        %8287 = vmatpush.msra.mxu0 0.0
        %8288 = vmatpush.msra.mxu0 0.0
        %8289 = vmatpush.msra.mxu0 0.0
        %8290 = vmatpush.msra.mxu0 0.0
        %8291 = vmatpush.msra.mxu0 0.0
        %8292 = vmatpush.msra.mxu0 0.0
        %8293 = vmatpush.msra.mxu0 0.0
        %8294 = vmatpush.msra.mxu0 0.0
        %8295 = vmatpush.msra.mxu0 0.0
        %8296 = vmatpush.msra.mxu0 0.0
        %8297 = vmatpush.msra.mxu0 0.0
        %8298 = vmatpush.msra.mxu0 0.0
        %8299 = vmatpush.msra.mxu0 0.0
        %8300 = vmatpush.msra.mxu0 0.0
        %8301 = vmatpush.msra.mxu0 %v8281
        %8302 = vmatmul.f32.gmra.mxu0 %v8284
        %v8303 = vpop.f32.mrf.mxu0
        %v8304 = vadd.f32 0.0, %v8303
        %8305 = vdwg.mxu0
        %8306 = vrot.lane.b32.xlu0 %v306, 104
        %v8307 = vpop.permute.xlu0 %8306
        %v8310 = vsel %vm311, %v8225, 0
        %8312 = vmatpush.msra.mxu0 0.0
        %8313 = vmatpush.msra.mxu0 0.0
        %8314 = vmatpush.msra.mxu0 0.0
        %8315 = vmatpush.msra.mxu0 0.0
        %8316 = vmatpush.msra.mxu0 0.0
        %8317 = vmatpush.msra.mxu0 0.0
        %8318 = vmatpush.msra.mxu0 0.0
        %8319 = vmatpush.msra.mxu0 0.0
        %8320 = vmatpush.msra.mxu0 0.0
        %8321 = vmatpush.msra.mxu0 0.0
        %8322 = vmatpush.msra.mxu0 0.0
        %8323 = vmatpush.msra.mxu0 0.0
        %8324 = vmatpush.msra.mxu0 0.0
        %8325 = vmatpush.msra.mxu0 0.0
        %8326 = vmatpush.msra.mxu0 0.0
        %8327 = vmatpush.msra.mxu0 %v8307
        %8328 = vmatmul.f32.gmra.mxu0 %v8310
        %v8329 = vpop.f32.mrf.mxu0
        %v8330 = vadd.f32 0.0, %v8329
        %8331 = vdwg.mxu0
        %8332 = vrot.lane.b32.xlu0 %v306, 96
        %v8333 = vpop.permute.xlu0 %8332
        %v8336 = vsel %vm311, %v8226, 0
        %8338 = vmatpush.msra.mxu0 0.0
        %8339 = vmatpush.msra.mxu0 0.0
        %8340 = vmatpush.msra.mxu0 0.0
        %8341 = vmatpush.msra.mxu0 0.0
        %8342 = vmatpush.msra.mxu0 0.0
        %8343 = vmatpush.msra.mxu0 0.0
        %8344 = vmatpush.msra.mxu0 0.0
        %8345 = vmatpush.msra.mxu0 0.0
        %8346 = vmatpush.msra.mxu0 0.0
        %8347 = vmatpush.msra.mxu0 0.0
        %8348 = vmatpush.msra.mxu0 0.0
        %8349 = vmatpush.msra.mxu0 0.0
        %8350 = vmatpush.msra.mxu0 0.0
        %8351 = vmatpush.msra.mxu0 0.0
        %8352 = vmatpush.msra.mxu0 0.0
        %8353 = vmatpush.msra.mxu0 %v8333
        %8354 = vmatmul.f32.gmra.mxu0 %v8336
        %v8355 = vpop.f32.mrf.mxu0
        %v8356 = vadd.f32 0.0, %v8355
        %8357 = vdwg.mxu0
        %8358 = vrot.lane.b32.xlu0 %v306, 88
        %v8359 = vpop.permute.xlu0 %8358
        %v8362 = vsel %vm311, %v8227, 0
        %8364 = vmatpush.msra.mxu0 0.0
        %8365 = vmatpush.msra.mxu0 0.0
        %8366 = vmatpush.msra.mxu0 0.0
        %8367 = vmatpush.msra.mxu0 0.0
        %8368 = vmatpush.msra.mxu0 0.0
        %8369 = vmatpush.msra.mxu0 0.0
        %8370 = vmatpush.msra.mxu0 0.0
        %8371 = vmatpush.msra.mxu0 0.0
        %8372 = vmatpush.msra.mxu0 0.0
        %8373 = vmatpush.msra.mxu0 0.0
        %8374 = vmatpush.msra.mxu0 0.0
        %8375 = vmatpush.msra.mxu0 0.0
        %8376 = vmatpush.msra.mxu0 0.0
        %8377 = vmatpush.msra.mxu0 0.0
        %8378 = vmatpush.msra.mxu0 0.0
        %8379 = vmatpush.msra.mxu0 %v8359
        %8380 = vmatmul.f32.gmra.mxu0 %v8362
        %v8381 = vpop.f32.mrf.mxu0
        %v8382 = vadd.f32 0.0, %v8381
        %8383 = vdwg.mxu0
        %8384 = vrot.lane.b32.xlu0 %v306, 80
        %v8385 = vpop.permute.xlu0 %8384
        %v8388 = vsel %vm311, %v8228, 0
        %8390 = vmatpush.msra.mxu0 0.0
        %8391 = vmatpush.msra.mxu0 0.0
        %8392 = vmatpush.msra.mxu0 0.0
        %8393 = vmatpush.msra.mxu0 0.0
        %8394 = vmatpush.msra.mxu0 0.0
        %8395 = vmatpush.msra.mxu0 0.0
        %8396 = vmatpush.msra.mxu0 0.0
        %8397 = vmatpush.msra.mxu0 0.0
        %8398 = vmatpush.msra.mxu0 0.0
        %8399 = vmatpush.msra.mxu0 0.0
        %8400 = vmatpush.msra.mxu0 0.0
        %8401 = vmatpush.msra.mxu0 0.0
        %8402 = vmatpush.msra.mxu0 0.0
        %8403 = vmatpush.msra.mxu0 0.0
        %8404 = vmatpush.msra.mxu0 0.0
        %8405 = vmatpush.msra.mxu0 %v8385
        %8406 = vmatmul.f32.gmra.mxu0 %v8388
        %v8407 = vpop.f32.mrf.mxu0
        %v8408 = vadd.f32 0.0, %v8407
        %8409 = vdwg.mxu0
        %8410 = vrot.lane.b32.xlu0 %v306, 72
        %v8411 = vpop.permute.xlu0 %8410
        %v8414 = vsel %vm311, %v8229, 0
        %8416 = vmatpush.msra.mxu0 0.0
        %8417 = vmatpush.msra.mxu0 0.0
        %8418 = vmatpush.msra.mxu0 0.0
        %8419 = vmatpush.msra.mxu0 0.0
        %8420 = vmatpush.msra.mxu0 0.0
        %8421 = vmatpush.msra.mxu0 0.0
        %8422 = vmatpush.msra.mxu0 0.0
        %8423 = vmatpush.msra.mxu0 0.0
        %8424 = vmatpush.msra.mxu0 0.0
        %8425 = vmatpush.msra.mxu0 0.0
        %8426 = vmatpush.msra.mxu0 0.0
        %8427 = vmatpush.msra.mxu0 0.0
        %8428 = vmatpush.msra.mxu0 0.0
        %8429 = vmatpush.msra.mxu0 0.0
        %8430 = vmatpush.msra.mxu0 0.0
        %8431 = vmatpush.msra.mxu0 %v8411
        %8432 = vmatmul.f32.gmra.mxu0 %v8414
        %v8433 = vpop.f32.mrf.mxu0
        %v8434 = vadd.f32 0.0, %v8433
        %8435 = vdwg.mxu0
        %8437 = vrot.lane.b32.xlu0 %v8278, 8
        %v8438 = vpop.permute.xlu0 %8437
        %8441 = vrot.lane.b32.xlu0 %v8304, 16
        %v8442 = vpop.permute.xlu0 %8441
        %8445 = vrot.lane.b32.xlu0 %v8330, 24
        %v8446 = vpop.permute.xlu0 %8445
        %8449 = vrot.lane.b32.xlu0 %v8356, 32
        %v8450 = vpop.permute.xlu0 %8449
        %8453 = vrot.lane.b32.xlu0 %v8382, 40
        %v8454 = vpop.permute.xlu0 %8453
        %8457 = vrot.lane.b32.xlu0 %v8408, 48
        %v8458 = vpop.permute.xlu0 %8457
        %8461 = vrot.lane.b32.xlu0 %v8434, 56
        %v8462 = vpop.permute.xlu0 %8461
        %v8464 = vsel %vm311, %v8251, %v8438
        %vm8465 = vcmask 130048
        %v8466 = vsel %vm8465, %v8464, %v8442
        %vm8467 = vcmask 195584
        %v8468 = vsel %vm8467, %v8466, %v8446
        %vm8469 = vcmask 261120
        %v8470 = vsel %vm8469, %v8468, %v8450
        %vm8471 = vcmask 326656
        %v8472 = vsel %vm8471, %v8470, %v8454
        %v8473 = vsel %vm264, %v8472, %v8458
        %vm8474 = vcmask 457728
        %v8475 = vsel %vm8474, %v8473, %v8462
        %v8476 = vld [vmem:[%s2] sm:$0xff]
        %v8477 = vld [vmem:[%s2 + $0x8] sm:$0xff]
        %v8478 = vld [vmem:[%s2 + $0x10] sm:$0xff]
        %v8479 = vld [vmem:[%s2 + $0x18] sm:$0xff]
        %v8480 = vld [vmem:[%s2 + $0x20] sm:$0xff]
        %v8481 = vld [vmem:[%s2 + $0x28] sm:$0xff]
        %v8482 = vld [vmem:[%s2 + $0x30] sm:$0xff]
        %v8483 = vld [vmem:[%s2 + $0x38] sm:$0xff]
        %v8484 = vperm.slane %v248, 1
        %vm8485 = vcmask 523264
        %v8487 = vsel %vm8485, %v8475, 0
        %8489 = vmatpush.msra.mxu0 0.0
        %8490 = vmatpush.msra.mxu0 0.0
        %8491 = vmatpush.msra.mxu0 0.0
        %8492 = vmatpush.msra.mxu0 0.0
        %8493 = vmatpush.msra.mxu0 0.0
        %8494 = vmatpush.msra.mxu0 0.0
        %8495 = vmatpush.msra.mxu0 0.0
        %8496 = vmatpush.msra.mxu0 0.0
        %8497 = vmatpush.msra.mxu0 %v8483
        %8498 = vmatpush.msra.mxu0 %v8482
        %8499 = vmatpush.msra.mxu0 %v8481
        %8500 = vmatpush.msra.mxu0 %v8480
        %8501 = vmatpush.msra.mxu0 %v8479
        %8502 = vmatpush.msra.mxu0 %v8478
        %8503 = vmatpush.msra.mxu0 %v8477
        %8504 = vmatpush.msra.mxu0 %v8476
        %8505 = vmatmul.f32.gmra.mxu0 %v8487
        %v8506 = vpop.f32.mrf.mxu0
        %v8507 = vadd.f32 %v8484, %v8506
        %8508 = vdwg.mxu0
        %v8509 = vsel %vm264, %v8507, 0.0
        %8510 = vadd.xlane.f32.xlu0 %v8509
        %v8511 = vpop.xlane.xlu0 %8510
        %v8512 = vrcp.pop 48.0
        %v8513 = vmul.f32 48.0, %v8512
        %v8514 = vsub.f32 1.0, %v8513
        %v8515 = vmul.f32 %v8512, %v8514
        %v8516 = vadd.f32 %v8512, %v8515
        %vm8517 = vweird.f32 %v8512
        %v8518 = vsel %vm8517, %v8512, %v8516
        %v8519 = vmul.f32 %v8511, %v8518
        %v8520 = vsub.f32 %v8507, %v8519
        %v8521 = vmul.f32 %v8520, %v8520
        %v8522 = vsel %vm264, %v8521, 0.0
        %8523 = vadd.xlane.f32.xlu0 %v8522
        %v8524 = vpop.xlane.xlu0 %8523
        %v8525 = vmul.f32 %v8524, %v8518
        %v8526 = vadd.f32 %v8525, 1e-05
        %v8527 = vrsqrt.pop %v8526
        %v8528 = vmul.f32 %v8527, %v8526
        %v8529 = vmul.f32 %v8528, %v8527
        %v8530 = vmul.f32 0.5, %v8529
        %v8531 = vsub.f32 1.5, %v8530
        %v8532 = vmul.f32 %v8527, %v8531
        %vm8533 = vweird.f32 %v8526
        %vm8534 = vweird.f32 %v8527
        %vm8535 = vmor %vm8533, %vm8534
        %v8536 = vsel %vm8535, %v8527, %v8532
        %v8537 = vmul.f32 %v8520, %v8536
        %v8538 = vperm.slane %v248, 2
        %v8539 = vmul.f32 %v8537, %v8538
        %v8540 = vperm.slane %v248, 3
        %v8541 = vadd.f32 %v8539, %v8540
        %v8542 = vadd.f32 %v247, %v8541
        %v8543 = vld [vmem:[%s3] sm:$0xff]
        %v8544 = vld [vmem:[%s3 + $0x8] sm:$0xff]
        %v8545 = vld [vmem:[%s3 + $0x10] sm:$0xff]
        %v8546 = vld [vmem:[%s3 + $0x18] sm:$0xff]
        %v8547 = vld [vmem:[%s3 + $0x20] sm:$0xff]
        %v8548 = vld [vmem:[%s3 + $0x28] sm:$0xff]
        %v8549 = vperm.slane %v248, 4
        %v8551 = vsel %vm264, %v8542, 0
        %8553 = vmatpush.msra.mxu0 0.0
        %8554 = vmatpush.msra.mxu0 0.0
        %8555 = vmatpush.msra.mxu0 0.0
        %8556 = vmatpush.msra.mxu0 0.0
        %8557 = vmatpush.msra.mxu0 0.0
        %8558 = vmatpush.msra.mxu0 0.0
        %8559 = vmatpush.msra.mxu0 0.0
        %8560 = vmatpush.msra.mxu0 0.0
        %8561 = vmatpush.msra.mxu0 0.0
        %8562 = vmatpush.msra.mxu0 0.0
        %8563 = vmatpush.msra.mxu0 %v8548
        %8564 = vmatpush.msra.mxu0 %v8547
        %8565 = vmatpush.msra.mxu0 %v8546
        %8566 = vmatpush.msra.mxu0 %v8545
        %8567 = vmatpush.msra.mxu0 %v8544
        %8568 = vmatpush.msra.mxu0 %v8543
        %8569 = vmatmul.f32.gmra.mxu0 %v8551
        %v8570 = vpop.f32.mrf.mxu0
        %v8571 = vadd.f32 %v8549, %v8570
        %8572 = vdwg.mxu0
        %v8573 = vmax.f32 %v8571, 0.0
        %v8574 = vand.u32 2147483647, %v8571
        %v8575 = vsub.f32 0.0, %v8574
        %v8576 = vmul.f32 %v8575, 1.442695
        %v8577 = vpow.pop %v8576
        %v8578 = vadd.f32 %v8577, 1.0
        %v8579 = vlog2.pop %v8578
        %v8580 = vmul.f32 %v8579, 0.6931472
        %v8581 = vadd.f32 %v8573, %v8580
        %v8582 = vtanh.pop %v8581
        %v8583 = vmul.f32 %v8571, %v8582
        %v8584 = vld [vmem:[%s4] sm:$0xff]
        %v8585 = vld [vmem:[%s4 + $0x8] sm:$0xff]
        %v8586 = vld [vmem:[%s4 + $0x10] sm:$0xff]
        %v8587 = vld [vmem:[%s4 + $0x18] sm:$0xff]
        %v8588 = vld [vmem:[%s4 + $0x20] sm:$0xff]
        %v8589 = vld [vmem:[%s4 + $0x28] sm:$0xff]
        %v8590 = vld [vmem:[%s4 + $0x30] sm:$0xff]
        %v8591 = vld [vmem:[%s4 + $0x38] sm:$0xff]
        %v8592 = vld [vmem:[%s4 + $0x40] sm:$0xff]
        %v8593 = vld [vmem:[%s4 + $0x48] sm:$0xff]
        %v8594 = vld [vmem:[%s4 + $0x50] sm:$0xff]
        %v8595 = vld [vmem:[%s4 + $0x58] sm:$0xff]
        %v8596 = vperm.slane %v248, 5
        %vm8597 = vcmask 785408
        %v8599 = vsel %vm8597, %v8583, 0
        %8601 = vmatpush.msra.mxu0 0.0
        %8602 = vmatpush.msra.mxu0 0.0
        %8603 = vmatpush.msra.mxu0 0.0
        %8604 = vmatpush.msra.mxu0 0.0
        %8605 = vmatpush.msra.mxu0 %v8595
        %8606 = vmatpush.msra.mxu0 %v8594
        %8607 = vmatpush.msra.mxu0 %v8593
        %8608 = vmatpush.msra.mxu0 %v8592
        %8609 = vmatpush.msra.mxu0 %v8591
        %8610 = vmatpush.msra.mxu0 %v8590
        %8611 = vmatpush.msra.mxu0 %v8589
        %8612 = vmatpush.msra.mxu0 %v8588
        %8613 = vmatpush.msra.mxu0 %v8587
        %8614 = vmatpush.msra.mxu0 %v8586
        %8615 = vmatpush.msra.mxu0 %v8585
        %8616 = vmatpush.msra.mxu0 %v8584
        %8617 = vmatmul.f32.gmra.mxu0 %v8599
        %v8618 = vpop.f32.mrf.mxu0
        %v8619 = vadd.f32 %v8596, %v8618
        %8620 = vdwg.mxu0
        %v8621 = vsel %vm264, %v8619, 0.0
        %8622 = vadd.xlane.f32.xlu0 %v8621
        %v8623 = vpop.xlane.xlu0 %8622
        %v8624 = vmul.f32 %v8623, %v8518
        %v8625 = vsub.f32 %v8619, %v8624
        %v8626 = vmul.f32 %v8625, %v8625
        %v8627 = vsel %vm264, %v8626, 0.0
        %8628 = vadd.xlane.f32.xlu0 %v8627
        %v8629 = vpop.xlane.xlu0 %8628
        %v8630 = vmul.f32 %v8629, %v8518
        %v8631 = vadd.f32 %v8630, 1e-05
        %v8632 = vrsqrt.pop %v8631
        %v8633 = vmul.f32 %v8632, %v8631
        %v8634 = vmul.f32 %v8633, %v8632
        %v8635 = vmul.f32 0.5, %v8634
        %v8636 = vsub.f32 1.5, %v8635
        %v8637 = vmul.f32 %v8632, %v8636
        %vm8638 = vweird.f32 %v8631
        %vm8639 = vweird.f32 %v8632
        %vm8640 = vmor %vm8638, %vm8639
        %v8641 = vsel %vm8640, %v8632, %v8637
        %v8642 = vmul.f32 %v8625, %v8641
        %v8643 = vperm.slane %v248, 6
        %v8644 = vmul.f32 %v8642, %v8643
        %v8645 = vperm.slane %v248, 7
        %v8646 = vadd.f32 %v8644, %v8645
        %v8647 = vadd.f32 %v8542, %v8646
        %8648 = vst.msk [vmem:[%s242] sm:$0xff] %vm264, %v8647
        %s8649 = sand.u32 %s159, 1
        %s8650 = scalar_lea.sflag [#allocation3], %s8649
        %s8651 = sand.u32 %s159, 1
        %s8652 = smul.addr %s8651, 8
        %s8653 = scalar_lea.vmem [#allocation2], %s8652
        // Predicated region
        $region45: #{tpu_custom_call.1} parent=43 // pred_check
          %p8654 = pneg %p169
        $region46: #{tpu_custom_call.1} parent=43 // pred_check_branch
          %8656 = sbr.rel (%p8654) target = $region48
        $region47: #{tpu_custom_call.1} parent=43 // pred_region
          %8658 = vsyncadd %s8650, 0
          %s8659 = smul.addr %s20, 8
          %s8660 = scalar_lea.hbm %s6, %s8659
          %s8662 = sshll.u32 %s8653, 4
          %s8663 = int_to_ptr.vmem [resolvable:$true] %s8662
          %s8664 = sshll.u32 %s8660, 4
          %s8665 = int_to_ptr.hbm [resolvable:$true] %s8664
          %8667 = dma.vmem_to_hbm [thread:$0]  %s8663, 128, %s8665, %s8650
        $region48: #{tpu_custom_call.1} parent=43 // pred_fallthru
          _
      $region44: #{tpu_custom_call.1} parent=5 // pred_fallthru
        _
      %p8668 = scmp.le.s32.totalorder 2, %s15
      // Predicated region
      $region49: #{tpu_custom_call.1} parent=5 // pred_check
        %p8669 = pneg %p8668
      $region50: #{tpu_custom_call.1} parent=5 // pred_check_branch
        %8671 = sbr.rel (%p8669) target = $region52
      $region51: #{tpu_custom_call.1} parent=5 // pred_region
        %s8672 = ssub.s32 %s15, 2
        // Predicated region
        $region53: #{tpu_custom_call.1} parent=51 // pred_check
          %p8673 = pneg %p175
        $region54: #{tpu_custom_call.1} parent=51 // pred_check_branch
          %8675 = sbr.rel (%p8673) target = $region56
        $region55: #{tpu_custom_call.1} parent=51 // pred_region
          %s8676 = sand.u32 %s160, 1
          %s8677 = scalar_lea.sflag [#allocation3], %s8676
          %s8678 = sand.u32 %s160, 1
          %s8679 = smul.addr %s8678, 8
          %s8680 = scalar_lea.vmem [#allocation2], %s8679
          %8682 = dma.done %s8677, 128
        $region56: #{tpu_custom_call.1} parent=51 // pred_fallthru
          _
      $region52: #{tpu_custom_call.1} parent=5 // pred_fallthru
        _
    $region6: #{tpu_custom_call.1} parent=1 // loop_footer
      %s19 = sadd.s32 1, %s15
    $region7: #{tpu_custom_call.1} parent=1 // loop_footer_branch
      %14 = sbr.rel target = $region3
    $region8: #{tpu_custom_call.1} parent=1 // loop_exit
      _
    %8683 = vsyncpa [#allocation3], 1
    %s8684 = scalar_lea.sflag [#allocation3], 1
    %8685 = vsyncpa %s8684, 1

</llo_original>
